<compile_context>
chip_gen: v7x
topology: tpu7x:2x2x1
jax: 0.10.0
libtpu: 0.0.40
codegen_flags: <defaults>
</compile_context>

<pallas_src>
import functools

import numpy as np
import jax
import jax.numpy as jnp
from jax.experimental import pallas as pl
from jax.experimental.pallas import tpu as pltpu


# ---------------------------------------------------------------------------
# In-kernel elementwise helpers
# ---------------------------------------------------------------------------
def _recip(x):
    # 1/x via EUP approximate reciprocal + one Newton-Raphson refinement.
    r = pl.reciprocal(x, approx=True)
    return r * (2.0 - x * r)


def _sigmoid(x):
    z = jnp.exp(-jnp.abs(x))
    r = _recip(1.0 + z)
    return jnp.where(x >= 0, r, z * r)


def _log_sigmoid(x):
    # stable log(sigmoid(x)) = min(x, 0) - log(1 + exp(-|x|))
    return jnp.minimum(x, 0.0) - jnp.log(1.0 + jnp.exp(-jnp.abs(x)))


def _softmax_lastdim(x):
    m = jnp.max(x, axis=-1, keepdims=True)
    e = jnp.exp(x - m)
    return e * _recip(jnp.sum(e, axis=-1, keepdims=True))


# ---------------------------------------------------------------------------
# Pallas kernel: one grid step == b_tile batch elements, full routing inside.
# Vote layout along lanes is (c, j, h):  m = c*(n_out*d_out) + j*d_out + h.
# ---------------------------------------------------------------------------
def _routing_kernel(a_ref, mu_ref, w_ref, b_ref, bu_ref, bi_ref, mask_ref,
                    a_out_ref, mu_out_ref, sig2_out_ref, v_scr,
                    *, d_cov, d_inp, d_out, n_out, n_iters, eps):
    bt, n_inp, _ = a_ref.shape
    JH = n_out * d_out
    M = d_cov * JH

    # ---- votes: V[b,i, c*JH + j*d_out + h] = sum_d mu[b,i,c,d] W[i,j,d,h] + B[i,j,c,h]
    # Pure VPU: single-column lane broadcasts of mu against the [n_inp, JH] W slabs.
    for c in range(d_cov):
        lo = c * JH
        vc = mu_ref[:, :, c * d_inp:c * d_inp + 1] * w_ref[0]
        for d in range(1, d_inp):
            vc = vc + mu_ref[:, :, c * d_inp + d:c * d_inp + d + 1] * w_ref[d]
        v_scr[:, :, lo:lo + JH] = vc + b_ref[:, lo:lo + JH]
    V = v_scr[...]                                  # [bt, n_inp, M]

    f_a = _sigmoid(a_ref[...])                      # [bt, n_inp, 1]
    beta_u = bu_ref[...]                            # [n_inp, n_out]
    beta_i = bi_ref[...]                            # [n_inp, n_out]
    mask = mask_ref[...]                            # [n_out, M]; mask[j, m] = (j(m) == j)
    mask_b = jnp.broadcast_to(mask[None], (bt, n_out, M))   # hoisted once

    a_out = mu_row = sig2_row = Vl2 = None
    for it in range(n_iters):                       # static unroll (n_iters is small)
        if it == 0:
            R = jnp.full((bt, n_inp, n_out), 1.0 / n_out, dtype=jnp.float32)
        else:
            inv2sig = 0.5 * _recip(sig2_row)        # [bt, 1, M]
            halflog = 0.5 * jnp.log(sig2_row)       # [bt, 1, M]
            X = Vl2 * inv2sig + halflog             # [bt, n_inp, M]
            # log_p[b,i,j] = -sum_m X[b,i,m] * mask[j,m]   (depth-M MXU contraction)
            log_p = -jnp.einsum('bim,bjm->bij', X, mask_b,
                                preferred_element_type=jnp.float32)
            R = _softmax_lastdim(_log_sigmoid(a_out) + log_p)

        D_use = f_a * R                             # [bt, n_inp, n_out]
        D_ign = f_a - D_use
        a_out = (jnp.sum(beta_u * D_use, axis=1, keepdims=True)
                 - jnp.sum(beta_i * D_ign, axis=1, keepdims=True))    # [bt, 1, n_out]
        over = _recip(jnp.sum(D_use, axis=1, keepdims=True) + eps)    # [bt, 1, n_out]
        Dn = D_use * over                           # [bt, n_inp, n_out]

        # mu_row[b,0,m] = sum_i Dn[b,i,j(m)] * V[b,i,m]  — per-j masked accumulate (VPU)
        mu_row = jnp.zeros((bt, 1, M), dtype=jnp.float32)
        for j in range(n_out):
            dj = Dn[:, :, j:j + 1]                  # [bt, n_inp, 1]
            mu_row = mu_row + mask[j:j + 1, :] * jnp.sum(dj * V, axis=1, keepdims=True)
        Vl2 = (V - mu_row) ** 2                     # [bt, n_inp, M]
        sig2_row = jnp.zeros((bt, 1, M), dtype=jnp.float32)
        for j in range(n_out):
            dj = Dn[:, :, j:j + 1]
            sig2_row = sig2_row + mask[j:j + 1, :] * jnp.sum(dj * Vl2, axis=1, keepdims=True)
        sig2_row = sig2_row + eps

    a_out_ref[...] = a_out
    mu_out_ref[...] = mu_row
    sig2_out_ref[...] = sig2_row


# ---------------------------------------------------------------------------
# Wrapper: parameter rearrangement + pallas_call with batch blocking
# ---------------------------------------------------------------------------
def routing_pallas(a_inp, mu_inp, W, Bp, beta_use, beta_ign,
                   *, n_iters=3, eps=1e-5, b_tile=8):
    B, n_inp = a_inp.shape
    _, _, d_cov, d_inp = mu_inp.shape
    n_out, d_out = W.shape[1], W.shape[3]
    JH = n_out * d_out
    M = d_cov * JH
    CD = d_cov * d_inp
    f32 = jnp.float32

    b_tile = max(1, min(b_tile, B))
    B_pad = ((B + b_tile - 1) // b_tile) * b_tile

    a3 = a_inp.astype(f32)[..., None]                       # [B, n_inp, 1]
    mu3 = mu_inp.astype(f32).reshape(B, n_inp, CD)          # (c, d) minor layout
    if B_pad != B:
        pad = B_pad - B
        a3 = jnp.concatenate([a3, jnp.zeros((pad, n_inp, 1), f32)], axis=0)
        mu3 = jnp.concatenate([mu3, jnp.zeros((pad, n_inp, CD), f32)], axis=0)

    # W_t[d, i, j*d_out + h] = W[i, j, d, h]   (no d_cov duplication)
    W_t = jnp.transpose(W.astype(f32), (2, 0, 1, 3)).reshape(d_inp, n_inp, JH)
    # B_flat[i, c*JH + j*d_out + h] = Bp[i, j, c, h]
    B_flat = jnp.transpose(Bp.astype(f32), (0, 2, 1, 3)).reshape(n_inp, M)
    # mask[j', c*JH + j*d_out + h] = 1 iff j == j'
    mask = jnp.broadcast_to(jnp.eye(n_out, dtype=f32)[:, None, :, None],
                            (n_out, d_cov, n_out, d_out)).reshape(n_out, M)

    kernel = functools.partial(_routing_kernel, d_cov=d_cov, d_inp=d_inp,
                               d_out=d_out, n_out=n_out, n_iters=n_iters, eps=eps)

    out_shapes = (
        jax.ShapeDtypeStruct((B_pad, 1, n_out), f32),
        jax.ShapeDtypeStruct((B_pad, 1, M), f32),
        jax.ShapeDtypeStruct((B_pad, 1, M), f32),
    )
    in_specs = [
        pl.BlockSpec((b_tile, n_inp, 1), lambda g: (g, 0, 0)),     # a (per batch tile)
        pl.BlockSpec((b_tile, n_inp, CD), lambda g: (g, 0, 0)),    # mu (per batch tile)
        pl.BlockSpec((d_inp, n_inp, JH), lambda g: (0, 0, 0)),     # W_t (shared)
        pl.BlockSpec((n_inp, M), lambda g: (0, 0)),                # B_flat (shared)
        pl.BlockSpec((n_inp, n_out), lambda g: (0, 0)),            # beta_use
        pl.BlockSpec((n_inp, n_out), lambda g: (0, 0)),            # beta_ign
        pl.BlockSpec((n_out, M), lambda g: (0, 0)),                # block mask
    ]
    out_specs = (
        pl.BlockSpec((b_tile, 1, n_out), lambda g: (g, 0, 0)),
        pl.BlockSpec((b_tile, 1, M), lambda g: (g, 0, 0)),
        pl.BlockSpec((b_tile, 1, M), lambda g: (g, 0, 0)),
    )

    a_o, mu_o, s_o = pl.pallas_call(
        kernel,
        out_shape=out_shapes,
        grid=(B_pad // b_tile,),
        in_specs=in_specs,
        out_specs=out_specs,
        scratch_shapes=[pltpu.VMEM((b_tile, n_inp, M), f32)],
        compiler_params=pltpu.CompilerParams(dimension_semantics=("parallel",)),
    )(a3, mu3, W_t, B_flat, beta_use.astype(f32), beta_ign.astype(f32), mask)

    a_out = a_o[:B].reshape(B, n_out)
    mu_out = mu_o[:B].reshape(B, d_cov, n_out, d_out).transpose(0, 2, 1, 3)
    sig2_out = s_o[:B].reshape(B, d_cov, n_out, d_out).transpose(0, 2, 1, 3)
    return a_out, mu_out, sig2_out


# ---------------------------------------------------------------------------
# Pure-JAX reference (mirrors the PyTorch forward) for correctness checking
# ---------------------------------------------------------------------------
def routing_reference(a_inp, mu_inp, W, Bp, beta_use, beta_ign, *, n_iters=3, eps=1e-5):
    n_out = W.shape[1]
    V = jnp.einsum('ijdh,bicd->bijch', W, mu_inp) + Bp
    f_a = jax.nn.sigmoid(a_inp)[..., None]
    a_out = mu_out = sig2_out = Vl2 = None
    for it in range(n_iters):
        if it == 0:
            R = jnp.full(V.shape[:-2], 1.0 / n_out, dtype=V.dtype)
        else:
            log_p = (-jnp.einsum('bijch,bjch->bij', Vl2, 1.0 / (2.0 * sig2_out))
                     - jnp.sum(jnp.log(jnp.sqrt(sig2_out)), axis=(-2, -1))[..., None, :])
            R = jax.nn.softmax(jax.nn.log_sigmoid(a_out)[..., None, :] + log_p, axis=-1)
        D_use = f_a * R
        D_ign = f_a - D_use
        a_out = jnp.sum(beta_use * D_use, axis=-2) - jnp.sum(beta_ign * D_ign, axis=-2)
        over = 1.0 / (jnp.sum(D_use, axis=-2) + eps)
        mu_out = jnp.einsum('bij,bijch,bj->bjch', D_use, V, over)
        Vl2 = (V - mu_out[:, None]) ** 2
        sig2_out = jnp.einsum('bij,bijch,bj->bjch', D_use, Vl2, over) + eps
    return a_out, mu_out, sig2_out


if __name__ == "__main__":
    key = jax.random.PRNGKey(0)
    B, n_inp, n_out = 6, 16, 8
    d_cov, d_inp, d_out = 4, 4, 4
    n_iters, eps = 3, 1e-5

    k1, k2, k3, k4, k5, k6 = jax.random.split(key, 6)
    a_inp = jax.random.normal(k1, (B, n_inp), jnp.float32)
    mu_inp = jax.random.normal(k2, (B, n_inp, d_cov, d_inp), jnp.float32)

    # W init as in the module (__init__: normal / d_inp); B / betas (zeros in
    # __init__) get small deterministic values so the full routing path is exercised.
    W = jax.random.normal(k3, (n_inp, n_out, d_inp, d_out), jnp.float32) / d_inp
    Bp = 0.1 * jax.random.normal(k4, (n_inp, n_out, d_cov, d_out), jnp.float32)
    beta_use = 0.1 * jax.random.normal(k5, (n_inp, n_out), jnp.float32)
    beta_ign = 0.1 * jax.random.normal(k6, (n_inp, n_out), jnp.float32)

    a_out, mu_out, sig2_out = routing_pallas(
        a_inp, mu_inp, W, Bp, beta_use, beta_ign,
        n_iters=n_iters, eps=eps, b_tile=4)   # B=6 -> padded to 8, grid of 2 steps
    jax.block_until_ready((a_out, mu_out, sig2_out))

    a_ref, mu_ref_, sig2_ref = routing_reference(
        a_inp, mu_inp, W, Bp, beta_use, beta_ign, n_iters=n_iters, eps=eps)
    np.testing.assert_allclose(np.asarray(a_out), np.asarray(a_ref), rtol=2e-3, atol=2e-5)
    np.testing.assert_allclose(np.asarray(mu_out), np.asarray(mu_ref_), rtol=2e-3, atol=2e-5)
    np.testing.assert_allclose(np.asarray(sig2_out), np.asarray(sig2_ref), rtol=2e-3, atol=2e-5)

    print("KERNEL_OK")
</pallas_src>

<mosaic_0001>
module attributes {stable_mosaic.version = 11 : i64} {
  func.func @_routing_kernel(%arg0: i32, %arg1: memref<4x16x1xf32, #tpu.memory_space<vmem>>, %arg2: memref<4x16x16xf32, #tpu.memory_space<vmem>>, %arg3: memref<4x16x32xf32, #tpu.memory_space<vmem>>, %arg4: memref<16x128xf32, #tpu.memory_space<vmem>>, %arg5: memref<16x8xf32, #tpu.memory_space<vmem>>, %arg6: memref<16x8xf32, #tpu.memory_space<vmem>>, %arg7: memref<8x128xf32, #tpu.memory_space<vmem>>, %arg8: memref<4x1x8xf32, #tpu.memory_space<vmem>>, %arg9: memref<4x1x128xf32, #tpu.memory_space<vmem>>, %arg10: memref<4x1x128xf32, #tpu.memory_space<vmem>>, %arg11: memref<4x16x128xf32, #tpu.memory_space<vmem>>) attributes {dimension_semantics = [#tpu.dimension_semantics<parallel>], iteration_bounds = array<i64: 2>, scalar_prefetch = 0 : i64, scratch_operands = 1 : i64, tpu.core_type = #tpu.core_type<tc>, window_params = [{transform_indices = @transform_0, window_bounds = array<i64: 4, 16, 1>}, {transform_indices = @transform_1, window_bounds = array<i64: 4, 16, 16>}, {pipeline_mode = #tpu.pipeline_mode<synchronous>, transform_indices = @transform_2, window_bounds = array<i64: 4, 16, 32>}, {pipeline_mode = #tpu.pipeline_mode<synchronous>, transform_indices = @transform_3, window_bounds = array<i64: 16, 128>}, {pipeline_mode = #tpu.pipeline_mode<synchronous>, transform_indices = @transform_4, window_bounds = array<i64: 16, 8>}, {pipeline_mode = #tpu.pipeline_mode<synchronous>, transform_indices = @transform_5, window_bounds = array<i64: 16, 8>}, {pipeline_mode = #tpu.pipeline_mode<synchronous>, transform_indices = @transform_6, window_bounds = array<i64: 8, 128>}, {transform_indices = @transform_7, window_bounds = array<i64: 4, 1, 8>}, {transform_indices = @transform_8, window_bounds = array<i64: 4, 1, 128>}, {transform_indices = @transform_9, window_bounds = array<i64: 4, 1, 128>}]} {
    %c0 = arith.constant 0 : index
    %c0_0 = arith.constant 0 : index
    %c0_1 = arith.constant 0 : index
    %0 = vector.load %arg2[%c0, %c0_0, %c0_1] : memref<4x16x16xf32, #tpu.memory_space<vmem>>, vector<4x16x1xf32>
    %c0_2 = arith.constant 0 : index
    %c0_3 = arith.constant 0 : index
    %c0_4 = arith.constant 0 : index
    %1 = vector.load %arg3[%c0_2, %c0_3, %c0_4] : memref<4x16x32xf32, #tpu.memory_space<vmem>>, vector<1x16x32xf32>
    %2 = vector.shape_cast %1 : vector<1x16x32xf32> to vector<16x32xf32>
    %3 = vector.shape_cast %2 : vector<16x32xf32> to vector<1x16x32xf32>
    %4 = vector.broadcast %0 : vector<4x16x1xf32> to vector<4x16x32xf32>
    %5 = vector.broadcast %3 : vector<1x16x32xf32> to vector<4x16x32xf32>
    %6 = arith.mulf %4, %5 : vector<4x16x32xf32>
    %c0_5 = arith.constant 0 : index
    %c0_6 = arith.constant 0 : index
    %c1 = arith.constant 1 : index
    %7 = vector.load %arg2[%c0_5, %c0_6, %c1] : memref<4x16x16xf32, #tpu.memory_space<vmem>>, vector<4x16x1xf32>
    %c1_7 = arith.constant 1 : index
    %c0_8 = arith.constant 0 : index
    %c0_9 = arith.constant 0 : index
    %8 = vector.load %arg3[%c1_7, %c0_8, %c0_9] : memref<4x16x32xf32, #tpu.memory_space<vmem>>, vector<1x16x32xf32>
    %9 = vector.shape_cast %8 : vector<1x16x32xf32> to vector<16x32xf32>
    %10 = vector.shape_cast %9 : vector<16x32xf32> to vector<1x16x32xf32>
    %11 = vector.broadcast %7 : vector<4x16x1xf32> to vector<4x16x32xf32>
    %12 = vector.broadcast %10 : vector<1x16x32xf32> to vector<4x16x32xf32>
    %13 = arith.mulf %11, %12 : vector<4x16x32xf32>
    %14 = arith.addf %6, %13 : vector<4x16x32xf32>
    %c0_10 = arith.constant 0 : index
    %c0_11 = arith.constant 0 : index
    %c2 = arith.constant 2 : index
    %15 = vector.load %arg2[%c0_10, %c0_11, %c2] : memref<4x16x16xf32, #tpu.memory_space<vmem>>, vector<4x16x1xf32>
    %c2_12 = arith.constant 2 : index
    %c0_13 = arith.constant 0 : index
    %c0_14 = arith.constant 0 : index
    %16 = vector.load %arg3[%c2_12, %c0_13, %c0_14] : memref<4x16x32xf32, #tpu.memory_space<vmem>>, vector<1x16x32xf32>
    %17 = vector.shape_cast %16 : vector<1x16x32xf32> to vector<16x32xf32>
    %18 = vector.shape_cast %17 : vector<16x32xf32> to vector<1x16x32xf32>
    %19 = vector.broadcast %15 : vector<4x16x1xf32> to vector<4x16x32xf32>
    %20 = vector.broadcast %18 : vector<1x16x32xf32> to vector<4x16x32xf32>
    %21 = arith.mulf %19, %20 : vector<4x16x32xf32>
    %22 = arith.addf %14, %21 : vector<4x16x32xf32>
    %c0_15 = arith.constant 0 : index
    %c0_16 = arith.constant 0 : index
    %c3 = arith.constant 3 : index
    %23 = vector.load %arg2[%c0_15, %c0_16, %c3] : memref<4x16x16xf32, #tpu.memory_space<vmem>>, vector<4x16x1xf32>
    %c3_17 = arith.constant 3 : index
    %c0_18 = arith.constant 0 : index
    %c0_19 = arith.constant 0 : index
    %24 = vector.load %arg3[%c3_17, %c0_18, %c0_19] : memref<4x16x32xf32, #tpu.memory_space<vmem>>, vector<1x16x32xf32>
    %25 = vector.shape_cast %24 : vector<1x16x32xf32> to vector<16x32xf32>
    %26 = vector.shape_cast %25 : vector<16x32xf32> to vector<1x16x32xf32>
    %27 = vector.broadcast %23 : vector<4x16x1xf32> to vector<4x16x32xf32>
    %28 = vector.broadcast %26 : vector<1x16x32xf32> to vector<4x16x32xf32>
    %29 = arith.mulf %27, %28 : vector<4x16x32xf32>
    %30 = arith.addf %22, %29 : vector<4x16x32xf32>
    %c0_20 = arith.constant 0 : index
    %c0_21 = arith.constant 0 : index
    %31 = vector.load %arg4[%c0_20, %c0_21] : memref<16x128xf32, #tpu.memory_space<vmem>>, vector<16x32xf32>
    %32 = vector.shape_cast %31 : vector<16x32xf32> to vector<1x16x32xf32>
    %33 = vector.broadcast %32 : vector<1x16x32xf32> to vector<4x16x32xf32>
    %34 = arith.addf %30, %33 : vector<4x16x32xf32>
    %c0_22 = arith.constant 0 : index
    %c0_23 = arith.constant 0 : index
    %c0_24 = arith.constant 0 : index
    %35 = vector.load %arg11[%c0_22, %c0_23, %c0_24] : memref<4x16x128xf32, #tpu.memory_space<vmem>>, vector<4x16x32xf32>
    tpu.vector_store %arg11[%c0_22, %c0_23, %c0_24], %34 {strides = array<i32>} : memref<4x16x128xf32, #tpu.memory_space<vmem>>, vector<4x16x32xf32>,
    %c0_25 = arith.constant 0 : index
    %c0_26 = arith.constant 0 : index
    %c4 = arith.constant 4 : index
    %36 = vector.load %arg2[%c0_25, %c0_26, %c4] : memref<4x16x16xf32, #tpu.memory_space<vmem>>, vector<4x16x1xf32>
    %c0_27 = arith.constant 0 : index
    %c0_28 = arith.constant 0 : index
    %c0_29 = arith.constant 0 : index
    %37 = vector.load %arg3[%c0_27, %c0_28, %c0_29] : memref<4x16x32xf32, #tpu.memory_space<vmem>>, vector<1x16x32xf32>
    %38 = vector.shape_cast %37 : vector<1x16x32xf32> to vector<16x32xf32>
    %39 = vector.shape_cast %38 : vector<16x32xf32> to vector<1x16x32xf32>
    %40 = vector.broadcast %36 : vector<4x16x1xf32> to vector<4x16x32xf32>
    %41 = vector.broadcast %39 : vector<1x16x32xf32> to vector<4x16x32xf32>
    %42 = arith.mulf %40, %41 : vector<4x16x32xf32>
    %c0_30 = arith.constant 0 : index
    %c0_31 = arith.constant 0 : index
    %c5 = arith.constant 5 : index
    %43 = vector.load %arg2[%c0_30, %c0_31, %c5] : memref<4x16x16xf32, #tpu.memory_space<vmem>>, vector<4x16x1xf32>
    %c1_32 = arith.constant 1 : index
    %c0_33 = arith.constant 0 : index
    %c0_34 = arith.constant 0 : index
    %44 = vector.load %arg3[%c1_32, %c0_33, %c0_34] : memref<4x16x32xf32, #tpu.memory_space<vmem>>, vector<1x16x32xf32>
    %45 = vector.shape_cast %44 : vector<1x16x32xf32> to vector<16x32xf32>
    %46 = vector.shape_cast %45 : vector<16x32xf32> to vector<1x16x32xf32>
    %47 = vector.broadcast %43 : vector<4x16x1xf32> to vector<4x16x32xf32>
    %48 = vector.broadcast %46 : vector<1x16x32xf32> to vector<4x16x32xf32>
    %49 = arith.mulf %47, %48 : vector<4x16x32xf32>
    %50 = arith.addf %42, %49 : vector<4x16x32xf32>
    %c0_35 = arith.constant 0 : index
    %c0_36 = arith.constant 0 : index
    %c6 = arith.constant 6 : index
    %51 = vector.load %arg2[%c0_35, %c0_36, %c6] : memref<4x16x16xf32, #tpu.memory_space<vmem>>, vector<4x16x1xf32>
    %c2_37 = arith.constant 2 : index
    %c0_38 = arith.constant 0 : index
    %c0_39 = arith.constant 0 : index
    %52 = vector.load %arg3[%c2_37, %c0_38, %c0_39] : memref<4x16x32xf32, #tpu.memory_space<vmem>>, vector<1x16x32xf32>
    %53 = vector.shape_cast %52 : vector<1x16x32xf32> to vector<16x32xf32>
    %54 = vector.shape_cast %53 : vector<16x32xf32> to vector<1x16x32xf32>
    %55 = vector.broadcast %51 : vector<4x16x1xf32> to vector<4x16x32xf32>
    %56 = vector.broadcast %54 : vector<1x16x32xf32> to vector<4x16x32xf32>
    %57 = arith.mulf %55, %56 : vector<4x16x32xf32>
    %58 = arith.addf %50, %57 : vector<4x16x32xf32>
    %c0_40 = arith.constant 0 : index
    %c0_41 = arith.constant 0 : index
    %c7 = arith.constant 7 : index
    %59 = vector.load %arg2[%c0_40, %c0_41, %c7] : memref<4x16x16xf32, #tpu.memory_space<vmem>>, vector<4x16x1xf32>
    %c3_42 = arith.constant 3 : index
    %c0_43 = arith.constant 0 : index
    %c0_44 = arith.constant 0 : index
    %60 = vector.load %arg3[%c3_42, %c0_43, %c0_44] : memref<4x16x32xf32, #tpu.memory_space<vmem>>, vector<1x16x32xf32>
    %61 = vector.shape_cast %60 : vector<1x16x32xf32> to vector<16x32xf32>
    %62 = vector.shape_cast %61 : vector<16x32xf32> to vector<1x16x32xf32>
    %63 = vector.broadcast %59 : vector<4x16x1xf32> to vector<4x16x32xf32>
    %64 = vector.broadcast %62 : vector<1x16x32xf32> to vector<4x16x32xf32>
    %65 = arith.mulf %63, %64 : vector<4x16x32xf32>
    %66 = arith.addf %58, %65 : vector<4x16x32xf32>
    %c0_45 = arith.constant 0 : index
    %c32 = arith.constant 32 : index
    %67 = vector.load %arg4[%c0_45, %c32] : memref<16x128xf32, #tpu.memory_space<vmem>>, vector<16x32xf32>
    %68 = vector.shape_cast %67 : vector<16x32xf32> to vector<1x16x32xf32>
    %69 = vector.broadcast %68 : vector<1x16x32xf32> to vector<4x16x32xf32>
    %70 = arith.addf %66, %69 : vector<4x16x32xf32>
    %c0_46 = arith.constant 0 : index
    %c0_47 = arith.constant 0 : index
    %c32_48 = arith.constant 32 : index
    %71 = vector.load %arg11[%c0_46, %c0_47, %c32_48] : memref<4x16x128xf32, #tpu.memory_space<vmem>>, vector<4x16x32xf32>
    tpu.vector_store %arg11[%c0_46, %c0_47, %c32_48], %70 {strides = array<i32>} : memref<4x16x128xf32, #tpu.memory_space<vmem>>, vector<4x16x32xf32>,
    %c0_49 = arith.constant 0 : index
    %c0_50 = arith.constant 0 : index
    %c8 = arith.constant 8 : index
    %72 = vector.load %arg2[%c0_49, %c0_50, %c8] : memref<4x16x16xf32, #tpu.memory_space<vmem>>, vector<4x16x1xf32>
    %c0_51 = arith.constant 0 : index
    %c0_52 = arith.constant 0 : index
    %c0_53 = arith.constant 0 : index
    %73 = vector.load %arg3[%c0_51, %c0_52, %c0_53] : memref<4x16x32xf32, #tpu.memory_space<vmem>>, vector<1x16x32xf32>
    %74 = vector.shape_cast %73 : vector<1x16x32xf32> to vector<16x32xf32>
    %75 = vector.shape_cast %74 : vector<16x32xf32> to vector<1x16x32xf32>
    %76 = vector.broadcast %72 : vector<4x16x1xf32> to vector<4x16x32xf32>
    %77 = vector.broadcast %75 : vector<1x16x32xf32> to vector<4x16x32xf32>
    %78 = arith.mulf %76, %77 : vector<4x16x32xf32>
    %c0_54 = arith.constant 0 : index
    %c0_55 = arith.constant 0 : index
    %c9 = arith.constant 9 : index
    %79 = vector.load %arg2[%c0_54, %c0_55, %c9] : memref<4x16x16xf32, #tpu.memory_space<vmem>>, vector<4x16x1xf32>
    %c1_56 = arith.constant 1 : index
    %c0_57 = arith.constant 0 : index
    %c0_58 = arith.constant 0 : index
    %80 = vector.load %arg3[%c1_56, %c0_57, %c0_58] : memref<4x16x32xf32, #tpu.memory_space<vmem>>, vector<1x16x32xf32>
    %81 = vector.shape_cast %80 : vector<1x16x32xf32> to vector<16x32xf32>
    %82 = vector.shape_cast %81 : vector<16x32xf32> to vector<1x16x32xf32>
    %83 = vector.broadcast %79 : vector<4x16x1xf32> to vector<4x16x32xf32>
    %84 = vector.broadcast %82 : vector<1x16x32xf32> to vector<4x16x32xf32>
    %85 = arith.mulf %83, %84 : vector<4x16x32xf32>
    %86 = arith.addf %78, %85 : vector<4x16x32xf32>
    %c0_59 = arith.constant 0 : index
    %c0_60 = arith.constant 0 : index
    %c10 = arith.constant 10 : index
    %87 = vector.load %arg2[%c0_59, %c0_60, %c10] : memref<4x16x16xf32, #tpu.memory_space<vmem>>, vector<4x16x1xf32>
    %c2_61 = arith.constant 2 : index
    %c0_62 = arith.constant 0 : index
    %c0_63 = arith.constant 0 : index
    %88 = vector.load %arg3[%c2_61, %c0_62, %c0_63] : memref<4x16x32xf32, #tpu.memory_space<vmem>>, vector<1x16x32xf32>
    %89 = vector.shape_cast %88 : vector<1x16x32xf32> to vector<16x32xf32>
    %90 = vector.shape_cast %89 : vector<16x32xf32> to vector<1x16x32xf32>
    %91 = vector.broadcast %87 : vector<4x16x1xf32> to vector<4x16x32xf32>
    %92 = vector.broadcast %90 : vector<1x16x32xf32> to vector<4x16x32xf32>
    %93 = arith.mulf %91, %92 : vector<4x16x32xf32>
    %94 = arith.addf %86, %93 : vector<4x16x32xf32>
    %c0_64 = arith.constant 0 : index
    %c0_65 = arith.constant 0 : index
    %c11 = arith.constant 11 : index
    %95 = vector.load %arg2[%c0_64, %c0_65, %c11] : memref<4x16x16xf32, #tpu.memory_space<vmem>>, vector<4x16x1xf32>
    %c3_66 = arith.constant 3 : index
    %c0_67 = arith.constant 0 : index
    %c0_68 = arith.constant 0 : index
    %96 = vector.load %arg3[%c3_66, %c0_67, %c0_68] : memref<4x16x32xf32, #tpu.memory_space<vmem>>, vector<1x16x32xf32>
    %97 = vector.shape_cast %96 : vector<1x16x32xf32> to vector<16x32xf32>
    %98 = vector.shape_cast %97 : vector<16x32xf32> to vector<1x16x32xf32>
    %99 = vector.broadcast %95 : vector<4x16x1xf32> to vector<4x16x32xf32>
    %100 = vector.broadcast %98 : vector<1x16x32xf32> to vector<4x16x32xf32>
    %101 = arith.mulf %99, %100 : vector<4x16x32xf32>
    %102 = arith.addf %94, %101 : vector<4x16x32xf32>
    %c0_69 = arith.constant 0 : index
    %c64 = arith.constant 64 : index
    %103 = vector.load %arg4[%c0_69, %c64] : memref<16x128xf32, #tpu.memory_space<vmem>>, vector<16x32xf32>
    %104 = vector.shape_cast %103 : vector<16x32xf32> to vector<1x16x32xf32>
    %105 = vector.broadcast %104 : vector<1x16x32xf32> to vector<4x16x32xf32>
    %106 = arith.addf %102, %105 : vector<4x16x32xf32>
    %c0_70 = arith.constant 0 : index
    %c0_71 = arith.constant 0 : index
    %c64_72 = arith.constant 64 : index
    %107 = vector.load %arg11[%c0_70, %c0_71, %c64_72] : memref<4x16x128xf32, #tpu.memory_space<vmem>>, vector<4x16x32xf32>
    tpu.vector_store %arg11[%c0_70, %c0_71, %c64_72], %106 {strides = array<i32>} : memref<4x16x128xf32, #tpu.memory_space<vmem>>, vector<4x16x32xf32>,
    %c0_73 = arith.constant 0 : index
    %c0_74 = arith.constant 0 : index
    %c12 = arith.constant 12 : index
    %108 = vector.load %arg2[%c0_73, %c0_74, %c12] : memref<4x16x16xf32, #tpu.memory_space<vmem>>, vector<4x16x1xf32>
    %c0_75 = arith.constant 0 : index
    %c0_76 = arith.constant 0 : index
    %c0_77 = arith.constant 0 : index
    %109 = vector.load %arg3[%c0_75, %c0_76, %c0_77] : memref<4x16x32xf32, #tpu.memory_space<vmem>>, vector<1x16x32xf32>
    %110 = vector.shape_cast %109 : vector<1x16x32xf32> to vector<16x32xf32>
    %111 = vector.shape_cast %110 : vector<16x32xf32> to vector<1x16x32xf32>
    %112 = vector.broadcast %108 : vector<4x16x1xf32> to vector<4x16x32xf32>
    %113 = vector.broadcast %111 : vector<1x16x32xf32> to vector<4x16x32xf32>
    %114 = arith.mulf %112, %113 : vector<4x16x32xf32>
    %c0_78 = arith.constant 0 : index
    %c0_79 = arith.constant 0 : index
    %c13 = arith.constant 13 : index
    %115 = vector.load %arg2[%c0_78, %c0_79, %c13] : memref<4x16x16xf32, #tpu.memory_space<vmem>>, vector<4x16x1xf32>
    %c1_80 = arith.constant 1 : index
    %c0_81 = arith.constant 0 : index
    %c0_82 = arith.constant 0 : index
    %116 = vector.load %arg3[%c1_80, %c0_81, %c0_82] : memref<4x16x32xf32, #tpu.memory_space<vmem>>, vector<1x16x32xf32>
    %117 = vector.shape_cast %116 : vector<1x16x32xf32> to vector<16x32xf32>
    %118 = vector.shape_cast %117 : vector<16x32xf32> to vector<1x16x32xf32>
    %119 = vector.broadcast %115 : vector<4x16x1xf32> to vector<4x16x32xf32>
    %120 = vector.broadcast %118 : vector<1x16x32xf32> to vector<4x16x32xf32>
    %121 = arith.mulf %119, %120 : vector<4x16x32xf32>
    %122 = arith.addf %114, %121 : vector<4x16x32xf32>
    %c0_83 = arith.constant 0 : index
    %c0_84 = arith.constant 0 : index
    %c14 = arith.constant 14 : index
    %123 = vector.load %arg2[%c0_83, %c0_84, %c14] : memref<4x16x16xf32, #tpu.memory_space<vmem>>, vector<4x16x1xf32>
    %c2_85 = arith.constant 2 : index
    %c0_86 = arith.constant 0 : index
    %c0_87 = arith.constant 0 : index
    %124 = vector.load %arg3[%c2_85, %c0_86, %c0_87] : memref<4x16x32xf32, #tpu.memory_space<vmem>>, vector<1x16x32xf32>
    %125 = vector.shape_cast %124 : vector<1x16x32xf32> to vector<16x32xf32>
    %126 = vector.shape_cast %125 : vector<16x32xf32> to vector<1x16x32xf32>
    %127 = vector.broadcast %123 : vector<4x16x1xf32> to vector<4x16x32xf32>
    %128 = vector.broadcast %126 : vector<1x16x32xf32> to vector<4x16x32xf32>
    %129 = arith.mulf %127, %128 : vector<4x16x32xf32>
    %130 = arith.addf %122, %129 : vector<4x16x32xf32>
    %c0_88 = arith.constant 0 : index
    %c0_89 = arith.constant 0 : index
    %c15 = arith.constant 15 : index
    %131 = vector.load %arg2[%c0_88, %c0_89, %c15] : memref<4x16x16xf32, #tpu.memory_space<vmem>>, vector<4x16x1xf32>
    %c3_90 = arith.constant 3 : index
    %c0_91 = arith.constant 0 : index
    %c0_92 = arith.constant 0 : index
    %132 = vector.load %arg3[%c3_90, %c0_91, %c0_92] : memref<4x16x32xf32, #tpu.memory_space<vmem>>, vector<1x16x32xf32>
    %133 = vector.shape_cast %132 : vector<1x16x32xf32> to vector<16x32xf32>
    %134 = vector.shape_cast %133 : vector<16x32xf32> to vector<1x16x32xf32>
    %135 = vector.broadcast %131 : vector<4x16x1xf32> to vector<4x16x32xf32>
    %136 = vector.broadcast %134 : vector<1x16x32xf32> to vector<4x16x32xf32>
    %137 = arith.mulf %135, %136 : vector<4x16x32xf32>
    %138 = arith.addf %130, %137 : vector<4x16x32xf32>
    %c0_93 = arith.constant 0 : index
    %c96 = arith.constant 96 : index
    %139 = vector.load %arg4[%c0_93, %c96] : memref<16x128xf32, #tpu.memory_space<vmem>>, vector<16x32xf32>
    %140 = vector.shape_cast %139 : vector<16x32xf32> to vector<1x16x32xf32>
    %141 = vector.broadcast %140 : vector<1x16x32xf32> to vector<4x16x32xf32>
    %142 = arith.addf %138, %141 : vector<4x16x32xf32>
    %c0_94 = arith.constant 0 : index
    %c0_95 = arith.constant 0 : index
    %c96_96 = arith.constant 96 : index
    %143 = vector.load %arg11[%c0_94, %c0_95, %c96_96] : memref<4x16x128xf32, #tpu.memory_space<vmem>>, vector<4x16x32xf32>
    tpu.vector_store %arg11[%c0_94, %c0_95, %c96_96], %142 {strides = array<i32>} : memref<4x16x128xf32, #tpu.memory_space<vmem>>, vector<4x16x32xf32>,
    %c0_97 = arith.constant 0 : index
    %c0_98 = arith.constant 0 : index
    %c0_99 = arith.constant 0 : index
    %144 = vector.load %arg11[%c0_97, %c0_98, %c0_99] : memref<4x16x128xf32, #tpu.memory_space<vmem>>, vector<4x16x128xf32>
    %c0_100 = arith.constant 0 : index
    %c0_101 = arith.constant 0 : index
    %c0_102 = arith.constant 0 : index
    %145 = vector.load %arg1[%c0_100, %c0_101, %c0_102] : memref<4x16x1xf32, #tpu.memory_space<vmem>>, vector<4x16x1xf32>
    %146 = math.absf %145 : vector<4x16x1xf32>
    %cst = arith.constant 0.000000e+00 : f32
    %147 = vector.broadcast %cst : f32 to vector<4x16x1xf32>
    %148 = arith.subf %147, %146 : vector<4x16x1xf32>
    %149 = math.exp %148 : vector<4x16x1xf32>
    %cst_103 = arith.constant 1.000000e+00 : f32
    %150 = vector.broadcast %cst_103 : f32 to vector<4x16x1xf32>
    %151 = arith.addf %150, %149 : vector<4x16x1xf32>
    %152 = tpu.reciprocal %151 {approx = true} : vector<4x16x1xf32> -> vector<4x16x1xf32>
    %153 = arith.mulf %151, %152 : vector<4x16x1xf32>
    %cst_104 = arith.constant 2.000000e+00 : f32
    %154 = vector.broadcast %cst_104 : f32 to vector<4x16x1xf32>
    %155 = arith.subf %154, %153 : vector<4x16x1xf32>
    %156 = arith.mulf %152, %155 : vector<4x16x1xf32>
    %cst_105 = arith.constant 0.000000e+00 : f32
    %157 = vector.broadcast %cst_105 : f32 to vector<4x16x1xf32>
    %158 = arith.cmpf oge, %145, %157 : vector<4x16x1xf32>
    %159 = arith.mulf %149, %156 : vector<4x16x1xf32>
    %160 = arith.select %158, %156, %159 : vector<4x16x1xi1>, vector<4x16x1xf32>
    %c0_106 = arith.constant 0 : index
    %c0_107 = arith.constant 0 : index
    %161 = vector.load %arg5[%c0_106, %c0_107] : memref<16x8xf32, #tpu.memory_space<vmem>>, vector<16x8xf32>
    %c0_108 = arith.constant 0 : index
    %c0_109 = arith.constant 0 : index
    %162 = vector.load %arg6[%c0_108, %c0_109] : memref<16x8xf32, #tpu.memory_space<vmem>>, vector<16x8xf32>
    %c0_110 = arith.constant 0 : index
    %c0_111 = arith.constant 0 : index
    %163 = vector.load %arg7[%c0_110, %c0_111] : memref<8x128xf32, #tpu.memory_space<vmem>>, vector<8x128xf32>
    %164 = vector.shape_cast %163 : vector<8x128xf32> to vector<1x8x128xf32>
    %165 = vector.shape_cast %164 : vector<1x8x128xf32> to vector<1x8x128xf32>
    %166 = vector.broadcast %165 : vector<1x8x128xf32> to vector<4x8x128xf32>
    %cst_112 = arith.constant 1.250000e-01 : f32
    %167 = vector.broadcast %cst_112 : f32 to vector<4x16x8xf32>
    %168 = vector.broadcast %160 : vector<4x16x1xf32> to vector<4x16x8xf32>
    %169 = arith.mulf %168, %167 : vector<4x16x8xf32>
    %170 = vector.broadcast %160 : vector<4x16x1xf32> to vector<4x16x8xf32>
    %171 = arith.subf %170, %169 : vector<4x16x8xf32>
    %172 = vector.shape_cast %161 : vector<16x8xf32> to vector<1x16x8xf32>
    %173 = vector.broadcast %172 : vector<1x16x8xf32> to vector<4x16x8xf32>
    %174 = arith.mulf %173, %169 : vector<4x16x8xf32>
    %cst_113 = arith.constant dense<0.000000e+00> : vector<4x8xf32>
    %175 = vector.multi_reduction <add>, %174, %cst_113 [1] : vector<4x16x8xf32> to vector<4x8xf32>
    %176 = vector.shape_cast %175 : vector<4x8xf32> to vector<4x1x8xf32>
    %177 = vector.shape_cast %162 : vector<16x8xf32> to vector<1x16x8xf32>
    %178 = vector.broadcast %177 : vector<1x16x8xf32> to vector<4x16x8xf32>
    %179 = arith.mulf %178, %171 : vector<4x16x8xf32>
    %cst_114 = arith.constant dense<0.000000e+00> : vector<4x8xf32>
    %180 = vector.multi_reduction <add>, %179, %cst_114 [1] : vector<4x16x8xf32> to vector<4x8xf32>
    %181 = vector.shape_cast %180 : vector<4x8xf32> to vector<4x1x8xf32>
    %182 = arith.subf %176, %181 : vector<4x1x8xf32>
    %cst_115 = arith.constant dense<0.000000e+00> : vector<4x8xf32>
    %183 = vector.multi_reduction <add>, %169, %cst_115 [1] : vector<4x16x8xf32> to vector<4x8xf32>
    %184 = vector.shape_cast %183 : vector<4x8xf32> to vector<4x1x8xf32>
    %cst_116 = arith.constant 9.99999974E-6 : f32
    %185 = vector.broadcast %cst_116 : f32 to vector<4x1x8xf32>
    %186 = arith.addf %184, %185 : vector<4x1x8xf32>
    %187 = tpu.reciprocal %186 {approx = true} : vector<4x1x8xf32> -> vector<4x1x8xf32>
    %188 = arith.mulf %186, %187 : vector<4x1x8xf32>
    %cst_117 = arith.constant 2.000000e+00 : f32
    %189 = vector.broadcast %cst_117 : f32 to vector<4x1x8xf32>
    %190 = arith.subf %189, %188 : vector<4x1x8xf32>
    %191 = arith.mulf %187, %190 : vector<4x1x8xf32>
    %192 = vector.broadcast %191 : vector<4x1x8xf32> to vector<4x16x8xf32>
    %193 = arith.mulf %169, %192 : vector<4x16x8xf32>
    %cst_118 = arith.constant 0.000000e+00 : f32
    %194 = vector.broadcast %cst_118 : f32 to vector<4x1x128xf32>
    %195 = vector.extract_strided_slice %193 {offsets = [0, 0, 0], sizes = [4, 16, 1], strides = [1, 1, 1]} : vector<4x16x8xf32> to vector<4x16x1xf32>
    %196 = vector.extract_strided_slice %163 {offsets = [0, 0], sizes = [1, 128], strides = [1, 1]} : vector<8x128xf32> to vector<1x128xf32>
    %197 = vector.broadcast %195 : vector<4x16x1xf32> to vector<4x16x128xf32>
    %198 = arith.mulf %197, %144 : vector<4x16x128xf32>
    %cst_119 = arith.constant dense<0.000000e+00> : vector<4x128xf32>
    %199 = vector.multi_reduction <add>, %198, %cst_119 [1] : vector<4x16x128xf32> to vector<4x128xf32>
    %200 = vector.shape_cast %199 : vector<4x128xf32> to vector<4x1x128xf32>
    %201 = vector.shape_cast %196 : vector<1x128xf32> to vector<1x1x128xf32>
    %202 = vector.broadcast %201 : vector<1x1x128xf32> to vector<4x1x128xf32>
    %203 = arith.mulf %202, %200 : vector<4x1x128xf32>
    %204 = arith.addf %194, %203 : vector<4x1x128xf32>
    %205 = vector.extract_strided_slice %193 {offsets = [0, 0, 1], sizes = [4, 16, 1], strides = [1, 1, 1]} : vector<4x16x8xf32> to vector<4x16x1xf32>
    %206 = vector.extract_strided_slice %163 {offsets = [1, 0], sizes = [1, 128], strides = [1, 1]} : vector<8x128xf32> to vector<1x128xf32>
    %207 = vector.broadcast %205 : vector<4x16x1xf32> to vector<4x16x128xf32>
    %208 = arith.mulf %207, %144 : vector<4x16x128xf32>
    %cst_120 = arith.constant dense<0.000000e+00> : vector<4x128xf32>
    %209 = vector.multi_reduction <add>, %208, %cst_120 [1] : vector<4x16x128xf32> to vector<4x128xf32>
    %210 = vector.shape_cast %209 : vector<4x128xf32> to vector<4x1x128xf32>
    %211 = vector.shape_cast %206 : vector<1x128xf32> to vector<1x1x128xf32>
    %212 = vector.broadcast %211 : vector<1x1x128xf32> to vector<4x1x128xf32>
    %213 = arith.mulf %212, %210 : vector<4x1x128xf32>
    %214 = arith.addf %204, %213 : vector<4x1x128xf32>
    %215 = vector.extract_strided_slice %193 {offsets = [0, 0, 2], sizes = [4, 16, 1], strides = [1, 1, 1]} : vector<4x16x8xf32> to vector<4x16x1xf32>
    %216 = vector.extract_strided_slice %163 {offsets = [2, 0], sizes = [1, 128], strides = [1, 1]} : vector<8x128xf32> to vector<1x128xf32>
    %217 = vector.broadcast %215 : vector<4x16x1xf32> to vector<4x16x128xf32>
    %218 = arith.mulf %217, %144 : vector<4x16x128xf32>
    %cst_121 = arith.constant dense<0.000000e+00> : vector<4x128xf32>
    %219 = vector.multi_reduction <add>, %218, %cst_121 [1] : vector<4x16x128xf32> to vector<4x128xf32>
    %220 = vector.shape_cast %219 : vector<4x128xf32> to vector<4x1x128xf32>
    %221 = vector.shape_cast %216 : vector<1x128xf32> to vector<1x1x128xf32>
    %222 = vector.broadcast %221 : vector<1x1x128xf32> to vector<4x1x128xf32>
    %223 = arith.mulf %222, %220 : vector<4x1x128xf32>
    %224 = arith.addf %214, %223 : vector<4x1x128xf32>
    %225 = vector.extract_strided_slice %193 {offsets = [0, 0, 3], sizes = [4, 16, 1], strides = [1, 1, 1]} : vector<4x16x8xf32> to vector<4x16x1xf32>
    %226 = vector.extract_strided_slice %163 {offsets = [3, 0], sizes = [1, 128], strides = [1, 1]} : vector<8x128xf32> to vector<1x128xf32>
    %227 = vector.broadcast %225 : vector<4x16x1xf32> to vector<4x16x128xf32>
    %228 = arith.mulf %227, %144 : vector<4x16x128xf32>
    %cst_122 = arith.constant dense<0.000000e+00> : vector<4x128xf32>
    %229 = vector.multi_reduction <add>, %228, %cst_122 [1] : vector<4x16x128xf32> to vector<4x128xf32>
    %230 = vector.shape_cast %229 : vector<4x128xf32> to vector<4x1x128xf32>
    %231 = vector.shape_cast %226 : vector<1x128xf32> to vector<1x1x128xf32>
    %232 = vector.broadcast %231 : vector<1x1x128xf32> to vector<4x1x128xf32>
    %233 = arith.mulf %232, %230 : vector<4x1x128xf32>
    %234 = arith.addf %224, %233 : vector<4x1x128xf32>
    %235 = vector.extract_strided_slice %193 {offsets = [0, 0, 4], sizes = [4, 16, 1], strides = [1, 1, 1]} : vector<4x16x8xf32> to vector<4x16x1xf32>
    %236 = vector.extract_strided_slice %163 {offsets = [4, 0], sizes = [1, 128], strides = [1, 1]} : vector<8x128xf32> to vector<1x128xf32>
    %237 = vector.broadcast %235 : vector<4x16x1xf32> to vector<4x16x128xf32>
    %238 = arith.mulf %237, %144 : vector<4x16x128xf32>
    %cst_123 = arith.constant dense<0.000000e+00> : vector<4x128xf32>
    %239 = vector.multi_reduction <add>, %238, %cst_123 [1] : vector<4x16x128xf32> to vector<4x128xf32>
    %240 = vector.shape_cast %239 : vector<4x128xf32> to vector<4x1x128xf32>
    %241 = vector.shape_cast %236 : vector<1x128xf32> to vector<1x1x128xf32>
    %242 = vector.broadcast %241 : vector<1x1x128xf32> to vector<4x1x128xf32>
    %243 = arith.mulf %242, %240 : vector<4x1x128xf32>
    %244 = arith.addf %234, %243 : vector<4x1x128xf32>
    %245 = vector.extract_strided_slice %193 {offsets = [0, 0, 5], sizes = [4, 16, 1], strides = [1, 1, 1]} : vector<4x16x8xf32> to vector<4x16x1xf32>
    %246 = vector.extract_strided_slice %163 {offsets = [5, 0], sizes = [1, 128], strides = [1, 1]} : vector<8x128xf32> to vector<1x128xf32>
    %247 = vector.broadcast %245 : vector<4x16x1xf32> to vector<4x16x128xf32>
    %248 = arith.mulf %247, %144 : vector<4x16x128xf32>
    %cst_124 = arith.constant dense<0.000000e+00> : vector<4x128xf32>
    %249 = vector.multi_reduction <add>, %248, %cst_124 [1] : vector<4x16x128xf32> to vector<4x128xf32>
    %250 = vector.shape_cast %249 : vector<4x128xf32> to vector<4x1x128xf32>
    %251 = vector.shape_cast %246 : vector<1x128xf32> to vector<1x1x128xf32>
    %252 = vector.broadcast %251 : vector<1x1x128xf32> to vector<4x1x128xf32>
    %253 = arith.mulf %252, %250 : vector<4x1x128xf32>
    %254 = arith.addf %244, %253 : vector<4x1x128xf32>
    %255 = vector.extract_strided_slice %193 {offsets = [0, 0, 6], sizes = [4, 16, 1], strides = [1, 1, 1]} : vector<4x16x8xf32> to vector<4x16x1xf32>
    %256 = vector.extract_strided_slice %163 {offsets = [6, 0], sizes = [1, 128], strides = [1, 1]} : vector<8x128xf32> to vector<1x128xf32>
    %257 = vector.broadcast %255 : vector<4x16x1xf32> to vector<4x16x128xf32>
    %258 = arith.mulf %257, %144 : vector<4x16x128xf32>
    %cst_125 = arith.constant dense<0.000000e+00> : vector<4x128xf32>
    %259 = vector.multi_reduction <add>, %258, %cst_125 [1] : vector<4x16x128xf32> to vector<4x128xf32>
    %260 = vector.shape_cast %259 : vector<4x128xf32> to vector<4x1x128xf32>
    %261 = vector.shape_cast %256 : vector<1x128xf32> to vector<1x1x128xf32>
    %262 = vector.broadcast %261 : vector<1x1x128xf32> to vector<4x1x128xf32>
    %263 = arith.mulf %262, %260 : vector<4x1x128xf32>
    %264 = arith.addf %254, %263 : vector<4x1x128xf32>
    %265 = vector.extract_strided_slice %193 {offsets = [0, 0, 7], sizes = [4, 16, 1], strides = [1, 1, 1]} : vector<4x16x8xf32> to vector<4x16x1xf32>
    %266 = vector.extract_strided_slice %163 {offsets = [7, 0], sizes = [1, 128], strides = [1, 1]} : vector<8x128xf32> to vector<1x128xf32>
    %267 = vector.broadcast %265 : vector<4x16x1xf32> to vector<4x16x128xf32>
    %268 = arith.mulf %267, %144 : vector<4x16x128xf32>
    %cst_126 = arith.constant dense<0.000000e+00> : vector<4x128xf32>
    %269 = vector.multi_reduction <add>, %268, %cst_126 [1] : vector<4x16x128xf32> to vector<4x128xf32>
    %270 = vector.shape_cast %269 : vector<4x128xf32> to vector<4x1x128xf32>
    %271 = vector.shape_cast %266 : vector<1x128xf32> to vector<1x1x128xf32>
    %272 = vector.broadcast %271 : vector<1x1x128xf32> to vector<4x1x128xf32>
    %273 = arith.mulf %272, %270 : vector<4x1x128xf32>
    %274 = arith.addf %264, %273 : vector<4x1x128xf32>
    %275 = vector.broadcast %274 : vector<4x1x128xf32> to vector<4x16x128xf32>
    %276 = arith.subf %144, %275 : vector<4x16x128xf32>
    %277 = arith.mulf %276, %276 : vector<4x16x128xf32>
    %cst_127 = arith.constant 0.000000e+00 : f32
    %278 = vector.broadcast %cst_127 : f32 to vector<4x1x128xf32>
    %279 = vector.extract_strided_slice %193 {offsets = [0, 0, 0], sizes = [4, 16, 1], strides = [1, 1, 1]} : vector<4x16x8xf32> to vector<4x16x1xf32>
    %280 = vector.extract_strided_slice %163 {offsets = [0, 0], sizes = [1, 128], strides = [1, 1]} : vector<8x128xf32> to vector<1x128xf32>
    %281 = vector.broadcast %279 : vector<4x16x1xf32> to vector<4x16x128xf32>
    %282 = arith.mulf %281, %277 : vector<4x16x128xf32>
    %cst_128 = arith.constant dense<0.000000e+00> : vector<4x128xf32>
    %283 = vector.multi_reduction <add>, %282, %cst_128 [1] : vector<4x16x128xf32> to vector<4x128xf32>
    %284 = vector.shape_cast %283 : vector<4x128xf32> to vector<4x1x128xf32>
    %285 = vector.shape_cast %280 : vector<1x128xf32> to vector<1x1x128xf32>
    %286 = vector.broadcast %285 : vector<1x1x128xf32> to vector<4x1x128xf32>
    %287 = arith.mulf %286, %284 : vector<4x1x128xf32>
    %288 = arith.addf %278, %287 : vector<4x1x128xf32>
    %289 = vector.extract_strided_slice %193 {offsets = [0, 0, 1], sizes = [4, 16, 1], strides = [1, 1, 1]} : vector<4x16x8xf32> to vector<4x16x1xf32>
    %290 = vector.extract_strided_slice %163 {offsets = [1, 0], sizes = [1, 128], strides = [1, 1]} : vector<8x128xf32> to vector<1x128xf32>
    %291 = vector.broadcast %289 : vector<4x16x1xf32> to vector<4x16x128xf32>
    %292 = arith.mulf %291, %277 : vector<4x16x128xf32>
    %cst_129 = arith.constant dense<0.000000e+00> : vector<4x128xf32>
    %293 = vector.multi_reduction <add>, %292, %cst_129 [1] : vector<4x16x128xf32> to vector<4x128xf32>
    %294 = vector.shape_cast %293 : vector<4x128xf32> to vector<4x1x128xf32>
    %295 = vector.shape_cast %290 : vector<1x128xf32> to vector<1x1x128xf32>
    %296 = vector.broadcast %295 : vector<1x1x128xf32> to vector<4x1x128xf32>
    %297 = arith.mulf %296, %294 : vector<4x1x128xf32>
    %298 = arith.addf %288, %297 : vector<4x1x128xf32>
    %299 = vector.extract_strided_slice %193 {offsets = [0, 0, 2], sizes = [4, 16, 1], strides = [1, 1, 1]} : vector<4x16x8xf32> to vector<4x16x1xf32>
    %300 = vector.extract_strided_slice %163 {offsets = [2, 0], sizes = [1, 128], strides = [1, 1]} : vector<8x128xf32> to vector<1x128xf32>
    %301 = vector.broadcast %299 : vector<4x16x1xf32> to vector<4x16x128xf32>
    %302 = arith.mulf %301, %277 : vector<4x16x128xf32>
    %cst_130 = arith.constant dense<0.000000e+00> : vector<4x128xf32>
    %303 = vector.multi_reduction <add>, %302, %cst_130 [1] : vector<4x16x128xf32> to vector<4x128xf32>
    %304 = vector.shape_cast %303 : vector<4x128xf32> to vector<4x1x128xf32>
    %305 = vector.shape_cast %300 : vector<1x128xf32> to vector<1x1x128xf32>
    %306 = vector.broadcast %305 : vector<1x1x128xf32> to vector<4x1x128xf32>
    %307 = arith.mulf %306, %304 : vector<4x1x128xf32>
    %308 = arith.addf %298, %307 : vector<4x1x128xf32>
    %309 = vector.extract_strided_slice %193 {offsets = [0, 0, 3], sizes = [4, 16, 1], strides = [1, 1, 1]} : vector<4x16x8xf32> to vector<4x16x1xf32>
    %310 = vector.extract_strided_slice %163 {offsets = [3, 0], sizes = [1, 128], strides = [1, 1]} : vector<8x128xf32> to vector<1x128xf32>
    %311 = vector.broadcast %309 : vector<4x16x1xf32> to vector<4x16x128xf32>
    %312 = arith.mulf %311, %277 : vector<4x16x128xf32>
    %cst_131 = arith.constant dense<0.000000e+00> : vector<4x128xf32>
    %313 = vector.multi_reduction <add>, %312, %cst_131 [1] : vector<4x16x128xf32> to vector<4x128xf32>
    %314 = vector.shape_cast %313 : vector<4x128xf32> to vector<4x1x128xf32>
    %315 = vector.shape_cast %310 : vector<1x128xf32> to vector<1x1x128xf32>
    %316 = vector.broadcast %315 : vector<1x1x128xf32> to vector<4x1x128xf32>
    %317 = arith.mulf %316, %314 : vector<4x1x128xf32>
    %318 = arith.addf %308, %317 : vector<4x1x128xf32>
    %319 = vector.extract_strided_slice %193 {offsets = [0, 0, 4], sizes = [4, 16, 1], strides = [1, 1, 1]} : vector<4x16x8xf32> to vector<4x16x1xf32>
    %320 = vector.extract_strided_slice %163 {offsets = [4, 0], sizes = [1, 128], strides = [1, 1]} : vector<8x128xf32> to vector<1x128xf32>
    %321 = vector.broadcast %319 : vector<4x16x1xf32> to vector<4x16x128xf32>
    %322 = arith.mulf %321, %277 : vector<4x16x128xf32>
    %cst_132 = arith.constant dense<0.000000e+00> : vector<4x128xf32>
    %323 = vector.multi_reduction <add>, %322, %cst_132 [1] : vector<4x16x128xf32> to vector<4x128xf32>
    %324 = vector.shape_cast %323 : vector<4x128xf32> to vector<4x1x128xf32>
    %325 = vector.shape_cast %320 : vector<1x128xf32> to vector<1x1x128xf32>
    %326 = vector.broadcast %325 : vector<1x1x128xf32> to vector<4x1x128xf32>
    %327 = arith.mulf %326, %324 : vector<4x1x128xf32>
    %328 = arith.addf %318, %327 : vector<4x1x128xf32>
    %329 = vector.extract_strided_slice %193 {offsets = [0, 0, 5], sizes = [4, 16, 1], strides = [1, 1, 1]} : vector<4x16x8xf32> to vector<4x16x1xf32>
    %330 = vector.extract_strided_slice %163 {offsets = [5, 0], sizes = [1, 128], strides = [1, 1]} : vector<8x128xf32> to vector<1x128xf32>
    %331 = vector.broadcast %329 : vector<4x16x1xf32> to vector<4x16x128xf32>
    %332 = arith.mulf %331, %277 : vector<4x16x128xf32>
    %cst_133 = arith.constant dense<0.000000e+00> : vector<4x128xf32>
    %333 = vector.multi_reduction <add>, %332, %cst_133 [1] : vector<4x16x128xf32> to vector<4x128xf32>
    %334 = vector.shape_cast %333 : vector<4x128xf32> to vector<4x1x128xf32>
    %335 = vector.shape_cast %330 : vector<1x128xf32> to vector<1x1x128xf32>
    %336 = vector.broadcast %335 : vector<1x1x128xf32> to vector<4x1x128xf32>
    %337 = arith.mulf %336, %334 : vector<4x1x128xf32>
    %338 = arith.addf %328, %337 : vector<4x1x128xf32>
    %339 = vector.extract_strided_slice %193 {offsets = [0, 0, 6], sizes = [4, 16, 1], strides = [1, 1, 1]} : vector<4x16x8xf32> to vector<4x16x1xf32>
    %340 = vector.extract_strided_slice %163 {offsets = [6, 0], sizes = [1, 128], strides = [1, 1]} : vector<8x128xf32> to vector<1x128xf32>
    %341 = vector.broadcast %339 : vector<4x16x1xf32> to vector<4x16x128xf32>
    %342 = arith.mulf %341, %277 : vector<4x16x128xf32>
    %cst_134 = arith.constant dense<0.000000e+00> : vector<4x128xf32>
    %343 = vector.multi_reduction <add>, %342, %cst_134 [1] : vector<4x16x128xf32> to vector<4x128xf32>
    %344 = vector.shape_cast %343 : vector<4x128xf32> to vector<4x1x128xf32>
    %345 = vector.shape_cast %340 : vector<1x128xf32> to vector<1x1x128xf32>
    %346 = vector.broadcast %345 : vector<1x1x128xf32> to vector<4x1x128xf32>
    %347 = arith.mulf %346, %344 : vector<4x1x128xf32>
    %348 = arith.addf %338, %347 : vector<4x1x128xf32>
    %349 = vector.extract_strided_slice %193 {offsets = [0, 0, 7], sizes = [4, 16, 1], strides = [1, 1, 1]} : vector<4x16x8xf32> to vector<4x16x1xf32>
    %350 = vector.extract_strided_slice %163 {offsets = [7, 0], sizes = [1, 128], strides = [1, 1]} : vector<8x128xf32> to vector<1x128xf32>
    %351 = vector.broadcast %349 : vector<4x16x1xf32> to vector<4x16x128xf32>
    %352 = arith.mulf %351, %277 : vector<4x16x128xf32>
    %cst_135 = arith.constant dense<0.000000e+00> : vector<4x128xf32>
    %353 = vector.multi_reduction <add>, %352, %cst_135 [1] : vector<4x16x128xf32> to vector<4x128xf32>
    %354 = vector.shape_cast %353 : vector<4x128xf32> to vector<4x1x128xf32>
    %355 = vector.shape_cast %350 : vector<1x128xf32> to vector<1x1x128xf32>
    %356 = vector.broadcast %355 : vector<1x1x128xf32> to vector<4x1x128xf32>
    %357 = arith.mulf %356, %354 : vector<4x1x128xf32>
    %358 = arith.addf %348, %357 : vector<4x1x128xf32>
    %cst_136 = arith.constant 9.99999974E-6 : f32
    %359 = vector.broadcast %cst_136 : f32 to vector<4x1x128xf32>
    %360 = arith.addf %358, %359 : vector<4x1x128xf32>
    %361 = tpu.reciprocal %360 {approx = true} : vector<4x1x128xf32> -> vector<4x1x128xf32>
    %362 = arith.mulf %360, %361 : vector<4x1x128xf32>
    %cst_137 = arith.constant 2.000000e+00 : f32
    %363 = vector.broadcast %cst_137 : f32 to vector<4x1x128xf32>
    %364 = arith.subf %363, %362 : vector<4x1x128xf32>
    %365 = arith.mulf %361, %364 : vector<4x1x128xf32>
    %cst_138 = arith.constant 5.000000e-01 : f32
    %366 = vector.broadcast %cst_138 : f32 to vector<4x1x128xf32>
    %367 = arith.mulf %366, %365 : vector<4x1x128xf32>
    %368 = math.log %360 : vector<4x1x128xf32>
    %cst_139 = arith.constant 5.000000e-01 : f32
    %369 = vector.broadcast %cst_139 : f32 to vector<4x1x128xf32>
    %370 = arith.mulf %369, %368 : vector<4x1x128xf32>
    %371 = vector.broadcast %367 : vector<4x1x128xf32> to vector<4x16x128xf32>
    %372 = arith.mulf %277, %371 : vector<4x16x128xf32>
    %373 = vector.broadcast %370 : vector<4x1x128xf32> to vector<4x16x128xf32>
    %374 = arith.addf %372, %373 : vector<4x16x128xf32>
    "tpu.trace_start"() <{level = 10 : i32, message = "bim,bjm->bij"}> : () -> ()
    %cst_140 = arith.constant dense<0.000000e+00> : vector<4x16x8xf32>
    %375 = tpu.matmul %374, %166, %cst_140 {dimension_numbers = #tpu.dot_dimension_numbers<[2], [2], [1], [1], [0, 0, 0, 1, 1, 1], [0], [0]>} : vector<4x16x128xf32>, vector<4x8x128xf32>, vector<4x16x8xf32> -> vector<4x16x8xf32>
    "tpu.trace_stop"() : () -> ()
    %cst_141 = arith.constant 0.000000e+00 : f32
    %376 = vector.broadcast %cst_141 : f32 to vector<4x16x8xf32>
    %377 = arith.subf %376, %375 : vector<4x16x8xf32>
    %cst_142 = arith.constant 0.000000e+00 : f32
    %378 = vector.broadcast %cst_142 : f32 to vector<4x1x8xf32>
    %379 = arith.minimumf %182, %378 : vector<4x1x8xf32>
    %380 = math.absf %182 : vector<4x1x8xf32>
    %cst_143 = arith.constant 0.000000e+00 : f32
    %381 = vector.broadcast %cst_143 : f32 to vector<4x1x8xf32>
    %382 = arith.subf %381, %380 : vector<4x1x8xf32>
    %383 = math.exp %382 : vector<4x1x8xf32>
    %cst_144 = arith.constant 1.000000e+00 : f32
    %384 = vector.broadcast %cst_144 : f32 to vector<4x1x8xf32>
    %385 = arith.addf %384, %383 : vector<4x1x8xf32>
    %386 = math.log %385 : vector<4x1x8xf32>
    %387 = arith.subf %379, %386 : vector<4x1x8xf32>
    %388 = vector.broadcast %387 : vector<4x1x8xf32> to vector<4x16x8xf32>
    %389 = arith.addf %388, %377 : vector<4x16x8xf32>
    %cst_145 = arith.constant dense<0xFF800000> : vector<4x16xf32>
    %390 = vector.multi_reduction <maximumf>, %389, %cst_145 [2] : vector<4x16x8xf32> to vector<4x16xf32>
    %391 = vector.shape_cast %390 : vector<4x16xf32> to vector<4x16x1xf32>
    %392 = vector.broadcast %391 : vector<4x16x1xf32> to vector<4x16x8xf32>
    %393 = arith.subf %389, %392 : vector<4x16x8xf32>
    %394 = math.exp %393 : vector<4x16x8xf32>
    %cst_146 = arith.constant dense<0.000000e+00> : vector<4x16xf32>
    %395 = vector.multi_reduction <add>, %394, %cst_146 [2] : vector<4x16x8xf32> to vector<4x16xf32>
    %396 = vector.shape_cast %395 : vector<4x16xf32> to vector<4x16x1xf32>
    %397 = tpu.reciprocal %396 {approx = true} : vector<4x16x1xf32> -> vector<4x16x1xf32>
    %398 = arith.mulf %396, %397 : vector<4x16x1xf32>
    %cst_147 = arith.constant 2.000000e+00 : f32
    %399 = vector.broadcast %cst_147 : f32 to vector<4x16x1xf32>
    %400 = arith.subf %399, %398 : vector<4x16x1xf32>
    %401 = arith.mulf %397, %400 : vector<4x16x1xf32>
    %402 = vector.broadcast %401 : vector<4x16x1xf32> to vector<4x16x8xf32>
    %403 = arith.mulf %394, %402 : vector<4x16x8xf32>
    %404 = vector.broadcast %160 : vector<4x16x1xf32> to vector<4x16x8xf32>
    %405 = arith.mulf %404, %403 : vector<4x16x8xf32>
    %406 = vector.broadcast %160 : vector<4x16x1xf32> to vector<4x16x8xf32>
    %407 = arith.subf %406, %405 : vector<4x16x8xf32>
    %408 = vector.shape_cast %161 : vector<16x8xf32> to vector<1x16x8xf32>
    %409 = vector.broadcast %408 : vector<1x16x8xf32> to vector<4x16x8xf32>
    %410 = arith.mulf %409, %405 : vector<4x16x8xf32>
    %cst_148 = arith.constant dense<0.000000e+00> : vector<4x8xf32>
    %411 = vector.multi_reduction <add>, %410, %cst_148 [1] : vector<4x16x8xf32> to vector<4x8xf32>
    %412 = vector.shape_cast %411 : vector<4x8xf32> to vector<4x1x8xf32>
    %413 = vector.shape_cast %162 : vector<16x8xf32> to vector<1x16x8xf32>
    %414 = vector.broadcast %413 : vector<1x16x8xf32> to vector<4x16x8xf32>
    %415 = arith.mulf %414, %407 : vector<4x16x8xf32>
    %cst_149 = arith.constant dense<0.000000e+00> : vector<4x8xf32>
    %416 = vector.multi_reduction <add>, %415, %cst_149 [1] : vector<4x16x8xf32> to vector<4x8xf32>
    %417 = vector.shape_cast %416 : vector<4x8xf32> to vector<4x1x8xf32>
    %418 = arith.subf %412, %417 : vector<4x1x8xf32>
    %cst_150 = arith.constant dense<0.000000e+00> : vector<4x8xf32>
    %419 = vector.multi_reduction <add>, %405, %cst_150 [1] : vector<4x16x8xf32> to vector<4x8xf32>
    %420 = vector.shape_cast %419 : vector<4x8xf32> to vector<4x1x8xf32>
    %cst_151 = arith.constant 9.99999974E-6 : f32
    %421 = vector.broadcast %cst_151 : f32 to vector<4x1x8xf32>
    %422 = arith.addf %420, %421 : vector<4x1x8xf32>
    %423 = tpu.reciprocal %422 {approx = true} : vector<4x1x8xf32> -> vector<4x1x8xf32>
    %424 = arith.mulf %422, %423 : vector<4x1x8xf32>
    %cst_152 = arith.constant 2.000000e+00 : f32
    %425 = vector.broadcast %cst_152 : f32 to vector<4x1x8xf32>
    %426 = arith.subf %425, %424 : vector<4x1x8xf32>
    %427 = arith.mulf %423, %426 : vector<4x1x8xf32>
    %428 = vector.broadcast %427 : vector<4x1x8xf32> to vector<4x16x8xf32>
    %429 = arith.mulf %405, %428 : vector<4x16x8xf32>
    %cst_153 = arith.constant 0.000000e+00 : f32
    %430 = vector.broadcast %cst_153 : f32 to vector<4x1x128xf32>
    %431 = vector.extract_strided_slice %429 {offsets = [0, 0, 0], sizes = [4, 16, 1], strides = [1, 1, 1]} : vector<4x16x8xf32> to vector<4x16x1xf32>
    %432 = vector.extract_strided_slice %163 {offsets = [0, 0], sizes = [1, 128], strides = [1, 1]} : vector<8x128xf32> to vector<1x128xf32>
    %433 = vector.broadcast %431 : vector<4x16x1xf32> to vector<4x16x128xf32>
    %434 = arith.mulf %433, %144 : vector<4x16x128xf32>
    %cst_154 = arith.constant dense<0.000000e+00> : vector<4x128xf32>
    %435 = vector.multi_reduction <add>, %434, %cst_154 [1] : vector<4x16x128xf32> to vector<4x128xf32>
    %436 = vector.shape_cast %435 : vector<4x128xf32> to vector<4x1x128xf32>
    %437 = vector.shape_cast %432 : vector<1x128xf32> to vector<1x1x128xf32>
    %438 = vector.broadcast %437 : vector<1x1x128xf32> to vector<4x1x128xf32>
    %439 = arith.mulf %438, %436 : vector<4x1x128xf32>
    %440 = arith.addf %430, %439 : vector<4x1x128xf32>
    %441 = vector.extract_strided_slice %429 {offsets = [0, 0, 1], sizes = [4, 16, 1], strides = [1, 1, 1]} : vector<4x16x8xf32> to vector<4x16x1xf32>
    %442 = vector.extract_strided_slice %163 {offsets = [1, 0], sizes = [1, 128], strides = [1, 1]} : vector<8x128xf32> to vector<1x128xf32>
    %443 = vector.broadcast %441 : vector<4x16x1xf32> to vector<4x16x128xf32>
    %444 = arith.mulf %443, %144 : vector<4x16x128xf32>
    %cst_155 = arith.constant dense<0.000000e+00> : vector<4x128xf32>
    %445 = vector.multi_reduction <add>, %444, %cst_155 [1] : vector<4x16x128xf32> to vector<4x128xf32>
    %446 = vector.shape_cast %445 : vector<4x128xf32> to vector<4x1x128xf32>
    %447 = vector.shape_cast %442 : vector<1x128xf32> to vector<1x1x128xf32>
    %448 = vector.broadcast %447 : vector<1x1x128xf32> to vector<4x1x128xf32>
    %449 = arith.mulf %448, %446 : vector<4x1x128xf32>
    %450 = arith.addf %440, %449 : vector<4x1x128xf32>
    %451 = vector.extract_strided_slice %429 {offsets = [0, 0, 2], sizes = [4, 16, 1], strides = [1, 1, 1]} : vector<4x16x8xf32> to vector<4x16x1xf32>
    %452 = vector.extract_strided_slice %163 {offsets = [2, 0], sizes = [1, 128], strides = [1, 1]} : vector<8x128xf32> to vector<1x128xf32>
    %453 = vector.broadcast %451 : vector<4x16x1xf32> to vector<4x16x128xf32>
    %454 = arith.mulf %453, %144 : vector<4x16x128xf32>
    %cst_156 = arith.constant dense<0.000000e+00> : vector<4x128xf32>
    %455 = vector.multi_reduction <add>, %454, %cst_156 [1] : vector<4x16x128xf32> to vector<4x128xf32>
    %456 = vector.shape_cast %455 : vector<4x128xf32> to vector<4x1x128xf32>
    %457 = vector.shape_cast %452 : vector<1x128xf32> to vector<1x1x128xf32>
    %458 = vector.broadcast %457 : vector<1x1x128xf32> to vector<4x1x128xf32>
    %459 = arith.mulf %458, %456 : vector<4x1x128xf32>
    %460 = arith.addf %450, %459 : vector<4x1x128xf32>
    %461 = vector.extract_strided_slice %429 {offsets = [0, 0, 3], sizes = [4, 16, 1], strides = [1, 1, 1]} : vector<4x16x8xf32> to vector<4x16x1xf32>
    %462 = vector.extract_strided_slice %163 {offsets = [3, 0], sizes = [1, 128], strides = [1, 1]} : vector<8x128xf32> to vector<1x128xf32>
    %463 = vector.broadcast %461 : vector<4x16x1xf32> to vector<4x16x128xf32>
    %464 = arith.mulf %463, %144 : vector<4x16x128xf32>
    %cst_157 = arith.constant dense<0.000000e+00> : vector<4x128xf32>
    %465 = vector.multi_reduction <add>, %464, %cst_157 [1] : vector<4x16x128xf32> to vector<4x128xf32>
    %466 = vector.shape_cast %465 : vector<4x128xf32> to vector<4x1x128xf32>
    %467 = vector.shape_cast %462 : vector<1x128xf32> to vector<1x1x128xf32>
    %468 = vector.broadcast %467 : vector<1x1x128xf32> to vector<4x1x128xf32>
    %469 = arith.mulf %468, %466 : vector<4x1x128xf32>
    %470 = arith.addf %460, %469 : vector<4x1x128xf32>
    %471 = vector.extract_strided_slice %429 {offsets = [0, 0, 4], sizes = [4, 16, 1], strides = [1, 1, 1]} : vector<4x16x8xf32> to vector<4x16x1xf32>
    %472 = vector.extract_strided_slice %163 {offsets = [4, 0], sizes = [1, 128], strides = [1, 1]} : vector<8x128xf32> to vector<1x128xf32>
    %473 = vector.broadcast %471 : vector<4x16x1xf32> to vector<4x16x128xf32>
    %474 = arith.mulf %473, %144 : vector<4x16x128xf32>
    %cst_158 = arith.constant dense<0.000000e+00> : vector<4x128xf32>
    %475 = vector.multi_reduction <add>, %474, %cst_158 [1] : vector<4x16x128xf32> to vector<4x128xf32>
    %476 = vector.shape_cast %475 : vector<4x128xf32> to vector<4x1x128xf32>
    %477 = vector.shape_cast %472 : vector<1x128xf32> to vector<1x1x128xf32>
    %478 = vector.broadcast %477 : vector<1x1x128xf32> to vector<4x1x128xf32>
    %479 = arith.mulf %478, %476 : vector<4x1x128xf32>
    %480 = arith.addf %470, %479 : vector<4x1x128xf32>
    %481 = vector.extract_strided_slice %429 {offsets = [0, 0, 5], sizes = [4, 16, 1], strides = [1, 1, 1]} : vector<4x16x8xf32> to vector<4x16x1xf32>
    %482 = vector.extract_strided_slice %163 {offsets = [5, 0], sizes = [1, 128], strides = [1, 1]} : vector<8x128xf32> to vector<1x128xf32>
    %483 = vector.broadcast %481 : vector<4x16x1xf32> to vector<4x16x128xf32>
    %484 = arith.mulf %483, %144 : vector<4x16x128xf32>
    %cst_159 = arith.constant dense<0.000000e+00> : vector<4x128xf32>
    %485 = vector.multi_reduction <add>, %484, %cst_159 [1] : vector<4x16x128xf32> to vector<4x128xf32>
    %486 = vector.shape_cast %485 : vector<4x128xf32> to vector<4x1x128xf32>
    %487 = vector.shape_cast %482 : vector<1x128xf32> to vector<1x1x128xf32>
    %488 = vector.broadcast %487 : vector<1x1x128xf32> to vector<4x1x128xf32>
    %489 = arith.mulf %488, %486 : vector<4x1x128xf32>
    %490 = arith.addf %480, %489 : vector<4x1x128xf32>
    %491 = vector.extract_strided_slice %429 {offsets = [0, 0, 6], sizes = [4, 16, 1], strides = [1, 1, 1]} : vector<4x16x8xf32> to vector<4x16x1xf32>
    %492 = vector.extract_strided_slice %163 {offsets = [6, 0], sizes = [1, 128], strides = [1, 1]} : vector<8x128xf32> to vector<1x128xf32>
    %493 = vector.broadcast %491 : vector<4x16x1xf32> to vector<4x16x128xf32>
    %494 = arith.mulf %493, %144 : vector<4x16x128xf32>
    %cst_160 = arith.constant dense<0.000000e+00> : vector<4x128xf32>
    %495 = vector.multi_reduction <add>, %494, %cst_160 [1] : vector<4x16x128xf32> to vector<4x128xf32>
    %496 = vector.shape_cast %495 : vector<4x128xf32> to vector<4x1x128xf32>
    %497 = vector.shape_cast %492 : vector<1x128xf32> to vector<1x1x128xf32>
    %498 = vector.broadcast %497 : vector<1x1x128xf32> to vector<4x1x128xf32>
    %499 = arith.mulf %498, %496 : vector<4x1x128xf32>
    %500 = arith.addf %490, %499 : vector<4x1x128xf32>
    %501 = vector.extract_strided_slice %429 {offsets = [0, 0, 7], sizes = [4, 16, 1], strides = [1, 1, 1]} : vector<4x16x8xf32> to vector<4x16x1xf32>
    %502 = vector.extract_strided_slice %163 {offsets = [7, 0], sizes = [1, 128], strides = [1, 1]} : vector<8x128xf32> to vector<1x128xf32>
    %503 = vector.broadcast %501 : vector<4x16x1xf32> to vector<4x16x128xf32>
    %504 = arith.mulf %503, %144 : vector<4x16x128xf32>
    %cst_161 = arith.constant dense<0.000000e+00> : vector<4x128xf32>
    %505 = vector.multi_reduction <add>, %504, %cst_161 [1] : vector<4x16x128xf32> to vector<4x128xf32>
    %506 = vector.shape_cast %505 : vector<4x128xf32> to vector<4x1x128xf32>
    %507 = vector.shape_cast %502 : vector<1x128xf32> to vector<1x1x128xf32>
    %508 = vector.broadcast %507 : vector<1x1x128xf32> to vector<4x1x128xf32>
    %509 = arith.mulf %508, %506 : vector<4x1x128xf32>
    %510 = arith.addf %500, %509 : vector<4x1x128xf32>
    %511 = vector.broadcast %510 : vector<4x1x128xf32> to vector<4x16x128xf32>
    %512 = arith.subf %144, %511 : vector<4x16x128xf32>
    %513 = arith.mulf %512, %512 : vector<4x16x128xf32>
    %cst_162 = arith.constant 0.000000e+00 : f32
    %514 = vector.broadcast %cst_162 : f32 to vector<4x1x128xf32>
    %515 = vector.extract_strided_slice %429 {offsets = [0, 0, 0], sizes = [4, 16, 1], strides = [1, 1, 1]} : vector<4x16x8xf32> to vector<4x16x1xf32>
    %516 = vector.extract_strided_slice %163 {offsets = [0, 0], sizes = [1, 128], strides = [1, 1]} : vector<8x128xf32> to vector<1x128xf32>
    %517 = vector.broadcast %515 : vector<4x16x1xf32> to vector<4x16x128xf32>
    %518 = arith.mulf %517, %513 : vector<4x16x128xf32>
    %cst_163 = arith.constant dense<0.000000e+00> : vector<4x128xf32>
    %519 = vector.multi_reduction <add>, %518, %cst_163 [1] : vector<4x16x128xf32> to vector<4x128xf32>
    %520 = vector.shape_cast %519 : vector<4x128xf32> to vector<4x1x128xf32>
    %521 = vector.shape_cast %516 : vector<1x128xf32> to vector<1x1x128xf32>
    %522 = vector.broadcast %521 : vector<1x1x128xf32> to vector<4x1x128xf32>
    %523 = arith.mulf %522, %520 : vector<4x1x128xf32>
    %524 = arith.addf %514, %523 : vector<4x1x128xf32>
    %525 = vector.extract_strided_slice %429 {offsets = [0, 0, 1], sizes = [4, 16, 1], strides = [1, 1, 1]} : vector<4x16x8xf32> to vector<4x16x1xf32>
    %526 = vector.extract_strided_slice %163 {offsets = [1, 0], sizes = [1, 128], strides = [1, 1]} : vector<8x128xf32> to vector<1x128xf32>
    %527 = vector.broadcast %525 : vector<4x16x1xf32> to vector<4x16x128xf32>
    %528 = arith.mulf %527, %513 : vector<4x16x128xf32>
    %cst_164 = arith.constant dense<0.000000e+00> : vector<4x128xf32>
    %529 = vector.multi_reduction <add>, %528, %cst_164 [1] : vector<4x16x128xf32> to vector<4x128xf32>
    %530 = vector.shape_cast %529 : vector<4x128xf32> to vector<4x1x128xf32>
    %531 = vector.shape_cast %526 : vector<1x128xf32> to vector<1x1x128xf32>
    %532 = vector.broadcast %531 : vector<1x1x128xf32> to vector<4x1x128xf32>
    %533 = arith.mulf %532, %530 : vector<4x1x128xf32>
    %534 = arith.addf %524, %533 : vector<4x1x128xf32>
    %535 = vector.extract_strided_slice %429 {offsets = [0, 0, 2], sizes = [4, 16, 1], strides = [1, 1, 1]} : vector<4x16x8xf32> to vector<4x16x1xf32>
    %536 = vector.extract_strided_slice %163 {offsets = [2, 0], sizes = [1, 128], strides = [1, 1]} : vector<8x128xf32> to vector<1x128xf32>
    %537 = vector.broadcast %535 : vector<4x16x1xf32> to vector<4x16x128xf32>
    %538 = arith.mulf %537, %513 : vector<4x16x128xf32>
    %cst_165 = arith.constant dense<0.000000e+00> : vector<4x128xf32>
    %539 = vector.multi_reduction <add>, %538, %cst_165 [1] : vector<4x16x128xf32> to vector<4x128xf32>
    %540 = vector.shape_cast %539 : vector<4x128xf32> to vector<4x1x128xf32>
    %541 = vector.shape_cast %536 : vector<1x128xf32> to vector<1x1x128xf32>
    %542 = vector.broadcast %541 : vector<1x1x128xf32> to vector<4x1x128xf32>
    %543 = arith.mulf %542, %540 : vector<4x1x128xf32>
    %544 = arith.addf %534, %543 : vector<4x1x128xf32>
    %545 = vector.extract_strided_slice %429 {offsets = [0, 0, 3], sizes = [4, 16, 1], strides = [1, 1, 1]} : vector<4x16x8xf32> to vector<4x16x1xf32>
    %546 = vector.extract_strided_slice %163 {offsets = [3, 0], sizes = [1, 128], strides = [1, 1]} : vector<8x128xf32> to vector<1x128xf32>
    %547 = vector.broadcast %545 : vector<4x16x1xf32> to vector<4x16x128xf32>
    %548 = arith.mulf %547, %513 : vector<4x16x128xf32>
    %cst_166 = arith.constant dense<0.000000e+00> : vector<4x128xf32>
    %549 = vector.multi_reduction <add>, %548, %cst_166 [1] : vector<4x16x128xf32> to vector<4x128xf32>
    %550 = vector.shape_cast %549 : vector<4x128xf32> to vector<4x1x128xf32>
    %551 = vector.shape_cast %546 : vector<1x128xf32> to vector<1x1x128xf32>
    %552 = vector.broadcast %551 : vector<1x1x128xf32> to vector<4x1x128xf32>
    %553 = arith.mulf %552, %550 : vector<4x1x128xf32>
    %554 = arith.addf %544, %553 : vector<4x1x128xf32>
    %555 = vector.extract_strided_slice %429 {offsets = [0, 0, 4], sizes = [4, 16, 1], strides = [1, 1, 1]} : vector<4x16x8xf32> to vector<4x16x1xf32>
    %556 = vector.extract_strided_slice %163 {offsets = [4, 0], sizes = [1, 128], strides = [1, 1]} : vector<8x128xf32> to vector<1x128xf32>
    %557 = vector.broadcast %555 : vector<4x16x1xf32> to vector<4x16x128xf32>
    %558 = arith.mulf %557, %513 : vector<4x16x128xf32>
    %cst_167 = arith.constant dense<0.000000e+00> : vector<4x128xf32>
    %559 = vector.multi_reduction <add>, %558, %cst_167 [1] : vector<4x16x128xf32> to vector<4x128xf32>
    %560 = vector.shape_cast %559 : vector<4x128xf32> to vector<4x1x128xf32>
    %561 = vector.shape_cast %556 : vector<1x128xf32> to vector<1x1x128xf32>
    %562 = vector.broadcast %561 : vector<1x1x128xf32> to vector<4x1x128xf32>
    %563 = arith.mulf %562, %560 : vector<4x1x128xf32>
    %564 = arith.addf %554, %563 : vector<4x1x128xf32>
    %565 = vector.extract_strided_slice %429 {offsets = [0, 0, 5], sizes = [4, 16, 1], strides = [1, 1, 1]} : vector<4x16x8xf32> to vector<4x16x1xf32>
    %566 = vector.extract_strided_slice %163 {offsets = [5, 0], sizes = [1, 128], strides = [1, 1]} : vector<8x128xf32> to vector<1x128xf32>
    %567 = vector.broadcast %565 : vector<4x16x1xf32> to vector<4x16x128xf32>
    %568 = arith.mulf %567, %513 : vector<4x16x128xf32>
    %cst_168 = arith.constant dense<0.000000e+00> : vector<4x128xf32>
    %569 = vector.multi_reduction <add>, %568, %cst_168 [1] : vector<4x16x128xf32> to vector<4x128xf32>
    %570 = vector.shape_cast %569 : vector<4x128xf32> to vector<4x1x128xf32>
    %571 = vector.shape_cast %566 : vector<1x128xf32> to vector<1x1x128xf32>
    %572 = vector.broadcast %571 : vector<1x1x128xf32> to vector<4x1x128xf32>
    %573 = arith.mulf %572, %570 : vector<4x1x128xf32>
    %574 = arith.addf %564, %573 : vector<4x1x128xf32>
    %575 = vector.extract_strided_slice %429 {offsets = [0, 0, 6], sizes = [4, 16, 1], strides = [1, 1, 1]} : vector<4x16x8xf32> to vector<4x16x1xf32>
    %576 = vector.extract_strided_slice %163 {offsets = [6, 0], sizes = [1, 128], strides = [1, 1]} : vector<8x128xf32> to vector<1x128xf32>
    %577 = vector.broadcast %575 : vector<4x16x1xf32> to vector<4x16x128xf32>
    %578 = arith.mulf %577, %513 : vector<4x16x128xf32>
    %cst_169 = arith.constant dense<0.000000e+00> : vector<4x128xf32>
    %579 = vector.multi_reduction <add>, %578, %cst_169 [1] : vector<4x16x128xf32> to vector<4x128xf32>
    %580 = vector.shape_cast %579 : vector<4x128xf32> to vector<4x1x128xf32>
    %581 = vector.shape_cast %576 : vector<1x128xf32> to vector<1x1x128xf32>
    %582 = vector.broadcast %581 : vector<1x1x128xf32> to vector<4x1x128xf32>
    %583 = arith.mulf %582, %580 : vector<4x1x128xf32>
    %584 = arith.addf %574, %583 : vector<4x1x128xf32>
    %585 = vector.extract_strided_slice %429 {offsets = [0, 0, 7], sizes = [4, 16, 1], strides = [1, 1, 1]} : vector<4x16x8xf32> to vector<4x16x1xf32>
    %586 = vector.extract_strided_slice %163 {offsets = [7, 0], sizes = [1, 128], strides = [1, 1]} : vector<8x128xf32> to vector<1x128xf32>
    %587 = vector.broadcast %585 : vector<4x16x1xf32> to vector<4x16x128xf32>
    %588 = arith.mulf %587, %513 : vector<4x16x128xf32>
    %cst_170 = arith.constant dense<0.000000e+00> : vector<4x128xf32>
    %589 = vector.multi_reduction <add>, %588, %cst_170 [1] : vector<4x16x128xf32> to vector<4x128xf32>
    %590 = vector.shape_cast %589 : vector<4x128xf32> to vector<4x1x128xf32>
    %591 = vector.shape_cast %586 : vector<1x128xf32> to vector<1x1x128xf32>
    %592 = vector.broadcast %591 : vector<1x1x128xf32> to vector<4x1x128xf32>
    %593 = arith.mulf %592, %590 : vector<4x1x128xf32>
    %594 = arith.addf %584, %593 : vector<4x1x128xf32>
    %cst_171 = arith.constant 9.99999974E-6 : f32
    %595 = vector.broadcast %cst_171 : f32 to vector<4x1x128xf32>
    %596 = arith.addf %594, %595 : vector<4x1x128xf32>
    %597 = tpu.reciprocal %596 {approx = true} : vector<4x1x128xf32> -> vector<4x1x128xf32>
    %598 = arith.mulf %596, %597 : vector<4x1x128xf32>
    %cst_172 = arith.constant 2.000000e+00 : f32
    %599 = vector.broadcast %cst_172 : f32 to vector<4x1x128xf32>
    %600 = arith.subf %599, %598 : vector<4x1x128xf32>
    %601 = arith.mulf %597, %600 : vector<4x1x128xf32>
    %cst_173 = arith.constant 5.000000e-01 : f32
    %602 = vector.broadcast %cst_173 : f32 to vector<4x1x128xf32>
    %603 = arith.mulf %602, %601 : vector<4x1x128xf32>
    %604 = math.log %596 : vector<4x1x128xf32>
    %cst_174 = arith.constant 5.000000e-01 : f32
    %605 = vector.broadcast %cst_174 : f32 to vector<4x1x128xf32>
    %606 = arith.mulf %605, %604 : vector<4x1x128xf32>
    %607 = vector.broadcast %603 : vector<4x1x128xf32> to vector<4x16x128xf32>
    %608 = arith.mulf %513, %607 : vector<4x16x128xf32>
    %609 = vector.broadcast %606 : vector<4x1x128xf32> to vector<4x16x128xf32>
    %610 = arith.addf %608, %609 : vector<4x16x128xf32>
    "tpu.trace_start"() <{level = 10 : i32, message = "bim,bjm->bij"}> : () -> ()
    %cst_175 = arith.constant dense<0.000000e+00> : vector<4x16x8xf32>
    %611 = tpu.matmul %610, %166, %cst_175 {dimension_numbers = #tpu.dot_dimension_numbers<[2], [2], [1], [1], [0, 0, 0, 1, 1, 1], [0], [0]>} : vector<4x16x128xf32>, vector<4x8x128xf32>, vector<4x16x8xf32> -> vector<4x16x8xf32>
    "tpu.trace_stop"() : () -> ()
    %cst_176 = arith.constant 0.000000e+00 : f32
    %612 = vector.broadcast %cst_176 : f32 to vector<4x16x8xf32>
    %613 = arith.subf %612, %611 : vector<4x16x8xf32>
    %cst_177 = arith.constant 0.000000e+00 : f32
    %614 = vector.broadcast %cst_177 : f32 to vector<4x1x8xf32>
    %615 = arith.minimumf %418, %614 : vector<4x1x8xf32>
    %616 = math.absf %418 : vector<4x1x8xf32>
    %cst_178 = arith.constant 0.000000e+00 : f32
    %617 = vector.broadcast %cst_178 : f32 to vector<4x1x8xf32>
    %618 = arith.subf %617, %616 : vector<4x1x8xf32>
    %619 = math.exp %618 : vector<4x1x8xf32>
    %cst_179 = arith.constant 1.000000e+00 : f32
    %620 = vector.broadcast %cst_179 : f32 to vector<4x1x8xf32>
    %621 = arith.addf %620, %619 : vector<4x1x8xf32>
    %622 = math.log %621 : vector<4x1x8xf32>
    %623 = arith.subf %615, %622 : vector<4x1x8xf32>
    %624 = vector.broadcast %623 : vector<4x1x8xf32> to vector<4x16x8xf32>
    %625 = arith.addf %624, %613 : vector<4x16x8xf32>
    %cst_180 = arith.constant dense<0xFF800000> : vector<4x16xf32>
    %626 = vector.multi_reduction <maximumf>, %625, %cst_180 [2] : vector<4x16x8xf32> to vector<4x16xf32>
    %627 = vector.shape_cast %626 : vector<4x16xf32> to vector<4x16x1xf32>
    %628 = vector.broadcast %627 : vector<4x16x1xf32> to vector<4x16x8xf32>
    %629 = arith.subf %625, %628 : vector<4x16x8xf32>
    %630 = math.exp %629 : vector<4x16x8xf32>
    %cst_181 = arith.constant dense<0.000000e+00> : vector<4x16xf32>
    %631 = vector.multi_reduction <add>, %630, %cst_181 [2] : vector<4x16x8xf32> to vector<4x16xf32>
    %632 = vector.shape_cast %631 : vector<4x16xf32> to vector<4x16x1xf32>
    %633 = tpu.reciprocal %632 {approx = true} : vector<4x16x1xf32> -> vector<4x16x1xf32>
    %634 = arith.mulf %632, %633 : vector<4x16x1xf32>
    %cst_182 = arith.constant 2.000000e+00 : f32
    %635 = vector.broadcast %cst_182 : f32 to vector<4x16x1xf32>
    %636 = arith.subf %635, %634 : vector<4x16x1xf32>
    %637 = arith.mulf %633, %636 : vector<4x16x1xf32>
    %638 = vector.broadcast %637 : vector<4x16x1xf32> to vector<4x16x8xf32>
    %639 = arith.mulf %630, %638 : vector<4x16x8xf32>
    %640 = vector.broadcast %160 : vector<4x16x1xf32> to vector<4x16x8xf32>
    %641 = arith.mulf %640, %639 : vector<4x16x8xf32>
    %642 = vector.broadcast %160 : vector<4x16x1xf32> to vector<4x16x8xf32>
    %643 = arith.subf %642, %641 : vector<4x16x8xf32>
    %644 = vector.shape_cast %161 : vector<16x8xf32> to vector<1x16x8xf32>
    %645 = vector.broadcast %644 : vector<1x16x8xf32> to vector<4x16x8xf32>
    %646 = arith.mulf %645, %641 : vector<4x16x8xf32>
    %cst_183 = arith.constant dense<0.000000e+00> : vector<4x8xf32>
    %647 = vector.multi_reduction <add>, %646, %cst_183 [1] : vector<4x16x8xf32> to vector<4x8xf32>
    %648 = vector.shape_cast %647 : vector<4x8xf32> to vector<4x1x8xf32>
    %649 = vector.shape_cast %162 : vector<16x8xf32> to vector<1x16x8xf32>
    %650 = vector.broadcast %649 : vector<1x16x8xf32> to vector<4x16x8xf32>
    %651 = arith.mulf %650, %643 : vector<4x16x8xf32>
    %cst_184 = arith.constant dense<0.000000e+00> : vector<4x8xf32>
    %652 = vector.multi_reduction <add>, %651, %cst_184 [1] : vector<4x16x8xf32> to vector<4x8xf32>
    %653 = vector.shape_cast %652 : vector<4x8xf32> to vector<4x1x8xf32>
    %654 = arith.subf %648, %653 : vector<4x1x8xf32>
    %cst_185 = arith.constant dense<0.000000e+00> : vector<4x8xf32>
    %655 = vector.multi_reduction <add>, %641, %cst_185 [1] : vector<4x16x8xf32> to vector<4x8xf32>
    %656 = vector.shape_cast %655 : vector<4x8xf32> to vector<4x1x8xf32>
    %cst_186 = arith.constant 9.99999974E-6 : f32
    %657 = vector.broadcast %cst_186 : f32 to vector<4x1x8xf32>
    %658 = arith.addf %656, %657 : vector<4x1x8xf32>
    %659 = tpu.reciprocal %658 {approx = true} : vector<4x1x8xf32> -> vector<4x1x8xf32>
    %660 = arith.mulf %658, %659 : vector<4x1x8xf32>
    %cst_187 = arith.constant 2.000000e+00 : f32
    %661 = vector.broadcast %cst_187 : f32 to vector<4x1x8xf32>
    %662 = arith.subf %661, %660 : vector<4x1x8xf32>
    %663 = arith.mulf %659, %662 : vector<4x1x8xf32>
    %664 = vector.broadcast %663 : vector<4x1x8xf32> to vector<4x16x8xf32>
    %665 = arith.mulf %641, %664 : vector<4x16x8xf32>
    %cst_188 = arith.constant 0.000000e+00 : f32
    %666 = vector.broadcast %cst_188 : f32 to vector<4x1x128xf32>
    %667 = vector.extract_strided_slice %665 {offsets = [0, 0, 0], sizes = [4, 16, 1], strides = [1, 1, 1]} : vector<4x16x8xf32> to vector<4x16x1xf32>
    %668 = vector.extract_strided_slice %163 {offsets = [0, 0], sizes = [1, 128], strides = [1, 1]} : vector<8x128xf32> to vector<1x128xf32>
    %669 = vector.broadcast %667 : vector<4x16x1xf32> to vector<4x16x128xf32>
    %670 = arith.mulf %669, %144 : vector<4x16x128xf32>
    %cst_189 = arith.constant dense<0.000000e+00> : vector<4x128xf32>
    %671 = vector.multi_reduction <add>, %670, %cst_189 [1] : vector<4x16x128xf32> to vector<4x128xf32>
    %672 = vector.shape_cast %671 : vector<4x128xf32> to vector<4x1x128xf32>
    %673 = vector.shape_cast %668 : vector<1x128xf32> to vector<1x1x128xf32>
    %674 = vector.broadcast %673 : vector<1x1x128xf32> to vector<4x1x128xf32>
    %675 = arith.mulf %674, %672 : vector<4x1x128xf32>
    %676 = arith.addf %666, %675 : vector<4x1x128xf32>
    %677 = vector.extract_strided_slice %665 {offsets = [0, 0, 1], sizes = [4, 16, 1], strides = [1, 1, 1]} : vector<4x16x8xf32> to vector<4x16x1xf32>
    %678 = vector.extract_strided_slice %163 {offsets = [1, 0], sizes = [1, 128], strides = [1, 1]} : vector<8x128xf32> to vector<1x128xf32>
    %679 = vector.broadcast %677 : vector<4x16x1xf32> to vector<4x16x128xf32>
    %680 = arith.mulf %679, %144 : vector<4x16x128xf32>
    %cst_190 = arith.constant dense<0.000000e+00> : vector<4x128xf32>
    %681 = vector.multi_reduction <add>, %680, %cst_190 [1] : vector<4x16x128xf32> to vector<4x128xf32>
    %682 = vector.shape_cast %681 : vector<4x128xf32> to vector<4x1x128xf32>
    %683 = vector.shape_cast %678 : vector<1x128xf32> to vector<1x1x128xf32>
    %684 = vector.broadcast %683 : vector<1x1x128xf32> to vector<4x1x128xf32>
    %685 = arith.mulf %684, %682 : vector<4x1x128xf32>
    %686 = arith.addf %676, %685 : vector<4x1x128xf32>
    %687 = vector.extract_strided_slice %665 {offsets = [0, 0, 2], sizes = [4, 16, 1], strides = [1, 1, 1]} : vector<4x16x8xf32> to vector<4x16x1xf32>
    %688 = vector.extract_strided_slice %163 {offsets = [2, 0], sizes = [1, 128], strides = [1, 1]} : vector<8x128xf32> to vector<1x128xf32>
    %689 = vector.broadcast %687 : vector<4x16x1xf32> to vector<4x16x128xf32>
    %690 = arith.mulf %689, %144 : vector<4x16x128xf32>
    %cst_191 = arith.constant dense<0.000000e+00> : vector<4x128xf32>
    %691 = vector.multi_reduction <add>, %690, %cst_191 [1] : vector<4x16x128xf32> to vector<4x128xf32>
    %692 = vector.shape_cast %691 : vector<4x128xf32> to vector<4x1x128xf32>
    %693 = vector.shape_cast %688 : vector<1x128xf32> to vector<1x1x128xf32>
    %694 = vector.broadcast %693 : vector<1x1x128xf32> to vector<4x1x128xf32>
    %695 = arith.mulf %694, %692 : vector<4x1x128xf32>
    %696 = arith.addf %686, %695 : vector<4x1x128xf32>
    %697 = vector.extract_strided_slice %665 {offsets = [0, 0, 3], sizes = [4, 16, 1], strides = [1, 1, 1]} : vector<4x16x8xf32> to vector<4x16x1xf32>
    %698 = vector.extract_strided_slice %163 {offsets = [3, 0], sizes = [1, 128], strides = [1, 1]} : vector<8x128xf32> to vector<1x128xf32>
    %699 = vector.broadcast %697 : vector<4x16x1xf32> to vector<4x16x128xf32>
    %700 = arith.mulf %699, %144 : vector<4x16x128xf32>
    %cst_192 = arith.constant dense<0.000000e+00> : vector<4x128xf32>
    %701 = vector.multi_reduction <add>, %700, %cst_192 [1] : vector<4x16x128xf32> to vector<4x128xf32>
    %702 = vector.shape_cast %701 : vector<4x128xf32> to vector<4x1x128xf32>
    %703 = vector.shape_cast %698 : vector<1x128xf32> to vector<1x1x128xf32>
    %704 = vector.broadcast %703 : vector<1x1x128xf32> to vector<4x1x128xf32>
    %705 = arith.mulf %704, %702 : vector<4x1x128xf32>
    %706 = arith.addf %696, %705 : vector<4x1x128xf32>
    %707 = vector.extract_strided_slice %665 {offsets = [0, 0, 4], sizes = [4, 16, 1], strides = [1, 1, 1]} : vector<4x16x8xf32> to vector<4x16x1xf32>
    %708 = vector.extract_strided_slice %163 {offsets = [4, 0], sizes = [1, 128], strides = [1, 1]} : vector<8x128xf32> to vector<1x128xf32>
    %709 = vector.broadcast %707 : vector<4x16x1xf32> to vector<4x16x128xf32>
    %710 = arith.mulf %709, %144 : vector<4x16x128xf32>
    %cst_193 = arith.constant dense<0.000000e+00> : vector<4x128xf32>
    %711 = vector.multi_reduction <add>, %710, %cst_193 [1] : vector<4x16x128xf32> to vector<4x128xf32>
    %712 = vector.shape_cast %711 : vector<4x128xf32> to vector<4x1x128xf32>
    %713 = vector.shape_cast %708 : vector<1x128xf32> to vector<1x1x128xf32>
    %714 = vector.broadcast %713 : vector<1x1x128xf32> to vector<4x1x128xf32>
    %715 = arith.mulf %714, %712 : vector<4x1x128xf32>
    %716 = arith.addf %706, %715 : vector<4x1x128xf32>
    %717 = vector.extract_strided_slice %665 {offsets = [0, 0, 5], sizes = [4, 16, 1], strides = [1, 1, 1]} : vector<4x16x8xf32> to vector<4x16x1xf32>
    %718 = vector.extract_strided_slice %163 {offsets = [5, 0], sizes = [1, 128], strides = [1, 1]} : vector<8x128xf32> to vector<1x128xf32>
    %719 = vector.broadcast %717 : vector<4x16x1xf32> to vector<4x16x128xf32>
    %720 = arith.mulf %719, %144 : vector<4x16x128xf32>
    %cst_194 = arith.constant dense<0.000000e+00> : vector<4x128xf32>
    %721 = vector.multi_reduction <add>, %720, %cst_194 [1] : vector<4x16x128xf32> to vector<4x128xf32>
    %722 = vector.shape_cast %721 : vector<4x128xf32> to vector<4x1x128xf32>
    %723 = vector.shape_cast %718 : vector<1x128xf32> to vector<1x1x128xf32>
    %724 = vector.broadcast %723 : vector<1x1x128xf32> to vector<4x1x128xf32>
    %725 = arith.mulf %724, %722 : vector<4x1x128xf32>
    %726 = arith.addf %716, %725 : vector<4x1x128xf32>
    %727 = vector.extract_strided_slice %665 {offsets = [0, 0, 6], sizes = [4, 16, 1], strides = [1, 1, 1]} : vector<4x16x8xf32> to vector<4x16x1xf32>
    %728 = vector.extract_strided_slice %163 {offsets = [6, 0], sizes = [1, 128], strides = [1, 1]} : vector<8x128xf32> to vector<1x128xf32>
    %729 = vector.broadcast %727 : vector<4x16x1xf32> to vector<4x16x128xf32>
    %730 = arith.mulf %729, %144 : vector<4x16x128xf32>
    %cst_195 = arith.constant dense<0.000000e+00> : vector<4x128xf32>
    %731 = vector.multi_reduction <add>, %730, %cst_195 [1] : vector<4x16x128xf32> to vector<4x128xf32>
    %732 = vector.shape_cast %731 : vector<4x128xf32> to vector<4x1x128xf32>
    %733 = vector.shape_cast %728 : vector<1x128xf32> to vector<1x1x128xf32>
    %734 = vector.broadcast %733 : vector<1x1x128xf32> to vector<4x1x128xf32>
    %735 = arith.mulf %734, %732 : vector<4x1x128xf32>
    %736 = arith.addf %726, %735 : vector<4x1x128xf32>
    %737 = vector.extract_strided_slice %665 {offsets = [0, 0, 7], sizes = [4, 16, 1], strides = [1, 1, 1]} : vector<4x16x8xf32> to vector<4x16x1xf32>
    %738 = vector.extract_strided_slice %163 {offsets = [7, 0], sizes = [1, 128], strides = [1, 1]} : vector<8x128xf32> to vector<1x128xf32>
    %739 = vector.broadcast %737 : vector<4x16x1xf32> to vector<4x16x128xf32>
    %740 = arith.mulf %739, %144 : vector<4x16x128xf32>
    %cst_196 = arith.constant dense<0.000000e+00> : vector<4x128xf32>
    %741 = vector.multi_reduction <add>, %740, %cst_196 [1] : vector<4x16x128xf32> to vector<4x128xf32>
    %742 = vector.shape_cast %741 : vector<4x128xf32> to vector<4x1x128xf32>
    %743 = vector.shape_cast %738 : vector<1x128xf32> to vector<1x1x128xf32>
    %744 = vector.broadcast %743 : vector<1x1x128xf32> to vector<4x1x128xf32>
    %745 = arith.mulf %744, %742 : vector<4x1x128xf32>
    %746 = arith.addf %736, %745 : vector<4x1x128xf32>
    %747 = vector.broadcast %746 : vector<4x1x128xf32> to vector<4x16x128xf32>
    %748 = arith.subf %144, %747 : vector<4x16x128xf32>
    %749 = arith.mulf %748, %748 : vector<4x16x128xf32>
    %cst_197 = arith.constant 0.000000e+00 : f32
    %750 = vector.broadcast %cst_197 : f32 to vector<4x1x128xf32>
    %751 = vector.extract_strided_slice %665 {offsets = [0, 0, 0], sizes = [4, 16, 1], strides = [1, 1, 1]} : vector<4x16x8xf32> to vector<4x16x1xf32>
    %752 = vector.extract_strided_slice %163 {offsets = [0, 0], sizes = [1, 128], strides = [1, 1]} : vector<8x128xf32> to vector<1x128xf32>
    %753 = vector.broadcast %751 : vector<4x16x1xf32> to vector<4x16x128xf32>
    %754 = arith.mulf %753, %749 : vector<4x16x128xf32>
    %cst_198 = arith.constant dense<0.000000e+00> : vector<4x128xf32>
    %755 = vector.multi_reduction <add>, %754, %cst_198 [1] : vector<4x16x128xf32> to vector<4x128xf32>
    %756 = vector.shape_cast %755 : vector<4x128xf32> to vector<4x1x128xf32>
    %757 = vector.shape_cast %752 : vector<1x128xf32> to vector<1x1x128xf32>
    %758 = vector.broadcast %757 : vector<1x1x128xf32> to vector<4x1x128xf32>
    %759 = arith.mulf %758, %756 : vector<4x1x128xf32>
    %760 = arith.addf %750, %759 : vector<4x1x128xf32>
    %761 = vector.extract_strided_slice %665 {offsets = [0, 0, 1], sizes = [4, 16, 1], strides = [1, 1, 1]} : vector<4x16x8xf32> to vector<4x16x1xf32>
    %762 = vector.extract_strided_slice %163 {offsets = [1, 0], sizes = [1, 128], strides = [1, 1]} : vector<8x128xf32> to vector<1x128xf32>
    %763 = vector.broadcast %761 : vector<4x16x1xf32> to vector<4x16x128xf32>
    %764 = arith.mulf %763, %749 : vector<4x16x128xf32>
    %cst_199 = arith.constant dense<0.000000e+00> : vector<4x128xf32>
    %765 = vector.multi_reduction <add>, %764, %cst_199 [1] : vector<4x16x128xf32> to vector<4x128xf32>
    %766 = vector.shape_cast %765 : vector<4x128xf32> to vector<4x1x128xf32>
    %767 = vector.shape_cast %762 : vector<1x128xf32> to vector<1x1x128xf32>
    %768 = vector.broadcast %767 : vector<1x1x128xf32> to vector<4x1x128xf32>
    %769 = arith.mulf %768, %766 : vector<4x1x128xf32>
    %770 = arith.addf %760, %769 : vector<4x1x128xf32>
    %771 = vector.extract_strided_slice %665 {offsets = [0, 0, 2], sizes = [4, 16, 1], strides = [1, 1, 1]} : vector<4x16x8xf32> to vector<4x16x1xf32>
    %772 = vector.extract_strided_slice %163 {offsets = [2, 0], sizes = [1, 128], strides = [1, 1]} : vector<8x128xf32> to vector<1x128xf32>
    %773 = vector.broadcast %771 : vector<4x16x1xf32> to vector<4x16x128xf32>
    %774 = arith.mulf %773, %749 : vector<4x16x128xf32>
    %cst_200 = arith.constant dense<0.000000e+00> : vector<4x128xf32>
    %775 = vector.multi_reduction <add>, %774, %cst_200 [1] : vector<4x16x128xf32> to vector<4x128xf32>
    %776 = vector.shape_cast %775 : vector<4x128xf32> to vector<4x1x128xf32>
    %777 = vector.shape_cast %772 : vector<1x128xf32> to vector<1x1x128xf32>
    %778 = vector.broadcast %777 : vector<1x1x128xf32> to vector<4x1x128xf32>
    %779 = arith.mulf %778, %776 : vector<4x1x128xf32>
    %780 = arith.addf %770, %779 : vector<4x1x128xf32>
    %781 = vector.extract_strided_slice %665 {offsets = [0, 0, 3], sizes = [4, 16, 1], strides = [1, 1, 1]} : vector<4x16x8xf32> to vector<4x16x1xf32>
    %782 = vector.extract_strided_slice %163 {offsets = [3, 0], sizes = [1, 128], strides = [1, 1]} : vector<8x128xf32> to vector<1x128xf32>
    %783 = vector.broadcast %781 : vector<4x16x1xf32> to vector<4x16x128xf32>
    %784 = arith.mulf %783, %749 : vector<4x16x128xf32>
    %cst_201 = arith.constant dense<0.000000e+00> : vector<4x128xf32>
    %785 = vector.multi_reduction <add>, %784, %cst_201 [1] : vector<4x16x128xf32> to vector<4x128xf32>
    %786 = vector.shape_cast %785 : vector<4x128xf32> to vector<4x1x128xf32>
    %787 = vector.shape_cast %782 : vector<1x128xf32> to vector<1x1x128xf32>
    %788 = vector.broadcast %787 : vector<1x1x128xf32> to vector<4x1x128xf32>
    %789 = arith.mulf %788, %786 : vector<4x1x128xf32>
    %790 = arith.addf %780, %789 : vector<4x1x128xf32>
    %791 = vector.extract_strided_slice %665 {offsets = [0, 0, 4], sizes = [4, 16, 1], strides = [1, 1, 1]} : vector<4x16x8xf32> to vector<4x16x1xf32>
    %792 = vector.extract_strided_slice %163 {offsets = [4, 0], sizes = [1, 128], strides = [1, 1]} : vector<8x128xf32> to vector<1x128xf32>
    %793 = vector.broadcast %791 : vector<4x16x1xf32> to vector<4x16x128xf32>
    %794 = arith.mulf %793, %749 : vector<4x16x128xf32>
    %cst_202 = arith.constant dense<0.000000e+00> : vector<4x128xf32>
    %795 = vector.multi_reduction <add>, %794, %cst_202 [1] : vector<4x16x128xf32> to vector<4x128xf32>
    %796 = vector.shape_cast %795 : vector<4x128xf32> to vector<4x1x128xf32>
    %797 = vector.shape_cast %792 : vector<1x128xf32> to vector<1x1x128xf32>
    %798 = vector.broadcast %797 : vector<1x1x128xf32> to vector<4x1x128xf32>
    %799 = arith.mulf %798, %796 : vector<4x1x128xf32>
    %800 = arith.addf %790, %799 : vector<4x1x128xf32>
    %801 = vector.extract_strided_slice %665 {offsets = [0, 0, 5], sizes = [4, 16, 1], strides = [1, 1, 1]} : vector<4x16x8xf32> to vector<4x16x1xf32>
    %802 = vector.extract_strided_slice %163 {offsets = [5, 0], sizes = [1, 128], strides = [1, 1]} : vector<8x128xf32> to vector<1x128xf32>
    %803 = vector.broadcast %801 : vector<4x16x1xf32> to vector<4x16x128xf32>
    %804 = arith.mulf %803, %749 : vector<4x16x128xf32>
    %cst_203 = arith.constant dense<0.000000e+00> : vector<4x128xf32>
    %805 = vector.multi_reduction <add>, %804, %cst_203 [1] : vector<4x16x128xf32> to vector<4x128xf32>
    %806 = vector.shape_cast %805 : vector<4x128xf32> to vector<4x1x128xf32>
    %807 = vector.shape_cast %802 : vector<1x128xf32> to vector<1x1x128xf32>
    %808 = vector.broadcast %807 : vector<1x1x128xf32> to vector<4x1x128xf32>
    %809 = arith.mulf %808, %806 : vector<4x1x128xf32>
    %810 = arith.addf %800, %809 : vector<4x1x128xf32>
    %811 = vector.extract_strided_slice %665 {offsets = [0, 0, 6], sizes = [4, 16, 1], strides = [1, 1, 1]} : vector<4x16x8xf32> to vector<4x16x1xf32>
    %812 = vector.extract_strided_slice %163 {offsets = [6, 0], sizes = [1, 128], strides = [1, 1]} : vector<8x128xf32> to vector<1x128xf32>
    %813 = vector.broadcast %811 : vector<4x16x1xf32> to vector<4x16x128xf32>
    %814 = arith.mulf %813, %749 : vector<4x16x128xf32>
    %cst_204 = arith.constant dense<0.000000e+00> : vector<4x128xf32>
    %815 = vector.multi_reduction <add>, %814, %cst_204 [1] : vector<4x16x128xf32> to vector<4x128xf32>
    %816 = vector.shape_cast %815 : vector<4x128xf32> to vector<4x1x128xf32>
    %817 = vector.shape_cast %812 : vector<1x128xf32> to vector<1x1x128xf32>
    %818 = vector.broadcast %817 : vector<1x1x128xf32> to vector<4x1x128xf32>
    %819 = arith.mulf %818, %816 : vector<4x1x128xf32>
    %820 = arith.addf %810, %819 : vector<4x1x128xf32>
    %821 = vector.extract_strided_slice %665 {offsets = [0, 0, 7], sizes = [4, 16, 1], strides = [1, 1, 1]} : vector<4x16x8xf32> to vector<4x16x1xf32>
    %822 = vector.extract_strided_slice %163 {offsets = [7, 0], sizes = [1, 128], strides = [1, 1]} : vector<8x128xf32> to vector<1x128xf32>
    %823 = vector.broadcast %821 : vector<4x16x1xf32> to vector<4x16x128xf32>
    %824 = arith.mulf %823, %749 : vector<4x16x128xf32>
    %cst_205 = arith.constant dense<0.000000e+00> : vector<4x128xf32>
    %825 = vector.multi_reduction <add>, %824, %cst_205 [1] : vector<4x16x128xf32> to vector<4x128xf32>
    %826 = vector.shape_cast %825 : vector<4x128xf32> to vector<4x1x128xf32>
    %827 = vector.shape_cast %822 : vector<1x128xf32> to vector<1x1x128xf32>
    %828 = vector.broadcast %827 : vector<1x1x128xf32> to vector<4x1x128xf32>
    %829 = arith.mulf %828, %826 : vector<4x1x128xf32>
    %830 = arith.addf %820, %829 : vector<4x1x128xf32>
    %cst_206 = arith.constant 9.99999974E-6 : f32
    %831 = vector.broadcast %cst_206 : f32 to vector<4x1x128xf32>
    %832 = arith.addf %830, %831 : vector<4x1x128xf32>
    %c0_207 = arith.constant 0 : index
    %c0_208 = arith.constant 0 : index
    %c0_209 = arith.constant 0 : index
    %833 = vector.load %arg8[%c0_207, %c0_208, %c0_209] : memref<4x1x8xf32, #tpu.memory_space<vmem>>, vector<4x1x8xf32>
    tpu.vector_store %arg8[%c0_207, %c0_208, %c0_209], %654 {strides = array<i32>} : memref<4x1x8xf32, #tpu.memory_space<vmem>>, vector<4x1x8xf32>,
    %c0_210 = arith.constant 0 : index
    %c0_211 = arith.constant 0 : index
    %c0_212 = arith.constant 0 : index
    %834 = vector.load %arg9[%c0_210, %c0_211, %c0_212] : memref<4x1x128xf32, #tpu.memory_space<vmem>>, vector<4x1x128xf32>
    tpu.vector_store %arg9[%c0_210, %c0_211, %c0_212], %746 {strides = array<i32>} : memref<4x1x128xf32, #tpu.memory_space<vmem>>, vector<4x1x128xf32>,
    %c0_213 = arith.constant 0 : index
    %c0_214 = arith.constant 0 : index
    %c0_215 = arith.constant 0 : index
    %835 = vector.load %arg10[%c0_213, %c0_214, %c0_215] : memref<4x1x128xf32, #tpu.memory_space<vmem>>, vector<4x1x128xf32>
    tpu.vector_store %arg10[%c0_213, %c0_214, %c0_215], %832 {strides = array<i32>} : memref<4x1x128xf32, #tpu.memory_space<vmem>>, vector<4x1x128xf32>,
    return
  }
  func.func @transform_0(%arg0: i32) -> (i32, i32, i32) {
    %c0_i32 = arith.constant 0 : i32
    %c0_i32_0 = arith.constant 0 : i32
    %c0_i32_1 = arith.constant 0 : i32
    return %arg0, %c0_i32, %c0_i32_0 : i32, i32, i32
  }
  func.func @transform_1(%arg0: i32) -> (i32, i32, i32) {
    %c0_i32 = arith.constant 0 : i32
    %c0_i32_0 = arith.constant 0 : i32
    %c0_i32_1 = arith.constant 0 : i32
    return %arg0, %c0_i32, %c0_i32_0 : i32, i32, i32
  }
  func.func @transform_2(%arg0: i32) -> (i32, i32, i32) {
    %c0_i32 = arith.constant 0 : i32
    %c0_i32_0 = arith.constant 0 : i32
    %c0_i32_1 = arith.constant 0 : i32
    %c0_i32_2 = arith.constant 0 : i32
    return %c0_i32, %c0_i32_0, %c0_i32_1 : i32, i32, i32
  }
  func.func @transform_3(%arg0: i32) -> (i32, i32) {
    %c0_i32 = arith.constant 0 : i32
    %c0_i32_0 = arith.constant 0 : i32
    %c0_i32_1 = arith.constant 0 : i32
    return %c0_i32, %c0_i32_0 : i32, i32
  }
  func.func @transform_4(%arg0: i32) -> (i32, i32) {
    %c0_i32 = arith.constant 0 : i32
    %c0_i32_0 = arith.constant 0 : i32
    %c0_i32_1 = arith.constant 0 : i32
    return %c0_i32, %c0_i32_0 : i32, i32
  }
  func.func @transform_5(%arg0: i32) -> (i32, i32) {
    %c0_i32 = arith.constant 0 : i32
    %c0_i32_0 = arith.constant 0 : i32
    %c0_i32_1 = arith.constant 0 : i32
    return %c0_i32, %c0_i32_0 : i32, i32
  }
  func.func @transform_6(%arg0: i32) -> (i32, i32) {
    %c0_i32 = arith.constant 0 : i32
    %c0_i32_0 = arith.constant 0 : i32
    %c0_i32_1 = arith.constant 0 : i32
    return %c0_i32, %c0_i32_0 : i32, i32
  }
  func.func @transform_7(%arg0: i32) -> (i32, i32, i32) {
    %c0_i32 = arith.constant 0 : i32
    %c0_i32_0 = arith.constant 0 : i32
    %c0_i32_1 = arith.constant 0 : i32
    return %arg0, %c0_i32, %c0_i32_0 : i32, i32, i32
  }
  func.func @transform_8(%arg0: i32) -> (i32, i32, i32) {
    %c0_i32 = arith.constant 0 : i32
    %c0_i32_0 = arith.constant 0 : i32
    %c0_i32_1 = arith.constant 0 : i32
    return %arg0, %c0_i32, %c0_i32_0 : i32, i32, i32
  }
  func.func @transform_9(%arg0: i32) -> (i32, i32, i32) {
    %c0_i32 = arith.constant 0 : i32
    %c0_i32_0 = arith.constant 0 : i32
    %c0_i32_1 = arith.constant 0 : i32
    return %arg0, %c0_i32, %c0_i32_0 : i32, i32, i32
  }
}

</mosaic_0001>

<llo_original>
// kernel: tpu_custom_call.1
$region0: #{tpu_custom_call.1}
  #allocation0 [shape = 'u32[]', space=smem, size = 0x4, offset = 0x4, fixed_abs, tag = 'smem constant byte address 0x4 - core index']
  #allocation1 [shape = 'u32[144,128]{1,0:T(1,128)}', space=vmem, size = 0x12000, scoped, tag = 'internal scratch']
  #allocation2 [shape = 'f32[4,16,128]{2,1,0:T(8,128)}', space=vmem, size = 0x8000, scoped, tag = 'scratch operand']
  %s0 = inlined_call_operand.vmem [shape: f32[8,16,1], index: 0, kind: input, shape index: {}]
  %s1 = inlined_call_operand.vmem [shape: f32[8,16,16], index: 1, kind: input, shape index: {}]
  %s2 = inlined_call_operand.hbm [shape: f32[4,16,32], index: 2, kind: input, shape index: {}]
  %s3 = inlined_call_operand.vmem [shape: f32[16,128], index: 3, kind: input, shape index: {}]
  %s4 = inlined_call_operand.vmem [shape: f32[16,8], index: 4, kind: input, shape index: {}]
  %s5 = inlined_call_operand.vmem [shape: f32[16,8], index: 5, kind: input, shape index: {}]
  %s6 = inlined_call_operand.vmem [shape: f32[8,128], index: 6, kind: input, shape index: {}]
  %s7 = inlined_call_operand.hbm [shape: f32[8,1,8], index: 7, kind: output, shape index: {0}]
  %s8 = inlined_call_operand.hbm [shape: f32[8,1,128], index: 8, kind: output, shape index: {1}]
  %s9 = inlined_call_operand.hbm [shape: f32[8,1,128], index: 9, kind: output, shape index: {2}]
  %10 = xla_tuple %s7, %s8, %s9
  %s11 = sld [smem:[#allocation0]]
  $region81: #{tpu_custom_call.1} parent=0
    _
  %s13 = ssub.s32 1, %s11
  %s14 = scalar_select 0, %s13, %s11
  $region1: #{tpu_custom_call.1} parent=0
    #allocation3 [shape = 'u8[32768]{0}', space=vmem, size = 0x8000, scoped, tag = 'input window, operand 2, single buffered']
    #allocation4 [shape = 's32[2]{0}', space=sflag, size = 0x8, scoped, tag = 'scoped memory for tpu_custom_call.1']
    #allocation5 [shape = 's32[2]{0}', space=sflag, size = 0x8, scoped, tag = 'scoped memory for tpu_custom_call.1']
    #allocation6 [shape = 'u8[4096]{0}', space=vmem, size = 0x1000, scoped, tag = 'output window, operand 0']
    #allocation7 [shape = 'u8[4096]{0}', space=vmem, size = 0x1000, scoped, tag = 'output window, operand 1']
    #allocation8 [shape = 's32[2]{0}', space=sflag, size = 0x8, scoped, tag = 'scoped memory for tpu_custom_call.1']
    #allocation9 [shape = 'u8[4096]{0}', space=vmem, size = 0x1000, scoped, tag = 'output window, operand 2']
    %15 = vsyncpa [#allocation4], 0
    %16 = vsyncpa [#allocation5], 0
    %s17 = scalar_lea.sflag [#allocation5], 1
    %18 = vsyncpa %s17, 0
    %19 = vsyncpa [#allocation8], 0
    %s20 = scalar_lea.sflag [#allocation8], 1
    %21 = vsyncpa %s20, 0
    loop: start=0, step=1, limit=4
    $region2: #{tpu_custom_call.1} parent=1 // loop_pre_header
      _
    $region3: #{tpu_custom_call.1} parent=1 // loop_header
      %s23 = sphi 0, %s27
      %p24 = scmp.ge.s32.totalorder %s23, 4
      %s33 = sphi 0, %s35
      %s36 = sphi 0, %s33
      %s37 = sphi 0, %s36
      %s53 = sphi 0, %s37
      %s59 = sphi 0, %s61
      %s62 = sphi 0, %s59
      %s63 = sphi 0, %s62
      %s79 = sphi 0, %s63
      %s83 = sphi 0, %s83
      %s85 = sphi 0, %s83
      %s86 = sphi 0, %s85
      %s100 = sphi 0, %s86
      %s104 = sphi 0, %s104
      %s106 = sphi 0, %s104
      %s107 = sphi 0, %s106
      %s121 = sphi 0, %s107
      %s125 = sphi 0, %s125
      %s127 = sphi 0, %s125
      %s128 = sphi 0, %s127
      %s142 = sphi 0, %s128
      %s146 = sphi 0, %s146
      %s148 = sphi 0, %s146
      %s149 = sphi 0, %s148
      %s163 = sphi 0, %s149
      %s167 = sphi 0, %s167
      %s169 = sphi 0, %s167
      %s170 = sphi 0, %s169
      %s184 = sphi 0, %s170
      %s190 = sphi 0, %s192
      %s193 = sphi 0, %s190
      %s194 = sphi 0, %s193
      %s210 = sphi 0, %s194
      %s216 = sphi 0, %s218
      %s219 = sphi 0, %s216
      %s220 = sphi 0, %s219
      %s236 = sphi 0, %s220
      %s242 = sphi 0, %s244
      %s245 = sphi 0, %s242
      %s246 = sphi 0, %s245
      %s262 = sphi 0, %s246
    $region4: #{tpu_custom_call.1} parent=1 // loop_header_branch
      %26 = sbr.rel (%p24) target = $region8
    $region5: #{tpu_custom_call.1} parent=1 // loop_body
      %s28 = ssub.s32 %s23, 1
      %s29 = ssub.s32 %s23, 2
      %s30 = sadd.s32 %s23, 1
      %s31 = ssub.s32 %s23, %s30
      %p32 = scmp.eq.s32.totalorder %s31, 0
      %s34 = sadd.s32 %s33, 1
      %s35 = scalar_select %p32, %s33, %s34
      %p38 = pneg %p32
      %p39 = scmp.eq.s32.totalorder %s23, 1
      %p40 = por %p38, %p39
      %p41 = scmp.ne.s32.totalorder %s33, %s36
      %p42 = scmp.eq.s32.totalorder %s23, 0
      %p43 = por %p41, %p42
      %p44 = scmp.ne.s32.totalorder %s33, %s36
      %p45 = scmp.eq.s32.totalorder %s28, 1
      %p46 = por %p44, %p45
      %p47 = scmp.ne.s32.totalorder %s36, %s37
      %p48 = scmp.eq.s32.totalorder %s28, 0
      %p49 = por %p47, %p48
      %p50 = scmp.ne.s32.totalorder %s36, %s37
      %p51 = scmp.eq.s32.totalorder %s29, 1
      %p52 = por %p50, %p51
      %p54 = scmp.ne.s32.totalorder %s37, %s53
      %p55 = scmp.eq.s32.totalorder %s29, 0
      %p56 = por %p54, %p55
      %s57 = ssub.s32 %s23, %s30
      %p58 = scmp.eq.s32.totalorder %s57, 0
      %s60 = sadd.s32 %s59, 1
      %s61 = scalar_select %p58, %s59, %s60
      %p64 = pneg %p58
      %p65 = scmp.eq.s32.totalorder %s23, 1
      %p66 = por %p64, %p65
      %p67 = scmp.ne.s32.totalorder %s59, %s62
      %p68 = scmp.eq.s32.totalorder %s23, 0
      %p69 = por %p67, %p68
      %p70 = scmp.ne.s32.totalorder %s59, %s62
      %p71 = scmp.eq.s32.totalorder %s28, 1
      %p72 = por %p70, %p71
      %p73 = scmp.ne.s32.totalorder %s62, %s63
      %p74 = scmp.eq.s32.totalorder %s28, 0
      %p75 = por %p73, %p74
      %p76 = scmp.ne.s32.totalorder %s62, %s63
      %p77 = scmp.eq.s32.totalorder %s29, 1
      %p78 = por %p76, %p77
      %p80 = scmp.ne.s32.totalorder %s63, %s79
      %p81 = scmp.eq.s32.totalorder %s29, 0
      %p82 = por %p80, %p81
      %s84 = sadd.s32 %s83, 1
      %p87 = scmp.eq.s32.totalorder %s23, 1
      %p88 = scmp.ne.s32.totalorder %s83, %s85
      %p89 = scmp.eq.s32.totalorder %s23, 0
      %p90 = por %p88, %p89
      %p91 = scmp.ne.s32.totalorder %s83, %s85
      %p92 = scmp.eq.s32.totalorder %s28, 1
      %p93 = por %p91, %p92
      %p94 = scmp.ne.s32.totalorder %s85, %s86
      %p95 = scmp.eq.s32.totalorder %s28, 0
      %p96 = por %p94, %p95
      %p97 = scmp.ne.s32.totalorder %s85, %s86
      %p98 = scmp.eq.s32.totalorder %s29, 1
      %p99 = por %p97, %p98
      %p101 = scmp.ne.s32.totalorder %s86, %s100
      %p102 = scmp.eq.s32.totalorder %s29, 0
      %p103 = por %p101, %p102
      %s105 = sadd.s32 %s104, 1
      %p108 = scmp.eq.s32.totalorder %s23, 1
      %p109 = scmp.ne.s32.totalorder %s104, %s106
      %p110 = scmp.eq.s32.totalorder %s23, 0
      %p111 = por %p109, %p110
      %p112 = scmp.ne.s32.totalorder %s104, %s106
      %p113 = scmp.eq.s32.totalorder %s28, 1
      %p114 = por %p112, %p113
      %p115 = scmp.ne.s32.totalorder %s106, %s107
      %p116 = scmp.eq.s32.totalorder %s28, 0
      %p117 = por %p115, %p116
      %p118 = scmp.ne.s32.totalorder %s106, %s107
      %p119 = scmp.eq.s32.totalorder %s29, 1
      %p120 = por %p118, %p119
      %p122 = scmp.ne.s32.totalorder %s107, %s121
      %p123 = scmp.eq.s32.totalorder %s29, 0
      %p124 = por %p122, %p123
      %s126 = sadd.s32 %s125, 1
      %p129 = scmp.eq.s32.totalorder %s23, 1
      %p130 = scmp.ne.s32.totalorder %s125, %s127
      %p131 = scmp.eq.s32.totalorder %s23, 0
      %p132 = por %p130, %p131
      %p133 = scmp.ne.s32.totalorder %s125, %s127
      %p134 = scmp.eq.s32.totalorder %s28, 1
      %p135 = por %p133, %p134
      %p136 = scmp.ne.s32.totalorder %s127, %s128
      %p137 = scmp.eq.s32.totalorder %s28, 0
      %p138 = por %p136, %p137
      %p139 = scmp.ne.s32.totalorder %s127, %s128
      %p140 = scmp.eq.s32.totalorder %s29, 1
      %p141 = por %p139, %p140
      %p143 = scmp.ne.s32.totalorder %s128, %s142
      %p144 = scmp.eq.s32.totalorder %s29, 0
      %p145 = por %p143, %p144
      %s147 = sadd.s32 %s146, 1
      %p150 = scmp.eq.s32.totalorder %s23, 1
      %p151 = scmp.ne.s32.totalorder %s146, %s148
      %p152 = scmp.eq.s32.totalorder %s23, 0
      %p153 = por %p151, %p152
      %p154 = scmp.ne.s32.totalorder %s146, %s148
      %p155 = scmp.eq.s32.totalorder %s28, 1
      %p156 = por %p154, %p155
      %p157 = scmp.ne.s32.totalorder %s148, %s149
      %p158 = scmp.eq.s32.totalorder %s28, 0
      %p159 = por %p157, %p158
      %p160 = scmp.ne.s32.totalorder %s148, %s149
      %p161 = scmp.eq.s32.totalorder %s29, 1
      %p162 = por %p160, %p161
      %p164 = scmp.ne.s32.totalorder %s149, %s163
      %p165 = scmp.eq.s32.totalorder %s29, 0
      %p166 = por %p164, %p165
      %s168 = sadd.s32 %s167, 1
      %p171 = scmp.eq.s32.totalorder %s23, 1
      %p172 = scmp.ne.s32.totalorder %s167, %s169
      %p173 = scmp.eq.s32.totalorder %s23, 0
      %p174 = por %p172, %p173
      %p175 = scmp.ne.s32.totalorder %s167, %s169
      %p176 = scmp.eq.s32.totalorder %s28, 1
      %p177 = por %p175, %p176
      %p178 = scmp.ne.s32.totalorder %s169, %s170
      %p179 = scmp.eq.s32.totalorder %s28, 0
      %p180 = por %p178, %p179
      %p181 = scmp.ne.s32.totalorder %s169, %s170
      %p182 = scmp.eq.s32.totalorder %s29, 1
      %p183 = por %p181, %p182
      %p185 = scmp.ne.s32.totalorder %s170, %s184
      %p186 = scmp.eq.s32.totalorder %s29, 0
      %p187 = por %p185, %p186
      %s188 = ssub.s32 %s23, %s30
      %p189 = scmp.eq.s32.totalorder %s188, 0
      %s191 = sadd.s32 %s190, 1
      %s192 = scalar_select %p189, %s190, %s191
      %p195 = pneg %p189
      %p196 = scmp.eq.s32.totalorder %s23, 1
      %p197 = por %p195, %p196
      %p198 = scmp.ne.s32.totalorder %s190, %s193
      %p199 = scmp.eq.s32.totalorder %s23, 0
      %p200 = por %p198, %p199
      %p201 = scmp.ne.s32.totalorder %s190, %s193
      %p202 = scmp.eq.s32.totalorder %s28, 1
      %p203 = por %p201, %p202
      %p204 = scmp.ne.s32.totalorder %s193, %s194
      %p205 = scmp.eq.s32.totalorder %s28, 0
      %p206 = por %p204, %p205
      %p207 = scmp.ne.s32.totalorder %s193, %s194
      %p208 = scmp.eq.s32.totalorder %s29, 1
      %p209 = por %p207, %p208
      %p211 = scmp.ne.s32.totalorder %s194, %s210
      %p212 = scmp.eq.s32.totalorder %s29, 0
      %p213 = por %p211, %p212
      %s214 = ssub.s32 %s23, %s30
      %p215 = scmp.eq.s32.totalorder %s214, 0
      %s217 = sadd.s32 %s216, 1
      %s218 = scalar_select %p215, %s216, %s217
      %p221 = pneg %p215
      %p222 = scmp.eq.s32.totalorder %s23, 1
      %p223 = por %p221, %p222
      %p224 = scmp.ne.s32.totalorder %s216, %s219
      %p225 = scmp.eq.s32.totalorder %s23, 0
      %p226 = por %p224, %p225
      %p227 = scmp.ne.s32.totalorder %s216, %s219
      %p228 = scmp.eq.s32.totalorder %s28, 1
      %p229 = por %p227, %p228
      %p230 = scmp.ne.s32.totalorder %s219, %s220
      %p231 = scmp.eq.s32.totalorder %s28, 0
      %p232 = por %p230, %p231
      %p233 = scmp.ne.s32.totalorder %s219, %s220
      %p234 = scmp.eq.s32.totalorder %s29, 1
      %p235 = por %p233, %p234
      %p237 = scmp.ne.s32.totalorder %s220, %s236
      %p238 = scmp.eq.s32.totalorder %s29, 0
      %p239 = por %p237, %p238
      %s240 = ssub.s32 %s23, %s30
      %p241 = scmp.eq.s32.totalorder %s240, 0
      %s243 = sadd.s32 %s242, 1
      %s244 = scalar_select %p241, %s242, %s243
      %p247 = pneg %p241
      %p248 = scmp.eq.s32.totalorder %s23, 1
      %p249 = por %p247, %p248
      %p250 = scmp.ne.s32.totalorder %s242, %s245
      %p251 = scmp.eq.s32.totalorder %s23, 0
      %p252 = por %p250, %p251
      %p253 = scmp.ne.s32.totalorder %s242, %s245
      %p254 = scmp.eq.s32.totalorder %s28, 1
      %p255 = por %p253, %p254
      %p256 = scmp.ne.s32.totalorder %s245, %s246
      %p257 = scmp.eq.s32.totalorder %s28, 0
      %p258 = por %p256, %p257
      %p259 = scmp.ne.s32.totalorder %s245, %s246
      %p260 = scmp.eq.s32.totalorder %s29, 1
      %p261 = por %p259, %p260
      %p263 = scmp.ne.s32.totalorder %s246, %s262
      %p264 = scmp.eq.s32.totalorder %s29, 0
      %p265 = por %p263, %p264
      %p266 = scmp.le.s32.totalorder 1, %s23
      %p267 = scmp.lt.s32.totalorder %s23, 3
      %p268 = pnand %p266, %p267
      %p269 = pneg %p268
      // Predicated region
      $region9: #{tpu_custom_call.1} parent=5 // pred_check
        _
      $region10: #{tpu_custom_call.1} parent=5 // pred_check_branch
        %271 = sbr.rel (%p268) target = $region12
      $region11: #{tpu_custom_call.1} parent=5 // pred_region
        %s272 = ssub.s32 %s23, 1
        // Predicated region
        $region13: #{tpu_custom_call.1} parent=11 // pred_check
          %p273 = pneg %p96
        $region14: #{tpu_custom_call.1} parent=11 // pred_check_branch
          %275 = sbr.rel (%p273) target = $region16
        $region15: #{tpu_custom_call.1} parent=11 // pred_region
          %s277 = ssub.s32 1024, 1024
          %278 = vsyncadd [#allocation4], %s277
          %s279 = sshll.u32 [#allocation3], 4
          %s280 = int_to_ptr.vmem [resolvable:$true] %s279
          %285 = dma.hbm_to_vmem [thread:$0]  %s2, 1024, %s280, [#allocation4], 128, 128, 8
        $region16: #{tpu_custom_call.1} parent=11 // pred_fallthru
          _
        // Predicated region
        $region17: #{tpu_custom_call.1} parent=11 // pred_check
          %p286 = pneg %p117
        $region18: #{tpu_custom_call.1} parent=11 // pred_check_branch
          %288 = sbr.rel (%p286) target = $region20
        $region19: #{tpu_custom_call.1} parent=11 // pred_region
          _
        $region20: #{tpu_custom_call.1} parent=11 // pred_fallthru
          _
        // Predicated region
        $region21: #{tpu_custom_call.1} parent=11 // pred_check
          %p289 = pneg %p138
        $region22: #{tpu_custom_call.1} parent=11 // pred_check_branch
          %291 = sbr.rel (%p289) target = $region24
        $region23: #{tpu_custom_call.1} parent=11 // pred_region
          _
        $region24: #{tpu_custom_call.1} parent=11 // pred_fallthru
          _
        // Predicated region
        $region25: #{tpu_custom_call.1} parent=11 // pred_check
          %p292 = pneg %p159
        $region26: #{tpu_custom_call.1} parent=11 // pred_check_branch
          %294 = sbr.rel (%p292) target = $region28
        $region27: #{tpu_custom_call.1} parent=11 // pred_region
          _
        $region28: #{tpu_custom_call.1} parent=11 // pred_fallthru
          _
        // Predicated region
        $region29: #{tpu_custom_call.1} parent=11 // pred_check
          %p295 = pneg %p180
        $region30: #{tpu_custom_call.1} parent=11 // pred_check_branch
          %297 = sbr.rel (%p295) target = $region32
        $region31: #{tpu_custom_call.1} parent=11 // pred_region
          _
        $region32: #{tpu_custom_call.1} parent=11 // pred_fallthru
          _
      $region12: #{tpu_custom_call.1} parent=5 // pred_fallthru
        _
      %p298 = scmp.lt.s32.totalorder %s23, 2
      // Predicated region
      $region33: #{tpu_custom_call.1} parent=5 // pred_check
        %p299 = pneg %p298
      $region34: #{tpu_custom_call.1} parent=5 // pred_check_branch
        %301 = sbr.rel (%p299) target = $region36
      $region35: #{tpu_custom_call.1} parent=5 // pred_region
        // Predicated region
        $region37: #{tpu_custom_call.1} parent=35 // pred_check
          %p302 = pneg %p43
        $region38: #{tpu_custom_call.1} parent=35 // pred_check_branch
          %304 = sbr.rel (%p302) target = $region40
        $region39: #{tpu_custom_call.1} parent=35 // pred_region
          %s305 = smul.u32 4, %s23
          %p306 = scmp.lt.s32.totalorder %s305, 7
          %s307 = scalar_select %p306, %s305, 7
          %s308 = smul.addr %s307, 2
          %s309 = smul.addr %s308, 8
          %s310 = scalar_lea.vmem %s0, %s309
          %s311 = smul.u32 4, %s23
        $region40: #{tpu_custom_call.1} parent=35 // pred_fallthru
          _
        // Predicated region
        $region41: #{tpu_custom_call.1} parent=35 // pred_check
          %p312 = pneg %p69
        $region42: #{tpu_custom_call.1} parent=35 // pred_check_branch
          %314 = sbr.rel (%p312) target = $region44
        $region43: #{tpu_custom_call.1} parent=35 // pred_region
          %s315 = smul.u32 4, %s23
          %p316 = scmp.lt.s32.totalorder %s315, 7
          %s317 = scalar_select %p316, %s315, 7
          %s318 = smul.addr %s317, 2
          %s319 = smul.addr %s318, 8
          %s320 = scalar_lea.vmem %s1, %s319
          %s321 = smul.u32 4, %s23
        $region44: #{tpu_custom_call.1} parent=35 // pred_fallthru
          _
      $region36: #{tpu_custom_call.1} parent=5 // pred_fallthru
        _
      %p322 = scmp.le.s32.totalorder 1, %s23
      %p323 = scmp.lt.s32.totalorder %s23, 3
      %p324 = pnand %p322, %p323
      %p325 = pneg %p324
      // Predicated region
      $region45: #{tpu_custom_call.1} parent=5 // pred_check
        _
      $region46: #{tpu_custom_call.1} parent=5 // pred_check_branch
        %327 = sbr.rel (%p324) target = $region48
      $region47: #{tpu_custom_call.1} parent=5 // pred_region
        %s328 = ssub.s32 %s23, 1
        // Predicated region
        $region49: #{tpu_custom_call.1} parent=47 // pred_check
          %p329 = pneg %p96
        $region50: #{tpu_custom_call.1} parent=47 // pred_check_branch
          %331 = sbr.rel (%p329) target = $region52
        $region51: #{tpu_custom_call.1} parent=47 // pred_region
          %332 = dma.done [#allocation4], 1024
        $region52: #{tpu_custom_call.1} parent=47 // pred_fallthru
          _
        %s333 = smul.u32 4, %s28
        %p334 = scmp.lt.s32.totalorder %s333, 7
        %s335 = scalar_select %p334, %s333, 7
        %s336 = smul.addr %s335, 2
        %s337 = smul.addr %s336, 8
        %s338 = scalar_lea.vmem %s0, %s337
        %p339 = pneg %p49
        %p340 = pneg %p46
        %s341 = smul.u32 4, %s28
        %p342 = scmp.lt.s32.totalorder %s341, 7
        %s343 = scalar_select %p342, %s341, 7
        %s344 = smul.addr %s343, 2
        %s345 = smul.addr %s344, 8
        %s346 = scalar_lea.vmem %s1, %s345
        %p347 = pneg %p75
        %p348 = pneg %p72
        %p349 = pneg %p96
        %p350 = pneg %p93
        %p351 = pneg %p117
        %p352 = pneg %p114
        %p353 = pneg %p138
        %p354 = pneg %p135
        %p355 = pneg %p159
        %p356 = pneg %p156
        %p357 = pneg %p180
        %p358 = pneg %p177
        %p359 = pneg %p206
        %p360 = pneg %p203
        %s361 = sand.u32 %s193, 1
        %s362 = scalar_lea.sflag [#allocation5], %s361
        %s363 = sand.u32 %s193, 1
        %s364 = smul.addr %s363, 4
        %s365 = scalar_lea.vmem [#allocation6], %s364
        %p366 = pneg %p232
        %p367 = pneg %p229
        %s368 = sand.u32 %s28, 1
        %s369 = scalar_lea.sflag [#allocation8], %s368
        %s370 = sand.u32 %s219, 1
        %s371 = smul.addr %s370, 4
        %s372 = scalar_lea.vmem [#allocation7], %s371
        %p373 = pneg %p258
        %p374 = pneg %p255
        %s375 = sand.u32 %s28, 1
        %s376 = scalar_lea.sflag [#allocation8], %s375
        %s377 = sand.u32 %s245, 1
        %s378 = smul.addr %s377, 4
        %s379 = scalar_lea.vmem [#allocation9], %s378
        %s380 = smul.u32 4, %s28
        %p381 = scmp.lt.s32.totalorder %s380, 7
        %s382 = scalar_select %p381, %s380, 7
        %s383 = smul.addr %s382, 2
        %s384 = smul.addr %s383, 8
        %s385 = scalar_lea.vmem %s0, %s384
        %s386 = smul.u32 4, %s28
        %s387 = smul.u32 4, %s28
        %p388 = scmp.lt.s32.totalorder %s387, 7
        %s389 = scalar_select %p388, %s387, 7
        %s390 = smul.addr %s389, 2
        %s391 = smul.addr %s390, 8
        %s392 = scalar_lea.vmem %s1, %s391
        %s393 = smul.u32 4, %s28
        %s394 = smul.u32 4, %s28
        %s395 = smul.u32 4, %s28
        %s396 = smul.u32 4, %s28
        %v397 = vld [vmem:[%s392] sm:$0xff]
        %v398 = vld [vmem:[%s392 + $0x8] sm:$0xff]
        %v399 = vld [vmem:[%s392 + $0x10] sm:$0xff]
        %v400 = vld [vmem:[%s392 + $0x18] sm:$0xff]
        %v401 = vld [vmem:[%s392 + $0x20] sm:$0xff]
        %v402 = vld [vmem:[%s392 + $0x28] sm:$0xff]
        %v403 = vld [vmem:[%s392 + $0x30] sm:$0xff]
        %v404 = vld [vmem:[%s392 + $0x38] sm:$0xff]
        %v405 = vld [vmem:[#allocation3] sm:$0xff]
        %v406 = vld [vmem:[#allocation3 + $0x8] sm:$0xff]
        %408 = vset.pattern.permute.xlu0 0
        %409 = vperm.xlu0 %408, %v397
        %v410 = vpop.permute.xlu0 %409
        %413 = vset.pattern.permute.xlu0 0
        %414 = vperm.xlu0 %413, %v398
        %v415 = vpop.permute.xlu0 %414
        %418 = vset.pattern.permute.xlu0 0
        %419 = vperm.xlu0 %418, %v399
        %v420 = vpop.permute.xlu0 %419
        %423 = vset.pattern.permute.xlu0 0
        %424 = vperm.xlu0 %423, %v400
        %v425 = vpop.permute.xlu0 %424
        %428 = vset.pattern.permute.xlu0 0
        %429 = vperm.xlu0 %428, %v401
        %v430 = vpop.permute.xlu0 %429
        %433 = vset.pattern.permute.xlu0 0
        %434 = vperm.xlu0 %433, %v402
        %v435 = vpop.permute.xlu0 %434
        %438 = vset.pattern.permute.xlu0 0
        %439 = vperm.xlu0 %438, %v403
        %v440 = vpop.permute.xlu0 %439
        %443 = vset.pattern.permute.xlu0 0
        %444 = vperm.xlu0 %443, %v404
        %v445 = vpop.permute.xlu0 %444
        %v447 = vmul.f32 %v410, %v405
        %v448 = vmul.f32 %v415, %v406
        %v449 = vmul.f32 %v420, %v405
        %v450 = vmul.f32 %v425, %v406
        %v451 = vmul.f32 %v430, %v405
        %v452 = vmul.f32 %v435, %v406
        %v453 = vmul.f32 %v440, %v405
        %v454 = vmul.f32 %v445, %v406
        %s455 = scalar_lea.vmem [#allocation3], 16
        %v456 = vld [vmem:[%s455] sm:$0xff]
        %v457 = vld [vmem:[%s455 + $0x8] sm:$0xff]
        %458 = vset.pattern.permute.xlu0 1
        %459 = vperm.xlu0 %458, %v397
        %v460 = vpop.permute.xlu0 %459
        %462 = vset.pattern.permute.xlu0 1
        %463 = vperm.xlu0 %462, %v398
        %v464 = vpop.permute.xlu0 %463
        %466 = vset.pattern.permute.xlu0 1
        %467 = vperm.xlu0 %466, %v399
        %v468 = vpop.permute.xlu0 %467
        %470 = vset.pattern.permute.xlu0 1
        %471 = vperm.xlu0 %470, %v400
        %v472 = vpop.permute.xlu0 %471
        %474 = vset.pattern.permute.xlu0 1
        %475 = vperm.xlu0 %474, %v401
        %v476 = vpop.permute.xlu0 %475
        %478 = vset.pattern.permute.xlu0 1
        %479 = vperm.xlu0 %478, %v402
        %v480 = vpop.permute.xlu0 %479
        %482 = vset.pattern.permute.xlu0 1
        %483 = vperm.xlu0 %482, %v403
        %v484 = vpop.permute.xlu0 %483
        %486 = vset.pattern.permute.xlu0 1
        %487 = vperm.xlu0 %486, %v404
        %v488 = vpop.permute.xlu0 %487
        %v490 = vmul.f32 %v460, %v456
        %v491 = vmul.f32 %v464, %v457
        %v492 = vmul.f32 %v468, %v456
        %v493 = vmul.f32 %v472, %v457
        %v494 = vmul.f32 %v476, %v456
        %v495 = vmul.f32 %v480, %v457
        %v496 = vmul.f32 %v484, %v456
        %v497 = vmul.f32 %v488, %v457
        %v498 = vadd.f32 %v447, %v490
        %v499 = vadd.f32 %v448, %v491
        %v500 = vadd.f32 %v449, %v492
        %v501 = vadd.f32 %v450, %v493
        %v502 = vadd.f32 %v451, %v494
        %v503 = vadd.f32 %v452, %v495
        %v504 = vadd.f32 %v453, %v496
        %v505 = vadd.f32 %v454, %v497
        %s506 = scalar_lea.vmem [#allocation3], 32
        %v507 = vld [vmem:[%s506] sm:$0xff]
        %v508 = vld [vmem:[%s506 + $0x8] sm:$0xff]
        %509 = vset.pattern.permute.xlu0 2
        %510 = vperm.xlu0 %509, %v397
        %v511 = vpop.permute.xlu0 %510
        %513 = vset.pattern.permute.xlu0 2
        %514 = vperm.xlu0 %513, %v398
        %v515 = vpop.permute.xlu0 %514
        %517 = vset.pattern.permute.xlu0 2
        %518 = vperm.xlu0 %517, %v399
        %v519 = vpop.permute.xlu0 %518
        %521 = vset.pattern.permute.xlu0 2
        %522 = vperm.xlu0 %521, %v400
        %v523 = vpop.permute.xlu0 %522
        %525 = vset.pattern.permute.xlu0 2
        %526 = vperm.xlu0 %525, %v401
        %v527 = vpop.permute.xlu0 %526
        %529 = vset.pattern.permute.xlu0 2
        %530 = vperm.xlu0 %529, %v402
        %v531 = vpop.permute.xlu0 %530
        %533 = vset.pattern.permute.xlu0 2
        %534 = vperm.xlu0 %533, %v403
        %v535 = vpop.permute.xlu0 %534
        %537 = vset.pattern.permute.xlu0 2
        %538 = vperm.xlu0 %537, %v404
        %v539 = vpop.permute.xlu0 %538
        %v541 = vmul.f32 %v511, %v507
        %v542 = vmul.f32 %v515, %v508
        %v543 = vmul.f32 %v519, %v507
        %v544 = vmul.f32 %v523, %v508
        %v545 = vmul.f32 %v527, %v507
        %v546 = vmul.f32 %v531, %v508
        %v547 = vmul.f32 %v535, %v507
        %v548 = vmul.f32 %v539, %v508
        %v549 = vadd.f32 %v498, %v541
        %v550 = vadd.f32 %v499, %v542
        %v551 = vadd.f32 %v500, %v543
        %v552 = vadd.f32 %v501, %v544
        %v553 = vadd.f32 %v502, %v545
        %v554 = vadd.f32 %v503, %v546
        %v555 = vadd.f32 %v504, %v547
        %v556 = vadd.f32 %v505, %v548
        %s557 = scalar_lea.vmem [#allocation3], 48
        %v558 = vld [vmem:[%s557] sm:$0xff]
        %v559 = vld [vmem:[%s557 + $0x8] sm:$0xff]
        %560 = vset.pattern.permute.xlu0 3
        %561 = vperm.xlu0 %560, %v397
        %v562 = vpop.permute.xlu0 %561
        %564 = vset.pattern.permute.xlu0 3
        %565 = vperm.xlu0 %564, %v398
        %v566 = vpop.permute.xlu0 %565
        %568 = vset.pattern.permute.xlu0 3
        %569 = vperm.xlu0 %568, %v399
        %v570 = vpop.permute.xlu0 %569
        %572 = vset.pattern.permute.xlu0 3
        %573 = vperm.xlu0 %572, %v400
        %v574 = vpop.permute.xlu0 %573
        %576 = vset.pattern.permute.xlu0 3
        %577 = vperm.xlu0 %576, %v401
        %v578 = vpop.permute.xlu0 %577
        %580 = vset.pattern.permute.xlu0 3
        %581 = vperm.xlu0 %580, %v402
        %v582 = vpop.permute.xlu0 %581
        %584 = vset.pattern.permute.xlu0 3
        %585 = vperm.xlu0 %584, %v403
        %v586 = vpop.permute.xlu0 %585
        %588 = vset.pattern.permute.xlu0 3
        %589 = vperm.xlu0 %588, %v404
        %v590 = vpop.permute.xlu0 %589
        %v592 = vmul.f32 %v562, %v558
        %v593 = vmul.f32 %v566, %v559
        %v594 = vmul.f32 %v570, %v558
        %v595 = vmul.f32 %v574, %v559
        %v596 = vmul.f32 %v578, %v558
        %v597 = vmul.f32 %v582, %v559
        %v598 = vmul.f32 %v586, %v558
        %v599 = vmul.f32 %v590, %v559
        %v600 = vadd.f32 %v549, %v592
        %v601 = vadd.f32 %v550, %v593
        %v602 = vadd.f32 %v551, %v594
        %v603 = vadd.f32 %v552, %v595
        %v604 = vadd.f32 %v553, %v596
        %v605 = vadd.f32 %v554, %v597
        %v606 = vadd.f32 %v555, %v598
        %v607 = vadd.f32 %v556, %v599
        %v608 = vld [vmem:[%s3] sm:$0xff]
        %v609 = vld [vmem:[%s3 + $0x8] sm:$0xff]
        %v610 = vadd.f32 %v600, %v608
        %v611 = vadd.f32 %v601, %v609
        %v612 = vadd.f32 %v602, %v608
        %v613 = vadd.f32 %v603, %v609
        %v614 = vadd.f32 %v604, %v608
        %v615 = vadd.f32 %v605, %v609
        %v616 = vadd.f32 %v606, %v608
        %v617 = vadd.f32 %v607, %v609
        %vm618 = vcmask 261120
        %619 = vst.msk [vmem:[#allocation2] sm:$0xff] %vm618, %v610
        %620 = vst.msk [vmem:[#allocation2 + $0x8] sm:$0xff] %vm618, %v611
        %621 = vst.msk [vmem:[#allocation2 + $0x10] sm:$0xff] %vm618, %v612
        %622 = vst.msk [vmem:[#allocation2 + $0x18] sm:$0xff] %vm618, %v613
        %623 = vst.msk [vmem:[#allocation2 + $0x20] sm:$0xff] %vm618, %v614
        %624 = vst.msk [vmem:[#allocation2 + $0x28] sm:$0xff] %vm618, %v615
        %625 = vst.msk [vmem:[#allocation2 + $0x30] sm:$0xff] %vm618, %v616
        %626 = vst.msk [vmem:[#allocation2 + $0x38] sm:$0xff] %vm618, %v617
        %v627 = vld [vmem:[%s392] sm:$0xff]
        %v628 = vld [vmem:[%s392 + $0x8] sm:$0xff]
        %v629 = vld [vmem:[%s392 + $0x10] sm:$0xff]
        %v630 = vld [vmem:[%s392 + $0x18] sm:$0xff]
        %v631 = vld [vmem:[%s392 + $0x20] sm:$0xff]
        %v632 = vld [vmem:[%s392 + $0x28] sm:$0xff]
        %v633 = vld [vmem:[%s392 + $0x30] sm:$0xff]
        %v634 = vld [vmem:[%s392 + $0x38] sm:$0xff]
        %v635 = vld [vmem:[#allocation3] sm:$0xff]
        %v636 = vld [vmem:[#allocation3 + $0x8] sm:$0xff]
        %638 = vset.pattern.permute.xlu0 4
        %639 = vperm.xlu0 %638, %v627
        %v640 = vpop.permute.xlu0 %639
        %643 = vset.pattern.permute.xlu0 4
        %644 = vperm.xlu0 %643, %v628
        %v645 = vpop.permute.xlu0 %644
        %648 = vset.pattern.permute.xlu0 4
        %649 = vperm.xlu0 %648, %v629
        %v650 = vpop.permute.xlu0 %649
        %653 = vset.pattern.permute.xlu0 4
        %654 = vperm.xlu0 %653, %v630
        %v655 = vpop.permute.xlu0 %654
        %658 = vset.pattern.permute.xlu0 4
        %659 = vperm.xlu0 %658, %v631
        %v660 = vpop.permute.xlu0 %659
        %663 = vset.pattern.permute.xlu0 4
        %664 = vperm.xlu0 %663, %v632
        %v665 = vpop.permute.xlu0 %664
        %668 = vset.pattern.permute.xlu0 4
        %669 = vperm.xlu0 %668, %v633
        %v670 = vpop.permute.xlu0 %669
        %673 = vset.pattern.permute.xlu0 4
        %674 = vperm.xlu0 %673, %v634
        %v675 = vpop.permute.xlu0 %674
        %v677 = vmul.f32 %v640, %v635
        %v678 = vmul.f32 %v645, %v636
        %v679 = vmul.f32 %v650, %v635
        %v680 = vmul.f32 %v655, %v636
        %v681 = vmul.f32 %v660, %v635
        %v682 = vmul.f32 %v665, %v636
        %v683 = vmul.f32 %v670, %v635
        %v684 = vmul.f32 %v675, %v636
        %v685 = vld [vmem:[%s455] sm:$0xff]
        %v686 = vld [vmem:[%s455 + $0x8] sm:$0xff]
        %687 = vset.pattern.permute.xlu0 5
        %688 = vperm.xlu0 %687, %v627
        %v689 = vpop.permute.xlu0 %688
        %691 = vset.pattern.permute.xlu0 5
        %692 = vperm.xlu0 %691, %v628
        %v693 = vpop.permute.xlu0 %692
        %695 = vset.pattern.permute.xlu0 5
        %696 = vperm.xlu0 %695, %v629
        %v697 = vpop.permute.xlu0 %696
        %699 = vset.pattern.permute.xlu0 5
        %700 = vperm.xlu0 %699, %v630
        %v701 = vpop.permute.xlu0 %700
        %703 = vset.pattern.permute.xlu0 5
        %704 = vperm.xlu0 %703, %v631
        %v705 = vpop.permute.xlu0 %704
        %707 = vset.pattern.permute.xlu0 5
        %708 = vperm.xlu0 %707, %v632
        %v709 = vpop.permute.xlu0 %708
        %711 = vset.pattern.permute.xlu0 5
        %712 = vperm.xlu0 %711, %v633
        %v713 = vpop.permute.xlu0 %712
        %715 = vset.pattern.permute.xlu0 5
        %716 = vperm.xlu0 %715, %v634
        %v717 = vpop.permute.xlu0 %716
        %v719 = vmul.f32 %v689, %v685
        %v720 = vmul.f32 %v693, %v686
        %v721 = vmul.f32 %v697, %v685
        %v722 = vmul.f32 %v701, %v686
        %v723 = vmul.f32 %v705, %v685
        %v724 = vmul.f32 %v709, %v686
        %v725 = vmul.f32 %v713, %v685
        %v726 = vmul.f32 %v717, %v686
        %v727 = vadd.f32 %v677, %v719
        %v728 = vadd.f32 %v678, %v720
        %v729 = vadd.f32 %v679, %v721
        %v730 = vadd.f32 %v680, %v722
        %v731 = vadd.f32 %v681, %v723
        %v732 = vadd.f32 %v682, %v724
        %v733 = vadd.f32 %v683, %v725
        %v734 = vadd.f32 %v684, %v726
        %v735 = vld [vmem:[%s506] sm:$0xff]
        %v736 = vld [vmem:[%s506 + $0x8] sm:$0xff]
        %737 = vset.pattern.permute.xlu0 6
        %738 = vperm.xlu0 %737, %v627
        %v739 = vpop.permute.xlu0 %738
        %741 = vset.pattern.permute.xlu0 6
        %742 = vperm.xlu0 %741, %v628
        %v743 = vpop.permute.xlu0 %742
        %745 = vset.pattern.permute.xlu0 6
        %746 = vperm.xlu0 %745, %v629
        %v747 = vpop.permute.xlu0 %746
        %749 = vset.pattern.permute.xlu0 6
        %750 = vperm.xlu0 %749, %v630
        %v751 = vpop.permute.xlu0 %750
        %753 = vset.pattern.permute.xlu0 6
        %754 = vperm.xlu0 %753, %v631
        %v755 = vpop.permute.xlu0 %754
        %757 = vset.pattern.permute.xlu0 6
        %758 = vperm.xlu0 %757, %v632
        %v759 = vpop.permute.xlu0 %758
        %761 = vset.pattern.permute.xlu0 6
        %762 = vperm.xlu0 %761, %v633
        %v763 = vpop.permute.xlu0 %762
        %765 = vset.pattern.permute.xlu0 6
        %766 = vperm.xlu0 %765, %v634
        %v767 = vpop.permute.xlu0 %766
        %v769 = vmul.f32 %v739, %v735
        %v770 = vmul.f32 %v743, %v736
        %v771 = vmul.f32 %v747, %v735
        %v772 = vmul.f32 %v751, %v736
        %v773 = vmul.f32 %v755, %v735
        %v774 = vmul.f32 %v759, %v736
        %v775 = vmul.f32 %v763, %v735
        %v776 = vmul.f32 %v767, %v736
        %v777 = vadd.f32 %v727, %v769
        %v778 = vadd.f32 %v728, %v770
        %v779 = vadd.f32 %v729, %v771
        %v780 = vadd.f32 %v730, %v772
        %v781 = vadd.f32 %v731, %v773
        %v782 = vadd.f32 %v732, %v774
        %v783 = vadd.f32 %v733, %v775
        %v784 = vadd.f32 %v734, %v776
        %v785 = vld [vmem:[%s557] sm:$0xff]
        %v786 = vld [vmem:[%s557 + $0x8] sm:$0xff]
        %787 = vset.pattern.permute.xlu0 7
        %788 = vperm.xlu0 %787, %v627
        %v789 = vpop.permute.xlu0 %788
        %791 = vset.pattern.permute.xlu0 7
        %792 = vperm.xlu0 %791, %v628
        %v793 = vpop.permute.xlu0 %792
        %795 = vset.pattern.permute.xlu0 7
        %796 = vperm.xlu0 %795, %v629
        %v797 = vpop.permute.xlu0 %796
        %799 = vset.pattern.permute.xlu0 7
        %800 = vperm.xlu0 %799, %v630
        %v801 = vpop.permute.xlu0 %800
        %803 = vset.pattern.permute.xlu0 7
        %804 = vperm.xlu0 %803, %v631
        %v805 = vpop.permute.xlu0 %804
        %807 = vset.pattern.permute.xlu0 7
        %808 = vperm.xlu0 %807, %v632
        %v809 = vpop.permute.xlu0 %808
        %811 = vset.pattern.permute.xlu0 7
        %812 = vperm.xlu0 %811, %v633
        %v813 = vpop.permute.xlu0 %812
        %815 = vset.pattern.permute.xlu0 7
        %816 = vperm.xlu0 %815, %v634
        %v817 = vpop.permute.xlu0 %816
        %v819 = vmul.f32 %v789, %v785
        %v820 = vmul.f32 %v793, %v786
        %v821 = vmul.f32 %v797, %v785
        %v822 = vmul.f32 %v801, %v786
        %v823 = vmul.f32 %v805, %v785
        %v824 = vmul.f32 %v809, %v786
        %v825 = vmul.f32 %v813, %v785
        %v826 = vmul.f32 %v817, %v786
        %v827 = vadd.f32 %v777, %v819
        %v828 = vadd.f32 %v778, %v820
        %v829 = vadd.f32 %v779, %v821
        %v830 = vadd.f32 %v780, %v822
        %v831 = vadd.f32 %v781, %v823
        %v832 = vadd.f32 %v782, %v824
        %v833 = vadd.f32 %v783, %v825
        %v834 = vadd.f32 %v784, %v826
        %v835 = vld [vmem:[%s3] sm:$0xff]
        %v836 = vld [vmem:[%s3 + $0x8] sm:$0xff]
        %839 = vrot.lane.b32.xlu0 %v835, 96
        %v840 = vpop.permute.xlu0 %839
        %841 = vrot.lane.b32.xlu0 %v836, 96
        %v842 = vpop.permute.xlu0 %841
        %v845 = vadd.f32 %v827, %v840
        %v846 = vadd.f32 %v828, %v842
        %v847 = vadd.f32 %v829, %v840
        %v848 = vadd.f32 %v830, %v842
        %v849 = vadd.f32 %v831, %v840
        %v850 = vadd.f32 %v832, %v842
        %v851 = vadd.f32 %v833, %v840
        %v852 = vadd.f32 %v834, %v842
        %861 = vrot.lane.b32.xlu0 %v845, 32
        %v862 = vpop.permute.xlu0 %861
        %863 = vrot.lane.b32.xlu0 %v846, 32
        %v864 = vpop.permute.xlu0 %863
        %865 = vrot.lane.b32.xlu0 %v847, 32
        %v866 = vpop.permute.xlu0 %865
        %867 = vrot.lane.b32.xlu0 %v848, 32
        %v868 = vpop.permute.xlu0 %867
        %869 = vrot.lane.b32.xlu0 %v849, 32
        %v870 = vpop.permute.xlu0 %869
        %871 = vrot.lane.b32.xlu0 %v850, 32
        %v872 = vpop.permute.xlu0 %871
        %873 = vrot.lane.b32.xlu0 %v851, 32
        %v874 = vpop.permute.xlu0 %873
        %875 = vrot.lane.b32.xlu0 %v852, 32
        %v876 = vpop.permute.xlu0 %875
        %vm885 = vcmask 523520
        %886 = vst.msk [vmem:[#allocation2] sm:$0xff] %vm885, %v862
        %887 = vst.msk [vmem:[#allocation2 + $0x8] sm:$0xff] %vm885, %v864
        %888 = vst.msk [vmem:[#allocation2 + $0x10] sm:$0xff] %vm885, %v866
        %889 = vst.msk [vmem:[#allocation2 + $0x18] sm:$0xff] %vm885, %v868
        %890 = vst.msk [vmem:[#allocation2 + $0x20] sm:$0xff] %vm885, %v870
        %891 = vst.msk [vmem:[#allocation2 + $0x28] sm:$0xff] %vm885, %v872
        %892 = vst.msk [vmem:[#allocation2 + $0x30] sm:$0xff] %vm885, %v874
        %893 = vst.msk [vmem:[#allocation2 + $0x38] sm:$0xff] %vm885, %v876
        %v894 = vld [vmem:[%s392] sm:$0xff]
        %v895 = vld [vmem:[%s392 + $0x8] sm:$0xff]
        %v896 = vld [vmem:[%s392 + $0x10] sm:$0xff]
        %v897 = vld [vmem:[%s392 + $0x18] sm:$0xff]
        %v898 = vld [vmem:[%s392 + $0x20] sm:$0xff]
        %v899 = vld [vmem:[%s392 + $0x28] sm:$0xff]
        %v900 = vld [vmem:[%s392 + $0x30] sm:$0xff]
        %v901 = vld [vmem:[%s392 + $0x38] sm:$0xff]
        %v902 = vld [vmem:[#allocation3] sm:$0xff]
        %v903 = vld [vmem:[#allocation3 + $0x8] sm:$0xff]
        %905 = vset.pattern.permute.xlu0 8
        %906 = vperm.xlu0 %905, %v894
        %v907 = vpop.permute.xlu0 %906
        %910 = vset.pattern.permute.xlu0 8
        %911 = vperm.xlu0 %910, %v895
        %v912 = vpop.permute.xlu0 %911
        %915 = vset.pattern.permute.xlu0 8
        %916 = vperm.xlu0 %915, %v896
        %v917 = vpop.permute.xlu0 %916
        %920 = vset.pattern.permute.xlu0 8
        %921 = vperm.xlu0 %920, %v897
        %v922 = vpop.permute.xlu0 %921
        %925 = vset.pattern.permute.xlu0 8
        %926 = vperm.xlu0 %925, %v898
        %v927 = vpop.permute.xlu0 %926
        %930 = vset.pattern.permute.xlu0 8
        %931 = vperm.xlu0 %930, %v899
        %v932 = vpop.permute.xlu0 %931
        %935 = vset.pattern.permute.xlu0 8
        %936 = vperm.xlu0 %935, %v900
        %v937 = vpop.permute.xlu0 %936
        %940 = vset.pattern.permute.xlu0 8
        %941 = vperm.xlu0 %940, %v901
        %v942 = vpop.permute.xlu0 %941
        %v944 = vmul.f32 %v907, %v902
        %v945 = vmul.f32 %v912, %v903
        %v946 = vmul.f32 %v917, %v902
        %v947 = vmul.f32 %v922, %v903
        %v948 = vmul.f32 %v927, %v902
        %v949 = vmul.f32 %v932, %v903
        %v950 = vmul.f32 %v937, %v902
        %v951 = vmul.f32 %v942, %v903
        %v952 = vld [vmem:[%s455] sm:$0xff]
        %v953 = vld [vmem:[%s455 + $0x8] sm:$0xff]
        %954 = vset.pattern.permute.xlu0 9
        %955 = vperm.xlu0 %954, %v894
        %v956 = vpop.permute.xlu0 %955
        %958 = vset.pattern.permute.xlu0 9
        %959 = vperm.xlu0 %958, %v895
        %v960 = vpop.permute.xlu0 %959
        %962 = vset.pattern.permute.xlu0 9
        %963 = vperm.xlu0 %962, %v896
        %v964 = vpop.permute.xlu0 %963
        %966 = vset.pattern.permute.xlu0 9
        %967 = vperm.xlu0 %966, %v897
        %v968 = vpop.permute.xlu0 %967
        %970 = vset.pattern.permute.xlu0 9
        %971 = vperm.xlu0 %970, %v898
        %v972 = vpop.permute.xlu0 %971
        %974 = vset.pattern.permute.xlu0 9
        %975 = vperm.xlu0 %974, %v899
        %v976 = vpop.permute.xlu0 %975
        %978 = vset.pattern.permute.xlu0 9
        %979 = vperm.xlu0 %978, %v900
        %v980 = vpop.permute.xlu0 %979
        %982 = vset.pattern.permute.xlu0 9
        %983 = vperm.xlu0 %982, %v901
        %v984 = vpop.permute.xlu0 %983
        %v986 = vmul.f32 %v956, %v952
        %v987 = vmul.f32 %v960, %v953
        %v988 = vmul.f32 %v964, %v952
        %v989 = vmul.f32 %v968, %v953
        %v990 = vmul.f32 %v972, %v952
        %v991 = vmul.f32 %v976, %v953
        %v992 = vmul.f32 %v980, %v952
        %v993 = vmul.f32 %v984, %v953
        %v994 = vadd.f32 %v944, %v986
        %v995 = vadd.f32 %v945, %v987
        %v996 = vadd.f32 %v946, %v988
        %v997 = vadd.f32 %v947, %v989
        %v998 = vadd.f32 %v948, %v990
        %v999 = vadd.f32 %v949, %v991
        %v1000 = vadd.f32 %v950, %v992
        %v1001 = vadd.f32 %v951, %v993
        %v1002 = vld [vmem:[%s506] sm:$0xff]
        %v1003 = vld [vmem:[%s506 + $0x8] sm:$0xff]
        %1004 = vset.pattern.permute.xlu0 10
        %1005 = vperm.xlu0 %1004, %v894
        %v1006 = vpop.permute.xlu0 %1005
        %1008 = vset.pattern.permute.xlu0 10
        %1009 = vperm.xlu0 %1008, %v895
        %v1010 = vpop.permute.xlu0 %1009
        %1012 = vset.pattern.permute.xlu0 10
        %1013 = vperm.xlu0 %1012, %v896
        %v1014 = vpop.permute.xlu0 %1013
        %1016 = vset.pattern.permute.xlu0 10
        %1017 = vperm.xlu0 %1016, %v897
        %v1018 = vpop.permute.xlu0 %1017
        %1020 = vset.pattern.permute.xlu0 10
        %1021 = vperm.xlu0 %1020, %v898
        %v1022 = vpop.permute.xlu0 %1021
        %1024 = vset.pattern.permute.xlu0 10
        %1025 = vperm.xlu0 %1024, %v899
        %v1026 = vpop.permute.xlu0 %1025
        %1028 = vset.pattern.permute.xlu0 10
        %1029 = vperm.xlu0 %1028, %v900
        %v1030 = vpop.permute.xlu0 %1029
        %1032 = vset.pattern.permute.xlu0 10
        %1033 = vperm.xlu0 %1032, %v901
        %v1034 = vpop.permute.xlu0 %1033
        %v1036 = vmul.f32 %v1006, %v1002
        %v1037 = vmul.f32 %v1010, %v1003
        %v1038 = vmul.f32 %v1014, %v1002
        %v1039 = vmul.f32 %v1018, %v1003
        %v1040 = vmul.f32 %v1022, %v1002
        %v1041 = vmul.f32 %v1026, %v1003
        %v1042 = vmul.f32 %v1030, %v1002
        %v1043 = vmul.f32 %v1034, %v1003
        %v1044 = vadd.f32 %v994, %v1036
        %v1045 = vadd.f32 %v995, %v1037
        %v1046 = vadd.f32 %v996, %v1038
        %v1047 = vadd.f32 %v997, %v1039
        %v1048 = vadd.f32 %v998, %v1040
        %v1049 = vadd.f32 %v999, %v1041
        %v1050 = vadd.f32 %v1000, %v1042
        %v1051 = vadd.f32 %v1001, %v1043
        %v1052 = vld [vmem:[%s557] sm:$0xff]
        %v1053 = vld [vmem:[%s557 + $0x8] sm:$0xff]
        %1054 = vset.pattern.permute.xlu0 11
        %1055 = vperm.xlu0 %1054, %v894
        %v1056 = vpop.permute.xlu0 %1055
        %1058 = vset.pattern.permute.xlu0 11
        %1059 = vperm.xlu0 %1058, %v895
        %v1060 = vpop.permute.xlu0 %1059
        %1062 = vset.pattern.permute.xlu0 11
        %1063 = vperm.xlu0 %1062, %v896
        %v1064 = vpop.permute.xlu0 %1063
        %1066 = vset.pattern.permute.xlu0 11
        %1067 = vperm.xlu0 %1066, %v897
        %v1068 = vpop.permute.xlu0 %1067
        %1070 = vset.pattern.permute.xlu0 11
        %1071 = vperm.xlu0 %1070, %v898
        %v1072 = vpop.permute.xlu0 %1071
        %1074 = vset.pattern.permute.xlu0 11
        %1075 = vperm.xlu0 %1074, %v899
        %v1076 = vpop.permute.xlu0 %1075
        %1078 = vset.pattern.permute.xlu0 11
        %1079 = vperm.xlu0 %1078, %v900
        %v1080 = vpop.permute.xlu0 %1079
        %1082 = vset.pattern.permute.xlu0 11
        %1083 = vperm.xlu0 %1082, %v901
        %v1084 = vpop.permute.xlu0 %1083
        %v1086 = vmul.f32 %v1056, %v1052
        %v1087 = vmul.f32 %v1060, %v1053
        %v1088 = vmul.f32 %v1064, %v1052
        %v1089 = vmul.f32 %v1068, %v1053
        %v1090 = vmul.f32 %v1072, %v1052
        %v1091 = vmul.f32 %v1076, %v1053
        %v1092 = vmul.f32 %v1080, %v1052
        %v1093 = vmul.f32 %v1084, %v1053
        %v1094 = vadd.f32 %v1044, %v1086
        %v1095 = vadd.f32 %v1045, %v1087
        %v1096 = vadd.f32 %v1046, %v1088
        %v1097 = vadd.f32 %v1047, %v1089
        %v1098 = vadd.f32 %v1048, %v1090
        %v1099 = vadd.f32 %v1049, %v1091
        %v1100 = vadd.f32 %v1050, %v1092
        %v1101 = vadd.f32 %v1051, %v1093
        %v1102 = vld [vmem:[%s3] sm:$0xff]
        %v1103 = vld [vmem:[%s3 + $0x8] sm:$0xff]
        %1106 = vrot.lane.b32.xlu0 %v1102, 64
        %v1107 = vpop.permute.xlu0 %1106
        %1108 = vrot.lane.b32.xlu0 %v1103, 64
        %v1109 = vpop.permute.xlu0 %1108
        %v1112 = vadd.f32 %v1094, %v1107
        %v1113 = vadd.f32 %v1095, %v1109
        %v1114 = vadd.f32 %v1096, %v1107
        %v1115 = vadd.f32 %v1097, %v1109
        %v1116 = vadd.f32 %v1098, %v1107
        %v1117 = vadd.f32 %v1099, %v1109
        %v1118 = vadd.f32 %v1100, %v1107
        %v1119 = vadd.f32 %v1101, %v1109
        %1128 = vrot.lane.b32.xlu0 %v1112, 64
        %v1129 = vpop.permute.xlu0 %1128
        %1130 = vrot.lane.b32.xlu0 %v1113, 64
        %v1131 = vpop.permute.xlu0 %1130
        %1132 = vrot.lane.b32.xlu0 %v1114, 64
        %v1133 = vpop.permute.xlu0 %1132
        %1134 = vrot.lane.b32.xlu0 %v1115, 64
        %v1135 = vpop.permute.xlu0 %1134
        %1136 = vrot.lane.b32.xlu0 %v1116, 64
        %v1137 = vpop.permute.xlu0 %1136
        %1138 = vrot.lane.b32.xlu0 %v1117, 64
        %v1139 = vpop.permute.xlu0 %1138
        %1140 = vrot.lane.b32.xlu0 %v1118, 64
        %v1141 = vpop.permute.xlu0 %1140
        %1142 = vrot.lane.b32.xlu0 %v1119, 64
        %v1143 = vpop.permute.xlu0 %1142
        %vm1152 = vcmask 785920
        %1153 = vst.msk [vmem:[#allocation2] sm:$0xff] %vm1152, %v1129
        %1154 = vst.msk [vmem:[#allocation2 + $0x8] sm:$0xff] %vm1152, %v1131
        %1155 = vst.msk [vmem:[#allocation2 + $0x10] sm:$0xff] %vm1152, %v1133
        %1156 = vst.msk [vmem:[#allocation2 + $0x18] sm:$0xff] %vm1152, %v1135
        %1157 = vst.msk [vmem:[#allocation2 + $0x20] sm:$0xff] %vm1152, %v1137
        %1158 = vst.msk [vmem:[#allocation2 + $0x28] sm:$0xff] %vm1152, %v1139
        %1159 = vst.msk [vmem:[#allocation2 + $0x30] sm:$0xff] %vm1152, %v1141
        %1160 = vst.msk [vmem:[#allocation2 + $0x38] sm:$0xff] %vm1152, %v1143
        %v1161 = vld [vmem:[%s392] sm:$0xff]
        %v1162 = vld [vmem:[%s392 + $0x8] sm:$0xff]
        %v1163 = vld [vmem:[%s392 + $0x10] sm:$0xff]
        %v1164 = vld [vmem:[%s392 + $0x18] sm:$0xff]
        %v1165 = vld [vmem:[%s392 + $0x20] sm:$0xff]
        %v1166 = vld [vmem:[%s392 + $0x28] sm:$0xff]
        %v1167 = vld [vmem:[%s392 + $0x30] sm:$0xff]
        %v1168 = vld [vmem:[%s392 + $0x38] sm:$0xff]
        %v1169 = vld [vmem:[#allocation3] sm:$0xff]
        %v1170 = vld [vmem:[#allocation3 + $0x8] sm:$0xff]
        %1172 = vset.pattern.permute.xlu0 12
        %1173 = vperm.xlu0 %1172, %v1161
        %v1174 = vpop.permute.xlu0 %1173
        %1177 = vset.pattern.permute.xlu0 12
        %1178 = vperm.xlu0 %1177, %v1162
        %v1179 = vpop.permute.xlu0 %1178
        %1182 = vset.pattern.permute.xlu0 12
        %1183 = vperm.xlu0 %1182, %v1163
        %v1184 = vpop.permute.xlu0 %1183
        %1187 = vset.pattern.permute.xlu0 12
        %1188 = vperm.xlu0 %1187, %v1164
        %v1189 = vpop.permute.xlu0 %1188
        %1192 = vset.pattern.permute.xlu0 12
        %1193 = vperm.xlu0 %1192, %v1165
        %v1194 = vpop.permute.xlu0 %1193
        %1197 = vset.pattern.permute.xlu0 12
        %1198 = vperm.xlu0 %1197, %v1166
        %v1199 = vpop.permute.xlu0 %1198
        %1202 = vset.pattern.permute.xlu0 12
        %1203 = vperm.xlu0 %1202, %v1167
        %v1204 = vpop.permute.xlu0 %1203
        %1207 = vset.pattern.permute.xlu0 12
        %1208 = vperm.xlu0 %1207, %v1168
        %v1209 = vpop.permute.xlu0 %1208
        %v1211 = vmul.f32 %v1174, %v1169
        %v1212 = vmul.f32 %v1179, %v1170
        %v1213 = vmul.f32 %v1184, %v1169
        %v1214 = vmul.f32 %v1189, %v1170
        %v1215 = vmul.f32 %v1194, %v1169
        %v1216 = vmul.f32 %v1199, %v1170
        %v1217 = vmul.f32 %v1204, %v1169
        %v1218 = vmul.f32 %v1209, %v1170
        %v1219 = vld [vmem:[%s455] sm:$0xff]
        %v1220 = vld [vmem:[%s455 + $0x8] sm:$0xff]
        %1221 = vset.pattern.permute.xlu0 13
        %1222 = vperm.xlu0 %1221, %v1161
        %v1223 = vpop.permute.xlu0 %1222
        %1225 = vset.pattern.permute.xlu0 13
        %1226 = vperm.xlu0 %1225, %v1162
        %v1227 = vpop.permute.xlu0 %1226
        %1229 = vset.pattern.permute.xlu0 13
        %1230 = vperm.xlu0 %1229, %v1163
        %v1231 = vpop.permute.xlu0 %1230
        %1233 = vset.pattern.permute.xlu0 13
        %1234 = vperm.xlu0 %1233, %v1164
        %v1235 = vpop.permute.xlu0 %1234
        %1237 = vset.pattern.permute.xlu0 13
        %1238 = vperm.xlu0 %1237, %v1165
        %v1239 = vpop.permute.xlu0 %1238
        %1241 = vset.pattern.permute.xlu0 13
        %1242 = vperm.xlu0 %1241, %v1166
        %v1243 = vpop.permute.xlu0 %1242
        %1245 = vset.pattern.permute.xlu0 13
        %1246 = vperm.xlu0 %1245, %v1167
        %v1247 = vpop.permute.xlu0 %1246
        %1249 = vset.pattern.permute.xlu0 13
        %1250 = vperm.xlu0 %1249, %v1168
        %v1251 = vpop.permute.xlu0 %1250
        %v1253 = vmul.f32 %v1223, %v1219
        %v1254 = vmul.f32 %v1227, %v1220
        %v1255 = vmul.f32 %v1231, %v1219
        %v1256 = vmul.f32 %v1235, %v1220
        %v1257 = vmul.f32 %v1239, %v1219
        %v1258 = vmul.f32 %v1243, %v1220
        %v1259 = vmul.f32 %v1247, %v1219
        %v1260 = vmul.f32 %v1251, %v1220
        %v1261 = vadd.f32 %v1211, %v1253
        %v1262 = vadd.f32 %v1212, %v1254
        %v1263 = vadd.f32 %v1213, %v1255
        %v1264 = vadd.f32 %v1214, %v1256
        %v1265 = vadd.f32 %v1215, %v1257
        %v1266 = vadd.f32 %v1216, %v1258
        %v1267 = vadd.f32 %v1217, %v1259
        %v1268 = vadd.f32 %v1218, %v1260
        %v1269 = vld [vmem:[%s506] sm:$0xff]
        %v1270 = vld [vmem:[%s506 + $0x8] sm:$0xff]
        %1271 = vset.pattern.permute.xlu0 14
        %1272 = vperm.xlu0 %1271, %v1161
        %v1273 = vpop.permute.xlu0 %1272
        %1275 = vset.pattern.permute.xlu0 14
        %1276 = vperm.xlu0 %1275, %v1162
        %v1277 = vpop.permute.xlu0 %1276
        %1279 = vset.pattern.permute.xlu0 14
        %1280 = vperm.xlu0 %1279, %v1163
        %v1281 = vpop.permute.xlu0 %1280
        %1283 = vset.pattern.permute.xlu0 14
        %1284 = vperm.xlu0 %1283, %v1164
        %v1285 = vpop.permute.xlu0 %1284
        %1287 = vset.pattern.permute.xlu0 14
        %1288 = vperm.xlu0 %1287, %v1165
        %v1289 = vpop.permute.xlu0 %1288
        %1291 = vset.pattern.permute.xlu0 14
        %1292 = vperm.xlu0 %1291, %v1166
        %v1293 = vpop.permute.xlu0 %1292
        %1295 = vset.pattern.permute.xlu0 14
        %1296 = vperm.xlu0 %1295, %v1167
        %v1297 = vpop.permute.xlu0 %1296
        %1299 = vset.pattern.permute.xlu0 14
        %1300 = vperm.xlu0 %1299, %v1168
        %v1301 = vpop.permute.xlu0 %1300
        %v1303 = vmul.f32 %v1273, %v1269
        %v1304 = vmul.f32 %v1277, %v1270
        %v1305 = vmul.f32 %v1281, %v1269
        %v1306 = vmul.f32 %v1285, %v1270
        %v1307 = vmul.f32 %v1289, %v1269
        %v1308 = vmul.f32 %v1293, %v1270
        %v1309 = vmul.f32 %v1297, %v1269
        %v1310 = vmul.f32 %v1301, %v1270
        %v1311 = vadd.f32 %v1261, %v1303
        %v1312 = vadd.f32 %v1262, %v1304
        %v1313 = vadd.f32 %v1263, %v1305
        %v1314 = vadd.f32 %v1264, %v1306
        %v1315 = vadd.f32 %v1265, %v1307
        %v1316 = vadd.f32 %v1266, %v1308
        %v1317 = vadd.f32 %v1267, %v1309
        %v1318 = vadd.f32 %v1268, %v1310
        %v1319 = vld [vmem:[%s557] sm:$0xff]
        %v1320 = vld [vmem:[%s557 + $0x8] sm:$0xff]
        %1321 = vset.pattern.permute.xlu0 15
        %1322 = vperm.xlu0 %1321, %v1161
        %v1323 = vpop.permute.xlu0 %1322
        %1325 = vset.pattern.permute.xlu0 15
        %1326 = vperm.xlu0 %1325, %v1162
        %v1327 = vpop.permute.xlu0 %1326
        %1329 = vset.pattern.permute.xlu0 15
        %1330 = vperm.xlu0 %1329, %v1163
        %v1331 = vpop.permute.xlu0 %1330
        %1333 = vset.pattern.permute.xlu0 15
        %1334 = vperm.xlu0 %1333, %v1164
        %v1335 = vpop.permute.xlu0 %1334
        %1337 = vset.pattern.permute.xlu0 15
        %1338 = vperm.xlu0 %1337, %v1165
        %v1339 = vpop.permute.xlu0 %1338
        %1341 = vset.pattern.permute.xlu0 15
        %1342 = vperm.xlu0 %1341, %v1166
        %v1343 = vpop.permute.xlu0 %1342
        %1345 = vset.pattern.permute.xlu0 15
        %1346 = vperm.xlu0 %1345, %v1167
        %v1347 = vpop.permute.xlu0 %1346
        %1349 = vset.pattern.permute.xlu0 15
        %1350 = vperm.xlu0 %1349, %v1168
        %v1351 = vpop.permute.xlu0 %1350
        %v1353 = vmul.f32 %v1323, %v1319
        %v1354 = vmul.f32 %v1327, %v1320
        %v1355 = vmul.f32 %v1331, %v1319
        %v1356 = vmul.f32 %v1335, %v1320
        %v1357 = vmul.f32 %v1339, %v1319
        %v1358 = vmul.f32 %v1343, %v1320
        %v1359 = vmul.f32 %v1347, %v1319
        %v1360 = vmul.f32 %v1351, %v1320
        %v1361 = vadd.f32 %v1311, %v1353
        %v1362 = vadd.f32 %v1312, %v1354
        %v1363 = vadd.f32 %v1313, %v1355
        %v1364 = vadd.f32 %v1314, %v1356
        %v1365 = vadd.f32 %v1315, %v1357
        %v1366 = vadd.f32 %v1316, %v1358
        %v1367 = vadd.f32 %v1317, %v1359
        %v1368 = vadd.f32 %v1318, %v1360
        %v1369 = vld [vmem:[%s3] sm:$0xff]
        %v1370 = vld [vmem:[%s3 + $0x8] sm:$0xff]
        %1373 = vrot.lane.b32.xlu0 %v1369, 32
        %v1374 = vpop.permute.xlu0 %1373
        %1375 = vrot.lane.b32.xlu0 %v1370, 32
        %v1376 = vpop.permute.xlu0 %1375
        %v1379 = vadd.f32 %v1361, %v1374
        %v1380 = vadd.f32 %v1362, %v1376
        %v1381 = vadd.f32 %v1363, %v1374
        %v1382 = vadd.f32 %v1364, %v1376
        %v1383 = vadd.f32 %v1365, %v1374
        %v1384 = vadd.f32 %v1366, %v1376
        %v1385 = vadd.f32 %v1367, %v1374
        %v1386 = vadd.f32 %v1368, %v1376
        %1395 = vrot.lane.b32.xlu0 %v1379, 96
        %v1396 = vpop.permute.xlu0 %1395
        %1397 = vrot.lane.b32.xlu0 %v1380, 96
        %v1398 = vpop.permute.xlu0 %1397
        %1399 = vrot.lane.b32.xlu0 %v1381, 96
        %v1400 = vpop.permute.xlu0 %1399
        %1401 = vrot.lane.b32.xlu0 %v1382, 96
        %v1402 = vpop.permute.xlu0 %1401
        %1403 = vrot.lane.b32.xlu0 %v1383, 96
        %v1404 = vpop.permute.xlu0 %1403
        %1405 = vrot.lane.b32.xlu0 %v1384, 96
        %v1406 = vpop.permute.xlu0 %1405
        %1407 = vrot.lane.b32.xlu0 %v1385, 96
        %v1408 = vpop.permute.xlu0 %1407
        %1409 = vrot.lane.b32.xlu0 %v1386, 96
        %v1410 = vpop.permute.xlu0 %1409
        %vm1419 = vcmask 1048320
        %1420 = vst.msk [vmem:[#allocation2] sm:$0xff] %vm1419, %v1396
        %1421 = vst.msk [vmem:[#allocation2 + $0x8] sm:$0xff] %vm1419, %v1398
        %1422 = vst.msk [vmem:[#allocation2 + $0x10] sm:$0xff] %vm1419, %v1400
        %1423 = vst.msk [vmem:[#allocation2 + $0x18] sm:$0xff] %vm1419, %v1402
        %1424 = vst.msk [vmem:[#allocation2 + $0x20] sm:$0xff] %vm1419, %v1404
        %1425 = vst.msk [vmem:[#allocation2 + $0x28] sm:$0xff] %vm1419, %v1406
        %1426 = vst.msk [vmem:[#allocation2 + $0x30] sm:$0xff] %vm1419, %v1408
        %1427 = vst.msk [vmem:[#allocation2 + $0x38] sm:$0xff] %vm1419, %v1410
        %v1428 = vld [vmem:[#allocation2] sm:$0xff]
        %v1429 = vld [vmem:[#allocation2 + $0x8] sm:$0xff]
        %v1430 = vld [vmem:[#allocation2 + $0x10] sm:$0xff]
        %v1431 = vld [vmem:[#allocation2 + $0x18] sm:$0xff]
        %v1432 = vld [vmem:[#allocation2 + $0x20] sm:$0xff]
        %v1433 = vld [vmem:[#allocation2 + $0x28] sm:$0xff]
        %v1434 = vld [vmem:[#allocation2 + $0x30] sm:$0xff]
        %v1435 = vld [vmem:[#allocation2 + $0x38] sm:$0xff]
        %v1436 = vld [vmem:[%s385] sm:$0xff]
        %v1437 = vld [vmem:[%s385 + $0x8] sm:$0xff]
        %v1438 = vld [vmem:[%s385 + $0x10] sm:$0xff]
        %v1439 = vld [vmem:[%s385 + $0x18] sm:$0xff]
        %v1440 = vld [vmem:[%s385 + $0x20] sm:$0xff]
        %v1441 = vld [vmem:[%s385 + $0x28] sm:$0xff]
        %v1442 = vld [vmem:[%s385 + $0x30] sm:$0xff]
        %v1443 = vld [vmem:[%s385 + $0x38] sm:$0xff]
        %v1444 = vand.u32 2147483647, %v1436
        %v1445 = vand.u32 2147483647, %v1437
        %v1446 = vand.u32 2147483647, %v1438
        %v1447 = vand.u32 2147483647, %v1439
        %v1448 = vand.u32 2147483647, %v1440
        %v1449 = vand.u32 2147483647, %v1441
        %v1450 = vand.u32 2147483647, %v1442
        %v1451 = vand.u32 2147483647, %v1443
        %v1452 = vsub.f32 0.0, %v1444
        %v1453 = vsub.f32 0.0, %v1445
        %v1454 = vsub.f32 0.0, %v1446
        %v1455 = vsub.f32 0.0, %v1447
        %v1456 = vsub.f32 0.0, %v1448
        %v1457 = vsub.f32 0.0, %v1449
        %v1458 = vsub.f32 0.0, %v1450
        %v1459 = vsub.f32 0.0, %v1451
        %v1460 = vmul.f32 %v1452, 1.442695
        %v1461 = vpow.pop %v1460
        %v1462 = vmul.f32 %v1453, 1.442695
        %v1463 = vpow.pop %v1462
        %v1464 = vmul.f32 %v1454, 1.442695
        %v1465 = vpow.pop %v1464
        %v1466 = vmul.f32 %v1455, 1.442695
        %v1467 = vpow.pop %v1466
        %v1468 = vmul.f32 %v1456, 1.442695
        %v1469 = vpow.pop %v1468
        %v1470 = vmul.f32 %v1457, 1.442695
        %v1471 = vpow.pop %v1470
        %v1472 = vmul.f32 %v1458, 1.442695
        %v1473 = vpow.pop %v1472
        %v1474 = vmul.f32 %v1459, 1.442695
        %v1475 = vpow.pop %v1474
        %v1476 = vadd.f32 %v1461, 1.0
        %v1477 = vadd.f32 %v1463, 1.0
        %v1478 = vadd.f32 %v1465, 1.0
        %v1479 = vadd.f32 %v1467, 1.0
        %v1480 = vadd.f32 %v1469, 1.0
        %v1481 = vadd.f32 %v1471, 1.0
        %v1482 = vadd.f32 %v1473, 1.0
        %v1483 = vadd.f32 %v1475, 1.0
        %v1484 = vrcp.pop %v1476
        %v1485 = vrcp.pop %v1477
        %v1486 = vrcp.pop %v1478
        %v1487 = vrcp.pop %v1479
        %v1488 = vrcp.pop %v1480
        %v1489 = vrcp.pop %v1481
        %v1490 = vrcp.pop %v1482
        %v1491 = vrcp.pop %v1483
        %v1492 = vmul.f32 %v1476, %v1484
        %v1493 = vmul.f32 %v1477, %v1485
        %v1494 = vmul.f32 %v1478, %v1486
        %v1495 = vmul.f32 %v1479, %v1487
        %v1496 = vmul.f32 %v1480, %v1488
        %v1497 = vmul.f32 %v1481, %v1489
        %v1498 = vmul.f32 %v1482, %v1490
        %v1499 = vmul.f32 %v1483, %v1491
        %v1500 = vsub.f32 2.0, %v1492
        %v1501 = vsub.f32 2.0, %v1493
        %v1502 = vsub.f32 2.0, %v1494
        %v1503 = vsub.f32 2.0, %v1495
        %v1504 = vsub.f32 2.0, %v1496
        %v1505 = vsub.f32 2.0, %v1497
        %v1506 = vsub.f32 2.0, %v1498
        %v1507 = vsub.f32 2.0, %v1499
        %v1508 = vmul.f32 %v1484, %v1500
        %v1509 = vmul.f32 %v1485, %v1501
        %v1510 = vmul.f32 %v1486, %v1502
        %v1511 = vmul.f32 %v1487, %v1503
        %v1512 = vmul.f32 %v1488, %v1504
        %v1513 = vmul.f32 %v1489, %v1505
        %v1514 = vmul.f32 %v1490, %v1506
        %v1515 = vmul.f32 %v1491, %v1507
        %vm1516 = vcmp.ge.f32.partialorder %v1436, 0.0
        %vm1517 = vcmp.ge.f32.partialorder %v1437, 0.0
        %vm1518 = vcmp.ge.f32.partialorder %v1438, 0.0
        %vm1519 = vcmp.ge.f32.partialorder %v1439, 0.0
        %vm1520 = vcmp.ge.f32.partialorder %v1440, 0.0
        %vm1521 = vcmp.ge.f32.partialorder %v1441, 0.0
        %vm1522 = vcmp.ge.f32.partialorder %v1442, 0.0
        %vm1523 = vcmp.ge.f32.partialorder %v1443, 0.0
        %v1524 = vmul.f32 %v1461, %v1508
        %v1525 = vmul.f32 %v1463, %v1509
        %v1526 = vmul.f32 %v1465, %v1510
        %v1527 = vmul.f32 %v1467, %v1511
        %v1528 = vmul.f32 %v1469, %v1512
        %v1529 = vmul.f32 %v1471, %v1513
        %v1530 = vmul.f32 %v1473, %v1514
        %v1531 = vmul.f32 %v1475, %v1515
        %v1532 = vsel %vm1516, %v1508, %v1524
        %v1533 = vsel %vm1517, %v1509, %v1525
        %v1534 = vsel %vm1518, %v1510, %v1526
        %v1535 = vsel %vm1519, %v1511, %v1527
        %v1536 = vsel %vm1520, %v1512, %v1528
        %v1537 = vsel %vm1521, %v1513, %v1529
        %v1538 = vsel %vm1522, %v1514, %v1530
        %v1539 = vsel %vm1523, %v1515, %v1531
        %v1540 = vld [vmem:[%s4] sm:$0xff]
        %v1541 = vld [vmem:[%s4 + $0x8] sm:$0xff]
        %v1542 = vld [vmem:[%s5] sm:$0xff]
        %v1543 = vld [vmem:[%s5 + $0x8] sm:$0xff]
        %v1544 = vld [vmem:[%s6] sm:$0xff]
        %1546 = vset.pattern.permute.xlu0 0
        %1547 = vperm.xlu0 %1546, %v1532
        %v1548 = vpop.permute.xlu0 %1547
        %1551 = vset.pattern.permute.xlu0 0
        %1552 = vperm.xlu0 %1551, %v1533
        %v1553 = vpop.permute.xlu0 %1552
        %1556 = vset.pattern.permute.xlu0 0
        %1557 = vperm.xlu0 %1556, %v1534
        %v1558 = vpop.permute.xlu0 %1557
        %1561 = vset.pattern.permute.xlu0 0
        %1562 = vperm.xlu0 %1561, %v1535
        %v1563 = vpop.permute.xlu0 %1562
        %1566 = vset.pattern.permute.xlu0 0
        %1567 = vperm.xlu0 %1566, %v1536
        %v1568 = vpop.permute.xlu0 %1567
        %1571 = vset.pattern.permute.xlu0 0
        %1572 = vperm.xlu0 %1571, %v1537
        %v1573 = vpop.permute.xlu0 %1572
        %1576 = vset.pattern.permute.xlu0 0
        %1577 = vperm.xlu0 %1576, %v1538
        %v1578 = vpop.permute.xlu0 %1577
        %1581 = vset.pattern.permute.xlu0 0
        %1582 = vperm.xlu0 %1581, %v1539
        %v1583 = vpop.permute.xlu0 %1582
        %v1585 = vmul.f32 %v1548, 0.125
        %v1586 = vmul.f32 %v1553, 0.125
        %v1587 = vmul.f32 %v1558, 0.125
        %v1588 = vmul.f32 %v1563, 0.125
        %v1589 = vmul.f32 %v1568, 0.125
        %v1590 = vmul.f32 %v1573, 0.125
        %v1591 = vmul.f32 %v1578, 0.125
        %v1592 = vmul.f32 %v1583, 0.125
        %v1593 = vsub.f32 %v1548, %v1585
        %v1594 = vsub.f32 %v1553, %v1586
        %v1595 = vsub.f32 %v1558, %v1587
        %v1596 = vsub.f32 %v1563, %v1588
        %v1597 = vsub.f32 %v1568, %v1589
        %v1598 = vsub.f32 %v1573, %v1590
        %v1599 = vsub.f32 %v1578, %v1591
        %v1600 = vsub.f32 %v1583, %v1592
        %v1601 = vmul.f32 %v1540, %v1585
        %v1602 = vmul.f32 %v1541, %v1586
        %v1603 = vmul.f32 %v1540, %v1587
        %v1604 = vmul.f32 %v1541, %v1588
        %v1605 = vmul.f32 %v1540, %v1589
        %v1606 = vmul.f32 %v1541, %v1590
        %v1607 = vmul.f32 %v1540, %v1591
        %v1608 = vmul.f32 %v1541, %v1592
        %vm1609 = vcmask 64512
        %v1610 = vsel %vm1609, %v1601, 0.0
        %v1611 = vsel %vm1609, %v1602, 0.0
        %v1612 = vadd.f32 %v1610, %v1611
        %v1613 = vrot.slane %v1612, 4
        %v1614 = vadd.f32 %v1612, %v1613
        %v1615 = vrot.slane %v1614, 2
        %v1616 = vadd.f32 %v1614, %v1615
        %v1617 = vrot.slane %v1616, 1
        %v1618 = vadd.f32 %v1616, %v1617
        %v1619 = vsel %vm1609, %v1603, 0.0
        %v1620 = vsel %vm1609, %v1604, 0.0
        %v1621 = vadd.f32 %v1619, %v1620
        %v1622 = vrot.slane %v1621, 4
        %v1623 = vadd.f32 %v1621, %v1622
        %v1624 = vrot.slane %v1623, 2
        %v1625 = vadd.f32 %v1623, %v1624
        %v1626 = vrot.slane %v1625, 1
        %v1627 = vadd.f32 %v1625, %v1626
        %v1628 = vsel %vm1609, %v1605, 0.0
        %v1629 = vsel %vm1609, %v1606, 0.0
        %v1630 = vadd.f32 %v1628, %v1629
        %v1631 = vrot.slane %v1630, 4
        %v1632 = vadd.f32 %v1630, %v1631
        %v1633 = vrot.slane %v1632, 2
        %v1634 = vadd.f32 %v1632, %v1633
        %v1635 = vrot.slane %v1634, 1
        %v1636 = vadd.f32 %v1634, %v1635
        %v1637 = vsel %vm1609, %v1607, 0.0
        %v1638 = vsel %vm1609, %v1608, 0.0
        %v1639 = vadd.f32 %v1637, %v1638
        %v1640 = vrot.slane %v1639, 4
        %v1641 = vadd.f32 %v1639, %v1640
        %v1642 = vrot.slane %v1641, 2
        %v1643 = vadd.f32 %v1641, %v1642
        %v1644 = vrot.slane %v1643, 1
        %v1645 = vadd.f32 %v1643, %v1644
        %v1646 = vmul.f32 %v1542, %v1593
        %v1647 = vmul.f32 %v1543, %v1594
        %v1648 = vmul.f32 %v1542, %v1595
        %v1649 = vmul.f32 %v1543, %v1596
        %v1650 = vmul.f32 %v1542, %v1597
        %v1651 = vmul.f32 %v1543, %v1598
        %v1652 = vmul.f32 %v1542, %v1599
        %v1653 = vmul.f32 %v1543, %v1600
        %v1654 = vsel %vm1609, %v1646, 0.0
        %v1655 = vsel %vm1609, %v1647, 0.0
        %v1656 = vadd.f32 %v1654, %v1655
        %v1657 = vrot.slane %v1656, 4
        %v1658 = vadd.f32 %v1656, %v1657
        %v1659 = vrot.slane %v1658, 2
        %v1660 = vadd.f32 %v1658, %v1659
        %v1661 = vrot.slane %v1660, 1
        %v1662 = vadd.f32 %v1660, %v1661
        %v1663 = vsel %vm1609, %v1648, 0.0
        %v1664 = vsel %vm1609, %v1649, 0.0
        %v1665 = vadd.f32 %v1663, %v1664
        %v1666 = vrot.slane %v1665, 4
        %v1667 = vadd.f32 %v1665, %v1666
        %v1668 = vrot.slane %v1667, 2
        %v1669 = vadd.f32 %v1667, %v1668
        %v1670 = vrot.slane %v1669, 1
        %v1671 = vadd.f32 %v1669, %v1670
        %v1672 = vsel %vm1609, %v1650, 0.0
        %v1673 = vsel %vm1609, %v1651, 0.0
        %v1674 = vadd.f32 %v1672, %v1673
        %v1675 = vrot.slane %v1674, 4
        %v1676 = vadd.f32 %v1674, %v1675
        %v1677 = vrot.slane %v1676, 2
        %v1678 = vadd.f32 %v1676, %v1677
        %v1679 = vrot.slane %v1678, 1
        %v1680 = vadd.f32 %v1678, %v1679
        %v1681 = vsel %vm1609, %v1652, 0.0
        %v1682 = vsel %vm1609, %v1653, 0.0
        %v1683 = vadd.f32 %v1681, %v1682
        %v1684 = vrot.slane %v1683, 4
        %v1685 = vadd.f32 %v1683, %v1684
        %v1686 = vrot.slane %v1685, 2
        %v1687 = vadd.f32 %v1685, %v1686
        %v1688 = vrot.slane %v1687, 1
        %v1689 = vadd.f32 %v1687, %v1688
        %v1690 = vsub.f32 %v1618, %v1662
        %v1691 = vsub.f32 %v1627, %v1671
        %v1692 = vsub.f32 %v1636, %v1680
        %v1693 = vsub.f32 %v1645, %v1689
        %v1694 = vadd.f32 %v1585, %v1586
        %v1695 = vrot.slane %v1694, 4
        %v1696 = vadd.f32 %v1694, %v1695
        %v1697 = vrot.slane %v1696, 2
        %v1698 = vadd.f32 %v1696, %v1697
        %v1699 = vrot.slane %v1698, 1
        %v1700 = vadd.f32 %v1698, %v1699
        %v1701 = vadd.f32 %v1587, %v1588
        %v1702 = vrot.slane %v1701, 4
        %v1703 = vadd.f32 %v1701, %v1702
        %v1704 = vrot.slane %v1703, 2
        %v1705 = vadd.f32 %v1703, %v1704
        %v1706 = vrot.slane %v1705, 1
        %v1707 = vadd.f32 %v1705, %v1706
        %v1708 = vadd.f32 %v1589, %v1590
        %v1709 = vrot.slane %v1708, 4
        %v1710 = vadd.f32 %v1708, %v1709
        %v1711 = vrot.slane %v1710, 2
        %v1712 = vadd.f32 %v1710, %v1711
        %v1713 = vrot.slane %v1712, 1
        %v1714 = vadd.f32 %v1712, %v1713
        %v1715 = vadd.f32 %v1591, %v1592
        %v1716 = vrot.slane %v1715, 4
        %v1717 = vadd.f32 %v1715, %v1716
        %v1718 = vrot.slane %v1717, 2
        %v1719 = vadd.f32 %v1717, %v1718
        %v1720 = vrot.slane %v1719, 1
        %v1721 = vadd.f32 %v1719, %v1720
        %v1722 = vadd.f32 %v1700, 1e-05
        %v1723 = vadd.f32 %v1707, 1e-05
        %v1724 = vadd.f32 %v1714, 1e-05
        %v1725 = vadd.f32 %v1721, 1e-05
        %v1726 = vrcp.pop %v1722
        %v1727 = vrcp.pop %v1723
        %v1728 = vrcp.pop %v1724
        %v1729 = vrcp.pop %v1725
        %v1730 = vmul.f32 %v1722, %v1726
        %v1731 = vmul.f32 %v1723, %v1727
        %v1732 = vmul.f32 %v1724, %v1728
        %v1733 = vmul.f32 %v1725, %v1729
        %v1734 = vsub.f32 2.0, %v1730
        %v1735 = vsub.f32 2.0, %v1731
        %v1736 = vsub.f32 2.0, %v1732
        %v1737 = vsub.f32 2.0, %v1733
        %v1738 = vmul.f32 %v1726, %v1734
        %v1739 = vmul.f32 %v1727, %v1735
        %v1740 = vmul.f32 %v1728, %v1736
        %v1741 = vmul.f32 %v1729, %v1737
        %v1742 = vmul.f32 %v1585, %v1738
        %v1743 = vmul.f32 %v1586, %v1738
        %v1744 = vmul.f32 %v1587, %v1739
        %v1745 = vmul.f32 %v1588, %v1739
        %v1746 = vmul.f32 %v1589, %v1740
        %v1747 = vmul.f32 %v1590, %v1740
        %v1748 = vmul.f32 %v1591, %v1741
        %v1749 = vmul.f32 %v1592, %v1741
        %v1750 = vmul.f32 %v1742, %v1428
        %v1751 = vmul.f32 %v1743, %v1429
        %v1752 = vmul.f32 %v1744, %v1430
        %v1753 = vmul.f32 %v1745, %v1431
        %v1754 = vmul.f32 %v1746, %v1432
        %v1755 = vmul.f32 %v1747, %v1433
        %v1756 = vmul.f32 %v1748, %v1434
        %v1757 = vmul.f32 %v1749, %v1435
        %v1758 = vadd.f32 %v1750, %v1751
        %v1759 = vrot.slane %v1758, 4
        %v1760 = vadd.f32 %v1758, %v1759
        %v1761 = vrot.slane %v1760, 2
        %v1762 = vadd.f32 %v1760, %v1761
        %v1763 = vrot.slane %v1762, 1
        %v1764 = vadd.f32 %v1762, %v1763
        %v1765 = vadd.f32 %v1752, %v1753
        %v1766 = vrot.slane %v1765, 4
        %v1767 = vadd.f32 %v1765, %v1766
        %v1768 = vrot.slane %v1767, 2
        %v1769 = vadd.f32 %v1767, %v1768
        %v1770 = vrot.slane %v1769, 1
        %v1771 = vadd.f32 %v1769, %v1770
        %v1772 = vadd.f32 %v1754, %v1755
        %v1773 = vrot.slane %v1772, 4
        %v1774 = vadd.f32 %v1772, %v1773
        %v1775 = vrot.slane %v1774, 2
        %v1776 = vadd.f32 %v1774, %v1775
        %v1777 = vrot.slane %v1776, 1
        %v1778 = vadd.f32 %v1776, %v1777
        %v1779 = vadd.f32 %v1756, %v1757
        %v1780 = vrot.slane %v1779, 4
        %v1781 = vadd.f32 %v1779, %v1780
        %v1782 = vrot.slane %v1781, 2
        %v1783 = vadd.f32 %v1781, %v1782
        %v1784 = vrot.slane %v1783, 1
        %v1785 = vadd.f32 %v1783, %v1784
        %v1786 = vmul.f32 %v1544, %v1764
        %v1787 = vmul.f32 %v1544, %v1771
        %v1788 = vmul.f32 %v1544, %v1778
        %v1789 = vmul.f32 %v1544, %v1785
        %v1790 = vadd.f32 %v1786, 0.0
        %v1791 = vadd.f32 %v1787, 0.0
        %v1792 = vadd.f32 %v1788, 0.0
        %v1793 = vadd.f32 %v1789, 0.0
        %v1798 = vrot.slane %v1786, 1
        %v1799 = vrot.slane %v1787, 1
        %v1800 = vrot.slane %v1788, 1
        %v1801 = vrot.slane %v1789, 1
        %v1806 = vadd.f32 %v1790, %v1798
        %v1807 = vadd.f32 %v1791, %v1799
        %v1808 = vadd.f32 %v1792, %v1800
        %v1809 = vadd.f32 %v1793, %v1801
        %v1810 = vrot.slane %v1786, 2
        %v1811 = vrot.slane %v1787, 2
        %v1812 = vrot.slane %v1788, 2
        %v1813 = vrot.slane %v1789, 2
        %v1818 = vadd.f32 %v1806, %v1810
        %v1819 = vadd.f32 %v1807, %v1811
        %v1820 = vadd.f32 %v1808, %v1812
        %v1821 = vadd.f32 %v1809, %v1813
        %v1822 = vrot.slane %v1786, 3
        %v1823 = vrot.slane %v1787, 3
        %v1824 = vrot.slane %v1788, 3
        %v1825 = vrot.slane %v1789, 3
        %v1830 = vadd.f32 %v1818, %v1822
        %v1831 = vadd.f32 %v1819, %v1823
        %v1832 = vadd.f32 %v1820, %v1824
        %v1833 = vadd.f32 %v1821, %v1825
        %v1834 = vrot.slane %v1786, 4
        %v1835 = vrot.slane %v1787, 4
        %v1836 = vrot.slane %v1788, 4
        %v1837 = vrot.slane %v1789, 4
        %v1842 = vadd.f32 %v1830, %v1834
        %v1843 = vadd.f32 %v1831, %v1835
        %v1844 = vadd.f32 %v1832, %v1836
        %v1845 = vadd.f32 %v1833, %v1837
        %v1846 = vrot.slane %v1786, 5
        %v1847 = vrot.slane %v1787, 5
        %v1848 = vrot.slane %v1788, 5
        %v1849 = vrot.slane %v1789, 5
        %v1854 = vadd.f32 %v1842, %v1846
        %v1855 = vadd.f32 %v1843, %v1847
        %v1856 = vadd.f32 %v1844, %v1848
        %v1857 = vadd.f32 %v1845, %v1849
        %v1858 = vrot.slane %v1786, 6
        %v1859 = vrot.slane %v1787, 6
        %v1860 = vrot.slane %v1788, 6
        %v1861 = vrot.slane %v1789, 6
        %v1866 = vadd.f32 %v1854, %v1858
        %v1867 = vadd.f32 %v1855, %v1859
        %v1868 = vadd.f32 %v1856, %v1860
        %v1869 = vadd.f32 %v1857, %v1861
        %v1870 = vrot.slane %v1786, 7
        %v1871 = vrot.slane %v1787, 7
        %v1872 = vrot.slane %v1788, 7
        %v1873 = vrot.slane %v1789, 7
        %v1878 = vadd.f32 %v1866, %v1870
        %v1879 = vadd.f32 %v1867, %v1871
        %v1880 = vadd.f32 %v1868, %v1872
        %v1881 = vadd.f32 %v1869, %v1873
        %v1882 = vlaneseq
        %v1883 = vshrl.u32 %v1882, 7
        %v1884 = vsub.s32 0, %v1883
        %v1885 = vrot.slane %v1878, %v1884
        %v1886 = vlaneseq
        %v1887 = vshrl.u32 %v1886, 7
        %v1888 = vsub.s32 0, %v1887
        %v1889 = vrot.slane %v1879, %v1888
        %v1890 = vlaneseq
        %v1891 = vshrl.u32 %v1890, 7
        %v1892 = vsub.s32 0, %v1891
        %v1893 = vrot.slane %v1880, %v1892
        %v1894 = vlaneseq
        %v1895 = vshrl.u32 %v1894, 7
        %v1896 = vsub.s32 0, %v1895
        %v1897 = vrot.slane %v1881, %v1896
        %v1898 = vsub.f32 %v1428, %v1885
        %v1899 = vsub.f32 %v1429, %v1885
        %v1900 = vsub.f32 %v1430, %v1889
        %v1901 = vsub.f32 %v1431, %v1889
        %v1902 = vsub.f32 %v1432, %v1893
        %v1903 = vsub.f32 %v1433, %v1893
        %v1904 = vsub.f32 %v1434, %v1897
        %v1905 = vsub.f32 %v1435, %v1897
        %v1906 = vmul.f32 %v1898, %v1898
        %v1907 = vmul.f32 %v1899, %v1899
        %v1908 = vmul.f32 %v1900, %v1900
        %v1909 = vmul.f32 %v1901, %v1901
        %v1910 = vmul.f32 %v1902, %v1902
        %v1911 = vmul.f32 %v1903, %v1903
        %v1912 = vmul.f32 %v1904, %v1904
        %v1913 = vmul.f32 %v1905, %v1905
        %v1914 = vmul.f32 %v1742, %v1906
        %v1915 = vmul.f32 %v1743, %v1907
        %v1916 = vmul.f32 %v1744, %v1908
        %v1917 = vmul.f32 %v1745, %v1909
        %v1918 = vmul.f32 %v1746, %v1910
        %v1919 = vmul.f32 %v1747, %v1911
        %v1920 = vmul.f32 %v1748, %v1912
        %v1921 = vmul.f32 %v1749, %v1913
        %v1922 = vadd.f32 %v1914, %v1915
        %v1923 = vrot.slane %v1922, 4
        %v1924 = vadd.f32 %v1922, %v1923
        %v1925 = vrot.slane %v1924, 2
        %v1926 = vadd.f32 %v1924, %v1925
        %v1927 = vrot.slane %v1926, 1
        %v1928 = vadd.f32 %v1926, %v1927
        %v1929 = vadd.f32 %v1916, %v1917
        %v1930 = vrot.slane %v1929, 4
        %v1931 = vadd.f32 %v1929, %v1930
        %v1932 = vrot.slane %v1931, 2
        %v1933 = vadd.f32 %v1931, %v1932
        %v1934 = vrot.slane %v1933, 1
        %v1935 = vadd.f32 %v1933, %v1934
        %v1936 = vadd.f32 %v1918, %v1919
        %v1937 = vrot.slane %v1936, 4
        %v1938 = vadd.f32 %v1936, %v1937
        %v1939 = vrot.slane %v1938, 2
        %v1940 = vadd.f32 %v1938, %v1939
        %v1941 = vrot.slane %v1940, 1
        %v1942 = vadd.f32 %v1940, %v1941
        %v1943 = vadd.f32 %v1920, %v1921
        %v1944 = vrot.slane %v1943, 4
        %v1945 = vadd.f32 %v1943, %v1944
        %v1946 = vrot.slane %v1945, 2
        %v1947 = vadd.f32 %v1945, %v1946
        %v1948 = vrot.slane %v1947, 1
        %v1949 = vadd.f32 %v1947, %v1948
        %v1950 = vmul.f32 %v1544, %v1928
        %v1951 = vmul.f32 %v1544, %v1935
        %v1952 = vmul.f32 %v1544, %v1942
        %v1953 = vmul.f32 %v1544, %v1949
        %v1954 = vadd.f32 %v1950, 0.0
        %v1955 = vadd.f32 %v1951, 0.0
        %v1956 = vadd.f32 %v1952, 0.0
        %v1957 = vadd.f32 %v1953, 0.0
        %v1962 = vrot.slane %v1950, 1
        %v1963 = vrot.slane %v1951, 1
        %v1964 = vrot.slane %v1952, 1
        %v1965 = vrot.slane %v1953, 1
        %v1970 = vadd.f32 %v1954, %v1962
        %v1971 = vadd.f32 %v1955, %v1963
        %v1972 = vadd.f32 %v1956, %v1964
        %v1973 = vadd.f32 %v1957, %v1965
        %v1974 = vrot.slane %v1950, 2
        %v1975 = vrot.slane %v1951, 2
        %v1976 = vrot.slane %v1952, 2
        %v1977 = vrot.slane %v1953, 2
        %v1982 = vadd.f32 %v1970, %v1974
        %v1983 = vadd.f32 %v1971, %v1975
        %v1984 = vadd.f32 %v1972, %v1976
        %v1985 = vadd.f32 %v1973, %v1977
        %v1986 = vrot.slane %v1950, 3
        %v1987 = vrot.slane %v1951, 3
        %v1988 = vrot.slane %v1952, 3
        %v1989 = vrot.slane %v1953, 3
        %v1994 = vadd.f32 %v1982, %v1986
        %v1995 = vadd.f32 %v1983, %v1987
        %v1996 = vadd.f32 %v1984, %v1988
        %v1997 = vadd.f32 %v1985, %v1989
        %v1998 = vrot.slane %v1950, 4
        %v1999 = vrot.slane %v1951, 4
        %v2000 = vrot.slane %v1952, 4
        %v2001 = vrot.slane %v1953, 4
        %v2006 = vadd.f32 %v1994, %v1998
        %v2007 = vadd.f32 %v1995, %v1999
        %v2008 = vadd.f32 %v1996, %v2000
        %v2009 = vadd.f32 %v1997, %v2001
        %v2010 = vrot.slane %v1950, 5
        %v2011 = vrot.slane %v1951, 5
        %v2012 = vrot.slane %v1952, 5
        %v2013 = vrot.slane %v1953, 5
        %v2018 = vadd.f32 %v2006, %v2010
        %v2019 = vadd.f32 %v2007, %v2011
        %v2020 = vadd.f32 %v2008, %v2012
        %v2021 = vadd.f32 %v2009, %v2013
        %v2022 = vrot.slane %v1950, 6
        %v2023 = vrot.slane %v1951, 6
        %v2024 = vrot.slane %v1952, 6
        %v2025 = vrot.slane %v1953, 6
        %v2030 = vadd.f32 %v2018, %v2022
        %v2031 = vadd.f32 %v2019, %v2023
        %v2032 = vadd.f32 %v2020, %v2024
        %v2033 = vadd.f32 %v2021, %v2025
        %v2034 = vrot.slane %v1950, 7
        %v2035 = vrot.slane %v1951, 7
        %v2036 = vrot.slane %v1952, 7
        %v2037 = vrot.slane %v1953, 7
        %v2042 = vadd.f32 %v2030, %v2034
        %v2043 = vadd.f32 %v2031, %v2035
        %v2044 = vadd.f32 %v2032, %v2036
        %v2045 = vadd.f32 %v2033, %v2037
        %v2046 = vadd.f32 %v2042, 1e-05
        %v2047 = vadd.f32 %v2043, 1e-05
        %v2048 = vadd.f32 %v2044, 1e-05
        %v2049 = vadd.f32 %v2045, 1e-05
        %v2050 = vrcp.pop %v2046
        %v2051 = vrcp.pop %v2047
        %v2052 = vrcp.pop %v2048
        %v2053 = vrcp.pop %v2049
        %v2054 = vmul.f32 %v2046, %v2050
        %v2055 = vmul.f32 %v2047, %v2051
        %v2056 = vmul.f32 %v2048, %v2052
        %v2057 = vmul.f32 %v2049, %v2053
        %v2058 = vsub.f32 2.0, %v2054
        %v2059 = vsub.f32 2.0, %v2055
        %v2060 = vsub.f32 2.0, %v2056
        %v2061 = vsub.f32 2.0, %v2057
        %v2062 = vmul.f32 %v2050, %v2058
        %v2063 = vmul.f32 %v2051, %v2059
        %v2064 = vmul.f32 %v2052, %v2060
        %v2065 = vmul.f32 %v2053, %v2061
        %v2066 = vmul.f32 %v2062, 0.5
        %v2067 = vmul.f32 %v2063, 0.5
        %v2068 = vmul.f32 %v2064, 0.5
        %v2069 = vmul.f32 %v2065, 0.5
        %v2070 = vlog2.pop %v2046
        %v2071 = vmul.f32 %v2070, 0.6931472
        %v2072 = vlog2.pop %v2047
        %v2073 = vmul.f32 %v2072, 0.6931472
        %v2074 = vlog2.pop %v2048
        %v2075 = vmul.f32 %v2074, 0.6931472
        %v2076 = vlog2.pop %v2049
        %v2077 = vmul.f32 %v2076, 0.6931472
        %v2078 = vmul.f32 %v2071, 0.5
        %v2079 = vmul.f32 %v2073, 0.5
        %v2080 = vmul.f32 %v2075, 0.5
        %v2081 = vmul.f32 %v2077, 0.5
        %v2082 = vlaneseq
        %v2083 = vshrl.u32 %v2082, 7
        %v2084 = vsub.s32 0, %v2083
        %v2085 = vrot.slane %v2066, %v2084
        %v2086 = vlaneseq
        %v2087 = vshrl.u32 %v2086, 7
        %v2088 = vsub.s32 0, %v2087
        %v2089 = vrot.slane %v2067, %v2088
        %v2090 = vlaneseq
        %v2091 = vshrl.u32 %v2090, 7
        %v2092 = vsub.s32 0, %v2091
        %v2093 = vrot.slane %v2068, %v2092
        %v2094 = vlaneseq
        %v2095 = vshrl.u32 %v2094, 7
        %v2096 = vsub.s32 0, %v2095
        %v2097 = vrot.slane %v2069, %v2096
        %v2098 = vmul.f32 %v1906, %v2085
        %v2099 = vmul.f32 %v1907, %v2085
        %v2100 = vmul.f32 %v1908, %v2089
        %v2101 = vmul.f32 %v1909, %v2089
        %v2102 = vmul.f32 %v1910, %v2093
        %v2103 = vmul.f32 %v1911, %v2093
        %v2104 = vmul.f32 %v1912, %v2097
        %v2105 = vmul.f32 %v1913, %v2097
        %v2106 = vlaneseq
        %v2107 = vshrl.u32 %v2106, 7
        %v2108 = vsub.s32 0, %v2107
        %v2109 = vrot.slane %v2078, %v2108
        %v2110 = vlaneseq
        %v2111 = vshrl.u32 %v2110, 7
        %v2112 = vsub.s32 0, %v2111
        %v2113 = vrot.slane %v2079, %v2112
        %v2114 = vlaneseq
        %v2115 = vshrl.u32 %v2114, 7
        %v2116 = vsub.s32 0, %v2115
        %v2117 = vrot.slane %v2080, %v2116
        %v2118 = vlaneseq
        %v2119 = vshrl.u32 %v2118, 7
        %v2120 = vsub.s32 0, %v2119
        %v2121 = vrot.slane %v2081, %v2120
        %v2122 = vadd.f32 %v2098, %v2109
        %v2123 = vadd.f32 %v2099, %v2109
        %v2124 = vadd.f32 %v2100, %v2113
        %v2125 = vadd.f32 %v2101, %v2113
        %v2126 = vadd.f32 %v2102, %v2117
        %v2127 = vadd.f32 %v2103, %v2117
        %v2128 = vadd.f32 %v2104, %v2121
        %v2129 = vadd.f32 %v2105, %v2121
        %2130 = vmatprep.subr.mxu0 0.0
        %2131 = vmatpush1.xpose.msra.mxu0 %v1544
        %2132 = vmatprep.subr.mxu0 0.0
        %2133 = vmatpush1.xpose.msra.mxu0 0.0
        %2134 = vmatprep.subr.mxu0 0.0
        %2135 = vmatpush1.xpose.msra.mxu0 0.0
        %2136 = vmatprep.subr.mxu0 0.0
        %2137 = vmatpush1.xpose.msra.mxu0 0.0
        %2138 = vmatprep.subr.mxu0 0.0
        %2139 = vmatpush1.xpose.msra.mxu0 0.0
        %2140 = vmatprep.subr.mxu0 0.0
        %2141 = vmatpush1.xpose.msra.mxu0 0.0
        %2142 = vmatprep.subr.mxu0 0.0
        %2143 = vmatpush1.xpose.msra.mxu0 0.0
        %2144 = vmatprep.subr.mxu0 0.0
        %2145 = vmatpush1.xpose.msra.mxu0 0.0
        %2146 = vmatprep.subr.mxu0 0.0
        %2147 = vmatpush1.xpose.msra.mxu0 0.0
        %2148 = vmatprep.subr.mxu0 0.0
        %2149 = vmatpush1.xpose.msra.mxu0 0.0
        %2150 = vmatprep.subr.mxu0 0.0
        %2151 = vmatpush1.xpose.msra.mxu0 0.0
        %2152 = vmatprep.subr.mxu0 0.0
        %2153 = vmatpush1.xpose.msra.mxu0 0.0
        %2154 = vmatprep.subr.mxu0 0.0
        %2155 = vmatpush1.xpose.msra.mxu0 0.0
        %2156 = vmatprep.subr.mxu0 0.0
        %2157 = vmatpush1.xpose.msra.mxu0 0.0
        %2158 = vmatprep.subr.mxu0 0.0
        %2159 = vmatpush1.xpose.msra.mxu0 0.0
        %2160 = vmatprep.subr.mxu0 0.0
        %2161 = vmatpush1.xpose.msra.mxu0 0.0
        %2162 = vmatprep.subr.mxu0 0.0
        %2163 = vmatpush1.xpose.msra.mxu0 0.0
        %2164 = vmatprep.subr.mxu0 0.0
        %2165 = vmatpush1.xpose.msra.mxu0 0.0
        %2166 = vmatprep.subr.mxu0 0.0
        %2167 = vmatpush1.xpose.msra.mxu0 0.0
        %2168 = vmatprep.subr.mxu0 0.0
        %2169 = vmatpush1.xpose.msra.mxu0 0.0
        %2170 = vmatprep.subr.mxu0 0.0
        %2171 = vmatpush1.xpose.msra.mxu0 0.0
        %2172 = vmatprep.subr.mxu0 0.0
        %2173 = vmatpush1.xpose.msra.mxu0 0.0
        %2174 = vmatprep.subr.mxu0 0.0
        %2175 = vmatpush1.xpose.msra.mxu0 0.0
        %2176 = vmatprep.subr.mxu0 0.0
        %2177 = vmatpush1.xpose.msra.mxu0 0.0
        %2178 = vmatprep.subr.mxu0 0.0
        %2179 = vmatpush1.xpose.msra.mxu0 0.0
        %2180 = vmatprep.subr.mxu0 0.0
        %2181 = vmatpush1.xpose.msra.mxu0 0.0
        %2182 = vmatprep.subr.mxu0 0.0
        %2183 = vmatpush1.xpose.msra.mxu0 0.0
        %2184 = vmatprep.subr.mxu0 0.0
        %2185 = vmatpush1.xpose.msra.mxu0 0.0
        %2186 = vmatprep.subr.mxu0 0.0
        %2187 = vmatpush1.xpose.msra.mxu0 0.0
        %2188 = vmatprep.subr.mxu0 0.0
        %2189 = vmatpush1.xpose.msra.mxu0 0.0
        %2190 = vmatprep.subr.mxu0 0.0
        %2191 = vmatpush1.xpose.msra.mxu0 0.0
        %2192 = vmatprep.subr.mxu0 0.0
        %2193 = vmatpush1.xpose.msra.mxu0 0.0
        %2194 = vmatprep.mubr.f32.mxu0 0.0
        %2195 = vmatmul.mubr.f32.gmra.mrb[0].mxu0 %v2122
        %v2196 = vpop.f32.mrb[0].mxu0
        %v2197 = vadd.f32 0.0, %v2196
        %v2198 = vpop.f32.mrb[0].mxu0
        %2199 = vmatprep.mubr.f32.mxu0 0.0
        %2200 = vmatmul.mubr.f32.gmra.mrb[0].mxu0 %v2123
        %v2201 = vpop.f32.mrb[0].mxu0
        %v2202 = vadd.f32 0.0, %v2201
        %v2203 = vpop.f32.mrb[0].mxu0
        %2204 = vdwg.mxu0
        %2205 = vmatprep.subr.mxu0 0.0
        %2206 = vmatpush1.xpose.msra.mxu0 %v1544
        %2207 = vmatprep.subr.mxu0 0.0
        %2208 = vmatpush1.xpose.msra.mxu0 0.0
        %2209 = vmatprep.subr.mxu0 0.0
        %2210 = vmatpush1.xpose.msra.mxu0 0.0
        %2211 = vmatprep.subr.mxu0 0.0
        %2212 = vmatpush1.xpose.msra.mxu0 0.0
        %2213 = vmatprep.subr.mxu0 0.0
        %2214 = vmatpush1.xpose.msra.mxu0 0.0
        %2215 = vmatprep.subr.mxu0 0.0
        %2216 = vmatpush1.xpose.msra.mxu0 0.0
        %2217 = vmatprep.subr.mxu0 0.0
        %2218 = vmatpush1.xpose.msra.mxu0 0.0
        %2219 = vmatprep.subr.mxu0 0.0
        %2220 = vmatpush1.xpose.msra.mxu0 0.0
        %2221 = vmatprep.subr.mxu0 0.0
        %2222 = vmatpush1.xpose.msra.mxu0 0.0
        %2223 = vmatprep.subr.mxu0 0.0
        %2224 = vmatpush1.xpose.msra.mxu0 0.0
        %2225 = vmatprep.subr.mxu0 0.0
        %2226 = vmatpush1.xpose.msra.mxu0 0.0
        %2227 = vmatprep.subr.mxu0 0.0
        %2228 = vmatpush1.xpose.msra.mxu0 0.0
        %2229 = vmatprep.subr.mxu0 0.0
        %2230 = vmatpush1.xpose.msra.mxu0 0.0
        %2231 = vmatprep.subr.mxu0 0.0
        %2232 = vmatpush1.xpose.msra.mxu0 0.0
        %2233 = vmatprep.subr.mxu0 0.0
        %2234 = vmatpush1.xpose.msra.mxu0 0.0
        %2235 = vmatprep.subr.mxu0 0.0
        %2236 = vmatpush1.xpose.msra.mxu0 0.0
        %2237 = vmatprep.subr.mxu0 0.0
        %2238 = vmatpush1.xpose.msra.mxu0 0.0
        %2239 = vmatprep.subr.mxu0 0.0
        %2240 = vmatpush1.xpose.msra.mxu0 0.0
        %2241 = vmatprep.subr.mxu0 0.0
        %2242 = vmatpush1.xpose.msra.mxu0 0.0
        %2243 = vmatprep.subr.mxu0 0.0
        %2244 = vmatpush1.xpose.msra.mxu0 0.0
        %2245 = vmatprep.subr.mxu0 0.0
        %2246 = vmatpush1.xpose.msra.mxu0 0.0
        %2247 = vmatprep.subr.mxu0 0.0
        %2248 = vmatpush1.xpose.msra.mxu0 0.0
        %2249 = vmatprep.subr.mxu0 0.0
        %2250 = vmatpush1.xpose.msra.mxu0 0.0
        %2251 = vmatprep.subr.mxu0 0.0
        %2252 = vmatpush1.xpose.msra.mxu0 0.0
        %2253 = vmatprep.subr.mxu0 0.0
        %2254 = vmatpush1.xpose.msra.mxu0 0.0
        %2255 = vmatprep.subr.mxu0 0.0
        %2256 = vmatpush1.xpose.msra.mxu0 0.0
        %2257 = vmatprep.subr.mxu0 0.0
        %2258 = vmatpush1.xpose.msra.mxu0 0.0
        %2259 = vmatprep.subr.mxu0 0.0
        %2260 = vmatpush1.xpose.msra.mxu0 0.0
        %2261 = vmatprep.subr.mxu0 0.0
        %2262 = vmatpush1.xpose.msra.mxu0 0.0
        %2263 = vmatprep.subr.mxu0 0.0
        %2264 = vmatpush1.xpose.msra.mxu0 0.0
        %2265 = vmatprep.subr.mxu0 0.0
        %2266 = vmatpush1.xpose.msra.mxu0 0.0
        %2267 = vmatprep.subr.mxu0 0.0
        %2268 = vmatpush1.xpose.msra.mxu0 0.0
        %2269 = vmatprep.mubr.f32.mxu0 0.0
        %2270 = vmatmul.mubr.f32.gmra.mrb[0].mxu0 %v2124
        %v2271 = vpop.f32.mrb[0].mxu0
        %v2272 = vadd.f32 0.0, %v2271
        %v2273 = vpop.f32.mrb[0].mxu0
        %2274 = vmatprep.mubr.f32.mxu0 0.0
        %2275 = vmatmul.mubr.f32.gmra.mrb[0].mxu0 %v2125
        %v2276 = vpop.f32.mrb[0].mxu0
        %v2277 = vadd.f32 0.0, %v2276
        %v2278 = vpop.f32.mrb[0].mxu0
        %2279 = vdwg.mxu0
        %2280 = vmatprep.subr.mxu0 0.0
        %2281 = vmatpush1.xpose.msra.mxu0 %v1544
        %2282 = vmatprep.subr.mxu0 0.0
        %2283 = vmatpush1.xpose.msra.mxu0 0.0
        %2284 = vmatprep.subr.mxu0 0.0
        %2285 = vmatpush1.xpose.msra.mxu0 0.0
        %2286 = vmatprep.subr.mxu0 0.0
        %2287 = vmatpush1.xpose.msra.mxu0 0.0
        %2288 = vmatprep.subr.mxu0 0.0
        %2289 = vmatpush1.xpose.msra.mxu0 0.0
        %2290 = vmatprep.subr.mxu0 0.0
        %2291 = vmatpush1.xpose.msra.mxu0 0.0
        %2292 = vmatprep.subr.mxu0 0.0
        %2293 = vmatpush1.xpose.msra.mxu0 0.0
        %2294 = vmatprep.subr.mxu0 0.0
        %2295 = vmatpush1.xpose.msra.mxu0 0.0
        %2296 = vmatprep.subr.mxu0 0.0
        %2297 = vmatpush1.xpose.msra.mxu0 0.0
        %2298 = vmatprep.subr.mxu0 0.0
        %2299 = vmatpush1.xpose.msra.mxu0 0.0
        %2300 = vmatprep.subr.mxu0 0.0
        %2301 = vmatpush1.xpose.msra.mxu0 0.0
        %2302 = vmatprep.subr.mxu0 0.0
        %2303 = vmatpush1.xpose.msra.mxu0 0.0
        %2304 = vmatprep.subr.mxu0 0.0
        %2305 = vmatpush1.xpose.msra.mxu0 0.0
        %2306 = vmatprep.subr.mxu0 0.0
        %2307 = vmatpush1.xpose.msra.mxu0 0.0
        %2308 = vmatprep.subr.mxu0 0.0
        %2309 = vmatpush1.xpose.msra.mxu0 0.0
        %2310 = vmatprep.subr.mxu0 0.0
        %2311 = vmatpush1.xpose.msra.mxu0 0.0
        %2312 = vmatprep.subr.mxu0 0.0
        %2313 = vmatpush1.xpose.msra.mxu0 0.0
        %2314 = vmatprep.subr.mxu0 0.0
        %2315 = vmatpush1.xpose.msra.mxu0 0.0
        %2316 = vmatprep.subr.mxu0 0.0
        %2317 = vmatpush1.xpose.msra.mxu0 0.0
        %2318 = vmatprep.subr.mxu0 0.0
        %2319 = vmatpush1.xpose.msra.mxu0 0.0
        %2320 = vmatprep.subr.mxu0 0.0
        %2321 = vmatpush1.xpose.msra.mxu0 0.0
        %2322 = vmatprep.subr.mxu0 0.0
        %2323 = vmatpush1.xpose.msra.mxu0 0.0
        %2324 = vmatprep.subr.mxu0 0.0
        %2325 = vmatpush1.xpose.msra.mxu0 0.0
        %2326 = vmatprep.subr.mxu0 0.0
        %2327 = vmatpush1.xpose.msra.mxu0 0.0
        %2328 = vmatprep.subr.mxu0 0.0
        %2329 = vmatpush1.xpose.msra.mxu0 0.0
        %2330 = vmatprep.subr.mxu0 0.0
        %2331 = vmatpush1.xpose.msra.mxu0 0.0
        %2332 = vmatprep.subr.mxu0 0.0
        %2333 = vmatpush1.xpose.msra.mxu0 0.0
        %2334 = vmatprep.subr.mxu0 0.0
        %2335 = vmatpush1.xpose.msra.mxu0 0.0
        %2336 = vmatprep.subr.mxu0 0.0
        %2337 = vmatpush1.xpose.msra.mxu0 0.0
        %2338 = vmatprep.subr.mxu0 0.0
        %2339 = vmatpush1.xpose.msra.mxu0 0.0
        %2340 = vmatprep.subr.mxu0 0.0
        %2341 = vmatpush1.xpose.msra.mxu0 0.0
        %2342 = vmatprep.subr.mxu0 0.0
        %2343 = vmatpush1.xpose.msra.mxu0 0.0
        %2344 = vmatprep.mubr.f32.mxu0 0.0
        %2345 = vmatmul.mubr.f32.gmra.mrb[0].mxu0 %v2126
        %v2346 = vpop.f32.mrb[0].mxu0
        %v2347 = vadd.f32 0.0, %v2346
        %v2348 = vpop.f32.mrb[0].mxu0
        %2349 = vmatprep.mubr.f32.mxu0 0.0
        %2350 = vmatmul.mubr.f32.gmra.mrb[0].mxu0 %v2127
        %v2351 = vpop.f32.mrb[0].mxu0
        %v2352 = vadd.f32 0.0, %v2351
        %v2353 = vpop.f32.mrb[0].mxu0
        %2354 = vdwg.mxu0
        %2355 = vmatprep.subr.mxu0 0.0
        %2356 = vmatpush1.xpose.msra.mxu0 %v1544
        %2357 = vmatprep.subr.mxu0 0.0
        %2358 = vmatpush1.xpose.msra.mxu0 0.0
        %2359 = vmatprep.subr.mxu0 0.0
        %2360 = vmatpush1.xpose.msra.mxu0 0.0
        %2361 = vmatprep.subr.mxu0 0.0
        %2362 = vmatpush1.xpose.msra.mxu0 0.0
        %2363 = vmatprep.subr.mxu0 0.0
        %2364 = vmatpush1.xpose.msra.mxu0 0.0
        %2365 = vmatprep.subr.mxu0 0.0
        %2366 = vmatpush1.xpose.msra.mxu0 0.0
        %2367 = vmatprep.subr.mxu0 0.0
        %2368 = vmatpush1.xpose.msra.mxu0 0.0
        %2369 = vmatprep.subr.mxu0 0.0
        %2370 = vmatpush1.xpose.msra.mxu0 0.0
        %2371 = vmatprep.subr.mxu0 0.0
        %2372 = vmatpush1.xpose.msra.mxu0 0.0
        %2373 = vmatprep.subr.mxu0 0.0
        %2374 = vmatpush1.xpose.msra.mxu0 0.0
        %2375 = vmatprep.subr.mxu0 0.0
        %2376 = vmatpush1.xpose.msra.mxu0 0.0
        %2377 = vmatprep.subr.mxu0 0.0
        %2378 = vmatpush1.xpose.msra.mxu0 0.0
        %2379 = vmatprep.subr.mxu0 0.0
        %2380 = vmatpush1.xpose.msra.mxu0 0.0
        %2381 = vmatprep.subr.mxu0 0.0
        %2382 = vmatpush1.xpose.msra.mxu0 0.0
        %2383 = vmatprep.subr.mxu0 0.0
        %2384 = vmatpush1.xpose.msra.mxu0 0.0
        %2385 = vmatprep.subr.mxu0 0.0
        %2386 = vmatpush1.xpose.msra.mxu0 0.0
        %2387 = vmatprep.subr.mxu0 0.0
        %2388 = vmatpush1.xpose.msra.mxu0 0.0
        %2389 = vmatprep.subr.mxu0 0.0
        %2390 = vmatpush1.xpose.msra.mxu0 0.0
        %2391 = vmatprep.subr.mxu0 0.0
        %2392 = vmatpush1.xpose.msra.mxu0 0.0
        %2393 = vmatprep.subr.mxu0 0.0
        %2394 = vmatpush1.xpose.msra.mxu0 0.0
        %2395 = vmatprep.subr.mxu0 0.0
        %2396 = vmatpush1.xpose.msra.mxu0 0.0
        %2397 = vmatprep.subr.mxu0 0.0
        %2398 = vmatpush1.xpose.msra.mxu0 0.0
        %2399 = vmatprep.subr.mxu0 0.0
        %2400 = vmatpush1.xpose.msra.mxu0 0.0
        %2401 = vmatprep.subr.mxu0 0.0
        %2402 = vmatpush1.xpose.msra.mxu0 0.0
        %2403 = vmatprep.subr.mxu0 0.0
        %2404 = vmatpush1.xpose.msra.mxu0 0.0
        %2405 = vmatprep.subr.mxu0 0.0
        %2406 = vmatpush1.xpose.msra.mxu0 0.0
        %2407 = vmatprep.subr.mxu0 0.0
        %2408 = vmatpush1.xpose.msra.mxu0 0.0
        %2409 = vmatprep.subr.mxu0 0.0
        %2410 = vmatpush1.xpose.msra.mxu0 0.0
        %2411 = vmatprep.subr.mxu0 0.0
        %2412 = vmatpush1.xpose.msra.mxu0 0.0
        %2413 = vmatprep.subr.mxu0 0.0
        %2414 = vmatpush1.xpose.msra.mxu0 0.0
        %2415 = vmatprep.subr.mxu0 0.0
        %2416 = vmatpush1.xpose.msra.mxu0 0.0
        %2417 = vmatprep.subr.mxu0 0.0
        %2418 = vmatpush1.xpose.msra.mxu0 0.0
        %2419 = vmatprep.mubr.f32.mxu0 0.0
        %2420 = vmatmul.mubr.f32.gmra.mrb[0].mxu0 %v2128
        %v2421 = vpop.f32.mrb[0].mxu0
        %v2422 = vadd.f32 0.0, %v2421
        %v2423 = vpop.f32.mrb[0].mxu0
        %2424 = vmatprep.mubr.f32.mxu0 0.0
        %2425 = vmatmul.mubr.f32.gmra.mrb[0].mxu0 %v2129
        %v2426 = vpop.f32.mrb[0].mxu0
        %v2427 = vadd.f32 0.0, %v2426
        %v2428 = vpop.f32.mrb[0].mxu0
        %2429 = vdwg.mxu0
        %v2430 = vsub.f32 0.0, %v2197
        %v2431 = vsub.f32 0.0, %v2202
        %v2432 = vsub.f32 0.0, %v2272
        %v2433 = vsub.f32 0.0, %v2277
        %v2434 = vsub.f32 0.0, %v2347
        %v2435 = vsub.f32 0.0, %v2352
        %v2436 = vsub.f32 0.0, %v2422
        %v2437 = vsub.f32 0.0, %v2427
        %v2438 = vmin.f32 %v1690, 0.0
        %v2439 = vmin.f32 %v1691, 0.0
        %v2440 = vmin.f32 %v1692, 0.0
        %v2441 = vmin.f32 %v1693, 0.0
        %v2442 = vand.u32 2147483647, %v1690
        %v2443 = vand.u32 2147483647, %v1691
        %v2444 = vand.u32 2147483647, %v1692
        %v2445 = vand.u32 2147483647, %v1693
        %v2446 = vsub.f32 0.0, %v2442
        %v2447 = vsub.f32 0.0, %v2443
        %v2448 = vsub.f32 0.0, %v2444
        %v2449 = vsub.f32 0.0, %v2445
        %v2450 = vmul.f32 %v2446, 1.442695
        %v2451 = vpow.pop %v2450
        %v2452 = vmul.f32 %v2447, 1.442695
        %v2453 = vpow.pop %v2452
        %v2454 = vmul.f32 %v2448, 1.442695
        %v2455 = vpow.pop %v2454
        %v2456 = vmul.f32 %v2449, 1.442695
        %v2457 = vpow.pop %v2456
        %v2458 = vadd.f32 %v2451, 1.0
        %v2459 = vadd.f32 %v2453, 1.0
        %v2460 = vadd.f32 %v2455, 1.0
        %v2461 = vadd.f32 %v2457, 1.0
        %v2462 = vlog2.pop %v2458
        %v2463 = vmul.f32 %v2462, 0.6931472
        %v2464 = vlog2.pop %v2459
        %v2465 = vmul.f32 %v2464, 0.6931472
        %v2466 = vlog2.pop %v2460
        %v2467 = vmul.f32 %v2466, 0.6931472
        %v2468 = vlog2.pop %v2461
        %v2469 = vmul.f32 %v2468, 0.6931472
        %v2470 = vsub.f32 %v2438, %v2463
        %v2471 = vsub.f32 %v2439, %v2465
        %v2472 = vsub.f32 %v2440, %v2467
        %v2473 = vsub.f32 %v2441, %v2469
        %v2474 = vadd.f32 %v2470, %v2430
        %v2475 = vadd.f32 %v2470, %v2431
        %v2476 = vadd.f32 %v2471, %v2432
        %v2477 = vadd.f32 %v2471, %v2433
        %v2478 = vadd.f32 %v2472, %v2434
        %v2479 = vadd.f32 %v2472, %v2435
        %v2480 = vadd.f32 %v2473, %v2436
        %v2481 = vadd.f32 %v2473, %v2437
        %v2482 = vsel %vm1609, %v2474, -inf
        %2483 = vmax.xlane.f32.xlu0 %v2482
        %v2484 = vpop.xlane.xlu0 %2483
        %v2485 = vsel %vm1609, %v2475, -inf
        %2486 = vmax.xlane.f32.xlu0 %v2485
        %v2487 = vpop.xlane.xlu0 %2486
        %v2488 = vsel %vm1609, %v2476, -inf
        %2489 = vmax.xlane.f32.xlu0 %v2488
        %v2490 = vpop.xlane.xlu0 %2489
        %v2491 = vsel %vm1609, %v2477, -inf
        %2492 = vmax.xlane.f32.xlu0 %v2491
        %v2493 = vpop.xlane.xlu0 %2492
        %v2494 = vsel %vm1609, %v2478, -inf
        %2495 = vmax.xlane.f32.xlu0 %v2494
        %v2496 = vpop.xlane.xlu0 %2495
        %v2497 = vsel %vm1609, %v2479, -inf
        %2498 = vmax.xlane.f32.xlu0 %v2497
        %v2499 = vpop.xlane.xlu0 %2498
        %v2500 = vsel %vm1609, %v2480, -inf
        %2501 = vmax.xlane.f32.xlu0 %v2500
        %v2502 = vpop.xlane.xlu0 %2501
        %v2503 = vsel %vm1609, %v2481, -inf
        %2504 = vmax.xlane.f32.xlu0 %v2503
        %v2505 = vpop.xlane.xlu0 %2504
        %v2506 = vsub.f32 %v2474, %v2484
        %v2507 = vsub.f32 %v2475, %v2487
        %v2508 = vsub.f32 %v2476, %v2490
        %v2509 = vsub.f32 %v2477, %v2493
        %v2510 = vsub.f32 %v2478, %v2496
        %v2511 = vsub.f32 %v2479, %v2499
        %v2512 = vsub.f32 %v2480, %v2502
        %v2513 = vsub.f32 %v2481, %v2505
        %v2514 = vmul.f32 %v2506, 1.442695
        %v2515 = vpow.pop %v2514
        %v2516 = vmul.f32 %v2507, 1.442695
        %v2517 = vpow.pop %v2516
        %v2518 = vmul.f32 %v2508, 1.442695
        %v2519 = vpow.pop %v2518
        %v2520 = vmul.f32 %v2509, 1.442695
        %v2521 = vpow.pop %v2520
        %v2522 = vmul.f32 %v2510, 1.442695
        %v2523 = vpow.pop %v2522
        %v2524 = vmul.f32 %v2511, 1.442695
        %v2525 = vpow.pop %v2524
        %v2526 = vmul.f32 %v2512, 1.442695
        %v2527 = vpow.pop %v2526
        %v2528 = vmul.f32 %v2513, 1.442695
        %v2529 = vpow.pop %v2528
        %v2530 = vsel %vm1609, %v2515, 0.0
        %2531 = vadd.xlane.f32.xlu0 %v2530
        %v2532 = vpop.xlane.xlu0 %2531
        %v2533 = vsel %vm1609, %v2517, 0.0
        %2534 = vadd.xlane.f32.xlu0 %v2533
        %v2535 = vpop.xlane.xlu0 %2534
        %v2536 = vsel %vm1609, %v2519, 0.0
        %2537 = vadd.xlane.f32.xlu0 %v2536
        %v2538 = vpop.xlane.xlu0 %2537
        %v2539 = vsel %vm1609, %v2521, 0.0
        %2540 = vadd.xlane.f32.xlu0 %v2539
        %v2541 = vpop.xlane.xlu0 %2540
        %v2542 = vsel %vm1609, %v2523, 0.0
        %2543 = vadd.xlane.f32.xlu0 %v2542
        %v2544 = vpop.xlane.xlu0 %2543
        %v2545 = vsel %vm1609, %v2525, 0.0
        %2546 = vadd.xlane.f32.xlu0 %v2545
        %v2547 = vpop.xlane.xlu0 %2546
        %v2548 = vsel %vm1609, %v2527, 0.0
        %2549 = vadd.xlane.f32.xlu0 %v2548
        %v2550 = vpop.xlane.xlu0 %2549
        %v2551 = vsel %vm1609, %v2529, 0.0
        %2552 = vadd.xlane.f32.xlu0 %v2551
        %v2553 = vpop.xlane.xlu0 %2552
        %v2554 = vrcp.pop %v2532
        %v2555 = vrcp.pop %v2535
        %v2556 = vrcp.pop %v2538
        %v2557 = vrcp.pop %v2541
        %v2558 = vrcp.pop %v2544
        %v2559 = vrcp.pop %v2547
        %v2560 = vrcp.pop %v2550
        %v2561 = vrcp.pop %v2553
        %v2562 = vmul.f32 %v2532, %v2554
        %v2563 = vmul.f32 %v2535, %v2555
        %v2564 = vmul.f32 %v2538, %v2556
        %v2565 = vmul.f32 %v2541, %v2557
        %v2566 = vmul.f32 %v2544, %v2558
        %v2567 = vmul.f32 %v2547, %v2559
        %v2568 = vmul.f32 %v2550, %v2560
        %v2569 = vmul.f32 %v2553, %v2561
        %v2570 = vsub.f32 2.0, %v2562
        %v2571 = vsub.f32 2.0, %v2563
        %v2572 = vsub.f32 2.0, %v2564
        %v2573 = vsub.f32 2.0, %v2565
        %v2574 = vsub.f32 2.0, %v2566
        %v2575 = vsub.f32 2.0, %v2567
        %v2576 = vsub.f32 2.0, %v2568
        %v2577 = vsub.f32 2.0, %v2569
        %v2578 = vmul.f32 %v2554, %v2570
        %v2579 = vmul.f32 %v2555, %v2571
        %v2580 = vmul.f32 %v2556, %v2572
        %v2581 = vmul.f32 %v2557, %v2573
        %v2582 = vmul.f32 %v2558, %v2574
        %v2583 = vmul.f32 %v2559, %v2575
        %v2584 = vmul.f32 %v2560, %v2576
        %v2585 = vmul.f32 %v2561, %v2577
        %v2586 = vmul.f32 %v2515, %v2578
        %v2587 = vmul.f32 %v2517, %v2579
        %v2588 = vmul.f32 %v2519, %v2580
        %v2589 = vmul.f32 %v2521, %v2581
        %v2590 = vmul.f32 %v2523, %v2582
        %v2591 = vmul.f32 %v2525, %v2583
        %v2592 = vmul.f32 %v2527, %v2584
        %v2593 = vmul.f32 %v2529, %v2585
        %v2594 = vmul.f32 %v1548, %v2586
        %v2595 = vmul.f32 %v1553, %v2587
        %v2596 = vmul.f32 %v1558, %v2588
        %v2597 = vmul.f32 %v1563, %v2589
        %v2598 = vmul.f32 %v1568, %v2590
        %v2599 = vmul.f32 %v1573, %v2591
        %v2600 = vmul.f32 %v1578, %v2592
        %v2601 = vmul.f32 %v1583, %v2593
        %v2602 = vsub.f32 %v1548, %v2594
        %v2603 = vsub.f32 %v1553, %v2595
        %v2604 = vsub.f32 %v1558, %v2596
        %v2605 = vsub.f32 %v1563, %v2597
        %v2606 = vsub.f32 %v1568, %v2598
        %v2607 = vsub.f32 %v1573, %v2599
        %v2608 = vsub.f32 %v1578, %v2600
        %v2609 = vsub.f32 %v1583, %v2601
        %v2610 = vmul.f32 %v1540, %v2594
        %v2611 = vmul.f32 %v1541, %v2595
        %v2612 = vmul.f32 %v1540, %v2596
        %v2613 = vmul.f32 %v1541, %v2597
        %v2614 = vmul.f32 %v1540, %v2598
        %v2615 = vmul.f32 %v1541, %v2599
        %v2616 = vmul.f32 %v1540, %v2600
        %v2617 = vmul.f32 %v1541, %v2601
        %v2618 = vsel %vm1609, %v2610, 0.0
        %v2619 = vsel %vm1609, %v2611, 0.0
        %v2620 = vadd.f32 %v2618, %v2619
        %v2621 = vrot.slane %v2620, 4
        %v2622 = vadd.f32 %v2620, %v2621
        %v2623 = vrot.slane %v2622, 2
        %v2624 = vadd.f32 %v2622, %v2623
        %v2625 = vrot.slane %v2624, 1
        %v2626 = vadd.f32 %v2624, %v2625
        %v2627 = vsel %vm1609, %v2612, 0.0
        %v2628 = vsel %vm1609, %v2613, 0.0
        %v2629 = vadd.f32 %v2627, %v2628
        %v2630 = vrot.slane %v2629, 4
        %v2631 = vadd.f32 %v2629, %v2630
        %v2632 = vrot.slane %v2631, 2
        %v2633 = vadd.f32 %v2631, %v2632
        %v2634 = vrot.slane %v2633, 1
        %v2635 = vadd.f32 %v2633, %v2634
        %v2636 = vsel %vm1609, %v2614, 0.0
        %v2637 = vsel %vm1609, %v2615, 0.0
        %v2638 = vadd.f32 %v2636, %v2637
        %v2639 = vrot.slane %v2638, 4
        %v2640 = vadd.f32 %v2638, %v2639
        %v2641 = vrot.slane %v2640, 2
        %v2642 = vadd.f32 %v2640, %v2641
        %v2643 = vrot.slane %v2642, 1
        %v2644 = vadd.f32 %v2642, %v2643
        %v2645 = vsel %vm1609, %v2616, 0.0
        %v2646 = vsel %vm1609, %v2617, 0.0
        %v2647 = vadd.f32 %v2645, %v2646
        %v2648 = vrot.slane %v2647, 4
        %v2649 = vadd.f32 %v2647, %v2648
        %v2650 = vrot.slane %v2649, 2
        %v2651 = vadd.f32 %v2649, %v2650
        %v2652 = vrot.slane %v2651, 1
        %v2653 = vadd.f32 %v2651, %v2652
        %v2654 = vmul.f32 %v1542, %v2602
        %v2655 = vmul.f32 %v1543, %v2603
        %v2656 = vmul.f32 %v1542, %v2604
        %v2657 = vmul.f32 %v1543, %v2605
        %v2658 = vmul.f32 %v1542, %v2606
        %v2659 = vmul.f32 %v1543, %v2607
        %v2660 = vmul.f32 %v1542, %v2608
        %v2661 = vmul.f32 %v1543, %v2609
        %v2662 = vsel %vm1609, %v2654, 0.0
        %v2663 = vsel %vm1609, %v2655, 0.0
        %v2664 = vadd.f32 %v2662, %v2663
        %v2665 = vrot.slane %v2664, 4
        %v2666 = vadd.f32 %v2664, %v2665
        %v2667 = vrot.slane %v2666, 2
        %v2668 = vadd.f32 %v2666, %v2667
        %v2669 = vrot.slane %v2668, 1
        %v2670 = vadd.f32 %v2668, %v2669
        %v2671 = vsel %vm1609, %v2656, 0.0
        %v2672 = vsel %vm1609, %v2657, 0.0
        %v2673 = vadd.f32 %v2671, %v2672
        %v2674 = vrot.slane %v2673, 4
        %v2675 = vadd.f32 %v2673, %v2674
        %v2676 = vrot.slane %v2675, 2
        %v2677 = vadd.f32 %v2675, %v2676
        %v2678 = vrot.slane %v2677, 1
        %v2679 = vadd.f32 %v2677, %v2678
        %v2680 = vsel %vm1609, %v2658, 0.0
        %v2681 = vsel %vm1609, %v2659, 0.0
        %v2682 = vadd.f32 %v2680, %v2681
        %v2683 = vrot.slane %v2682, 4
        %v2684 = vadd.f32 %v2682, %v2683
        %v2685 = vrot.slane %v2684, 2
        %v2686 = vadd.f32 %v2684, %v2685
        %v2687 = vrot.slane %v2686, 1
        %v2688 = vadd.f32 %v2686, %v2687
        %v2689 = vsel %vm1609, %v2660, 0.0
        %v2690 = vsel %vm1609, %v2661, 0.0
        %v2691 = vadd.f32 %v2689, %v2690
        %v2692 = vrot.slane %v2691, 4
        %v2693 = vadd.f32 %v2691, %v2692
        %v2694 = vrot.slane %v2693, 2
        %v2695 = vadd.f32 %v2693, %v2694
        %v2696 = vrot.slane %v2695, 1
        %v2697 = vadd.f32 %v2695, %v2696
        %v2698 = vsub.f32 %v2626, %v2670
        %v2699 = vsub.f32 %v2635, %v2679
        %v2700 = vsub.f32 %v2644, %v2688
        %v2701 = vsub.f32 %v2653, %v2697
        %v2702 = vsel %vm1609, %v2594, 0.0
        %v2703 = vsel %vm1609, %v2595, 0.0
        %v2704 = vadd.f32 %v2702, %v2703
        %v2705 = vrot.slane %v2704, 4
        %v2706 = vadd.f32 %v2704, %v2705
        %v2707 = vrot.slane %v2706, 2
        %v2708 = vadd.f32 %v2706, %v2707
        %v2709 = vrot.slane %v2708, 1
        %v2710 = vadd.f32 %v2708, %v2709
        %v2711 = vsel %vm1609, %v2596, 0.0
        %v2712 = vsel %vm1609, %v2597, 0.0
        %v2713 = vadd.f32 %v2711, %v2712
        %v2714 = vrot.slane %v2713, 4
        %v2715 = vadd.f32 %v2713, %v2714
        %v2716 = vrot.slane %v2715, 2
        %v2717 = vadd.f32 %v2715, %v2716
        %v2718 = vrot.slane %v2717, 1
        %v2719 = vadd.f32 %v2717, %v2718
        %v2720 = vsel %vm1609, %v2598, 0.0
        %v2721 = vsel %vm1609, %v2599, 0.0
        %v2722 = vadd.f32 %v2720, %v2721
        %v2723 = vrot.slane %v2722, 4
        %v2724 = vadd.f32 %v2722, %v2723
        %v2725 = vrot.slane %v2724, 2
        %v2726 = vadd.f32 %v2724, %v2725
        %v2727 = vrot.slane %v2726, 1
        %v2728 = vadd.f32 %v2726, %v2727
        %v2729 = vsel %vm1609, %v2600, 0.0
        %v2730 = vsel %vm1609, %v2601, 0.0
        %v2731 = vadd.f32 %v2729, %v2730
        %v2732 = vrot.slane %v2731, 4
        %v2733 = vadd.f32 %v2731, %v2732
        %v2734 = vrot.slane %v2733, 2
        %v2735 = vadd.f32 %v2733, %v2734
        %v2736 = vrot.slane %v2735, 1
        %v2737 = vadd.f32 %v2735, %v2736
        %v2738 = vadd.f32 %v2710, 1e-05
        %v2739 = vadd.f32 %v2719, 1e-05
        %v2740 = vadd.f32 %v2728, 1e-05
        %v2741 = vadd.f32 %v2737, 1e-05
        %v2742 = vrcp.pop %v2738
        %v2743 = vrcp.pop %v2739
        %v2744 = vrcp.pop %v2740
        %v2745 = vrcp.pop %v2741
        %v2746 = vmul.f32 %v2738, %v2742
        %v2747 = vmul.f32 %v2739, %v2743
        %v2748 = vmul.f32 %v2740, %v2744
        %v2749 = vmul.f32 %v2741, %v2745
        %v2750 = vsub.f32 2.0, %v2746
        %v2751 = vsub.f32 2.0, %v2747
        %v2752 = vsub.f32 2.0, %v2748
        %v2753 = vsub.f32 2.0, %v2749
        %v2754 = vmul.f32 %v2742, %v2750
        %v2755 = vmul.f32 %v2743, %v2751
        %v2756 = vmul.f32 %v2744, %v2752
        %v2757 = vmul.f32 %v2745, %v2753
        %v2758 = vmul.f32 %v2594, %v2754
        %v2759 = vmul.f32 %v2595, %v2754
        %v2760 = vmul.f32 %v2596, %v2755
        %v2761 = vmul.f32 %v2597, %v2755
        %v2762 = vmul.f32 %v2598, %v2756
        %v2763 = vmul.f32 %v2599, %v2756
        %v2764 = vmul.f32 %v2600, %v2757
        %v2765 = vmul.f32 %v2601, %v2757
        %2767 = vset.pattern.permute.xlu0 0
        %2768 = vperm.xlu0 %2767, %v2758
        %v2769 = vpop.permute.xlu0 %2768
        %2772 = vset.pattern.permute.xlu0 0
        %2773 = vperm.xlu0 %2772, %v2759
        %v2774 = vpop.permute.xlu0 %2773
        %2777 = vset.pattern.permute.xlu0 0
        %2778 = vperm.xlu0 %2777, %v2760
        %v2779 = vpop.permute.xlu0 %2778
        %2782 = vset.pattern.permute.xlu0 0
        %2783 = vperm.xlu0 %2782, %v2761
        %v2784 = vpop.permute.xlu0 %2783
        %2787 = vset.pattern.permute.xlu0 0
        %2788 = vperm.xlu0 %2787, %v2762
        %v2789 = vpop.permute.xlu0 %2788
        %2792 = vset.pattern.permute.xlu0 0
        %2793 = vperm.xlu0 %2792, %v2763
        %v2794 = vpop.permute.xlu0 %2793
        %2797 = vset.pattern.permute.xlu0 0
        %2798 = vperm.xlu0 %2797, %v2764
        %v2799 = vpop.permute.xlu0 %2798
        %2802 = vset.pattern.permute.xlu0 0
        %2803 = vperm.xlu0 %2802, %v2765
        %v2804 = vpop.permute.xlu0 %2803
        %v2806 = vmul.f32 %v2769, %v1428
        %v2807 = vmul.f32 %v2774, %v1429
        %v2808 = vmul.f32 %v2779, %v1430
        %v2809 = vmul.f32 %v2784, %v1431
        %v2810 = vmul.f32 %v2789, %v1432
        %v2811 = vmul.f32 %v2794, %v1433
        %v2812 = vmul.f32 %v2799, %v1434
        %v2813 = vmul.f32 %v2804, %v1435
        %v2814 = vadd.f32 %v2806, %v2807
        %v2815 = vrot.slane %v2814, 4
        %v2816 = vadd.f32 %v2814, %v2815
        %v2817 = vrot.slane %v2816, 2
        %v2818 = vadd.f32 %v2816, %v2817
        %v2819 = vrot.slane %v2818, 1
        %v2820 = vadd.f32 %v2818, %v2819
        %v2821 = vadd.f32 %v2808, %v2809
        %v2822 = vrot.slane %v2821, 4
        %v2823 = vadd.f32 %v2821, %v2822
        %v2824 = vrot.slane %v2823, 2
        %v2825 = vadd.f32 %v2823, %v2824
        %v2826 = vrot.slane %v2825, 1
        %v2827 = vadd.f32 %v2825, %v2826
        %v2828 = vadd.f32 %v2810, %v2811
        %v2829 = vrot.slane %v2828, 4
        %v2830 = vadd.f32 %v2828, %v2829
        %v2831 = vrot.slane %v2830, 2
        %v2832 = vadd.f32 %v2830, %v2831
        %v2833 = vrot.slane %v2832, 1
        %v2834 = vadd.f32 %v2832, %v2833
        %v2835 = vadd.f32 %v2812, %v2813
        %v2836 = vrot.slane %v2835, 4
        %v2837 = vadd.f32 %v2835, %v2836
        %v2838 = vrot.slane %v2837, 2
        %v2839 = vadd.f32 %v2837, %v2838
        %v2840 = vrot.slane %v2839, 1
        %v2841 = vadd.f32 %v2839, %v2840
        %v2842 = vmul.f32 %v1544, %v2820
        %v2843 = vmul.f32 %v1544, %v2827
        %v2844 = vmul.f32 %v1544, %v2834
        %v2845 = vmul.f32 %v1544, %v2841
        %v2846 = vadd.f32 %v2842, 0.0
        %v2847 = vadd.f32 %v2843, 0.0
        %v2848 = vadd.f32 %v2844, 0.0
        %v2849 = vadd.f32 %v2845, 0.0
        %2850 = vset.pattern.permute.xlu0 1
        %2851 = vperm.xlu0 %2850, %v2758
        %v2852 = vpop.permute.xlu0 %2851
        %2854 = vset.pattern.permute.xlu0 1
        %2855 = vperm.xlu0 %2854, %v2759
        %v2856 = vpop.permute.xlu0 %2855
        %2858 = vset.pattern.permute.xlu0 1
        %2859 = vperm.xlu0 %2858, %v2760
        %v2860 = vpop.permute.xlu0 %2859
        %2862 = vset.pattern.permute.xlu0 1
        %2863 = vperm.xlu0 %2862, %v2761
        %v2864 = vpop.permute.xlu0 %2863
        %2866 = vset.pattern.permute.xlu0 1
        %2867 = vperm.xlu0 %2866, %v2762
        %v2868 = vpop.permute.xlu0 %2867
        %2870 = vset.pattern.permute.xlu0 1
        %2871 = vperm.xlu0 %2870, %v2763
        %v2872 = vpop.permute.xlu0 %2871
        %2874 = vset.pattern.permute.xlu0 1
        %2875 = vperm.xlu0 %2874, %v2764
        %v2876 = vpop.permute.xlu0 %2875
        %2878 = vset.pattern.permute.xlu0 1
        %2879 = vperm.xlu0 %2878, %v2765
        %v2880 = vpop.permute.xlu0 %2879
        %v2882 = vmul.f32 %v2852, %v1428
        %v2883 = vmul.f32 %v2856, %v1429
        %v2884 = vmul.f32 %v2860, %v1430
        %v2885 = vmul.f32 %v2864, %v1431
        %v2886 = vmul.f32 %v2868, %v1432
        %v2887 = vmul.f32 %v2872, %v1433
        %v2888 = vmul.f32 %v2876, %v1434
        %v2889 = vmul.f32 %v2880, %v1435
        %v2890 = vadd.f32 %v2882, %v2883
        %v2891 = vrot.slane %v2890, 4
        %v2892 = vadd.f32 %v2890, %v2891
        %v2893 = vrot.slane %v2892, 2
        %v2894 = vadd.f32 %v2892, %v2893
        %v2895 = vrot.slane %v2894, 1
        %v2896 = vadd.f32 %v2894, %v2895
        %v2897 = vadd.f32 %v2884, %v2885
        %v2898 = vrot.slane %v2897, 4
        %v2899 = vadd.f32 %v2897, %v2898
        %v2900 = vrot.slane %v2899, 2
        %v2901 = vadd.f32 %v2899, %v2900
        %v2902 = vrot.slane %v2901, 1
        %v2903 = vadd.f32 %v2901, %v2902
        %v2904 = vadd.f32 %v2886, %v2887
        %v2905 = vrot.slane %v2904, 4
        %v2906 = vadd.f32 %v2904, %v2905
        %v2907 = vrot.slane %v2906, 2
        %v2908 = vadd.f32 %v2906, %v2907
        %v2909 = vrot.slane %v2908, 1
        %v2910 = vadd.f32 %v2908, %v2909
        %v2911 = vadd.f32 %v2888, %v2889
        %v2912 = vrot.slane %v2911, 4
        %v2913 = vadd.f32 %v2911, %v2912
        %v2914 = vrot.slane %v2913, 2
        %v2915 = vadd.f32 %v2913, %v2914
        %v2916 = vrot.slane %v2915, 1
        %v2917 = vadd.f32 %v2915, %v2916
        %v2918 = vmul.f32 %v1544, %v2896
        %v2919 = vmul.f32 %v1544, %v2903
        %v2920 = vmul.f32 %v1544, %v2910
        %v2921 = vmul.f32 %v1544, %v2917
        %v2926 = vrot.slane %v2918, 1
        %v2927 = vrot.slane %v2919, 1
        %v2928 = vrot.slane %v2920, 1
        %v2929 = vrot.slane %v2921, 1
        %v2934 = vadd.f32 %v2846, %v2926
        %v2935 = vadd.f32 %v2847, %v2927
        %v2936 = vadd.f32 %v2848, %v2928
        %v2937 = vadd.f32 %v2849, %v2929
        %2938 = vset.pattern.permute.xlu0 2
        %2939 = vperm.xlu0 %2938, %v2758
        %v2940 = vpop.permute.xlu0 %2939
        %2942 = vset.pattern.permute.xlu0 2
        %2943 = vperm.xlu0 %2942, %v2759
        %v2944 = vpop.permute.xlu0 %2943
        %2946 = vset.pattern.permute.xlu0 2
        %2947 = vperm.xlu0 %2946, %v2760
        %v2948 = vpop.permute.xlu0 %2947
        %2950 = vset.pattern.permute.xlu0 2
        %2951 = vperm.xlu0 %2950, %v2761
        %v2952 = vpop.permute.xlu0 %2951
        %2954 = vset.pattern.permute.xlu0 2
        %2955 = vperm.xlu0 %2954, %v2762
        %v2956 = vpop.permute.xlu0 %2955
        %2958 = vset.pattern.permute.xlu0 2
        %2959 = vperm.xlu0 %2958, %v2763
        %v2960 = vpop.permute.xlu0 %2959
        %2962 = vset.pattern.permute.xlu0 2
        %2963 = vperm.xlu0 %2962, %v2764
        %v2964 = vpop.permute.xlu0 %2963
        %2966 = vset.pattern.permute.xlu0 2
        %2967 = vperm.xlu0 %2966, %v2765
        %v2968 = vpop.permute.xlu0 %2967
        %v2970 = vmul.f32 %v2940, %v1428
        %v2971 = vmul.f32 %v2944, %v1429
        %v2972 = vmul.f32 %v2948, %v1430
        %v2973 = vmul.f32 %v2952, %v1431
        %v2974 = vmul.f32 %v2956, %v1432
        %v2975 = vmul.f32 %v2960, %v1433
        %v2976 = vmul.f32 %v2964, %v1434
        %v2977 = vmul.f32 %v2968, %v1435
        %v2978 = vadd.f32 %v2970, %v2971
        %v2979 = vrot.slane %v2978, 4
        %v2980 = vadd.f32 %v2978, %v2979
        %v2981 = vrot.slane %v2980, 2
        %v2982 = vadd.f32 %v2980, %v2981
        %v2983 = vrot.slane %v2982, 1
        %v2984 = vadd.f32 %v2982, %v2983
        %v2985 = vadd.f32 %v2972, %v2973
        %v2986 = vrot.slane %v2985, 4
        %v2987 = vadd.f32 %v2985, %v2986
        %v2988 = vrot.slane %v2987, 2
        %v2989 = vadd.f32 %v2987, %v2988
        %v2990 = vrot.slane %v2989, 1
        %v2991 = vadd.f32 %v2989, %v2990
        %v2992 = vadd.f32 %v2974, %v2975
        %v2993 = vrot.slane %v2992, 4
        %v2994 = vadd.f32 %v2992, %v2993
        %v2995 = vrot.slane %v2994, 2
        %v2996 = vadd.f32 %v2994, %v2995
        %v2997 = vrot.slane %v2996, 1
        %v2998 = vadd.f32 %v2996, %v2997
        %v2999 = vadd.f32 %v2976, %v2977
        %v3000 = vrot.slane %v2999, 4
        %v3001 = vadd.f32 %v2999, %v3000
        %v3002 = vrot.slane %v3001, 2
        %v3003 = vadd.f32 %v3001, %v3002
        %v3004 = vrot.slane %v3003, 1
        %v3005 = vadd.f32 %v3003, %v3004
        %v3006 = vmul.f32 %v1544, %v2984
        %v3007 = vmul.f32 %v1544, %v2991
        %v3008 = vmul.f32 %v1544, %v2998
        %v3009 = vmul.f32 %v1544, %v3005
        %v3014 = vrot.slane %v3006, 2
        %v3015 = vrot.slane %v3007, 2
        %v3016 = vrot.slane %v3008, 2
        %v3017 = vrot.slane %v3009, 2
        %v3022 = vadd.f32 %v2934, %v3014
        %v3023 = vadd.f32 %v2935, %v3015
        %v3024 = vadd.f32 %v2936, %v3016
        %v3025 = vadd.f32 %v2937, %v3017
        %3026 = vset.pattern.permute.xlu0 3
        %3027 = vperm.xlu0 %3026, %v2758
        %v3028 = vpop.permute.xlu0 %3027
        %3030 = vset.pattern.permute.xlu0 3
        %3031 = vperm.xlu0 %3030, %v2759
        %v3032 = vpop.permute.xlu0 %3031
        %3034 = vset.pattern.permute.xlu0 3
        %3035 = vperm.xlu0 %3034, %v2760
        %v3036 = vpop.permute.xlu0 %3035
        %3038 = vset.pattern.permute.xlu0 3
        %3039 = vperm.xlu0 %3038, %v2761
        %v3040 = vpop.permute.xlu0 %3039
        %3042 = vset.pattern.permute.xlu0 3
        %3043 = vperm.xlu0 %3042, %v2762
        %v3044 = vpop.permute.xlu0 %3043
        %3046 = vset.pattern.permute.xlu0 3
        %3047 = vperm.xlu0 %3046, %v2763
        %v3048 = vpop.permute.xlu0 %3047
        %3050 = vset.pattern.permute.xlu0 3
        %3051 = vperm.xlu0 %3050, %v2764
        %v3052 = vpop.permute.xlu0 %3051
        %3054 = vset.pattern.permute.xlu0 3
        %3055 = vperm.xlu0 %3054, %v2765
        %v3056 = vpop.permute.xlu0 %3055
        %v3058 = vmul.f32 %v3028, %v1428
        %v3059 = vmul.f32 %v3032, %v1429
        %v3060 = vmul.f32 %v3036, %v1430
        %v3061 = vmul.f32 %v3040, %v1431
        %v3062 = vmul.f32 %v3044, %v1432
        %v3063 = vmul.f32 %v3048, %v1433
        %v3064 = vmul.f32 %v3052, %v1434
        %v3065 = vmul.f32 %v3056, %v1435
        %v3066 = vadd.f32 %v3058, %v3059
        %v3067 = vrot.slane %v3066, 4
        %v3068 = vadd.f32 %v3066, %v3067
        %v3069 = vrot.slane %v3068, 2
        %v3070 = vadd.f32 %v3068, %v3069
        %v3071 = vrot.slane %v3070, 1
        %v3072 = vadd.f32 %v3070, %v3071
        %v3073 = vadd.f32 %v3060, %v3061
        %v3074 = vrot.slane %v3073, 4
        %v3075 = vadd.f32 %v3073, %v3074
        %v3076 = vrot.slane %v3075, 2
        %v3077 = vadd.f32 %v3075, %v3076
        %v3078 = vrot.slane %v3077, 1
        %v3079 = vadd.f32 %v3077, %v3078
        %v3080 = vadd.f32 %v3062, %v3063
        %v3081 = vrot.slane %v3080, 4
        %v3082 = vadd.f32 %v3080, %v3081
        %v3083 = vrot.slane %v3082, 2
        %v3084 = vadd.f32 %v3082, %v3083
        %v3085 = vrot.slane %v3084, 1
        %v3086 = vadd.f32 %v3084, %v3085
        %v3087 = vadd.f32 %v3064, %v3065
        %v3088 = vrot.slane %v3087, 4
        %v3089 = vadd.f32 %v3087, %v3088
        %v3090 = vrot.slane %v3089, 2
        %v3091 = vadd.f32 %v3089, %v3090
        %v3092 = vrot.slane %v3091, 1
        %v3093 = vadd.f32 %v3091, %v3092
        %v3094 = vmul.f32 %v1544, %v3072
        %v3095 = vmul.f32 %v1544, %v3079
        %v3096 = vmul.f32 %v1544, %v3086
        %v3097 = vmul.f32 %v1544, %v3093
        %v3102 = vrot.slane %v3094, 3
        %v3103 = vrot.slane %v3095, 3
        %v3104 = vrot.slane %v3096, 3
        %v3105 = vrot.slane %v3097, 3
        %v3110 = vadd.f32 %v3022, %v3102
        %v3111 = vadd.f32 %v3023, %v3103
        %v3112 = vadd.f32 %v3024, %v3104
        %v3113 = vadd.f32 %v3025, %v3105
        %3114 = vset.pattern.permute.xlu0 4
        %3115 = vperm.xlu0 %3114, %v2758
        %v3116 = vpop.permute.xlu0 %3115
        %3118 = vset.pattern.permute.xlu0 4
        %3119 = vperm.xlu0 %3118, %v2759
        %v3120 = vpop.permute.xlu0 %3119
        %3122 = vset.pattern.permute.xlu0 4
        %3123 = vperm.xlu0 %3122, %v2760
        %v3124 = vpop.permute.xlu0 %3123
        %3126 = vset.pattern.permute.xlu0 4
        %3127 = vperm.xlu0 %3126, %v2761
        %v3128 = vpop.permute.xlu0 %3127
        %3130 = vset.pattern.permute.xlu0 4
        %3131 = vperm.xlu0 %3130, %v2762
        %v3132 = vpop.permute.xlu0 %3131
        %3134 = vset.pattern.permute.xlu0 4
        %3135 = vperm.xlu0 %3134, %v2763
        %v3136 = vpop.permute.xlu0 %3135
        %3138 = vset.pattern.permute.xlu0 4
        %3139 = vperm.xlu0 %3138, %v2764
        %v3140 = vpop.permute.xlu0 %3139
        %3142 = vset.pattern.permute.xlu0 4
        %3143 = vperm.xlu0 %3142, %v2765
        %v3144 = vpop.permute.xlu0 %3143
        %v3146 = vmul.f32 %v3116, %v1428
        %v3147 = vmul.f32 %v3120, %v1429
        %v3148 = vmul.f32 %v3124, %v1430
        %v3149 = vmul.f32 %v3128, %v1431
        %v3150 = vmul.f32 %v3132, %v1432
        %v3151 = vmul.f32 %v3136, %v1433
        %v3152 = vmul.f32 %v3140, %v1434
        %v3153 = vmul.f32 %v3144, %v1435
        %v3154 = vadd.f32 %v3146, %v3147
        %v3155 = vrot.slane %v3154, 4
        %v3156 = vadd.f32 %v3154, %v3155
        %v3157 = vrot.slane %v3156, 2
        %v3158 = vadd.f32 %v3156, %v3157
        %v3159 = vrot.slane %v3158, 1
        %v3160 = vadd.f32 %v3158, %v3159
        %v3161 = vadd.f32 %v3148, %v3149
        %v3162 = vrot.slane %v3161, 4
        %v3163 = vadd.f32 %v3161, %v3162
        %v3164 = vrot.slane %v3163, 2
        %v3165 = vadd.f32 %v3163, %v3164
        %v3166 = vrot.slane %v3165, 1
        %v3167 = vadd.f32 %v3165, %v3166
        %v3168 = vadd.f32 %v3150, %v3151
        %v3169 = vrot.slane %v3168, 4
        %v3170 = vadd.f32 %v3168, %v3169
        %v3171 = vrot.slane %v3170, 2
        %v3172 = vadd.f32 %v3170, %v3171
        %v3173 = vrot.slane %v3172, 1
        %v3174 = vadd.f32 %v3172, %v3173
        %v3175 = vadd.f32 %v3152, %v3153
        %v3176 = vrot.slane %v3175, 4
        %v3177 = vadd.f32 %v3175, %v3176
        %v3178 = vrot.slane %v3177, 2
        %v3179 = vadd.f32 %v3177, %v3178
        %v3180 = vrot.slane %v3179, 1
        %v3181 = vadd.f32 %v3179, %v3180
        %v3182 = vmul.f32 %v1544, %v3160
        %v3183 = vmul.f32 %v1544, %v3167
        %v3184 = vmul.f32 %v1544, %v3174
        %v3185 = vmul.f32 %v1544, %v3181
        %v3190 = vrot.slane %v3182, 4
        %v3191 = vrot.slane %v3183, 4
        %v3192 = vrot.slane %v3184, 4
        %v3193 = vrot.slane %v3185, 4
        %v3198 = vadd.f32 %v3110, %v3190
        %v3199 = vadd.f32 %v3111, %v3191
        %v3200 = vadd.f32 %v3112, %v3192
        %v3201 = vadd.f32 %v3113, %v3193
        %3202 = vset.pattern.permute.xlu0 5
        %3203 = vperm.xlu0 %3202, %v2758
        %v3204 = vpop.permute.xlu0 %3203
        %3206 = vset.pattern.permute.xlu0 5
        %3207 = vperm.xlu0 %3206, %v2759
        %v3208 = vpop.permute.xlu0 %3207
        %3210 = vset.pattern.permute.xlu0 5
        %3211 = vperm.xlu0 %3210, %v2760
        %v3212 = vpop.permute.xlu0 %3211
        %3214 = vset.pattern.permute.xlu0 5
        %3215 = vperm.xlu0 %3214, %v2761
        %v3216 = vpop.permute.xlu0 %3215
        %3218 = vset.pattern.permute.xlu0 5
        %3219 = vperm.xlu0 %3218, %v2762
        %v3220 = vpop.permute.xlu0 %3219
        %3222 = vset.pattern.permute.xlu0 5
        %3223 = vperm.xlu0 %3222, %v2763
        %v3224 = vpop.permute.xlu0 %3223
        %3226 = vset.pattern.permute.xlu0 5
        %3227 = vperm.xlu0 %3226, %v2764
        %v3228 = vpop.permute.xlu0 %3227
        %3230 = vset.pattern.permute.xlu0 5
        %3231 = vperm.xlu0 %3230, %v2765
        %v3232 = vpop.permute.xlu0 %3231
        %v3234 = vmul.f32 %v3204, %v1428
        %v3235 = vmul.f32 %v3208, %v1429
        %v3236 = vmul.f32 %v3212, %v1430
        %v3237 = vmul.f32 %v3216, %v1431
        %v3238 = vmul.f32 %v3220, %v1432
        %v3239 = vmul.f32 %v3224, %v1433
        %v3240 = vmul.f32 %v3228, %v1434
        %v3241 = vmul.f32 %v3232, %v1435
        %v3242 = vadd.f32 %v3234, %v3235
        %v3243 = vrot.slane %v3242, 4
        %v3244 = vadd.f32 %v3242, %v3243
        %v3245 = vrot.slane %v3244, 2
        %v3246 = vadd.f32 %v3244, %v3245
        %v3247 = vrot.slane %v3246, 1
        %v3248 = vadd.f32 %v3246, %v3247
        %v3249 = vadd.f32 %v3236, %v3237
        %v3250 = vrot.slane %v3249, 4
        %v3251 = vadd.f32 %v3249, %v3250
        %v3252 = vrot.slane %v3251, 2
        %v3253 = vadd.f32 %v3251, %v3252
        %v3254 = vrot.slane %v3253, 1
        %v3255 = vadd.f32 %v3253, %v3254
        %v3256 = vadd.f32 %v3238, %v3239
        %v3257 = vrot.slane %v3256, 4
        %v3258 = vadd.f32 %v3256, %v3257
        %v3259 = vrot.slane %v3258, 2
        %v3260 = vadd.f32 %v3258, %v3259
        %v3261 = vrot.slane %v3260, 1
        %v3262 = vadd.f32 %v3260, %v3261
        %v3263 = vadd.f32 %v3240, %v3241
        %v3264 = vrot.slane %v3263, 4
        %v3265 = vadd.f32 %v3263, %v3264
        %v3266 = vrot.slane %v3265, 2
        %v3267 = vadd.f32 %v3265, %v3266
        %v3268 = vrot.slane %v3267, 1
        %v3269 = vadd.f32 %v3267, %v3268
        %v3270 = vmul.f32 %v1544, %v3248
        %v3271 = vmul.f32 %v1544, %v3255
        %v3272 = vmul.f32 %v1544, %v3262
        %v3273 = vmul.f32 %v1544, %v3269
        %v3278 = vrot.slane %v3270, 5
        %v3279 = vrot.slane %v3271, 5
        %v3280 = vrot.slane %v3272, 5
        %v3281 = vrot.slane %v3273, 5
        %v3286 = vadd.f32 %v3198, %v3278
        %v3287 = vadd.f32 %v3199, %v3279
        %v3288 = vadd.f32 %v3200, %v3280
        %v3289 = vadd.f32 %v3201, %v3281
        %3290 = vset.pattern.permute.xlu0 6
        %3291 = vperm.xlu0 %3290, %v2758
        %v3292 = vpop.permute.xlu0 %3291
        %3294 = vset.pattern.permute.xlu0 6
        %3295 = vperm.xlu0 %3294, %v2759
        %v3296 = vpop.permute.xlu0 %3295
        %3298 = vset.pattern.permute.xlu0 6
        %3299 = vperm.xlu0 %3298, %v2760
        %v3300 = vpop.permute.xlu0 %3299
        %3302 = vset.pattern.permute.xlu0 6
        %3303 = vperm.xlu0 %3302, %v2761
        %v3304 = vpop.permute.xlu0 %3303
        %3306 = vset.pattern.permute.xlu0 6
        %3307 = vperm.xlu0 %3306, %v2762
        %v3308 = vpop.permute.xlu0 %3307
        %3310 = vset.pattern.permute.xlu0 6
        %3311 = vperm.xlu0 %3310, %v2763
        %v3312 = vpop.permute.xlu0 %3311
        %3314 = vset.pattern.permute.xlu0 6
        %3315 = vperm.xlu0 %3314, %v2764
        %v3316 = vpop.permute.xlu0 %3315
        %3318 = vset.pattern.permute.xlu0 6
        %3319 = vperm.xlu0 %3318, %v2765
        %v3320 = vpop.permute.xlu0 %3319
        %v3322 = vmul.f32 %v3292, %v1428
        %v3323 = vmul.f32 %v3296, %v1429
        %v3324 = vmul.f32 %v3300, %v1430
        %v3325 = vmul.f32 %v3304, %v1431
        %v3326 = vmul.f32 %v3308, %v1432
        %v3327 = vmul.f32 %v3312, %v1433
        %v3328 = vmul.f32 %v3316, %v1434
        %v3329 = vmul.f32 %v3320, %v1435
        %v3330 = vadd.f32 %v3322, %v3323
        %v3331 = vrot.slane %v3330, 4
        %v3332 = vadd.f32 %v3330, %v3331
        %v3333 = vrot.slane %v3332, 2
        %v3334 = vadd.f32 %v3332, %v3333
        %v3335 = vrot.slane %v3334, 1
        %v3336 = vadd.f32 %v3334, %v3335
        %v3337 = vadd.f32 %v3324, %v3325
        %v3338 = vrot.slane %v3337, 4
        %v3339 = vadd.f32 %v3337, %v3338
        %v3340 = vrot.slane %v3339, 2
        %v3341 = vadd.f32 %v3339, %v3340
        %v3342 = vrot.slane %v3341, 1
        %v3343 = vadd.f32 %v3341, %v3342
        %v3344 = vadd.f32 %v3326, %v3327
        %v3345 = vrot.slane %v3344, 4
        %v3346 = vadd.f32 %v3344, %v3345
        %v3347 = vrot.slane %v3346, 2
        %v3348 = vadd.f32 %v3346, %v3347
        %v3349 = vrot.slane %v3348, 1
        %v3350 = vadd.f32 %v3348, %v3349
        %v3351 = vadd.f32 %v3328, %v3329
        %v3352 = vrot.slane %v3351, 4
        %v3353 = vadd.f32 %v3351, %v3352
        %v3354 = vrot.slane %v3353, 2
        %v3355 = vadd.f32 %v3353, %v3354
        %v3356 = vrot.slane %v3355, 1
        %v3357 = vadd.f32 %v3355, %v3356
        %v3358 = vmul.f32 %v1544, %v3336
        %v3359 = vmul.f32 %v1544, %v3343
        %v3360 = vmul.f32 %v1544, %v3350
        %v3361 = vmul.f32 %v1544, %v3357
        %v3366 = vrot.slane %v3358, 6
        %v3367 = vrot.slane %v3359, 6
        %v3368 = vrot.slane %v3360, 6
        %v3369 = vrot.slane %v3361, 6
        %v3374 = vadd.f32 %v3286, %v3366
        %v3375 = vadd.f32 %v3287, %v3367
        %v3376 = vadd.f32 %v3288, %v3368
        %v3377 = vadd.f32 %v3289, %v3369
        %3378 = vset.pattern.permute.xlu0 7
        %3379 = vperm.xlu0 %3378, %v2758
        %v3380 = vpop.permute.xlu0 %3379
        %3382 = vset.pattern.permute.xlu0 7
        %3383 = vperm.xlu0 %3382, %v2759
        %v3384 = vpop.permute.xlu0 %3383
        %3386 = vset.pattern.permute.xlu0 7
        %3387 = vperm.xlu0 %3386, %v2760
        %v3388 = vpop.permute.xlu0 %3387
        %3390 = vset.pattern.permute.xlu0 7
        %3391 = vperm.xlu0 %3390, %v2761
        %v3392 = vpop.permute.xlu0 %3391
        %3394 = vset.pattern.permute.xlu0 7
        %3395 = vperm.xlu0 %3394, %v2762
        %v3396 = vpop.permute.xlu0 %3395
        %3398 = vset.pattern.permute.xlu0 7
        %3399 = vperm.xlu0 %3398, %v2763
        %v3400 = vpop.permute.xlu0 %3399
        %3402 = vset.pattern.permute.xlu0 7
        %3403 = vperm.xlu0 %3402, %v2764
        %v3404 = vpop.permute.xlu0 %3403
        %3406 = vset.pattern.permute.xlu0 7
        %3407 = vperm.xlu0 %3406, %v2765
        %v3408 = vpop.permute.xlu0 %3407
        %v3410 = vmul.f32 %v3380, %v1428
        %v3411 = vmul.f32 %v3384, %v1429
        %v3412 = vmul.f32 %v3388, %v1430
        %v3413 = vmul.f32 %v3392, %v1431
        %v3414 = vmul.f32 %v3396, %v1432
        %v3415 = vmul.f32 %v3400, %v1433
        %v3416 = vmul.f32 %v3404, %v1434
        %v3417 = vmul.f32 %v3408, %v1435
        %v3418 = vadd.f32 %v3410, %v3411
        %v3419 = vrot.slane %v3418, 4
        %v3420 = vadd.f32 %v3418, %v3419
        %v3421 = vrot.slane %v3420, 2
        %v3422 = vadd.f32 %v3420, %v3421
        %v3423 = vrot.slane %v3422, 1
        %v3424 = vadd.f32 %v3422, %v3423
        %v3425 = vadd.f32 %v3412, %v3413
        %v3426 = vrot.slane %v3425, 4
        %v3427 = vadd.f32 %v3425, %v3426
        %v3428 = vrot.slane %v3427, 2
        %v3429 = vadd.f32 %v3427, %v3428
        %v3430 = vrot.slane %v3429, 1
        %v3431 = vadd.f32 %v3429, %v3430
        %v3432 = vadd.f32 %v3414, %v3415
        %v3433 = vrot.slane %v3432, 4
        %v3434 = vadd.f32 %v3432, %v3433
        %v3435 = vrot.slane %v3434, 2
        %v3436 = vadd.f32 %v3434, %v3435
        %v3437 = vrot.slane %v3436, 1
        %v3438 = vadd.f32 %v3436, %v3437
        %v3439 = vadd.f32 %v3416, %v3417
        %v3440 = vrot.slane %v3439, 4
        %v3441 = vadd.f32 %v3439, %v3440
        %v3442 = vrot.slane %v3441, 2
        %v3443 = vadd.f32 %v3441, %v3442
        %v3444 = vrot.slane %v3443, 1
        %v3445 = vadd.f32 %v3443, %v3444
        %v3446 = vmul.f32 %v1544, %v3424
        %v3447 = vmul.f32 %v1544, %v3431
        %v3448 = vmul.f32 %v1544, %v3438
        %v3449 = vmul.f32 %v1544, %v3445
        %v3454 = vrot.slane %v3446, 7
        %v3455 = vrot.slane %v3447, 7
        %v3456 = vrot.slane %v3448, 7
        %v3457 = vrot.slane %v3449, 7
        %v3462 = vadd.f32 %v3374, %v3454
        %v3463 = vadd.f32 %v3375, %v3455
        %v3464 = vadd.f32 %v3376, %v3456
        %v3465 = vadd.f32 %v3377, %v3457
        %v3466 = vlaneseq
        %v3467 = vshrl.u32 %v3466, 7
        %v3468 = vsub.s32 0, %v3467
        %v3469 = vrot.slane %v3462, %v3468
        %v3470 = vlaneseq
        %v3471 = vshrl.u32 %v3470, 7
        %v3472 = vsub.s32 0, %v3471
        %v3473 = vrot.slane %v3463, %v3472
        %v3474 = vlaneseq
        %v3475 = vshrl.u32 %v3474, 7
        %v3476 = vsub.s32 0, %v3475
        %v3477 = vrot.slane %v3464, %v3476
        %v3478 = vlaneseq
        %v3479 = vshrl.u32 %v3478, 7
        %v3480 = vsub.s32 0, %v3479
        %v3481 = vrot.slane %v3465, %v3480
        %v3482 = vsub.f32 %v1428, %v3469
        %v3483 = vsub.f32 %v1429, %v3469
        %v3484 = vsub.f32 %v1430, %v3473
        %v3485 = vsub.f32 %v1431, %v3473
        %v3486 = vsub.f32 %v1432, %v3477
        %v3487 = vsub.f32 %v1433, %v3477
        %v3488 = vsub.f32 %v1434, %v3481
        %v3489 = vsub.f32 %v1435, %v3481
        %v3490 = vmul.f32 %v3482, %v3482
        %v3491 = vmul.f32 %v3483, %v3483
        %v3492 = vmul.f32 %v3484, %v3484
        %v3493 = vmul.f32 %v3485, %v3485
        %v3494 = vmul.f32 %v3486, %v3486
        %v3495 = vmul.f32 %v3487, %v3487
        %v3496 = vmul.f32 %v3488, %v3488
        %v3497 = vmul.f32 %v3489, %v3489
        %v3498 = vmul.f32 %v2769, %v3490
        %v3499 = vmul.f32 %v2774, %v3491
        %v3500 = vmul.f32 %v2779, %v3492
        %v3501 = vmul.f32 %v2784, %v3493
        %v3502 = vmul.f32 %v2789, %v3494
        %v3503 = vmul.f32 %v2794, %v3495
        %v3504 = vmul.f32 %v2799, %v3496
        %v3505 = vmul.f32 %v2804, %v3497
        %v3506 = vadd.f32 %v3498, %v3499
        %v3507 = vrot.slane %v3506, 4
        %v3508 = vadd.f32 %v3506, %v3507
        %v3509 = vrot.slane %v3508, 2
        %v3510 = vadd.f32 %v3508, %v3509
        %v3511 = vrot.slane %v3510, 1
        %v3512 = vadd.f32 %v3510, %v3511
        %v3513 = vadd.f32 %v3500, %v3501
        %v3514 = vrot.slane %v3513, 4
        %v3515 = vadd.f32 %v3513, %v3514
        %v3516 = vrot.slane %v3515, 2
        %v3517 = vadd.f32 %v3515, %v3516
        %v3518 = vrot.slane %v3517, 1
        %v3519 = vadd.f32 %v3517, %v3518
        %v3520 = vadd.f32 %v3502, %v3503
        %v3521 = vrot.slane %v3520, 4
        %v3522 = vadd.f32 %v3520, %v3521
        %v3523 = vrot.slane %v3522, 2
        %v3524 = vadd.f32 %v3522, %v3523
        %v3525 = vrot.slane %v3524, 1
        %v3526 = vadd.f32 %v3524, %v3525
        %v3527 = vadd.f32 %v3504, %v3505
        %v3528 = vrot.slane %v3527, 4
        %v3529 = vadd.f32 %v3527, %v3528
        %v3530 = vrot.slane %v3529, 2
        %v3531 = vadd.f32 %v3529, %v3530
        %v3532 = vrot.slane %v3531, 1
        %v3533 = vadd.f32 %v3531, %v3532
        %v3534 = vmul.f32 %v1544, %v3512
        %v3535 = vmul.f32 %v1544, %v3519
        %v3536 = vmul.f32 %v1544, %v3526
        %v3537 = vmul.f32 %v1544, %v3533
        %v3538 = vadd.f32 %v3534, 0.0
        %v3539 = vadd.f32 %v3535, 0.0
        %v3540 = vadd.f32 %v3536, 0.0
        %v3541 = vadd.f32 %v3537, 0.0
        %v3542 = vmul.f32 %v2852, %v3490
        %v3543 = vmul.f32 %v2856, %v3491
        %v3544 = vmul.f32 %v2860, %v3492
        %v3545 = vmul.f32 %v2864, %v3493
        %v3546 = vmul.f32 %v2868, %v3494
        %v3547 = vmul.f32 %v2872, %v3495
        %v3548 = vmul.f32 %v2876, %v3496
        %v3549 = vmul.f32 %v2880, %v3497
        %v3550 = vadd.f32 %v3542, %v3543
        %v3551 = vrot.slane %v3550, 4
        %v3552 = vadd.f32 %v3550, %v3551
        %v3553 = vrot.slane %v3552, 2
        %v3554 = vadd.f32 %v3552, %v3553
        %v3555 = vrot.slane %v3554, 1
        %v3556 = vadd.f32 %v3554, %v3555
        %v3557 = vadd.f32 %v3544, %v3545
        %v3558 = vrot.slane %v3557, 4
        %v3559 = vadd.f32 %v3557, %v3558
        %v3560 = vrot.slane %v3559, 2
        %v3561 = vadd.f32 %v3559, %v3560
        %v3562 = vrot.slane %v3561, 1
        %v3563 = vadd.f32 %v3561, %v3562
        %v3564 = vadd.f32 %v3546, %v3547
        %v3565 = vrot.slane %v3564, 4
        %v3566 = vadd.f32 %v3564, %v3565
        %v3567 = vrot.slane %v3566, 2
        %v3568 = vadd.f32 %v3566, %v3567
        %v3569 = vrot.slane %v3568, 1
        %v3570 = vadd.f32 %v3568, %v3569
        %v3571 = vadd.f32 %v3548, %v3549
        %v3572 = vrot.slane %v3571, 4
        %v3573 = vadd.f32 %v3571, %v3572
        %v3574 = vrot.slane %v3573, 2
        %v3575 = vadd.f32 %v3573, %v3574
        %v3576 = vrot.slane %v3575, 1
        %v3577 = vadd.f32 %v3575, %v3576
        %v3578 = vmul.f32 %v1544, %v3556
        %v3579 = vmul.f32 %v1544, %v3563
        %v3580 = vmul.f32 %v1544, %v3570
        %v3581 = vmul.f32 %v1544, %v3577
        %v3586 = vrot.slane %v3578, 1
        %v3587 = vrot.slane %v3579, 1
        %v3588 = vrot.slane %v3580, 1
        %v3589 = vrot.slane %v3581, 1
        %v3594 = vadd.f32 %v3538, %v3586
        %v3595 = vadd.f32 %v3539, %v3587
        %v3596 = vadd.f32 %v3540, %v3588
        %v3597 = vadd.f32 %v3541, %v3589
        %v3598 = vmul.f32 %v2940, %v3490
        %v3599 = vmul.f32 %v2944, %v3491
        %v3600 = vmul.f32 %v2948, %v3492
        %v3601 = vmul.f32 %v2952, %v3493
        %v3602 = vmul.f32 %v2956, %v3494
        %v3603 = vmul.f32 %v2960, %v3495
        %v3604 = vmul.f32 %v2964, %v3496
        %v3605 = vmul.f32 %v2968, %v3497
        %v3606 = vadd.f32 %v3598, %v3599
        %v3607 = vrot.slane %v3606, 4
        %v3608 = vadd.f32 %v3606, %v3607
        %v3609 = vrot.slane %v3608, 2
        %v3610 = vadd.f32 %v3608, %v3609
        %v3611 = vrot.slane %v3610, 1
        %v3612 = vadd.f32 %v3610, %v3611
        %v3613 = vadd.f32 %v3600, %v3601
        %v3614 = vrot.slane %v3613, 4
        %v3615 = vadd.f32 %v3613, %v3614
        %v3616 = vrot.slane %v3615, 2
        %v3617 = vadd.f32 %v3615, %v3616
        %v3618 = vrot.slane %v3617, 1
        %v3619 = vadd.f32 %v3617, %v3618
        %v3620 = vadd.f32 %v3602, %v3603
        %v3621 = vrot.slane %v3620, 4
        %v3622 = vadd.f32 %v3620, %v3621
        %v3623 = vrot.slane %v3622, 2
        %v3624 = vadd.f32 %v3622, %v3623
        %v3625 = vrot.slane %v3624, 1
        %v3626 = vadd.f32 %v3624, %v3625
        %v3627 = vadd.f32 %v3604, %v3605
        %v3628 = vrot.slane %v3627, 4
        %v3629 = vadd.f32 %v3627, %v3628
        %v3630 = vrot.slane %v3629, 2
        %v3631 = vadd.f32 %v3629, %v3630
        %v3632 = vrot.slane %v3631, 1
        %v3633 = vadd.f32 %v3631, %v3632
        %v3634 = vmul.f32 %v1544, %v3612
        %v3635 = vmul.f32 %v1544, %v3619
        %v3636 = vmul.f32 %v1544, %v3626
        %v3637 = vmul.f32 %v1544, %v3633
        %v3642 = vrot.slane %v3634, 2
        %v3643 = vrot.slane %v3635, 2
        %v3644 = vrot.slane %v3636, 2
        %v3645 = vrot.slane %v3637, 2
        %v3650 = vadd.f32 %v3594, %v3642
        %v3651 = vadd.f32 %v3595, %v3643
        %v3652 = vadd.f32 %v3596, %v3644
        %v3653 = vadd.f32 %v3597, %v3645
        %v3654 = vmul.f32 %v3028, %v3490
        %v3655 = vmul.f32 %v3032, %v3491
        %v3656 = vmul.f32 %v3036, %v3492
        %v3657 = vmul.f32 %v3040, %v3493
        %v3658 = vmul.f32 %v3044, %v3494
        %v3659 = vmul.f32 %v3048, %v3495
        %v3660 = vmul.f32 %v3052, %v3496
        %v3661 = vmul.f32 %v3056, %v3497
        %v3662 = vadd.f32 %v3654, %v3655
        %v3663 = vrot.slane %v3662, 4
        %v3664 = vadd.f32 %v3662, %v3663
        %v3665 = vrot.slane %v3664, 2
        %v3666 = vadd.f32 %v3664, %v3665
        %v3667 = vrot.slane %v3666, 1
        %v3668 = vadd.f32 %v3666, %v3667
        %v3669 = vadd.f32 %v3656, %v3657
        %v3670 = vrot.slane %v3669, 4
        %v3671 = vadd.f32 %v3669, %v3670
        %v3672 = vrot.slane %v3671, 2
        %v3673 = vadd.f32 %v3671, %v3672
        %v3674 = vrot.slane %v3673, 1
        %v3675 = vadd.f32 %v3673, %v3674
        %v3676 = vadd.f32 %v3658, %v3659
        %v3677 = vrot.slane %v3676, 4
        %v3678 = vadd.f32 %v3676, %v3677
        %v3679 = vrot.slane %v3678, 2
        %v3680 = vadd.f32 %v3678, %v3679
        %v3681 = vrot.slane %v3680, 1
        %v3682 = vadd.f32 %v3680, %v3681
        %v3683 = vadd.f32 %v3660, %v3661
        %v3684 = vrot.slane %v3683, 4
        %v3685 = vadd.f32 %v3683, %v3684
        %v3686 = vrot.slane %v3685, 2
        %v3687 = vadd.f32 %v3685, %v3686
        %v3688 = vrot.slane %v3687, 1
        %v3689 = vadd.f32 %v3687, %v3688
        %v3690 = vmul.f32 %v1544, %v3668
        %v3691 = vmul.f32 %v1544, %v3675
        %v3692 = vmul.f32 %v1544, %v3682
        %v3693 = vmul.f32 %v1544, %v3689
        %v3698 = vrot.slane %v3690, 3
        %v3699 = vrot.slane %v3691, 3
        %v3700 = vrot.slane %v3692, 3
        %v3701 = vrot.slane %v3693, 3
        %v3706 = vadd.f32 %v3650, %v3698
        %v3707 = vadd.f32 %v3651, %v3699
        %v3708 = vadd.f32 %v3652, %v3700
        %v3709 = vadd.f32 %v3653, %v3701
        %v3710 = vmul.f32 %v3116, %v3490
        %v3711 = vmul.f32 %v3120, %v3491
        %v3712 = vmul.f32 %v3124, %v3492
        %v3713 = vmul.f32 %v3128, %v3493
        %v3714 = vmul.f32 %v3132, %v3494
        %v3715 = vmul.f32 %v3136, %v3495
        %v3716 = vmul.f32 %v3140, %v3496
        %v3717 = vmul.f32 %v3144, %v3497
        %v3718 = vadd.f32 %v3710, %v3711
        %v3719 = vrot.slane %v3718, 4
        %v3720 = vadd.f32 %v3718, %v3719
        %v3721 = vrot.slane %v3720, 2
        %v3722 = vadd.f32 %v3720, %v3721
        %v3723 = vrot.slane %v3722, 1
        %v3724 = vadd.f32 %v3722, %v3723
        %v3725 = vadd.f32 %v3712, %v3713
        %v3726 = vrot.slane %v3725, 4
        %v3727 = vadd.f32 %v3725, %v3726
        %v3728 = vrot.slane %v3727, 2
        %v3729 = vadd.f32 %v3727, %v3728
        %v3730 = vrot.slane %v3729, 1
        %v3731 = vadd.f32 %v3729, %v3730
        %v3732 = vadd.f32 %v3714, %v3715
        %v3733 = vrot.slane %v3732, 4
        %v3734 = vadd.f32 %v3732, %v3733
        %v3735 = vrot.slane %v3734, 2
        %v3736 = vadd.f32 %v3734, %v3735
        %v3737 = vrot.slane %v3736, 1
        %v3738 = vadd.f32 %v3736, %v3737
        %v3739 = vadd.f32 %v3716, %v3717
        %v3740 = vrot.slane %v3739, 4
        %v3741 = vadd.f32 %v3739, %v3740
        %v3742 = vrot.slane %v3741, 2
        %v3743 = vadd.f32 %v3741, %v3742
        %v3744 = vrot.slane %v3743, 1
        %v3745 = vadd.f32 %v3743, %v3744
        %v3746 = vmul.f32 %v1544, %v3724
        %v3747 = vmul.f32 %v1544, %v3731
        %v3748 = vmul.f32 %v1544, %v3738
        %v3749 = vmul.f32 %v1544, %v3745
        %v3754 = vrot.slane %v3746, 4
        %v3755 = vrot.slane %v3747, 4
        %v3756 = vrot.slane %v3748, 4
        %v3757 = vrot.slane %v3749, 4
        %v3762 = vadd.f32 %v3706, %v3754
        %v3763 = vadd.f32 %v3707, %v3755
        %v3764 = vadd.f32 %v3708, %v3756
        %v3765 = vadd.f32 %v3709, %v3757
        %v3766 = vmul.f32 %v3204, %v3490
        %v3767 = vmul.f32 %v3208, %v3491
        %v3768 = vmul.f32 %v3212, %v3492
        %v3769 = vmul.f32 %v3216, %v3493
        %v3770 = vmul.f32 %v3220, %v3494
        %v3771 = vmul.f32 %v3224, %v3495
        %v3772 = vmul.f32 %v3228, %v3496
        %v3773 = vmul.f32 %v3232, %v3497
        %v3774 = vadd.f32 %v3766, %v3767
        %v3775 = vrot.slane %v3774, 4
        %v3776 = vadd.f32 %v3774, %v3775
        %v3777 = vrot.slane %v3776, 2
        %v3778 = vadd.f32 %v3776, %v3777
        %v3779 = vrot.slane %v3778, 1
        %v3780 = vadd.f32 %v3778, %v3779
        %v3781 = vadd.f32 %v3768, %v3769
        %v3782 = vrot.slane %v3781, 4
        %v3783 = vadd.f32 %v3781, %v3782
        %v3784 = vrot.slane %v3783, 2
        %v3785 = vadd.f32 %v3783, %v3784
        %v3786 = vrot.slane %v3785, 1
        %v3787 = vadd.f32 %v3785, %v3786
        %v3788 = vadd.f32 %v3770, %v3771
        %v3789 = vrot.slane %v3788, 4
        %v3790 = vadd.f32 %v3788, %v3789
        %v3791 = vrot.slane %v3790, 2
        %v3792 = vadd.f32 %v3790, %v3791
        %v3793 = vrot.slane %v3792, 1
        %v3794 = vadd.f32 %v3792, %v3793
        %v3795 = vadd.f32 %v3772, %v3773
        %v3796 = vrot.slane %v3795, 4
        %v3797 = vadd.f32 %v3795, %v3796
        %v3798 = vrot.slane %v3797, 2
        %v3799 = vadd.f32 %v3797, %v3798
        %v3800 = vrot.slane %v3799, 1
        %v3801 = vadd.f32 %v3799, %v3800
        %v3802 = vmul.f32 %v1544, %v3780
        %v3803 = vmul.f32 %v1544, %v3787
        %v3804 = vmul.f32 %v1544, %v3794
        %v3805 = vmul.f32 %v1544, %v3801
        %v3810 = vrot.slane %v3802, 5
        %v3811 = vrot.slane %v3803, 5
        %v3812 = vrot.slane %v3804, 5
        %v3813 = vrot.slane %v3805, 5
        %v3818 = vadd.f32 %v3762, %v3810
        %v3819 = vadd.f32 %v3763, %v3811
        %v3820 = vadd.f32 %v3764, %v3812
        %v3821 = vadd.f32 %v3765, %v3813
        %v3822 = vmul.f32 %v3292, %v3490
        %v3823 = vmul.f32 %v3296, %v3491
        %v3824 = vmul.f32 %v3300, %v3492
        %v3825 = vmul.f32 %v3304, %v3493
        %v3826 = vmul.f32 %v3308, %v3494
        %v3827 = vmul.f32 %v3312, %v3495
        %v3828 = vmul.f32 %v3316, %v3496
        %v3829 = vmul.f32 %v3320, %v3497
        %v3830 = vadd.f32 %v3822, %v3823
        %v3831 = vrot.slane %v3830, 4
        %v3832 = vadd.f32 %v3830, %v3831
        %v3833 = vrot.slane %v3832, 2
        %v3834 = vadd.f32 %v3832, %v3833
        %v3835 = vrot.slane %v3834, 1
        %v3836 = vadd.f32 %v3834, %v3835
        %v3837 = vadd.f32 %v3824, %v3825
        %v3838 = vrot.slane %v3837, 4
        %v3839 = vadd.f32 %v3837, %v3838
        %v3840 = vrot.slane %v3839, 2
        %v3841 = vadd.f32 %v3839, %v3840
        %v3842 = vrot.slane %v3841, 1
        %v3843 = vadd.f32 %v3841, %v3842
        %v3844 = vadd.f32 %v3826, %v3827
        %v3845 = vrot.slane %v3844, 4
        %v3846 = vadd.f32 %v3844, %v3845
        %v3847 = vrot.slane %v3846, 2
        %v3848 = vadd.f32 %v3846, %v3847
        %v3849 = vrot.slane %v3848, 1
        %v3850 = vadd.f32 %v3848, %v3849
        %v3851 = vadd.f32 %v3828, %v3829
        %v3852 = vrot.slane %v3851, 4
        %v3853 = vadd.f32 %v3851, %v3852
        %v3854 = vrot.slane %v3853, 2
        %v3855 = vadd.f32 %v3853, %v3854
        %v3856 = vrot.slane %v3855, 1
        %v3857 = vadd.f32 %v3855, %v3856
        %v3858 = vmul.f32 %v1544, %v3836
        %v3859 = vmul.f32 %v1544, %v3843
        %v3860 = vmul.f32 %v1544, %v3850
        %v3861 = vmul.f32 %v1544, %v3857
        %v3866 = vrot.slane %v3858, 6
        %v3867 = vrot.slane %v3859, 6
        %v3868 = vrot.slane %v3860, 6
        %v3869 = vrot.slane %v3861, 6
        %v3874 = vadd.f32 %v3818, %v3866
        %v3875 = vadd.f32 %v3819, %v3867
        %v3876 = vadd.f32 %v3820, %v3868
        %v3877 = vadd.f32 %v3821, %v3869
        %v3878 = vmul.f32 %v3380, %v3490
        %v3879 = vmul.f32 %v3384, %v3491
        %v3880 = vmul.f32 %v3388, %v3492
        %v3881 = vmul.f32 %v3392, %v3493
        %v3882 = vmul.f32 %v3396, %v3494
        %v3883 = vmul.f32 %v3400, %v3495
        %v3884 = vmul.f32 %v3404, %v3496
        %v3885 = vmul.f32 %v3408, %v3497
        %v3886 = vadd.f32 %v3878, %v3879
        %v3887 = vrot.slane %v3886, 4
        %v3888 = vadd.f32 %v3886, %v3887
        %v3889 = vrot.slane %v3888, 2
        %v3890 = vadd.f32 %v3888, %v3889
        %v3891 = vrot.slane %v3890, 1
        %v3892 = vadd.f32 %v3890, %v3891
        %v3893 = vadd.f32 %v3880, %v3881
        %v3894 = vrot.slane %v3893, 4
        %v3895 = vadd.f32 %v3893, %v3894
        %v3896 = vrot.slane %v3895, 2
        %v3897 = vadd.f32 %v3895, %v3896
        %v3898 = vrot.slane %v3897, 1
        %v3899 = vadd.f32 %v3897, %v3898
        %v3900 = vadd.f32 %v3882, %v3883
        %v3901 = vrot.slane %v3900, 4
        %v3902 = vadd.f32 %v3900, %v3901
        %v3903 = vrot.slane %v3902, 2
        %v3904 = vadd.f32 %v3902, %v3903
        %v3905 = vrot.slane %v3904, 1
        %v3906 = vadd.f32 %v3904, %v3905
        %v3907 = vadd.f32 %v3884, %v3885
        %v3908 = vrot.slane %v3907, 4
        %v3909 = vadd.f32 %v3907, %v3908
        %v3910 = vrot.slane %v3909, 2
        %v3911 = vadd.f32 %v3909, %v3910
        %v3912 = vrot.slane %v3911, 1
        %v3913 = vadd.f32 %v3911, %v3912
        %v3914 = vmul.f32 %v1544, %v3892
        %v3915 = vmul.f32 %v1544, %v3899
        %v3916 = vmul.f32 %v1544, %v3906
        %v3917 = vmul.f32 %v1544, %v3913
        %v3922 = vrot.slane %v3914, 7
        %v3923 = vrot.slane %v3915, 7
        %v3924 = vrot.slane %v3916, 7
        %v3925 = vrot.slane %v3917, 7
        %v3930 = vadd.f32 %v3874, %v3922
        %v3931 = vadd.f32 %v3875, %v3923
        %v3932 = vadd.f32 %v3876, %v3924
        %v3933 = vadd.f32 %v3877, %v3925
        %v3934 = vadd.f32 %v3930, 1e-05
        %v3935 = vadd.f32 %v3931, 1e-05
        %v3936 = vadd.f32 %v3932, 1e-05
        %v3937 = vadd.f32 %v3933, 1e-05
        %v3938 = vrcp.pop %v3934
        %v3939 = vrcp.pop %v3935
        %v3940 = vrcp.pop %v3936
        %v3941 = vrcp.pop %v3937
        %v3942 = vmul.f32 %v3934, %v3938
        %v3943 = vmul.f32 %v3935, %v3939
        %v3944 = vmul.f32 %v3936, %v3940
        %v3945 = vmul.f32 %v3937, %v3941
        %v3946 = vsub.f32 2.0, %v3942
        %v3947 = vsub.f32 2.0, %v3943
        %v3948 = vsub.f32 2.0, %v3944
        %v3949 = vsub.f32 2.0, %v3945
        %v3950 = vmul.f32 %v3938, %v3946
        %v3951 = vmul.f32 %v3939, %v3947
        %v3952 = vmul.f32 %v3940, %v3948
        %v3953 = vmul.f32 %v3941, %v3949
        %v3954 = vmul.f32 %v3950, 0.5
        %v3955 = vmul.f32 %v3951, 0.5
        %v3956 = vmul.f32 %v3952, 0.5
        %v3957 = vmul.f32 %v3953, 0.5
        %v3958 = vlog2.pop %v3934
        %v3959 = vmul.f32 %v3958, 0.6931472
        %v3960 = vlog2.pop %v3935
        %v3961 = vmul.f32 %v3960, 0.6931472
        %v3962 = vlog2.pop %v3936
        %v3963 = vmul.f32 %v3962, 0.6931472
        %v3964 = vlog2.pop %v3937
        %v3965 = vmul.f32 %v3964, 0.6931472
        %v3966 = vmul.f32 %v3959, 0.5
        %v3967 = vmul.f32 %v3961, 0.5
        %v3968 = vmul.f32 %v3963, 0.5
        %v3969 = vmul.f32 %v3965, 0.5
        %v3970 = vlaneseq
        %v3971 = vshrl.u32 %v3970, 7
        %v3972 = vsub.s32 0, %v3971
        %v3973 = vrot.slane %v3954, %v3972
        %v3974 = vlaneseq
        %v3975 = vshrl.u32 %v3974, 7
        %v3976 = vsub.s32 0, %v3975
        %v3977 = vrot.slane %v3955, %v3976
        %v3978 = vlaneseq
        %v3979 = vshrl.u32 %v3978, 7
        %v3980 = vsub.s32 0, %v3979
        %v3981 = vrot.slane %v3956, %v3980
        %v3982 = vlaneseq
        %v3983 = vshrl.u32 %v3982, 7
        %v3984 = vsub.s32 0, %v3983
        %v3985 = vrot.slane %v3957, %v3984
        %v3986 = vmul.f32 %v3490, %v3973
        %v3987 = vmul.f32 %v3491, %v3973
        %v3988 = vmul.f32 %v3492, %v3977
        %v3989 = vmul.f32 %v3493, %v3977
        %v3990 = vmul.f32 %v3494, %v3981
        %v3991 = vmul.f32 %v3495, %v3981
        %v3992 = vmul.f32 %v3496, %v3985
        %v3993 = vmul.f32 %v3497, %v3985
        %v3994 = vlaneseq
        %v3995 = vshrl.u32 %v3994, 7
        %v3996 = vsub.s32 0, %v3995
        %v3997 = vrot.slane %v3966, %v3996
        %v3998 = vlaneseq
        %v3999 = vshrl.u32 %v3998, 7
        %v4000 = vsub.s32 0, %v3999
        %v4001 = vrot.slane %v3967, %v4000
        %v4002 = vlaneseq
        %v4003 = vshrl.u32 %v4002, 7
        %v4004 = vsub.s32 0, %v4003
        %v4005 = vrot.slane %v3968, %v4004
        %v4006 = vlaneseq
        %v4007 = vshrl.u32 %v4006, 7
        %v4008 = vsub.s32 0, %v4007
        %v4009 = vrot.slane %v3969, %v4008
        %v4010 = vadd.f32 %v3986, %v3997
        %v4011 = vadd.f32 %v3987, %v3997
        %v4012 = vadd.f32 %v3988, %v4001
        %v4013 = vadd.f32 %v3989, %v4001
        %v4014 = vadd.f32 %v3990, %v4005
        %v4015 = vadd.f32 %v3991, %v4005
        %v4016 = vadd.f32 %v3992, %v4009
        %v4017 = vadd.f32 %v3993, %v4009
        %4018 = vmatprep.subr.mxu0 0.0
        %4019 = vmatpush1.xpose.msra.mxu0 %v1544
        %4020 = vmatprep.subr.mxu0 0.0
        %4021 = vmatpush1.xpose.msra.mxu0 0.0
        %4022 = vmatprep.subr.mxu0 0.0
        %4023 = vmatpush1.xpose.msra.mxu0 0.0
        %4024 = vmatprep.subr.mxu0 0.0
        %4025 = vmatpush1.xpose.msra.mxu0 0.0
        %4026 = vmatprep.subr.mxu0 0.0
        %4027 = vmatpush1.xpose.msra.mxu0 0.0
        %4028 = vmatprep.subr.mxu0 0.0
        %4029 = vmatpush1.xpose.msra.mxu0 0.0
        %4030 = vmatprep.subr.mxu0 0.0
        %4031 = vmatpush1.xpose.msra.mxu0 0.0
        %4032 = vmatprep.subr.mxu0 0.0
        %4033 = vmatpush1.xpose.msra.mxu0 0.0
        %4034 = vmatprep.subr.mxu0 0.0
        %4035 = vmatpush1.xpose.msra.mxu0 0.0
        %4036 = vmatprep.subr.mxu0 0.0
        %4037 = vmatpush1.xpose.msra.mxu0 0.0
        %4038 = vmatprep.subr.mxu0 0.0
        %4039 = vmatpush1.xpose.msra.mxu0 0.0
        %4040 = vmatprep.subr.mxu0 0.0
        %4041 = vmatpush1.xpose.msra.mxu0 0.0
        %4042 = vmatprep.subr.mxu0 0.0
        %4043 = vmatpush1.xpose.msra.mxu0 0.0
        %4044 = vmatprep.subr.mxu0 0.0
        %4045 = vmatpush1.xpose.msra.mxu0 0.0
        %4046 = vmatprep.subr.mxu0 0.0
        %4047 = vmatpush1.xpose.msra.mxu0 0.0
        %4048 = vmatprep.subr.mxu0 0.0
        %4049 = vmatpush1.xpose.msra.mxu0 0.0
        %4050 = vmatprep.subr.mxu0 0.0
        %4051 = vmatpush1.xpose.msra.mxu0 0.0
        %4052 = vmatprep.subr.mxu0 0.0
        %4053 = vmatpush1.xpose.msra.mxu0 0.0
        %4054 = vmatprep.subr.mxu0 0.0
        %4055 = vmatpush1.xpose.msra.mxu0 0.0
        %4056 = vmatprep.subr.mxu0 0.0
        %4057 = vmatpush1.xpose.msra.mxu0 0.0
        %4058 = vmatprep.subr.mxu0 0.0
        %4059 = vmatpush1.xpose.msra.mxu0 0.0
        %4060 = vmatprep.subr.mxu0 0.0
        %4061 = vmatpush1.xpose.msra.mxu0 0.0
        %4062 = vmatprep.subr.mxu0 0.0
        %4063 = vmatpush1.xpose.msra.mxu0 0.0
        %4064 = vmatprep.subr.mxu0 0.0
        %4065 = vmatpush1.xpose.msra.mxu0 0.0
        %4066 = vmatprep.subr.mxu0 0.0
        %4067 = vmatpush1.xpose.msra.mxu0 0.0
        %4068 = vmatprep.subr.mxu0 0.0
        %4069 = vmatpush1.xpose.msra.mxu0 0.0
        %4070 = vmatprep.subr.mxu0 0.0
        %4071 = vmatpush1.xpose.msra.mxu0 0.0
        %4072 = vmatprep.subr.mxu0 0.0
        %4073 = vmatpush1.xpose.msra.mxu0 0.0
        %4074 = vmatprep.subr.mxu0 0.0
        %4075 = vmatpush1.xpose.msra.mxu0 0.0
        %4076 = vmatprep.subr.mxu0 0.0
        %4077 = vmatpush1.xpose.msra.mxu0 0.0
        %4078 = vmatprep.subr.mxu0 0.0
        %4079 = vmatpush1.xpose.msra.mxu0 0.0
        %4080 = vmatprep.subr.mxu0 0.0
        %4081 = vmatpush1.xpose.msra.mxu0 0.0
        %4082 = vmatprep.mubr.f32.mxu0 0.0
        %4083 = vmatmul.mubr.f32.gmra.mrb[0].mxu0 %v4010
        %v4084 = vpop.f32.mrb[0].mxu0
        %v4085 = vadd.f32 0.0, %v4084
        %v4086 = vpop.f32.mrb[0].mxu0
        %4087 = vmatprep.mubr.f32.mxu0 0.0
        %4088 = vmatmul.mubr.f32.gmra.mrb[0].mxu0 %v4011
        %v4089 = vpop.f32.mrb[0].mxu0
        %v4090 = vadd.f32 0.0, %v4089
        %v4091 = vpop.f32.mrb[0].mxu0
        %4092 = vdwg.mxu0
        %4093 = vmatprep.subr.mxu0 0.0
        %4094 = vmatpush1.xpose.msra.mxu0 %v1544
        %4095 = vmatprep.subr.mxu0 0.0
        %4096 = vmatpush1.xpose.msra.mxu0 0.0
        %4097 = vmatprep.subr.mxu0 0.0
        %4098 = vmatpush1.xpose.msra.mxu0 0.0
        %4099 = vmatprep.subr.mxu0 0.0
        %4100 = vmatpush1.xpose.msra.mxu0 0.0
        %4101 = vmatprep.subr.mxu0 0.0
        %4102 = vmatpush1.xpose.msra.mxu0 0.0
        %4103 = vmatprep.subr.mxu0 0.0
        %4104 = vmatpush1.xpose.msra.mxu0 0.0
        %4105 = vmatprep.subr.mxu0 0.0
        %4106 = vmatpush1.xpose.msra.mxu0 0.0
        %4107 = vmatprep.subr.mxu0 0.0
        %4108 = vmatpush1.xpose.msra.mxu0 0.0
        %4109 = vmatprep.subr.mxu0 0.0
        %4110 = vmatpush1.xpose.msra.mxu0 0.0
        %4111 = vmatprep.subr.mxu0 0.0
        %4112 = vmatpush1.xpose.msra.mxu0 0.0
        %4113 = vmatprep.subr.mxu0 0.0
        %4114 = vmatpush1.xpose.msra.mxu0 0.0
        %4115 = vmatprep.subr.mxu0 0.0
        %4116 = vmatpush1.xpose.msra.mxu0 0.0
        %4117 = vmatprep.subr.mxu0 0.0
        %4118 = vmatpush1.xpose.msra.mxu0 0.0
        %4119 = vmatprep.subr.mxu0 0.0
        %4120 = vmatpush1.xpose.msra.mxu0 0.0
        %4121 = vmatprep.subr.mxu0 0.0
        %4122 = vmatpush1.xpose.msra.mxu0 0.0
        %4123 = vmatprep.subr.mxu0 0.0
        %4124 = vmatpush1.xpose.msra.mxu0 0.0
        %4125 = vmatprep.subr.mxu0 0.0
        %4126 = vmatpush1.xpose.msra.mxu0 0.0
        %4127 = vmatprep.subr.mxu0 0.0
        %4128 = vmatpush1.xpose.msra.mxu0 0.0
        %4129 = vmatprep.subr.mxu0 0.0
        %4130 = vmatpush1.xpose.msra.mxu0 0.0
        %4131 = vmatprep.subr.mxu0 0.0
        %4132 = vmatpush1.xpose.msra.mxu0 0.0
        %4133 = vmatprep.subr.mxu0 0.0
        %4134 = vmatpush1.xpose.msra.mxu0 0.0
        %4135 = vmatprep.subr.mxu0 0.0
        %4136 = vmatpush1.xpose.msra.mxu0 0.0
        %4137 = vmatprep.subr.mxu0 0.0
        %4138 = vmatpush1.xpose.msra.mxu0 0.0
        %4139 = vmatprep.subr.mxu0 0.0
        %4140 = vmatpush1.xpose.msra.mxu0 0.0
        %4141 = vmatprep.subr.mxu0 0.0
        %4142 = vmatpush1.xpose.msra.mxu0 0.0
        %4143 = vmatprep.subr.mxu0 0.0
        %4144 = vmatpush1.xpose.msra.mxu0 0.0
        %4145 = vmatprep.subr.mxu0 0.0
        %4146 = vmatpush1.xpose.msra.mxu0 0.0
        %4147 = vmatprep.subr.mxu0 0.0
        %4148 = vmatpush1.xpose.msra.mxu0 0.0
        %4149 = vmatprep.subr.mxu0 0.0
        %4150 = vmatpush1.xpose.msra.mxu0 0.0
        %4151 = vmatprep.subr.mxu0 0.0
        %4152 = vmatpush1.xpose.msra.mxu0 0.0
        %4153 = vmatprep.subr.mxu0 0.0
        %4154 = vmatpush1.xpose.msra.mxu0 0.0
        %4155 = vmatprep.subr.mxu0 0.0
        %4156 = vmatpush1.xpose.msra.mxu0 0.0
        %4157 = vmatprep.mubr.f32.mxu0 0.0
        %4158 = vmatmul.mubr.f32.gmra.mrb[0].mxu0 %v4012
        %v4159 = vpop.f32.mrb[0].mxu0
        %v4160 = vadd.f32 0.0, %v4159
        %v4161 = vpop.f32.mrb[0].mxu0
        %4162 = vmatprep.mubr.f32.mxu0 0.0
        %4163 = vmatmul.mubr.f32.gmra.mrb[0].mxu0 %v4013
        %v4164 = vpop.f32.mrb[0].mxu0
        %v4165 = vadd.f32 0.0, %v4164
        %v4166 = vpop.f32.mrb[0].mxu0
        %4167 = vdwg.mxu0
        %4168 = vmatprep.subr.mxu0 0.0
        %4169 = vmatpush1.xpose.msra.mxu0 %v1544
        %4170 = vmatprep.subr.mxu0 0.0
        %4171 = vmatpush1.xpose.msra.mxu0 0.0
        %4172 = vmatprep.subr.mxu0 0.0
        %4173 = vmatpush1.xpose.msra.mxu0 0.0
        %4174 = vmatprep.subr.mxu0 0.0
        %4175 = vmatpush1.xpose.msra.mxu0 0.0
        %4176 = vmatprep.subr.mxu0 0.0
        %4177 = vmatpush1.xpose.msra.mxu0 0.0
        %4178 = vmatprep.subr.mxu0 0.0
        %4179 = vmatpush1.xpose.msra.mxu0 0.0
        %4180 = vmatprep.subr.mxu0 0.0
        %4181 = vmatpush1.xpose.msra.mxu0 0.0
        %4182 = vmatprep.subr.mxu0 0.0
        %4183 = vmatpush1.xpose.msra.mxu0 0.0
        %4184 = vmatprep.subr.mxu0 0.0
        %4185 = vmatpush1.xpose.msra.mxu0 0.0
        %4186 = vmatprep.subr.mxu0 0.0
        %4187 = vmatpush1.xpose.msra.mxu0 0.0
        %4188 = vmatprep.subr.mxu0 0.0
        %4189 = vmatpush1.xpose.msra.mxu0 0.0
        %4190 = vmatprep.subr.mxu0 0.0
        %4191 = vmatpush1.xpose.msra.mxu0 0.0
        %4192 = vmatprep.subr.mxu0 0.0
        %4193 = vmatpush1.xpose.msra.mxu0 0.0
        %4194 = vmatprep.subr.mxu0 0.0
        %4195 = vmatpush1.xpose.msra.mxu0 0.0
        %4196 = vmatprep.subr.mxu0 0.0
        %4197 = vmatpush1.xpose.msra.mxu0 0.0
        %4198 = vmatprep.subr.mxu0 0.0
        %4199 = vmatpush1.xpose.msra.mxu0 0.0
        %4200 = vmatprep.subr.mxu0 0.0
        %4201 = vmatpush1.xpose.msra.mxu0 0.0
        %4202 = vmatprep.subr.mxu0 0.0
        %4203 = vmatpush1.xpose.msra.mxu0 0.0
        %4204 = vmatprep.subr.mxu0 0.0
        %4205 = vmatpush1.xpose.msra.mxu0 0.0
        %4206 = vmatprep.subr.mxu0 0.0
        %4207 = vmatpush1.xpose.msra.mxu0 0.0
        %4208 = vmatprep.subr.mxu0 0.0
        %4209 = vmatpush1.xpose.msra.mxu0 0.0
        %4210 = vmatprep.subr.mxu0 0.0
        %4211 = vmatpush1.xpose.msra.mxu0 0.0
        %4212 = vmatprep.subr.mxu0 0.0
        %4213 = vmatpush1.xpose.msra.mxu0 0.0
        %4214 = vmatprep.subr.mxu0 0.0
        %4215 = vmatpush1.xpose.msra.mxu0 0.0
        %4216 = vmatprep.subr.mxu0 0.0
        %4217 = vmatpush1.xpose.msra.mxu0 0.0
        %4218 = vmatprep.subr.mxu0 0.0
        %4219 = vmatpush1.xpose.msra.mxu0 0.0
        %4220 = vmatprep.subr.mxu0 0.0
        %4221 = vmatpush1.xpose.msra.mxu0 0.0
        %4222 = vmatprep.subr.mxu0 0.0
        %4223 = vmatpush1.xpose.msra.mxu0 0.0
        %4224 = vmatprep.subr.mxu0 0.0
        %4225 = vmatpush1.xpose.msra.mxu0 0.0
        %4226 = vmatprep.subr.mxu0 0.0
        %4227 = vmatpush1.xpose.msra.mxu0 0.0
        %4228 = vmatprep.subr.mxu0 0.0
        %4229 = vmatpush1.xpose.msra.mxu0 0.0
        %4230 = vmatprep.subr.mxu0 0.0
        %4231 = vmatpush1.xpose.msra.mxu0 0.0
        %4232 = vmatprep.mubr.f32.mxu0 0.0
        %4233 = vmatmul.mubr.f32.gmra.mrb[0].mxu0 %v4014
        %v4234 = vpop.f32.mrb[0].mxu0
        %v4235 = vadd.f32 0.0, %v4234
        %v4236 = vpop.f32.mrb[0].mxu0
        %4237 = vmatprep.mubr.f32.mxu0 0.0
        %4238 = vmatmul.mubr.f32.gmra.mrb[0].mxu0 %v4015
        %v4239 = vpop.f32.mrb[0].mxu0
        %v4240 = vadd.f32 0.0, %v4239
        %v4241 = vpop.f32.mrb[0].mxu0
        %4242 = vdwg.mxu0
        %4243 = vmatprep.subr.mxu0 0.0
        %4244 = vmatpush1.xpose.msra.mxu0 %v1544
        %4245 = vmatprep.subr.mxu0 0.0
        %4246 = vmatpush1.xpose.msra.mxu0 0.0
        %4247 = vmatprep.subr.mxu0 0.0
        %4248 = vmatpush1.xpose.msra.mxu0 0.0
        %4249 = vmatprep.subr.mxu0 0.0
        %4250 = vmatpush1.xpose.msra.mxu0 0.0
        %4251 = vmatprep.subr.mxu0 0.0
        %4252 = vmatpush1.xpose.msra.mxu0 0.0
        %4253 = vmatprep.subr.mxu0 0.0
        %4254 = vmatpush1.xpose.msra.mxu0 0.0
        %4255 = vmatprep.subr.mxu0 0.0
        %4256 = vmatpush1.xpose.msra.mxu0 0.0
        %4257 = vmatprep.subr.mxu0 0.0
        %4258 = vmatpush1.xpose.msra.mxu0 0.0
        %4259 = vmatprep.subr.mxu0 0.0
        %4260 = vmatpush1.xpose.msra.mxu0 0.0
        %4261 = vmatprep.subr.mxu0 0.0
        %4262 = vmatpush1.xpose.msra.mxu0 0.0
        %4263 = vmatprep.subr.mxu0 0.0
        %4264 = vmatpush1.xpose.msra.mxu0 0.0
        %4265 = vmatprep.subr.mxu0 0.0
        %4266 = vmatpush1.xpose.msra.mxu0 0.0
        %4267 = vmatprep.subr.mxu0 0.0
        %4268 = vmatpush1.xpose.msra.mxu0 0.0
        %4269 = vmatprep.subr.mxu0 0.0
        %4270 = vmatpush1.xpose.msra.mxu0 0.0
        %4271 = vmatprep.subr.mxu0 0.0
        %4272 = vmatpush1.xpose.msra.mxu0 0.0
        %4273 = vmatprep.subr.mxu0 0.0
        %4274 = vmatpush1.xpose.msra.mxu0 0.0
        %4275 = vmatprep.subr.mxu0 0.0
        %4276 = vmatpush1.xpose.msra.mxu0 0.0
        %4277 = vmatprep.subr.mxu0 0.0
        %4278 = vmatpush1.xpose.msra.mxu0 0.0
        %4279 = vmatprep.subr.mxu0 0.0
        %4280 = vmatpush1.xpose.msra.mxu0 0.0
        %4281 = vmatprep.subr.mxu0 0.0
        %4282 = vmatpush1.xpose.msra.mxu0 0.0
        %4283 = vmatprep.subr.mxu0 0.0
        %4284 = vmatpush1.xpose.msra.mxu0 0.0
        %4285 = vmatprep.subr.mxu0 0.0
        %4286 = vmatpush1.xpose.msra.mxu0 0.0
        %4287 = vmatprep.subr.mxu0 0.0
        %4288 = vmatpush1.xpose.msra.mxu0 0.0
        %4289 = vmatprep.subr.mxu0 0.0
        %4290 = vmatpush1.xpose.msra.mxu0 0.0
        %4291 = vmatprep.subr.mxu0 0.0
        %4292 = vmatpush1.xpose.msra.mxu0 0.0
        %4293 = vmatprep.subr.mxu0 0.0
        %4294 = vmatpush1.xpose.msra.mxu0 0.0
        %4295 = vmatprep.subr.mxu0 0.0
        %4296 = vmatpush1.xpose.msra.mxu0 0.0
        %4297 = vmatprep.subr.mxu0 0.0
        %4298 = vmatpush1.xpose.msra.mxu0 0.0
        %4299 = vmatprep.subr.mxu0 0.0
        %4300 = vmatpush1.xpose.msra.mxu0 0.0
        %4301 = vmatprep.subr.mxu0 0.0
        %4302 = vmatpush1.xpose.msra.mxu0 0.0
        %4303 = vmatprep.subr.mxu0 0.0
        %4304 = vmatpush1.xpose.msra.mxu0 0.0
        %4305 = vmatprep.subr.mxu0 0.0
        %4306 = vmatpush1.xpose.msra.mxu0 0.0
        %4307 = vmatprep.mubr.f32.mxu0 0.0
        %4308 = vmatmul.mubr.f32.gmra.mrb[0].mxu0 %v4016
        %v4309 = vpop.f32.mrb[0].mxu0
        %v4310 = vadd.f32 0.0, %v4309
        %v4311 = vpop.f32.mrb[0].mxu0
        %4312 = vmatprep.mubr.f32.mxu0 0.0
        %4313 = vmatmul.mubr.f32.gmra.mrb[0].mxu0 %v4017
        %v4314 = vpop.f32.mrb[0].mxu0
        %v4315 = vadd.f32 0.0, %v4314
        %v4316 = vpop.f32.mrb[0].mxu0
        %4317 = vdwg.mxu0
        %v4318 = vsub.f32 0.0, %v4085
        %v4319 = vsub.f32 0.0, %v4090
        %v4320 = vsub.f32 0.0, %v4160
        %v4321 = vsub.f32 0.0, %v4165
        %v4322 = vsub.f32 0.0, %v4235
        %v4323 = vsub.f32 0.0, %v4240
        %v4324 = vsub.f32 0.0, %v4310
        %v4325 = vsub.f32 0.0, %v4315
        %v4326 = vmin.f32 %v2698, 0.0
        %v4327 = vmin.f32 %v2699, 0.0
        %v4328 = vmin.f32 %v2700, 0.0
        %v4329 = vmin.f32 %v2701, 0.0
        %v4330 = vand.u32 2147483647, %v2698
        %v4331 = vand.u32 2147483647, %v2699
        %v4332 = vand.u32 2147483647, %v2700
        %v4333 = vand.u32 2147483647, %v2701
        %v4334 = vsub.f32 0.0, %v4330
        %v4335 = vsub.f32 0.0, %v4331
        %v4336 = vsub.f32 0.0, %v4332
        %v4337 = vsub.f32 0.0, %v4333
        %v4338 = vmul.f32 %v4334, 1.442695
        %v4339 = vpow.pop %v4338
        %v4340 = vmul.f32 %v4335, 1.442695
        %v4341 = vpow.pop %v4340
        %v4342 = vmul.f32 %v4336, 1.442695
        %v4343 = vpow.pop %v4342
        %v4344 = vmul.f32 %v4337, 1.442695
        %v4345 = vpow.pop %v4344
        %v4346 = vadd.f32 %v4339, 1.0
        %v4347 = vadd.f32 %v4341, 1.0
        %v4348 = vadd.f32 %v4343, 1.0
        %v4349 = vadd.f32 %v4345, 1.0
        %v4350 = vlog2.pop %v4346
        %v4351 = vmul.f32 %v4350, 0.6931472
        %v4352 = vlog2.pop %v4347
        %v4353 = vmul.f32 %v4352, 0.6931472
        %v4354 = vlog2.pop %v4348
        %v4355 = vmul.f32 %v4354, 0.6931472
        %v4356 = vlog2.pop %v4349
        %v4357 = vmul.f32 %v4356, 0.6931472
        %v4358 = vsub.f32 %v4326, %v4351
        %v4359 = vsub.f32 %v4327, %v4353
        %v4360 = vsub.f32 %v4328, %v4355
        %v4361 = vsub.f32 %v4329, %v4357
        %v4362 = vadd.f32 %v4358, %v4318
        %v4363 = vadd.f32 %v4358, %v4319
        %v4364 = vadd.f32 %v4359, %v4320
        %v4365 = vadd.f32 %v4359, %v4321
        %v4366 = vadd.f32 %v4360, %v4322
        %v4367 = vadd.f32 %v4360, %v4323
        %v4368 = vadd.f32 %v4361, %v4324
        %v4369 = vadd.f32 %v4361, %v4325
        %v4370 = vsel %vm1609, %v4362, -inf
        %4371 = vmax.xlane.f32.xlu0 %v4370
        %v4372 = vpop.xlane.xlu0 %4371
        %v4373 = vsel %vm1609, %v4363, -inf
        %4374 = vmax.xlane.f32.xlu0 %v4373
        %v4375 = vpop.xlane.xlu0 %4374
        %v4376 = vsel %vm1609, %v4364, -inf
        %4377 = vmax.xlane.f32.xlu0 %v4376
        %v4378 = vpop.xlane.xlu0 %4377
        %v4379 = vsel %vm1609, %v4365, -inf
        %4380 = vmax.xlane.f32.xlu0 %v4379
        %v4381 = vpop.xlane.xlu0 %4380
        %v4382 = vsel %vm1609, %v4366, -inf
        %4383 = vmax.xlane.f32.xlu0 %v4382
        %v4384 = vpop.xlane.xlu0 %4383
        %v4385 = vsel %vm1609, %v4367, -inf
        %4386 = vmax.xlane.f32.xlu0 %v4385
        %v4387 = vpop.xlane.xlu0 %4386
        %v4388 = vsel %vm1609, %v4368, -inf
        %4389 = vmax.xlane.f32.xlu0 %v4388
        %v4390 = vpop.xlane.xlu0 %4389
        %v4391 = vsel %vm1609, %v4369, -inf
        %4392 = vmax.xlane.f32.xlu0 %v4391
        %v4393 = vpop.xlane.xlu0 %4392
        %v4394 = vsub.f32 %v4362, %v4372
        %v4395 = vsub.f32 %v4363, %v4375
        %v4396 = vsub.f32 %v4364, %v4378
        %v4397 = vsub.f32 %v4365, %v4381
        %v4398 = vsub.f32 %v4366, %v4384
        %v4399 = vsub.f32 %v4367, %v4387
        %v4400 = vsub.f32 %v4368, %v4390
        %v4401 = vsub.f32 %v4369, %v4393
        %v4402 = vmul.f32 %v4394, 1.442695
        %v4403 = vpow.pop %v4402
        %v4404 = vmul.f32 %v4395, 1.442695
        %v4405 = vpow.pop %v4404
        %v4406 = vmul.f32 %v4396, 1.442695
        %v4407 = vpow.pop %v4406
        %v4408 = vmul.f32 %v4397, 1.442695
        %v4409 = vpow.pop %v4408
        %v4410 = vmul.f32 %v4398, 1.442695
        %v4411 = vpow.pop %v4410
        %v4412 = vmul.f32 %v4399, 1.442695
        %v4413 = vpow.pop %v4412
        %v4414 = vmul.f32 %v4400, 1.442695
        %v4415 = vpow.pop %v4414
        %v4416 = vmul.f32 %v4401, 1.442695
        %v4417 = vpow.pop %v4416
        %v4418 = vsel %vm1609, %v4403, 0.0
        %4419 = vadd.xlane.f32.xlu0 %v4418
        %v4420 = vpop.xlane.xlu0 %4419
        %v4421 = vsel %vm1609, %v4405, 0.0
        %4422 = vadd.xlane.f32.xlu0 %v4421
        %v4423 = vpop.xlane.xlu0 %4422
        %v4424 = vsel %vm1609, %v4407, 0.0
        %4425 = vadd.xlane.f32.xlu0 %v4424
        %v4426 = vpop.xlane.xlu0 %4425
        %v4427 = vsel %vm1609, %v4409, 0.0
        %4428 = vadd.xlane.f32.xlu0 %v4427
        %v4429 = vpop.xlane.xlu0 %4428
        %v4430 = vsel %vm1609, %v4411, 0.0
        %4431 = vadd.xlane.f32.xlu0 %v4430
        %v4432 = vpop.xlane.xlu0 %4431
        %v4433 = vsel %vm1609, %v4413, 0.0
        %4434 = vadd.xlane.f32.xlu0 %v4433
        %v4435 = vpop.xlane.xlu0 %4434
        %v4436 = vsel %vm1609, %v4415, 0.0
        %4437 = vadd.xlane.f32.xlu0 %v4436
        %v4438 = vpop.xlane.xlu0 %4437
        %v4439 = vsel %vm1609, %v4417, 0.0
        %4440 = vadd.xlane.f32.xlu0 %v4439
        %v4441 = vpop.xlane.xlu0 %4440
        %v4442 = vrcp.pop %v4420
        %v4443 = vrcp.pop %v4423
        %v4444 = vrcp.pop %v4426
        %v4445 = vrcp.pop %v4429
        %v4446 = vrcp.pop %v4432
        %v4447 = vrcp.pop %v4435
        %v4448 = vrcp.pop %v4438
        %v4449 = vrcp.pop %v4441
        %v4450 = vmul.f32 %v4420, %v4442
        %v4451 = vmul.f32 %v4423, %v4443
        %v4452 = vmul.f32 %v4426, %v4444
        %v4453 = vmul.f32 %v4429, %v4445
        %v4454 = vmul.f32 %v4432, %v4446
        %v4455 = vmul.f32 %v4435, %v4447
        %v4456 = vmul.f32 %v4438, %v4448
        %v4457 = vmul.f32 %v4441, %v4449
        %v4458 = vsub.f32 2.0, %v4450
        %v4459 = vsub.f32 2.0, %v4451
        %v4460 = vsub.f32 2.0, %v4452
        %v4461 = vsub.f32 2.0, %v4453
        %v4462 = vsub.f32 2.0, %v4454
        %v4463 = vsub.f32 2.0, %v4455
        %v4464 = vsub.f32 2.0, %v4456
        %v4465 = vsub.f32 2.0, %v4457
        %v4466 = vmul.f32 %v4442, %v4458
        %v4467 = vmul.f32 %v4443, %v4459
        %v4468 = vmul.f32 %v4444, %v4460
        %v4469 = vmul.f32 %v4445, %v4461
        %v4470 = vmul.f32 %v4446, %v4462
        %v4471 = vmul.f32 %v4447, %v4463
        %v4472 = vmul.f32 %v4448, %v4464
        %v4473 = vmul.f32 %v4449, %v4465
        %v4474 = vmul.f32 %v4403, %v4466
        %v4475 = vmul.f32 %v4405, %v4467
        %v4476 = vmul.f32 %v4407, %v4468
        %v4477 = vmul.f32 %v4409, %v4469
        %v4478 = vmul.f32 %v4411, %v4470
        %v4479 = vmul.f32 %v4413, %v4471
        %v4480 = vmul.f32 %v4415, %v4472
        %v4481 = vmul.f32 %v4417, %v4473
        %v4482 = vmul.f32 %v1548, %v4474
        %v4483 = vmul.f32 %v1553, %v4475
        %v4484 = vmul.f32 %v1558, %v4476
        %v4485 = vmul.f32 %v1563, %v4477
        %v4486 = vmul.f32 %v1568, %v4478
        %v4487 = vmul.f32 %v1573, %v4479
        %v4488 = vmul.f32 %v1578, %v4480
        %v4489 = vmul.f32 %v1583, %v4481
        %v4490 = vsub.f32 %v1548, %v4482
        %v4491 = vsub.f32 %v1553, %v4483
        %v4492 = vsub.f32 %v1558, %v4484
        %v4493 = vsub.f32 %v1563, %v4485
        %v4494 = vsub.f32 %v1568, %v4486
        %v4495 = vsub.f32 %v1573, %v4487
        %v4496 = vsub.f32 %v1578, %v4488
        %v4497 = vsub.f32 %v1583, %v4489
        %v4498 = vmul.f32 %v1540, %v4482
        %v4499 = vmul.f32 %v1541, %v4483
        %v4500 = vmul.f32 %v1540, %v4484
        %v4501 = vmul.f32 %v1541, %v4485
        %v4502 = vmul.f32 %v1540, %v4486
        %v4503 = vmul.f32 %v1541, %v4487
        %v4504 = vmul.f32 %v1540, %v4488
        %v4505 = vmul.f32 %v1541, %v4489
        %v4506 = vsel %vm1609, %v4498, 0.0
        %v4507 = vsel %vm1609, %v4499, 0.0
        %v4508 = vadd.f32 %v4506, %v4507
        %v4509 = vrot.slane %v4508, 4
        %v4510 = vadd.f32 %v4508, %v4509
        %v4511 = vrot.slane %v4510, 2
        %v4512 = vadd.f32 %v4510, %v4511
        %v4513 = vrot.slane %v4512, 1
        %v4514 = vadd.f32 %v4512, %v4513
        %v4515 = vsel %vm1609, %v4500, 0.0
        %v4516 = vsel %vm1609, %v4501, 0.0
        %v4517 = vadd.f32 %v4515, %v4516
        %v4518 = vrot.slane %v4517, 4
        %v4519 = vadd.f32 %v4517, %v4518
        %v4520 = vrot.slane %v4519, 2
        %v4521 = vadd.f32 %v4519, %v4520
        %v4522 = vrot.slane %v4521, 1
        %v4523 = vadd.f32 %v4521, %v4522
        %v4524 = vsel %vm1609, %v4502, 0.0
        %v4525 = vsel %vm1609, %v4503, 0.0
        %v4526 = vadd.f32 %v4524, %v4525
        %v4527 = vrot.slane %v4526, 4
        %v4528 = vadd.f32 %v4526, %v4527
        %v4529 = vrot.slane %v4528, 2
        %v4530 = vadd.f32 %v4528, %v4529
        %v4531 = vrot.slane %v4530, 1
        %v4532 = vadd.f32 %v4530, %v4531
        %v4533 = vsel %vm1609, %v4504, 0.0
        %v4534 = vsel %vm1609, %v4505, 0.0
        %v4535 = vadd.f32 %v4533, %v4534
        %v4536 = vrot.slane %v4535, 4
        %v4537 = vadd.f32 %v4535, %v4536
        %v4538 = vrot.slane %v4537, 2
        %v4539 = vadd.f32 %v4537, %v4538
        %v4540 = vrot.slane %v4539, 1
        %v4541 = vadd.f32 %v4539, %v4540
        %v4542 = vmul.f32 %v1542, %v4490
        %v4543 = vmul.f32 %v1543, %v4491
        %v4544 = vmul.f32 %v1542, %v4492
        %v4545 = vmul.f32 %v1543, %v4493
        %v4546 = vmul.f32 %v1542, %v4494
        %v4547 = vmul.f32 %v1543, %v4495
        %v4548 = vmul.f32 %v1542, %v4496
        %v4549 = vmul.f32 %v1543, %v4497
        %v4550 = vsel %vm1609, %v4542, 0.0
        %v4551 = vsel %vm1609, %v4543, 0.0
        %v4552 = vadd.f32 %v4550, %v4551
        %v4553 = vrot.slane %v4552, 4
        %v4554 = vadd.f32 %v4552, %v4553
        %v4555 = vrot.slane %v4554, 2
        %v4556 = vadd.f32 %v4554, %v4555
        %v4557 = vrot.slane %v4556, 1
        %v4558 = vadd.f32 %v4556, %v4557
        %v4559 = vsel %vm1609, %v4544, 0.0
        %v4560 = vsel %vm1609, %v4545, 0.0
        %v4561 = vadd.f32 %v4559, %v4560
        %v4562 = vrot.slane %v4561, 4
        %v4563 = vadd.f32 %v4561, %v4562
        %v4564 = vrot.slane %v4563, 2
        %v4565 = vadd.f32 %v4563, %v4564
        %v4566 = vrot.slane %v4565, 1
        %v4567 = vadd.f32 %v4565, %v4566
        %v4568 = vsel %vm1609, %v4546, 0.0
        %v4569 = vsel %vm1609, %v4547, 0.0
        %v4570 = vadd.f32 %v4568, %v4569
        %v4571 = vrot.slane %v4570, 4
        %v4572 = vadd.f32 %v4570, %v4571
        %v4573 = vrot.slane %v4572, 2
        %v4574 = vadd.f32 %v4572, %v4573
        %v4575 = vrot.slane %v4574, 1
        %v4576 = vadd.f32 %v4574, %v4575
        %v4577 = vsel %vm1609, %v4548, 0.0
        %v4578 = vsel %vm1609, %v4549, 0.0
        %v4579 = vadd.f32 %v4577, %v4578
        %v4580 = vrot.slane %v4579, 4
        %v4581 = vadd.f32 %v4579, %v4580
        %v4582 = vrot.slane %v4581, 2
        %v4583 = vadd.f32 %v4581, %v4582
        %v4584 = vrot.slane %v4583, 1
        %v4585 = vadd.f32 %v4583, %v4584
        %v4586 = vsub.f32 %v4514, %v4558
        %v4587 = vsub.f32 %v4523, %v4567
        %v4588 = vsub.f32 %v4532, %v4576
        %v4589 = vsub.f32 %v4541, %v4585
        %v4590 = vsel %vm1609, %v4482, 0.0
        %v4591 = vsel %vm1609, %v4483, 0.0
        %v4592 = vadd.f32 %v4590, %v4591
        %v4593 = vrot.slane %v4592, 4
        %v4594 = vadd.f32 %v4592, %v4593
        %v4595 = vrot.slane %v4594, 2
        %v4596 = vadd.f32 %v4594, %v4595
        %v4597 = vrot.slane %v4596, 1
        %v4598 = vadd.f32 %v4596, %v4597
        %v4599 = vsel %vm1609, %v4484, 0.0
        %v4600 = vsel %vm1609, %v4485, 0.0
        %v4601 = vadd.f32 %v4599, %v4600
        %v4602 = vrot.slane %v4601, 4
        %v4603 = vadd.f32 %v4601, %v4602
        %v4604 = vrot.slane %v4603, 2
        %v4605 = vadd.f32 %v4603, %v4604
        %v4606 = vrot.slane %v4605, 1
        %v4607 = vadd.f32 %v4605, %v4606
        %v4608 = vsel %vm1609, %v4486, 0.0
        %v4609 = vsel %vm1609, %v4487, 0.0
        %v4610 = vadd.f32 %v4608, %v4609
        %v4611 = vrot.slane %v4610, 4
        %v4612 = vadd.f32 %v4610, %v4611
        %v4613 = vrot.slane %v4612, 2
        %v4614 = vadd.f32 %v4612, %v4613
        %v4615 = vrot.slane %v4614, 1
        %v4616 = vadd.f32 %v4614, %v4615
        %v4617 = vsel %vm1609, %v4488, 0.0
        %v4618 = vsel %vm1609, %v4489, 0.0
        %v4619 = vadd.f32 %v4617, %v4618
        %v4620 = vrot.slane %v4619, 4
        %v4621 = vadd.f32 %v4619, %v4620
        %v4622 = vrot.slane %v4621, 2
        %v4623 = vadd.f32 %v4621, %v4622
        %v4624 = vrot.slane %v4623, 1
        %v4625 = vadd.f32 %v4623, %v4624
        %v4626 = vadd.f32 %v4598, 1e-05
        %v4627 = vadd.f32 %v4607, 1e-05
        %v4628 = vadd.f32 %v4616, 1e-05
        %v4629 = vadd.f32 %v4625, 1e-05
        %v4630 = vrcp.pop %v4626
        %v4631 = vrcp.pop %v4627
        %v4632 = vrcp.pop %v4628
        %v4633 = vrcp.pop %v4629
        %v4634 = vmul.f32 %v4626, %v4630
        %v4635 = vmul.f32 %v4627, %v4631
        %v4636 = vmul.f32 %v4628, %v4632
        %v4637 = vmul.f32 %v4629, %v4633
        %v4638 = vsub.f32 2.0, %v4634
        %v4639 = vsub.f32 2.0, %v4635
        %v4640 = vsub.f32 2.0, %v4636
        %v4641 = vsub.f32 2.0, %v4637
        %v4642 = vmul.f32 %v4630, %v4638
        %v4643 = vmul.f32 %v4631, %v4639
        %v4644 = vmul.f32 %v4632, %v4640
        %v4645 = vmul.f32 %v4633, %v4641
        %v4646 = vmul.f32 %v4482, %v4642
        %v4647 = vmul.f32 %v4483, %v4642
        %v4648 = vmul.f32 %v4484, %v4643
        %v4649 = vmul.f32 %v4485, %v4643
        %v4650 = vmul.f32 %v4486, %v4644
        %v4651 = vmul.f32 %v4487, %v4644
        %v4652 = vmul.f32 %v4488, %v4645
        %v4653 = vmul.f32 %v4489, %v4645
        %4655 = vset.pattern.permute.xlu0 0
        %4656 = vperm.xlu0 %4655, %v4646
        %v4657 = vpop.permute.xlu0 %4656
        %4660 = vset.pattern.permute.xlu0 0
        %4661 = vperm.xlu0 %4660, %v4647
        %v4662 = vpop.permute.xlu0 %4661
        %4665 = vset.pattern.permute.xlu0 0
        %4666 = vperm.xlu0 %4665, %v4648
        %v4667 = vpop.permute.xlu0 %4666
        %4670 = vset.pattern.permute.xlu0 0
        %4671 = vperm.xlu0 %4670, %v4649
        %v4672 = vpop.permute.xlu0 %4671
        %4675 = vset.pattern.permute.xlu0 0
        %4676 = vperm.xlu0 %4675, %v4650
        %v4677 = vpop.permute.xlu0 %4676
        %4680 = vset.pattern.permute.xlu0 0
        %4681 = vperm.xlu0 %4680, %v4651
        %v4682 = vpop.permute.xlu0 %4681
        %4685 = vset.pattern.permute.xlu0 0
        %4686 = vperm.xlu0 %4685, %v4652
        %v4687 = vpop.permute.xlu0 %4686
        %4690 = vset.pattern.permute.xlu0 0
        %4691 = vperm.xlu0 %4690, %v4653
        %v4692 = vpop.permute.xlu0 %4691
        %v4694 = vmul.f32 %v4657, %v1428
        %v4695 = vmul.f32 %v4662, %v1429
        %v4696 = vmul.f32 %v4667, %v1430
        %v4697 = vmul.f32 %v4672, %v1431
        %v4698 = vmul.f32 %v4677, %v1432
        %v4699 = vmul.f32 %v4682, %v1433
        %v4700 = vmul.f32 %v4687, %v1434
        %v4701 = vmul.f32 %v4692, %v1435
        %v4702 = vadd.f32 %v4694, %v4695
        %v4703 = vrot.slane %v4702, 4
        %v4704 = vadd.f32 %v4702, %v4703
        %v4705 = vrot.slane %v4704, 2
        %v4706 = vadd.f32 %v4704, %v4705
        %v4707 = vrot.slane %v4706, 1
        %v4708 = vadd.f32 %v4706, %v4707
        %v4709 = vadd.f32 %v4696, %v4697
        %v4710 = vrot.slane %v4709, 4
        %v4711 = vadd.f32 %v4709, %v4710
        %v4712 = vrot.slane %v4711, 2
        %v4713 = vadd.f32 %v4711, %v4712
        %v4714 = vrot.slane %v4713, 1
        %v4715 = vadd.f32 %v4713, %v4714
        %v4716 = vadd.f32 %v4698, %v4699
        %v4717 = vrot.slane %v4716, 4
        %v4718 = vadd.f32 %v4716, %v4717
        %v4719 = vrot.slane %v4718, 2
        %v4720 = vadd.f32 %v4718, %v4719
        %v4721 = vrot.slane %v4720, 1
        %v4722 = vadd.f32 %v4720, %v4721
        %v4723 = vadd.f32 %v4700, %v4701
        %v4724 = vrot.slane %v4723, 4
        %v4725 = vadd.f32 %v4723, %v4724
        %v4726 = vrot.slane %v4725, 2
        %v4727 = vadd.f32 %v4725, %v4726
        %v4728 = vrot.slane %v4727, 1
        %v4729 = vadd.f32 %v4727, %v4728
        %v4730 = vmul.f32 %v1544, %v4708
        %v4731 = vmul.f32 %v1544, %v4715
        %v4732 = vmul.f32 %v1544, %v4722
        %v4733 = vmul.f32 %v1544, %v4729
        %v4734 = vadd.f32 %v4730, 0.0
        %v4735 = vadd.f32 %v4731, 0.0
        %v4736 = vadd.f32 %v4732, 0.0
        %v4737 = vadd.f32 %v4733, 0.0
        %4738 = vset.pattern.permute.xlu0 1
        %4739 = vperm.xlu0 %4738, %v4646
        %v4740 = vpop.permute.xlu0 %4739
        %4742 = vset.pattern.permute.xlu0 1
        %4743 = vperm.xlu0 %4742, %v4647
        %v4744 = vpop.permute.xlu0 %4743
        %4746 = vset.pattern.permute.xlu0 1
        %4747 = vperm.xlu0 %4746, %v4648
        %v4748 = vpop.permute.xlu0 %4747
        %4750 = vset.pattern.permute.xlu0 1
        %4751 = vperm.xlu0 %4750, %v4649
        %v4752 = vpop.permute.xlu0 %4751
        %4754 = vset.pattern.permute.xlu0 1
        %4755 = vperm.xlu0 %4754, %v4650
        %v4756 = vpop.permute.xlu0 %4755
        %4758 = vset.pattern.permute.xlu0 1
        %4759 = vperm.xlu0 %4758, %v4651
        %v4760 = vpop.permute.xlu0 %4759
        %4762 = vset.pattern.permute.xlu0 1
        %4763 = vperm.xlu0 %4762, %v4652
        %v4764 = vpop.permute.xlu0 %4763
        %4766 = vset.pattern.permute.xlu0 1
        %4767 = vperm.xlu0 %4766, %v4653
        %v4768 = vpop.permute.xlu0 %4767
        %v4770 = vmul.f32 %v4740, %v1428
        %v4771 = vmul.f32 %v4744, %v1429
        %v4772 = vmul.f32 %v4748, %v1430
        %v4773 = vmul.f32 %v4752, %v1431
        %v4774 = vmul.f32 %v4756, %v1432
        %v4775 = vmul.f32 %v4760, %v1433
        %v4776 = vmul.f32 %v4764, %v1434
        %v4777 = vmul.f32 %v4768, %v1435
        %v4778 = vadd.f32 %v4770, %v4771
        %v4779 = vrot.slane %v4778, 4
        %v4780 = vadd.f32 %v4778, %v4779
        %v4781 = vrot.slane %v4780, 2
        %v4782 = vadd.f32 %v4780, %v4781
        %v4783 = vrot.slane %v4782, 1
        %v4784 = vadd.f32 %v4782, %v4783
        %v4785 = vadd.f32 %v4772, %v4773
        %v4786 = vrot.slane %v4785, 4
        %v4787 = vadd.f32 %v4785, %v4786
        %v4788 = vrot.slane %v4787, 2
        %v4789 = vadd.f32 %v4787, %v4788
        %v4790 = vrot.slane %v4789, 1
        %v4791 = vadd.f32 %v4789, %v4790
        %v4792 = vadd.f32 %v4774, %v4775
        %v4793 = vrot.slane %v4792, 4
        %v4794 = vadd.f32 %v4792, %v4793
        %v4795 = vrot.slane %v4794, 2
        %v4796 = vadd.f32 %v4794, %v4795
        %v4797 = vrot.slane %v4796, 1
        %v4798 = vadd.f32 %v4796, %v4797
        %v4799 = vadd.f32 %v4776, %v4777
        %v4800 = vrot.slane %v4799, 4
        %v4801 = vadd.f32 %v4799, %v4800
        %v4802 = vrot.slane %v4801, 2
        %v4803 = vadd.f32 %v4801, %v4802
        %v4804 = vrot.slane %v4803, 1
        %v4805 = vadd.f32 %v4803, %v4804
        %v4806 = vmul.f32 %v1544, %v4784
        %v4807 = vmul.f32 %v1544, %v4791
        %v4808 = vmul.f32 %v1544, %v4798
        %v4809 = vmul.f32 %v1544, %v4805
        %v4814 = vrot.slane %v4806, 1
        %v4815 = vrot.slane %v4807, 1
        %v4816 = vrot.slane %v4808, 1
        %v4817 = vrot.slane %v4809, 1
        %v4822 = vadd.f32 %v4734, %v4814
        %v4823 = vadd.f32 %v4735, %v4815
        %v4824 = vadd.f32 %v4736, %v4816
        %v4825 = vadd.f32 %v4737, %v4817
        %4826 = vset.pattern.permute.xlu0 2
        %4827 = vperm.xlu0 %4826, %v4646
        %v4828 = vpop.permute.xlu0 %4827
        %4830 = vset.pattern.permute.xlu0 2
        %4831 = vperm.xlu0 %4830, %v4647
        %v4832 = vpop.permute.xlu0 %4831
        %4834 = vset.pattern.permute.xlu0 2
        %4835 = vperm.xlu0 %4834, %v4648
        %v4836 = vpop.permute.xlu0 %4835
        %4838 = vset.pattern.permute.xlu0 2
        %4839 = vperm.xlu0 %4838, %v4649
        %v4840 = vpop.permute.xlu0 %4839
        %4842 = vset.pattern.permute.xlu0 2
        %4843 = vperm.xlu0 %4842, %v4650
        %v4844 = vpop.permute.xlu0 %4843
        %4846 = vset.pattern.permute.xlu0 2
        %4847 = vperm.xlu0 %4846, %v4651
        %v4848 = vpop.permute.xlu0 %4847
        %4850 = vset.pattern.permute.xlu0 2
        %4851 = vperm.xlu0 %4850, %v4652
        %v4852 = vpop.permute.xlu0 %4851
        %4854 = vset.pattern.permute.xlu0 2
        %4855 = vperm.xlu0 %4854, %v4653
        %v4856 = vpop.permute.xlu0 %4855
        %v4858 = vmul.f32 %v4828, %v1428
        %v4859 = vmul.f32 %v4832, %v1429
        %v4860 = vmul.f32 %v4836, %v1430
        %v4861 = vmul.f32 %v4840, %v1431
        %v4862 = vmul.f32 %v4844, %v1432
        %v4863 = vmul.f32 %v4848, %v1433
        %v4864 = vmul.f32 %v4852, %v1434
        %v4865 = vmul.f32 %v4856, %v1435
        %v4866 = vadd.f32 %v4858, %v4859
        %v4867 = vrot.slane %v4866, 4
        %v4868 = vadd.f32 %v4866, %v4867
        %v4869 = vrot.slane %v4868, 2
        %v4870 = vadd.f32 %v4868, %v4869
        %v4871 = vrot.slane %v4870, 1
        %v4872 = vadd.f32 %v4870, %v4871
        %v4873 = vadd.f32 %v4860, %v4861
        %v4874 = vrot.slane %v4873, 4
        %v4875 = vadd.f32 %v4873, %v4874
        %v4876 = vrot.slane %v4875, 2
        %v4877 = vadd.f32 %v4875, %v4876
        %v4878 = vrot.slane %v4877, 1
        %v4879 = vadd.f32 %v4877, %v4878
        %v4880 = vadd.f32 %v4862, %v4863
        %v4881 = vrot.slane %v4880, 4
        %v4882 = vadd.f32 %v4880, %v4881
        %v4883 = vrot.slane %v4882, 2
        %v4884 = vadd.f32 %v4882, %v4883
        %v4885 = vrot.slane %v4884, 1
        %v4886 = vadd.f32 %v4884, %v4885
        %v4887 = vadd.f32 %v4864, %v4865
        %v4888 = vrot.slane %v4887, 4
        %v4889 = vadd.f32 %v4887, %v4888
        %v4890 = vrot.slane %v4889, 2
        %v4891 = vadd.f32 %v4889, %v4890
        %v4892 = vrot.slane %v4891, 1
        %v4893 = vadd.f32 %v4891, %v4892
        %v4894 = vmul.f32 %v1544, %v4872
        %v4895 = vmul.f32 %v1544, %v4879
        %v4896 = vmul.f32 %v1544, %v4886
        %v4897 = vmul.f32 %v1544, %v4893
        %v4902 = vrot.slane %v4894, 2
        %v4903 = vrot.slane %v4895, 2
        %v4904 = vrot.slane %v4896, 2
        %v4905 = vrot.slane %v4897, 2
        %v4910 = vadd.f32 %v4822, %v4902
        %v4911 = vadd.f32 %v4823, %v4903
        %v4912 = vadd.f32 %v4824, %v4904
        %v4913 = vadd.f32 %v4825, %v4905
        %4914 = vset.pattern.permute.xlu0 3
        %4915 = vperm.xlu0 %4914, %v4646
        %v4916 = vpop.permute.xlu0 %4915
        %4918 = vset.pattern.permute.xlu0 3
        %4919 = vperm.xlu0 %4918, %v4647
        %v4920 = vpop.permute.xlu0 %4919
        %4922 = vset.pattern.permute.xlu0 3
        %4923 = vperm.xlu0 %4922, %v4648
        %v4924 = vpop.permute.xlu0 %4923
        %4926 = vset.pattern.permute.xlu0 3
        %4927 = vperm.xlu0 %4926, %v4649
        %v4928 = vpop.permute.xlu0 %4927
        %4930 = vset.pattern.permute.xlu0 3
        %4931 = vperm.xlu0 %4930, %v4650
        %v4932 = vpop.permute.xlu0 %4931
        %4934 = vset.pattern.permute.xlu0 3
        %4935 = vperm.xlu0 %4934, %v4651
        %v4936 = vpop.permute.xlu0 %4935
        %4938 = vset.pattern.permute.xlu0 3
        %4939 = vperm.xlu0 %4938, %v4652
        %v4940 = vpop.permute.xlu0 %4939
        %4942 = vset.pattern.permute.xlu0 3
        %4943 = vperm.xlu0 %4942, %v4653
        %v4944 = vpop.permute.xlu0 %4943
        %v4946 = vmul.f32 %v4916, %v1428
        %v4947 = vmul.f32 %v4920, %v1429
        %v4948 = vmul.f32 %v4924, %v1430
        %v4949 = vmul.f32 %v4928, %v1431
        %v4950 = vmul.f32 %v4932, %v1432
        %v4951 = vmul.f32 %v4936, %v1433
        %v4952 = vmul.f32 %v4940, %v1434
        %v4953 = vmul.f32 %v4944, %v1435
        %v4954 = vadd.f32 %v4946, %v4947
        %v4955 = vrot.slane %v4954, 4
        %v4956 = vadd.f32 %v4954, %v4955
        %v4957 = vrot.slane %v4956, 2
        %v4958 = vadd.f32 %v4956, %v4957
        %v4959 = vrot.slane %v4958, 1
        %v4960 = vadd.f32 %v4958, %v4959
        %v4961 = vadd.f32 %v4948, %v4949
        %v4962 = vrot.slane %v4961, 4
        %v4963 = vadd.f32 %v4961, %v4962
        %v4964 = vrot.slane %v4963, 2
        %v4965 = vadd.f32 %v4963, %v4964
        %v4966 = vrot.slane %v4965, 1
        %v4967 = vadd.f32 %v4965, %v4966
        %v4968 = vadd.f32 %v4950, %v4951
        %v4969 = vrot.slane %v4968, 4
        %v4970 = vadd.f32 %v4968, %v4969
        %v4971 = vrot.slane %v4970, 2
        %v4972 = vadd.f32 %v4970, %v4971
        %v4973 = vrot.slane %v4972, 1
        %v4974 = vadd.f32 %v4972, %v4973
        %v4975 = vadd.f32 %v4952, %v4953
        %v4976 = vrot.slane %v4975, 4
        %v4977 = vadd.f32 %v4975, %v4976
        %v4978 = vrot.slane %v4977, 2
        %v4979 = vadd.f32 %v4977, %v4978
        %v4980 = vrot.slane %v4979, 1
        %v4981 = vadd.f32 %v4979, %v4980
        %v4982 = vmul.f32 %v1544, %v4960
        %v4983 = vmul.f32 %v1544, %v4967
        %v4984 = vmul.f32 %v1544, %v4974
        %v4985 = vmul.f32 %v1544, %v4981
        %v4990 = vrot.slane %v4982, 3
        %v4991 = vrot.slane %v4983, 3
        %v4992 = vrot.slane %v4984, 3
        %v4993 = vrot.slane %v4985, 3
        %v4998 = vadd.f32 %v4910, %v4990
        %v4999 = vadd.f32 %v4911, %v4991
        %v5000 = vadd.f32 %v4912, %v4992
        %v5001 = vadd.f32 %v4913, %v4993
        %5002 = vset.pattern.permute.xlu0 4
        %5003 = vperm.xlu0 %5002, %v4646
        %v5004 = vpop.permute.xlu0 %5003
        %5006 = vset.pattern.permute.xlu0 4
        %5007 = vperm.xlu0 %5006, %v4647
        %v5008 = vpop.permute.xlu0 %5007
        %5010 = vset.pattern.permute.xlu0 4
        %5011 = vperm.xlu0 %5010, %v4648
        %v5012 = vpop.permute.xlu0 %5011
        %5014 = vset.pattern.permute.xlu0 4
        %5015 = vperm.xlu0 %5014, %v4649
        %v5016 = vpop.permute.xlu0 %5015
        %5018 = vset.pattern.permute.xlu0 4
        %5019 = vperm.xlu0 %5018, %v4650
        %v5020 = vpop.permute.xlu0 %5019
        %5022 = vset.pattern.permute.xlu0 4
        %5023 = vperm.xlu0 %5022, %v4651
        %v5024 = vpop.permute.xlu0 %5023
        %5026 = vset.pattern.permute.xlu0 4
        %5027 = vperm.xlu0 %5026, %v4652
        %v5028 = vpop.permute.xlu0 %5027
        %5030 = vset.pattern.permute.xlu0 4
        %5031 = vperm.xlu0 %5030, %v4653
        %v5032 = vpop.permute.xlu0 %5031
        %v5034 = vmul.f32 %v5004, %v1428
        %v5035 = vmul.f32 %v5008, %v1429
        %v5036 = vmul.f32 %v5012, %v1430
        %v5037 = vmul.f32 %v5016, %v1431
        %v5038 = vmul.f32 %v5020, %v1432
        %v5039 = vmul.f32 %v5024, %v1433
        %v5040 = vmul.f32 %v5028, %v1434
        %v5041 = vmul.f32 %v5032, %v1435
        %v5042 = vadd.f32 %v5034, %v5035
        %v5043 = vrot.slane %v5042, 4
        %v5044 = vadd.f32 %v5042, %v5043
        %v5045 = vrot.slane %v5044, 2
        %v5046 = vadd.f32 %v5044, %v5045
        %v5047 = vrot.slane %v5046, 1
        %v5048 = vadd.f32 %v5046, %v5047
        %v5049 = vadd.f32 %v5036, %v5037
        %v5050 = vrot.slane %v5049, 4
        %v5051 = vadd.f32 %v5049, %v5050
        %v5052 = vrot.slane %v5051, 2
        %v5053 = vadd.f32 %v5051, %v5052
        %v5054 = vrot.slane %v5053, 1
        %v5055 = vadd.f32 %v5053, %v5054
        %v5056 = vadd.f32 %v5038, %v5039
        %v5057 = vrot.slane %v5056, 4
        %v5058 = vadd.f32 %v5056, %v5057
        %v5059 = vrot.slane %v5058, 2
        %v5060 = vadd.f32 %v5058, %v5059
        %v5061 = vrot.slane %v5060, 1
        %v5062 = vadd.f32 %v5060, %v5061
        %v5063 = vadd.f32 %v5040, %v5041
        %v5064 = vrot.slane %v5063, 4
        %v5065 = vadd.f32 %v5063, %v5064
        %v5066 = vrot.slane %v5065, 2
        %v5067 = vadd.f32 %v5065, %v5066
        %v5068 = vrot.slane %v5067, 1
        %v5069 = vadd.f32 %v5067, %v5068
        %v5070 = vmul.f32 %v1544, %v5048
        %v5071 = vmul.f32 %v1544, %v5055
        %v5072 = vmul.f32 %v1544, %v5062
        %v5073 = vmul.f32 %v1544, %v5069
        %v5078 = vrot.slane %v5070, 4
        %v5079 = vrot.slane %v5071, 4
        %v5080 = vrot.slane %v5072, 4
        %v5081 = vrot.slane %v5073, 4
        %v5086 = vadd.f32 %v4998, %v5078
        %v5087 = vadd.f32 %v4999, %v5079
        %v5088 = vadd.f32 %v5000, %v5080
        %v5089 = vadd.f32 %v5001, %v5081
        %5090 = vset.pattern.permute.xlu0 5
        %5091 = vperm.xlu0 %5090, %v4646
        %v5092 = vpop.permute.xlu0 %5091
        %5094 = vset.pattern.permute.xlu0 5
        %5095 = vperm.xlu0 %5094, %v4647
        %v5096 = vpop.permute.xlu0 %5095
        %5098 = vset.pattern.permute.xlu0 5
        %5099 = vperm.xlu0 %5098, %v4648
        %v5100 = vpop.permute.xlu0 %5099
        %5102 = vset.pattern.permute.xlu0 5
        %5103 = vperm.xlu0 %5102, %v4649
        %v5104 = vpop.permute.xlu0 %5103
        %5106 = vset.pattern.permute.xlu0 5
        %5107 = vperm.xlu0 %5106, %v4650
        %v5108 = vpop.permute.xlu0 %5107
        %5110 = vset.pattern.permute.xlu0 5
        %5111 = vperm.xlu0 %5110, %v4651
        %v5112 = vpop.permute.xlu0 %5111
        %5114 = vset.pattern.permute.xlu0 5
        %5115 = vperm.xlu0 %5114, %v4652
        %v5116 = vpop.permute.xlu0 %5115
        %5118 = vset.pattern.permute.xlu0 5
        %5119 = vperm.xlu0 %5118, %v4653
        %v5120 = vpop.permute.xlu0 %5119
        %v5122 = vmul.f32 %v5092, %v1428
        %v5123 = vmul.f32 %v5096, %v1429
        %v5124 = vmul.f32 %v5100, %v1430
        %v5125 = vmul.f32 %v5104, %v1431
        %v5126 = vmul.f32 %v5108, %v1432
        %v5127 = vmul.f32 %v5112, %v1433
        %v5128 = vmul.f32 %v5116, %v1434
        %v5129 = vmul.f32 %v5120, %v1435
        %v5130 = vadd.f32 %v5122, %v5123
        %v5131 = vrot.slane %v5130, 4
        %v5132 = vadd.f32 %v5130, %v5131
        %v5133 = vrot.slane %v5132, 2
        %v5134 = vadd.f32 %v5132, %v5133
        %v5135 = vrot.slane %v5134, 1
        %v5136 = vadd.f32 %v5134, %v5135
        %v5137 = vadd.f32 %v5124, %v5125
        %v5138 = vrot.slane %v5137, 4
        %v5139 = vadd.f32 %v5137, %v5138
        %v5140 = vrot.slane %v5139, 2
        %v5141 = vadd.f32 %v5139, %v5140
        %v5142 = vrot.slane %v5141, 1
        %v5143 = vadd.f32 %v5141, %v5142
        %v5144 = vadd.f32 %v5126, %v5127
        %v5145 = vrot.slane %v5144, 4
        %v5146 = vadd.f32 %v5144, %v5145
        %v5147 = vrot.slane %v5146, 2
        %v5148 = vadd.f32 %v5146, %v5147
        %v5149 = vrot.slane %v5148, 1
        %v5150 = vadd.f32 %v5148, %v5149
        %v5151 = vadd.f32 %v5128, %v5129
        %v5152 = vrot.slane %v5151, 4
        %v5153 = vadd.f32 %v5151, %v5152
        %v5154 = vrot.slane %v5153, 2
        %v5155 = vadd.f32 %v5153, %v5154
        %v5156 = vrot.slane %v5155, 1
        %v5157 = vadd.f32 %v5155, %v5156
        %v5158 = vmul.f32 %v1544, %v5136
        %v5159 = vmul.f32 %v1544, %v5143
        %v5160 = vmul.f32 %v1544, %v5150
        %v5161 = vmul.f32 %v1544, %v5157
        %v5166 = vrot.slane %v5158, 5
        %v5167 = vrot.slane %v5159, 5
        %v5168 = vrot.slane %v5160, 5
        %v5169 = vrot.slane %v5161, 5
        %v5174 = vadd.f32 %v5086, %v5166
        %v5175 = vadd.f32 %v5087, %v5167
        %v5176 = vadd.f32 %v5088, %v5168
        %v5177 = vadd.f32 %v5089, %v5169
        %5178 = vset.pattern.permute.xlu0 6
        %5179 = vperm.xlu0 %5178, %v4646
        %v5180 = vpop.permute.xlu0 %5179
        %5182 = vset.pattern.permute.xlu0 6
        %5183 = vperm.xlu0 %5182, %v4647
        %v5184 = vpop.permute.xlu0 %5183
        %5186 = vset.pattern.permute.xlu0 6
        %5187 = vperm.xlu0 %5186, %v4648
        %v5188 = vpop.permute.xlu0 %5187
        %5190 = vset.pattern.permute.xlu0 6
        %5191 = vperm.xlu0 %5190, %v4649
        %v5192 = vpop.permute.xlu0 %5191
        %5194 = vset.pattern.permute.xlu0 6
        %5195 = vperm.xlu0 %5194, %v4650
        %v5196 = vpop.permute.xlu0 %5195
        %5198 = vset.pattern.permute.xlu0 6
        %5199 = vperm.xlu0 %5198, %v4651
        %v5200 = vpop.permute.xlu0 %5199
        %5202 = vset.pattern.permute.xlu0 6
        %5203 = vperm.xlu0 %5202, %v4652
        %v5204 = vpop.permute.xlu0 %5203
        %5206 = vset.pattern.permute.xlu0 6
        %5207 = vperm.xlu0 %5206, %v4653
        %v5208 = vpop.permute.xlu0 %5207
        %v5210 = vmul.f32 %v5180, %v1428
        %v5211 = vmul.f32 %v5184, %v1429
        %v5212 = vmul.f32 %v5188, %v1430
        %v5213 = vmul.f32 %v5192, %v1431
        %v5214 = vmul.f32 %v5196, %v1432
        %v5215 = vmul.f32 %v5200, %v1433
        %v5216 = vmul.f32 %v5204, %v1434
        %v5217 = vmul.f32 %v5208, %v1435
        %v5218 = vadd.f32 %v5210, %v5211
        %v5219 = vrot.slane %v5218, 4
        %v5220 = vadd.f32 %v5218, %v5219
        %v5221 = vrot.slane %v5220, 2
        %v5222 = vadd.f32 %v5220, %v5221
        %v5223 = vrot.slane %v5222, 1
        %v5224 = vadd.f32 %v5222, %v5223
        %v5225 = vadd.f32 %v5212, %v5213
        %v5226 = vrot.slane %v5225, 4
        %v5227 = vadd.f32 %v5225, %v5226
        %v5228 = vrot.slane %v5227, 2
        %v5229 = vadd.f32 %v5227, %v5228
        %v5230 = vrot.slane %v5229, 1
        %v5231 = vadd.f32 %v5229, %v5230
        %v5232 = vadd.f32 %v5214, %v5215
        %v5233 = vrot.slane %v5232, 4
        %v5234 = vadd.f32 %v5232, %v5233
        %v5235 = vrot.slane %v5234, 2
        %v5236 = vadd.f32 %v5234, %v5235
        %v5237 = vrot.slane %v5236, 1
        %v5238 = vadd.f32 %v5236, %v5237
        %v5239 = vadd.f32 %v5216, %v5217
        %v5240 = vrot.slane %v5239, 4
        %v5241 = vadd.f32 %v5239, %v5240
        %v5242 = vrot.slane %v5241, 2
        %v5243 = vadd.f32 %v5241, %v5242
        %v5244 = vrot.slane %v5243, 1
        %v5245 = vadd.f32 %v5243, %v5244
        %v5246 = vmul.f32 %v1544, %v5224
        %v5247 = vmul.f32 %v1544, %v5231
        %v5248 = vmul.f32 %v1544, %v5238
        %v5249 = vmul.f32 %v1544, %v5245
        %v5254 = vrot.slane %v5246, 6
        %v5255 = vrot.slane %v5247, 6
        %v5256 = vrot.slane %v5248, 6
        %v5257 = vrot.slane %v5249, 6
        %v5262 = vadd.f32 %v5174, %v5254
        %v5263 = vadd.f32 %v5175, %v5255
        %v5264 = vadd.f32 %v5176, %v5256
        %v5265 = vadd.f32 %v5177, %v5257
        %5266 = vset.pattern.permute.xlu0 7
        %5267 = vperm.xlu0 %5266, %v4646
        %v5268 = vpop.permute.xlu0 %5267
        %5270 = vset.pattern.permute.xlu0 7
        %5271 = vperm.xlu0 %5270, %v4647
        %v5272 = vpop.permute.xlu0 %5271
        %5274 = vset.pattern.permute.xlu0 7
        %5275 = vperm.xlu0 %5274, %v4648
        %v5276 = vpop.permute.xlu0 %5275
        %5278 = vset.pattern.permute.xlu0 7
        %5279 = vperm.xlu0 %5278, %v4649
        %v5280 = vpop.permute.xlu0 %5279
        %5282 = vset.pattern.permute.xlu0 7
        %5283 = vperm.xlu0 %5282, %v4650
        %v5284 = vpop.permute.xlu0 %5283
        %5286 = vset.pattern.permute.xlu0 7
        %5287 = vperm.xlu0 %5286, %v4651
        %v5288 = vpop.permute.xlu0 %5287
        %5290 = vset.pattern.permute.xlu0 7
        %5291 = vperm.xlu0 %5290, %v4652
        %v5292 = vpop.permute.xlu0 %5291
        %5294 = vset.pattern.permute.xlu0 7
        %5295 = vperm.xlu0 %5294, %v4653
        %v5296 = vpop.permute.xlu0 %5295
        %v5298 = vmul.f32 %v5268, %v1428
        %v5299 = vmul.f32 %v5272, %v1429
        %v5300 = vmul.f32 %v5276, %v1430
        %v5301 = vmul.f32 %v5280, %v1431
        %v5302 = vmul.f32 %v5284, %v1432
        %v5303 = vmul.f32 %v5288, %v1433
        %v5304 = vmul.f32 %v5292, %v1434
        %v5305 = vmul.f32 %v5296, %v1435
        %v5306 = vadd.f32 %v5298, %v5299
        %v5307 = vrot.slane %v5306, 4
        %v5308 = vadd.f32 %v5306, %v5307
        %v5309 = vrot.slane %v5308, 2
        %v5310 = vadd.f32 %v5308, %v5309
        %v5311 = vrot.slane %v5310, 1
        %v5312 = vadd.f32 %v5310, %v5311
        %v5313 = vadd.f32 %v5300, %v5301
        %v5314 = vrot.slane %v5313, 4
        %v5315 = vadd.f32 %v5313, %v5314
        %v5316 = vrot.slane %v5315, 2
        %v5317 = vadd.f32 %v5315, %v5316
        %v5318 = vrot.slane %v5317, 1
        %v5319 = vadd.f32 %v5317, %v5318
        %v5320 = vadd.f32 %v5302, %v5303
        %v5321 = vrot.slane %v5320, 4
        %v5322 = vadd.f32 %v5320, %v5321
        %v5323 = vrot.slane %v5322, 2
        %v5324 = vadd.f32 %v5322, %v5323
        %v5325 = vrot.slane %v5324, 1
        %v5326 = vadd.f32 %v5324, %v5325
        %v5327 = vadd.f32 %v5304, %v5305
        %v5328 = vrot.slane %v5327, 4
        %v5329 = vadd.f32 %v5327, %v5328
        %v5330 = vrot.slane %v5329, 2
        %v5331 = vadd.f32 %v5329, %v5330
        %v5332 = vrot.slane %v5331, 1
        %v5333 = vadd.f32 %v5331, %v5332
        %v5334 = vmul.f32 %v1544, %v5312
        %v5335 = vmul.f32 %v1544, %v5319
        %v5336 = vmul.f32 %v1544, %v5326
        %v5337 = vmul.f32 %v1544, %v5333
        %v5342 = vrot.slane %v5334, 7
        %v5343 = vrot.slane %v5335, 7
        %v5344 = vrot.slane %v5336, 7
        %v5345 = vrot.slane %v5337, 7
        %v5350 = vadd.f32 %v5262, %v5342
        %v5351 = vadd.f32 %v5263, %v5343
        %v5352 = vadd.f32 %v5264, %v5344
        %v5353 = vadd.f32 %v5265, %v5345
        %v5354 = vlaneseq
        %v5355 = vshrl.u32 %v5354, 7
        %v5356 = vsub.s32 0, %v5355
        %v5357 = vrot.slane %v5350, %v5356
        %v5358 = vlaneseq
        %v5359 = vshrl.u32 %v5358, 7
        %v5360 = vsub.s32 0, %v5359
        %v5361 = vrot.slane %v5351, %v5360
        %v5362 = vlaneseq
        %v5363 = vshrl.u32 %v5362, 7
        %v5364 = vsub.s32 0, %v5363
        %v5365 = vrot.slane %v5352, %v5364
        %v5366 = vlaneseq
        %v5367 = vshrl.u32 %v5366, 7
        %v5368 = vsub.s32 0, %v5367
        %v5369 = vrot.slane %v5353, %v5368
        %v5370 = vsub.f32 %v1428, %v5357
        %v5371 = vsub.f32 %v1429, %v5357
        %v5372 = vsub.f32 %v1430, %v5361
        %v5373 = vsub.f32 %v1431, %v5361
        %v5374 = vsub.f32 %v1432, %v5365
        %v5375 = vsub.f32 %v1433, %v5365
        %v5376 = vsub.f32 %v1434, %v5369
        %v5377 = vsub.f32 %v1435, %v5369
        %v5378 = vmul.f32 %v5370, %v5370
        %v5379 = vmul.f32 %v5371, %v5371
        %v5380 = vmul.f32 %v5372, %v5372
        %v5381 = vmul.f32 %v5373, %v5373
        %v5382 = vmul.f32 %v5374, %v5374
        %v5383 = vmul.f32 %v5375, %v5375
        %v5384 = vmul.f32 %v5376, %v5376
        %v5385 = vmul.f32 %v5377, %v5377
        %v5386 = vmul.f32 %v4657, %v5378
        %v5387 = vmul.f32 %v4662, %v5379
        %v5388 = vmul.f32 %v4667, %v5380
        %v5389 = vmul.f32 %v4672, %v5381
        %v5390 = vmul.f32 %v4677, %v5382
        %v5391 = vmul.f32 %v4682, %v5383
        %v5392 = vmul.f32 %v4687, %v5384
        %v5393 = vmul.f32 %v4692, %v5385
        %v5394 = vadd.f32 %v5386, %v5387
        %v5395 = vrot.slane %v5394, 4
        %v5396 = vadd.f32 %v5394, %v5395
        %v5397 = vrot.slane %v5396, 2
        %v5398 = vadd.f32 %v5396, %v5397
        %v5399 = vrot.slane %v5398, 1
        %v5400 = vadd.f32 %v5398, %v5399
        %v5401 = vadd.f32 %v5388, %v5389
        %v5402 = vrot.slane %v5401, 4
        %v5403 = vadd.f32 %v5401, %v5402
        %v5404 = vrot.slane %v5403, 2
        %v5405 = vadd.f32 %v5403, %v5404
        %v5406 = vrot.slane %v5405, 1
        %v5407 = vadd.f32 %v5405, %v5406
        %v5408 = vadd.f32 %v5390, %v5391
        %v5409 = vrot.slane %v5408, 4
        %v5410 = vadd.f32 %v5408, %v5409
        %v5411 = vrot.slane %v5410, 2
        %v5412 = vadd.f32 %v5410, %v5411
        %v5413 = vrot.slane %v5412, 1
        %v5414 = vadd.f32 %v5412, %v5413
        %v5415 = vadd.f32 %v5392, %v5393
        %v5416 = vrot.slane %v5415, 4
        %v5417 = vadd.f32 %v5415, %v5416
        %v5418 = vrot.slane %v5417, 2
        %v5419 = vadd.f32 %v5417, %v5418
        %v5420 = vrot.slane %v5419, 1
        %v5421 = vadd.f32 %v5419, %v5420
        %v5422 = vmul.f32 %v1544, %v5400
        %v5423 = vmul.f32 %v1544, %v5407
        %v5424 = vmul.f32 %v1544, %v5414
        %v5425 = vmul.f32 %v1544, %v5421
        %v5426 = vadd.f32 %v5422, 0.0
        %v5427 = vadd.f32 %v5423, 0.0
        %v5428 = vadd.f32 %v5424, 0.0
        %v5429 = vadd.f32 %v5425, 0.0
        %v5430 = vmul.f32 %v4740, %v5378
        %v5431 = vmul.f32 %v4744, %v5379
        %v5432 = vmul.f32 %v4748, %v5380
        %v5433 = vmul.f32 %v4752, %v5381
        %v5434 = vmul.f32 %v4756, %v5382
        %v5435 = vmul.f32 %v4760, %v5383
        %v5436 = vmul.f32 %v4764, %v5384
        %v5437 = vmul.f32 %v4768, %v5385
        %v5438 = vadd.f32 %v5430, %v5431
        %v5439 = vrot.slane %v5438, 4
        %v5440 = vadd.f32 %v5438, %v5439
        %v5441 = vrot.slane %v5440, 2
        %v5442 = vadd.f32 %v5440, %v5441
        %v5443 = vrot.slane %v5442, 1
        %v5444 = vadd.f32 %v5442, %v5443
        %v5445 = vadd.f32 %v5432, %v5433
        %v5446 = vrot.slane %v5445, 4
        %v5447 = vadd.f32 %v5445, %v5446
        %v5448 = vrot.slane %v5447, 2
        %v5449 = vadd.f32 %v5447, %v5448
        %v5450 = vrot.slane %v5449, 1
        %v5451 = vadd.f32 %v5449, %v5450
        %v5452 = vadd.f32 %v5434, %v5435
        %v5453 = vrot.slane %v5452, 4
        %v5454 = vadd.f32 %v5452, %v5453
        %v5455 = vrot.slane %v5454, 2
        %v5456 = vadd.f32 %v5454, %v5455
        %v5457 = vrot.slane %v5456, 1
        %v5458 = vadd.f32 %v5456, %v5457
        %v5459 = vadd.f32 %v5436, %v5437
        %v5460 = vrot.slane %v5459, 4
        %v5461 = vadd.f32 %v5459, %v5460
        %v5462 = vrot.slane %v5461, 2
        %v5463 = vadd.f32 %v5461, %v5462
        %v5464 = vrot.slane %v5463, 1
        %v5465 = vadd.f32 %v5463, %v5464
        %v5466 = vmul.f32 %v1544, %v5444
        %v5467 = vmul.f32 %v1544, %v5451
        %v5468 = vmul.f32 %v1544, %v5458
        %v5469 = vmul.f32 %v1544, %v5465
        %v5474 = vrot.slane %v5466, 1
        %v5475 = vrot.slane %v5467, 1
        %v5476 = vrot.slane %v5468, 1
        %v5477 = vrot.slane %v5469, 1
        %v5482 = vadd.f32 %v5426, %v5474
        %v5483 = vadd.f32 %v5427, %v5475
        %v5484 = vadd.f32 %v5428, %v5476
        %v5485 = vadd.f32 %v5429, %v5477
        %v5486 = vmul.f32 %v4828, %v5378
        %v5487 = vmul.f32 %v4832, %v5379
        %v5488 = vmul.f32 %v4836, %v5380
        %v5489 = vmul.f32 %v4840, %v5381
        %v5490 = vmul.f32 %v4844, %v5382
        %v5491 = vmul.f32 %v4848, %v5383
        %v5492 = vmul.f32 %v4852, %v5384
        %v5493 = vmul.f32 %v4856, %v5385
        %v5494 = vadd.f32 %v5486, %v5487
        %v5495 = vrot.slane %v5494, 4
        %v5496 = vadd.f32 %v5494, %v5495
        %v5497 = vrot.slane %v5496, 2
        %v5498 = vadd.f32 %v5496, %v5497
        %v5499 = vrot.slane %v5498, 1
        %v5500 = vadd.f32 %v5498, %v5499
        %v5501 = vadd.f32 %v5488, %v5489
        %v5502 = vrot.slane %v5501, 4
        %v5503 = vadd.f32 %v5501, %v5502
        %v5504 = vrot.slane %v5503, 2
        %v5505 = vadd.f32 %v5503, %v5504
        %v5506 = vrot.slane %v5505, 1
        %v5507 = vadd.f32 %v5505, %v5506
        %v5508 = vadd.f32 %v5490, %v5491
        %v5509 = vrot.slane %v5508, 4
        %v5510 = vadd.f32 %v5508, %v5509
        %v5511 = vrot.slane %v5510, 2
        %v5512 = vadd.f32 %v5510, %v5511
        %v5513 = vrot.slane %v5512, 1
        %v5514 = vadd.f32 %v5512, %v5513
        %v5515 = vadd.f32 %v5492, %v5493
        %v5516 = vrot.slane %v5515, 4
        %v5517 = vadd.f32 %v5515, %v5516
        %v5518 = vrot.slane %v5517, 2
        %v5519 = vadd.f32 %v5517, %v5518
        %v5520 = vrot.slane %v5519, 1
        %v5521 = vadd.f32 %v5519, %v5520
        %v5522 = vmul.f32 %v1544, %v5500
        %v5523 = vmul.f32 %v1544, %v5507
        %v5524 = vmul.f32 %v1544, %v5514
        %v5525 = vmul.f32 %v1544, %v5521
        %v5530 = vrot.slane %v5522, 2
        %v5531 = vrot.slane %v5523, 2
        %v5532 = vrot.slane %v5524, 2
        %v5533 = vrot.slane %v5525, 2
        %v5538 = vadd.f32 %v5482, %v5530
        %v5539 = vadd.f32 %v5483, %v5531
        %v5540 = vadd.f32 %v5484, %v5532
        %v5541 = vadd.f32 %v5485, %v5533
        %v5542 = vmul.f32 %v4916, %v5378
        %v5543 = vmul.f32 %v4920, %v5379
        %v5544 = vmul.f32 %v4924, %v5380
        %v5545 = vmul.f32 %v4928, %v5381
        %v5546 = vmul.f32 %v4932, %v5382
        %v5547 = vmul.f32 %v4936, %v5383
        %v5548 = vmul.f32 %v4940, %v5384
        %v5549 = vmul.f32 %v4944, %v5385
        %v5550 = vadd.f32 %v5542, %v5543
        %v5551 = vrot.slane %v5550, 4
        %v5552 = vadd.f32 %v5550, %v5551
        %v5553 = vrot.slane %v5552, 2
        %v5554 = vadd.f32 %v5552, %v5553
        %v5555 = vrot.slane %v5554, 1
        %v5556 = vadd.f32 %v5554, %v5555
        %v5557 = vadd.f32 %v5544, %v5545
        %v5558 = vrot.slane %v5557, 4
        %v5559 = vadd.f32 %v5557, %v5558
        %v5560 = vrot.slane %v5559, 2
        %v5561 = vadd.f32 %v5559, %v5560
        %v5562 = vrot.slane %v5561, 1
        %v5563 = vadd.f32 %v5561, %v5562
        %v5564 = vadd.f32 %v5546, %v5547
        %v5565 = vrot.slane %v5564, 4
        %v5566 = vadd.f32 %v5564, %v5565
        %v5567 = vrot.slane %v5566, 2
        %v5568 = vadd.f32 %v5566, %v5567
        %v5569 = vrot.slane %v5568, 1
        %v5570 = vadd.f32 %v5568, %v5569
        %v5571 = vadd.f32 %v5548, %v5549
        %v5572 = vrot.slane %v5571, 4
        %v5573 = vadd.f32 %v5571, %v5572
        %v5574 = vrot.slane %v5573, 2
        %v5575 = vadd.f32 %v5573, %v5574
        %v5576 = vrot.slane %v5575, 1
        %v5577 = vadd.f32 %v5575, %v5576
        %v5578 = vmul.f32 %v1544, %v5556
        %v5579 = vmul.f32 %v1544, %v5563
        %v5580 = vmul.f32 %v1544, %v5570
        %v5581 = vmul.f32 %v1544, %v5577
        %v5586 = vrot.slane %v5578, 3
        %v5587 = vrot.slane %v5579, 3
        %v5588 = vrot.slane %v5580, 3
        %v5589 = vrot.slane %v5581, 3
        %v5594 = vadd.f32 %v5538, %v5586
        %v5595 = vadd.f32 %v5539, %v5587
        %v5596 = vadd.f32 %v5540, %v5588
        %v5597 = vadd.f32 %v5541, %v5589
        %v5598 = vmul.f32 %v5004, %v5378
        %v5599 = vmul.f32 %v5008, %v5379
        %v5600 = vmul.f32 %v5012, %v5380
        %v5601 = vmul.f32 %v5016, %v5381
        %v5602 = vmul.f32 %v5020, %v5382
        %v5603 = vmul.f32 %v5024, %v5383
        %v5604 = vmul.f32 %v5028, %v5384
        %v5605 = vmul.f32 %v5032, %v5385
        %v5606 = vadd.f32 %v5598, %v5599
        %v5607 = vrot.slane %v5606, 4
        %v5608 = vadd.f32 %v5606, %v5607
        %v5609 = vrot.slane %v5608, 2
        %v5610 = vadd.f32 %v5608, %v5609
        %v5611 = vrot.slane %v5610, 1
        %v5612 = vadd.f32 %v5610, %v5611
        %v5613 = vadd.f32 %v5600, %v5601
        %v5614 = vrot.slane %v5613, 4
        %v5615 = vadd.f32 %v5613, %v5614
        %v5616 = vrot.slane %v5615, 2
        %v5617 = vadd.f32 %v5615, %v5616
        %v5618 = vrot.slane %v5617, 1
        %v5619 = vadd.f32 %v5617, %v5618
        %v5620 = vadd.f32 %v5602, %v5603
        %v5621 = vrot.slane %v5620, 4
        %v5622 = vadd.f32 %v5620, %v5621
        %v5623 = vrot.slane %v5622, 2
        %v5624 = vadd.f32 %v5622, %v5623
        %v5625 = vrot.slane %v5624, 1
        %v5626 = vadd.f32 %v5624, %v5625
        %v5627 = vadd.f32 %v5604, %v5605
        %v5628 = vrot.slane %v5627, 4
        %v5629 = vadd.f32 %v5627, %v5628
        %v5630 = vrot.slane %v5629, 2
        %v5631 = vadd.f32 %v5629, %v5630
        %v5632 = vrot.slane %v5631, 1
        %v5633 = vadd.f32 %v5631, %v5632
        %v5634 = vmul.f32 %v1544, %v5612
        %v5635 = vmul.f32 %v1544, %v5619
        %v5636 = vmul.f32 %v1544, %v5626
        %v5637 = vmul.f32 %v1544, %v5633
        %v5642 = vrot.slane %v5634, 4
        %v5643 = vrot.slane %v5635, 4
        %v5644 = vrot.slane %v5636, 4
        %v5645 = vrot.slane %v5637, 4
        %v5650 = vadd.f32 %v5594, %v5642
        %v5651 = vadd.f32 %v5595, %v5643
        %v5652 = vadd.f32 %v5596, %v5644
        %v5653 = vadd.f32 %v5597, %v5645
        %v5654 = vmul.f32 %v5092, %v5378
        %v5655 = vmul.f32 %v5096, %v5379
        %v5656 = vmul.f32 %v5100, %v5380
        %v5657 = vmul.f32 %v5104, %v5381
        %v5658 = vmul.f32 %v5108, %v5382
        %v5659 = vmul.f32 %v5112, %v5383
        %v5660 = vmul.f32 %v5116, %v5384
        %v5661 = vmul.f32 %v5120, %v5385
        %v5662 = vadd.f32 %v5654, %v5655
        %v5663 = vrot.slane %v5662, 4
        %v5664 = vadd.f32 %v5662, %v5663
        %v5665 = vrot.slane %v5664, 2
        %v5666 = vadd.f32 %v5664, %v5665
        %v5667 = vrot.slane %v5666, 1
        %v5668 = vadd.f32 %v5666, %v5667
        %v5669 = vadd.f32 %v5656, %v5657
        %v5670 = vrot.slane %v5669, 4
        %v5671 = vadd.f32 %v5669, %v5670
        %v5672 = vrot.slane %v5671, 2
        %v5673 = vadd.f32 %v5671, %v5672
        %v5674 = vrot.slane %v5673, 1
        %v5675 = vadd.f32 %v5673, %v5674
        %v5676 = vadd.f32 %v5658, %v5659
        %v5677 = vrot.slane %v5676, 4
        %v5678 = vadd.f32 %v5676, %v5677
        %v5679 = vrot.slane %v5678, 2
        %v5680 = vadd.f32 %v5678, %v5679
        %v5681 = vrot.slane %v5680, 1
        %v5682 = vadd.f32 %v5680, %v5681
        %v5683 = vadd.f32 %v5660, %v5661
        %v5684 = vrot.slane %v5683, 4
        %v5685 = vadd.f32 %v5683, %v5684
        %v5686 = vrot.slane %v5685, 2
        %v5687 = vadd.f32 %v5685, %v5686
        %v5688 = vrot.slane %v5687, 1
        %v5689 = vadd.f32 %v5687, %v5688
        %v5690 = vmul.f32 %v1544, %v5668
        %v5691 = vmul.f32 %v1544, %v5675
        %v5692 = vmul.f32 %v1544, %v5682
        %v5693 = vmul.f32 %v1544, %v5689
        %v5698 = vrot.slane %v5690, 5
        %v5699 = vrot.slane %v5691, 5
        %v5700 = vrot.slane %v5692, 5
        %v5701 = vrot.slane %v5693, 5
        %v5706 = vadd.f32 %v5650, %v5698
        %v5707 = vadd.f32 %v5651, %v5699
        %v5708 = vadd.f32 %v5652, %v5700
        %v5709 = vadd.f32 %v5653, %v5701
        %v5710 = vmul.f32 %v5180, %v5378
        %v5711 = vmul.f32 %v5184, %v5379
        %v5712 = vmul.f32 %v5188, %v5380
        %v5713 = vmul.f32 %v5192, %v5381
        %v5714 = vmul.f32 %v5196, %v5382
        %v5715 = vmul.f32 %v5200, %v5383
        %v5716 = vmul.f32 %v5204, %v5384
        %v5717 = vmul.f32 %v5208, %v5385
        %v5718 = vadd.f32 %v5710, %v5711
        %v5719 = vrot.slane %v5718, 4
        %v5720 = vadd.f32 %v5718, %v5719
        %v5721 = vrot.slane %v5720, 2
        %v5722 = vadd.f32 %v5720, %v5721
        %v5723 = vrot.slane %v5722, 1
        %v5724 = vadd.f32 %v5722, %v5723
        %v5725 = vadd.f32 %v5712, %v5713
        %v5726 = vrot.slane %v5725, 4
        %v5727 = vadd.f32 %v5725, %v5726
        %v5728 = vrot.slane %v5727, 2
        %v5729 = vadd.f32 %v5727, %v5728
        %v5730 = vrot.slane %v5729, 1
        %v5731 = vadd.f32 %v5729, %v5730
        %v5732 = vadd.f32 %v5714, %v5715
        %v5733 = vrot.slane %v5732, 4
        %v5734 = vadd.f32 %v5732, %v5733
        %v5735 = vrot.slane %v5734, 2
        %v5736 = vadd.f32 %v5734, %v5735
        %v5737 = vrot.slane %v5736, 1
        %v5738 = vadd.f32 %v5736, %v5737
        %v5739 = vadd.f32 %v5716, %v5717
        %v5740 = vrot.slane %v5739, 4
        %v5741 = vadd.f32 %v5739, %v5740
        %v5742 = vrot.slane %v5741, 2
        %v5743 = vadd.f32 %v5741, %v5742
        %v5744 = vrot.slane %v5743, 1
        %v5745 = vadd.f32 %v5743, %v5744
        %v5746 = vmul.f32 %v1544, %v5724
        %v5747 = vmul.f32 %v1544, %v5731
        %v5748 = vmul.f32 %v1544, %v5738
        %v5749 = vmul.f32 %v1544, %v5745
        %v5754 = vrot.slane %v5746, 6
        %v5755 = vrot.slane %v5747, 6
        %v5756 = vrot.slane %v5748, 6
        %v5757 = vrot.slane %v5749, 6
        %v5762 = vadd.f32 %v5706, %v5754
        %v5763 = vadd.f32 %v5707, %v5755
        %v5764 = vadd.f32 %v5708, %v5756
        %v5765 = vadd.f32 %v5709, %v5757
        %v5766 = vmul.f32 %v5268, %v5378
        %v5767 = vmul.f32 %v5272, %v5379
        %v5768 = vmul.f32 %v5276, %v5380
        %v5769 = vmul.f32 %v5280, %v5381
        %v5770 = vmul.f32 %v5284, %v5382
        %v5771 = vmul.f32 %v5288, %v5383
        %v5772 = vmul.f32 %v5292, %v5384
        %v5773 = vmul.f32 %v5296, %v5385
        %v5774 = vadd.f32 %v5766, %v5767
        %v5775 = vrot.slane %v5774, 4
        %v5776 = vadd.f32 %v5774, %v5775
        %v5777 = vrot.slane %v5776, 2
        %v5778 = vadd.f32 %v5776, %v5777
        %v5779 = vrot.slane %v5778, 1
        %v5780 = vadd.f32 %v5778, %v5779
        %v5781 = vadd.f32 %v5768, %v5769
        %v5782 = vrot.slane %v5781, 4
        %v5783 = vadd.f32 %v5781, %v5782
        %v5784 = vrot.slane %v5783, 2
        %v5785 = vadd.f32 %v5783, %v5784
        %v5786 = vrot.slane %v5785, 1
        %v5787 = vadd.f32 %v5785, %v5786
        %v5788 = vadd.f32 %v5770, %v5771
        %v5789 = vrot.slane %v5788, 4
        %v5790 = vadd.f32 %v5788, %v5789
        %v5791 = vrot.slane %v5790, 2
        %v5792 = vadd.f32 %v5790, %v5791
        %v5793 = vrot.slane %v5792, 1
        %v5794 = vadd.f32 %v5792, %v5793
        %v5795 = vadd.f32 %v5772, %v5773
        %v5796 = vrot.slane %v5795, 4
        %v5797 = vadd.f32 %v5795, %v5796
        %v5798 = vrot.slane %v5797, 2
        %v5799 = vadd.f32 %v5797, %v5798
        %v5800 = vrot.slane %v5799, 1
        %v5801 = vadd.f32 %v5799, %v5800
        %v5802 = vmul.f32 %v1544, %v5780
        %v5803 = vmul.f32 %v1544, %v5787
        %v5804 = vmul.f32 %v1544, %v5794
        %v5805 = vmul.f32 %v1544, %v5801
        %v5810 = vrot.slane %v5802, 7
        %v5811 = vrot.slane %v5803, 7
        %v5812 = vrot.slane %v5804, 7
        %v5813 = vrot.slane %v5805, 7
        %v5818 = vadd.f32 %v5762, %v5810
        %v5819 = vadd.f32 %v5763, %v5811
        %v5820 = vadd.f32 %v5764, %v5812
        %v5821 = vadd.f32 %v5765, %v5813
        %v5822 = vadd.f32 %v5818, 1e-05
        %v5823 = vadd.f32 %v5819, 1e-05
        %v5824 = vadd.f32 %v5820, 1e-05
        %v5825 = vadd.f32 %v5821, 1e-05
        %vm5826 = vcmask 57344
        %5827 = vst.msk [vmem:[%s365] sm:$0x1] %vm5826, %v4586
        %5828 = vst.msk [vmem:[%s365 + $0x1] sm:$0x1] %vm5826, %v4587
        %5829 = vst.msk [vmem:[%s365 + $0x2] sm:$0x1] %vm5826, %v4588
        %5830 = vst.msk [vmem:[%s365 + $0x3] sm:$0x1] %vm5826, %v4589
        %5831 = vst [vmem:[%s372] sm:$0x1] %v5350
        %5832 = vst [vmem:[%s372 + $0x1] sm:$0x1] %v5351
        %5833 = vst [vmem:[%s372 + $0x2] sm:$0x1] %v5352
        %5834 = vst [vmem:[%s372 + $0x3] sm:$0x1] %v5353
        %5835 = vst [vmem:[%s379] sm:$0x1] %v5822
        %5836 = vst [vmem:[%s379 + $0x1] sm:$0x1] %v5823
        %5837 = vst [vmem:[%s379 + $0x2] sm:$0x1] %v5824
        %5838 = vst [vmem:[%s379 + $0x3] sm:$0x1] %v5825
        %s5839 = sand.u32 %s193, 1
        %s5840 = scalar_lea.sflag [#allocation5], %s5839
        %s5841 = sand.u32 %s193, 1
        %s5842 = smul.addr %s5841, 4
        %s5843 = scalar_lea.vmem [#allocation6], %s5842
        %s5844 = sand.u32 %s28, 1
        %s5845 = scalar_lea.sflag [#allocation8], %s5844
        %s5846 = sand.u32 %s219, 1
        %s5847 = smul.addr %s5846, 4
        %s5848 = scalar_lea.vmem [#allocation7], %s5847
        %s5849 = sand.u32 %s28, 1
        %s5850 = scalar_lea.sflag [#allocation8], %s5849
        %s5851 = sand.u32 %s245, 1
        %s5852 = smul.addr %s5851, 4
        %s5853 = scalar_lea.vmem [#allocation9], %s5852
        // Predicated region
        $region53: #{tpu_custom_call.1} parent=47 // pred_check
          %p5854 = pneg %p203
        $region54: #{tpu_custom_call.1} parent=47 // pred_check_branch
          %5856 = sbr.rel (%p5854) target = $region56
        $region55: #{tpu_custom_call.1} parent=47 // pred_region
          %s5857 = smul.u32 4, %s28
          %s5859 = ssub.s32 64, 64
          %5860 = vsyncadd %s5840, %s5859
          %s5861 = smul.addr %s5857, 16
          %s5862 = scalar_lea.hbm %s7, %s5861
          %s5863 = sshll.u32 %s5843, 4
          %s5864 = int_to_ptr.vmem [resolvable:$true] %s5863
          %5869 = dma.vmem_to_hbm [thread:$0]  %s5864, 64, %s5862, %s5840, 16, 16, 1
        $region56: #{tpu_custom_call.1} parent=47 // pred_fallthru
          _
        // Predicated region
        $region57: #{tpu_custom_call.1} parent=47 // pred_check
          %p5870 = pneg %p229
        $region58: #{tpu_custom_call.1} parent=47 // pred_check_branch
          %5872 = sbr.rel (%p5870) target = $region60
        $region59: #{tpu_custom_call.1} parent=47 // pred_region
          %s5873 = smul.u32 4, %s28
          %s5875 = ssub.s32 64, 64
          %5876 = vsyncadd %s5845, %s5875
          %s5877 = smul.addr %s5873, 16
          %s5878 = scalar_lea.hbm %s8, %s5877
          %s5879 = sshll.u32 %s5848, 4
          %s5880 = int_to_ptr.vmem [resolvable:$true] %s5879
          %5885 = dma.vmem_to_hbm [thread:$0]  %s5880, 64, %s5878, %s5845, 16, 16, 1
        $region60: #{tpu_custom_call.1} parent=47 // pred_fallthru
          _
        // Predicated region
        $region61: #{tpu_custom_call.1} parent=47 // pred_check
          %p5886 = pneg %p255
        $region62: #{tpu_custom_call.1} parent=47 // pred_check_branch
          %5888 = sbr.rel (%p5886) target = $region64
        $region63: #{tpu_custom_call.1} parent=47 // pred_region
          %s5889 = smul.u32 4, %s28
          %s5891 = ssub.s32 64, 64
          %5892 = vsyncadd %s5850, %s5891
          %s5893 = smul.addr %s5889, 16
          %s5894 = scalar_lea.hbm %s9, %s5893
          %s5895 = sshll.u32 %s5853, 4
          %s5896 = int_to_ptr.vmem [resolvable:$true] %s5895
          %5901 = dma.vmem_to_hbm [thread:$0]  %s5896, 64, %s5894, %s5850, 16, 16, 1
        $region64: #{tpu_custom_call.1} parent=47 // pred_fallthru
          _
      $region48: #{tpu_custom_call.1} parent=5 // pred_fallthru
        _
      %p5902 = scmp.le.s32.totalorder 2, %s23
      // Predicated region
      $region65: #{tpu_custom_call.1} parent=5 // pred_check
        %p5903 = pneg %p5902
      $region66: #{tpu_custom_call.1} parent=5 // pred_check_branch
        %5905 = sbr.rel (%p5903) target = $region68
      $region67: #{tpu_custom_call.1} parent=5 // pred_region
        %s5906 = ssub.s32 %s23, 2
        // Predicated region
        $region69: #{tpu_custom_call.1} parent=67 // pred_check
          %p5907 = pneg %p209
        $region70: #{tpu_custom_call.1} parent=67 // pred_check_branch
          %5909 = sbr.rel (%p5907) target = $region72
        $region71: #{tpu_custom_call.1} parent=67 // pred_region
          %s5910 = sand.u32 %s194, 1
          %s5911 = scalar_lea.sflag [#allocation5], %s5910
          %s5912 = sand.u32 %s194, 1
          %s5913 = smul.addr %s5912, 4
          %s5914 = scalar_lea.vmem [#allocation6], %s5913
          %5915 = dma.done %s5911, 64
        $region72: #{tpu_custom_call.1} parent=67 // pred_fallthru
          _
        // Predicated region
        $region73: #{tpu_custom_call.1} parent=67 // pred_check
          %p5916 = pneg %p235
        $region74: #{tpu_custom_call.1} parent=67 // pred_check_branch
          %5918 = sbr.rel (%p5916) target = $region76
        $region75: #{tpu_custom_call.1} parent=67 // pred_region
          %s5919 = sand.u32 %s29, 1
          %s5920 = scalar_lea.sflag [#allocation8], %s5919
          %s5921 = sand.u32 %s220, 1
          %s5922 = smul.addr %s5921, 4
          %s5923 = scalar_lea.vmem [#allocation7], %s5922
          %5924 = dma.done %s5920, 64
        $region76: #{tpu_custom_call.1} parent=67 // pred_fallthru
          _
        // Predicated region
        $region77: #{tpu_custom_call.1} parent=67 // pred_check
          %p5925 = pneg %p261
        $region78: #{tpu_custom_call.1} parent=67 // pred_check_branch
          %5927 = sbr.rel (%p5925) target = $region80
        $region79: #{tpu_custom_call.1} parent=67 // pred_region
          %s5928 = sand.u32 %s29, 1
          %s5929 = scalar_lea.sflag [#allocation8], %s5928
          %s5930 = sand.u32 %s246, 1
          %s5931 = smul.addr %s5930, 4
          %s5932 = scalar_lea.vmem [#allocation9], %s5931
          %5933 = dma.done %s5929, 64
        $region80: #{tpu_custom_call.1} parent=67 // pred_fallthru
          _
      $region68: #{tpu_custom_call.1} parent=5 // pred_fallthru
        _
    $region6: #{tpu_custom_call.1} parent=1 // loop_footer
      %s27 = sadd.s32 1, %s23
    $region7: #{tpu_custom_call.1} parent=1 // loop_footer_branch
      %22 = sbr.rel target = $region3
    $region8: #{tpu_custom_call.1} parent=1 // loop_exit
      _
    %5934 = vsyncpa [#allocation4], 1
    %s5935 = scalar_lea.sflag [#allocation4], 1
    %5936 = vsyncpa %s5935, 1
    %5937 = vsyncpa [#allocation5], 1
    %s5938 = scalar_lea.sflag [#allocation5], 1
    %5939 = vsyncpa %s5938, 1
    %5940 = vsyncpa [#allocation8], 1
    %s5941 = scalar_lea.sflag [#allocation8], 1
    %5942 = vsyncpa %s5941, 1

</llo_original>
